<compile_context>
chip_gen: v7x
topology: tpu7x:2x2x1
jax: 0.10.0
libtpu: 0.0.40
codegen_flags: <defaults>
</compile_context>

<pallas_src>
import functools

import jax
import jax.numpy as jnp
from jax.experimental import pallas as pl
from jax.experimental.pallas import tpu as pltpu

_STEM_CIN_PAD = 4  # pad RGB (3) channels to 4 so the contraction K stays 8-aligned


# ----------------------------- Pallas kernels -------------------------------

def _stem_kernel(x_ref, wb_ref, s_ref, b_ref, out_ref, *, H, Wo, Cout):
    # x_ref : (1, H+2, (W+2)*Cin)  zero-padded input, lane-dense (bf16)
    # wb_ref: (3, (W+2)*Cin, W*Cout) banded conv weight (one band per dy)
    # s/b   : (1, W*Cout) folded-BN scale/bias tiled over W (f32)
    acc = jnp.zeros((H, Wo * Cout), jnp.float32)
    for dy in range(3):
        acc = acc + jnp.dot(x_ref[0, dy:dy + H, :], wb_ref[dy],
                            preferred_element_type=jnp.float32)
    y = jnp.maximum(acc * s_ref[...] + b_ref[...], 0.0)
    out_ref[0] = y.astype(out_ref.dtype)


def _block_kernel(x_ref, res_ref, w1_ref, s1_ref, b1_ref,
                  w2_ref, s2_ref, b2_ref, out_ref, ypad_ref,
                  *, stride, Ho, Wo, Cout):
    # Fused BasicBlock: conv1+BN+ReLU -> conv2+BN -> +residual -> ReLU.
    #  stride 1: x_ref is (1, H+2, (W+2)*Cin) lane-dense padded input.
    #  stride 2: x_ref is (1, 2, (H+2)//2, (W+2)*Cin) row-parity planes of it.
    acc = jnp.zeros((Ho, Wo * Cout), jnp.float32)
    for dy in range(3):
        if stride == 1:
            xs = x_ref[0, dy:dy + Ho, :]
        else:
            xs = x_ref[0, dy % 2, dy // 2:dy // 2 + Ho, :]
        acc = acc + jnp.dot(xs, w1_ref[dy], preferred_element_type=jnp.float32)
    y = jnp.maximum(acc * s1_ref[...] + b1_ref[...], 0.0)      # (Ho, Wo*Cout) f32

    # Zero-pad the intermediate into VMEM scratch (never touches HBM).
    ypad_ref[...] = jnp.zeros_like(ypad_ref)
    ypad_ref[1:1 + Ho, Cout:Cout + Wo * Cout] = y

    acc2 = jnp.zeros((Ho, Wo * Cout), jnp.float32)
    for dy in range(3):
        ys = ypad_ref[dy:dy + Ho, :].astype(jnp.bfloat16)
        acc2 = acc2 + jnp.dot(ys, w2_ref[dy], preferred_element_type=jnp.float32)
    z = acc2 * s2_ref[...] + b2_ref[...] + res_ref[0].astype(jnp.float32)
    out_ref[0] = jnp.maximum(z, 0.0).astype(out_ref.dtype)


def _head_kernel(x_ref, w_ref, b_ref, out_ref, *, N):
    # x_ref: (N, Ho, Wo*C) lane-dense features (bf16)
    # w_ref: (Wo*C, num_classes) fc weight tiled over Wo, 1/(Ho*Wo) folded in.
    rows = [jnp.sum(x_ref[i].astype(jnp.float32), axis=0, keepdims=True)
            for i in range(N)]
    pooled = jnp.concatenate(rows, axis=0)                      # (N, Wo*C)
    out = jnp.dot(pooled, w_ref[...], preferred_element_type=jnp.float32)
    out_ref[...] = (out + b_ref[...]).astype(out_ref.dtype)


# ------------------------------ JAX wrappers ---------------------------------

def _conv_stem(x_nhwc, sp):
    n, h, w, cin = x_nhwc.shape
    cout = sp["cout"]
    kl = (w + 2) * cin
    xp = jnp.pad(x_nhwc, ((0, 0), (1, 1), (1, 1), (0, 0))).reshape(n, h + 2, kl)
    kern = functools.partial(_stem_kernel, H=h, Wo=w, Cout=cout)
    return pl.pallas_call(
        kern,
        out_shape=jax.ShapeDtypeStruct((n, h, w * cout), jnp.bfloat16),
        grid=(n,),
        in_specs=[
            pl.BlockSpec((1, h + 2, kl), lambda i: (i, 0, 0)),
            pl.BlockSpec((3, kl, w * cout), lambda i: (0, 0, 0)),
            pl.BlockSpec((1, w * cout), lambda i: (0, 0)),
            pl.BlockSpec((1, w * cout), lambda i: (0, 0)),
        ],
        out_specs=pl.BlockSpec((1, h, w * cout), lambda i: (i, 0, 0)),
        compiler_params=pltpu.CompilerParams(dimension_semantics=("parallel",)),
        cost_estimate=pl.CostEstimate(
            flops=2 * n * 3 * h * kl * w * cout,
            transcendentals=0,
            bytes_accessed=2 * (xp.size + sp["wb"].size + n * h * w * cout)),
    )(xp, sp["wb"], sp["s"], sp["b"])


def _block_forward(x, bp):
    # x: (N, H, W*Cin) lane-dense bf16 activations from the previous layer.
    n = x.shape[0]
    h = bp["h_in"]
    w = h                                   # square activations
    cin, cout, stride = bp["cin"], bp["cout"], bp["stride"]
    ho = wo = h // stride
    kl1 = (w + 2) * cin
    kl2 = (wo + 2) * cout

    x4 = x.reshape(n, h, w, cin)
    xp = jnp.pad(x4, ((0, 0), (1, 1), (1, 1), (0, 0))).reshape(n, h + 2, kl1)
    if stride == 1:
        xin = xp
        xin_spec = pl.BlockSpec((1, h + 2, kl1), lambda i: (i, 0, 0))
        sc = x4
    else:
        # row-parity planes: plane p holds padded rows p, p+2, ...
        xin = jnp.stack([xp[:, 0::2, :], xp[:, 1::2, :]], axis=1)
        hh = xin.shape[2]
        xin_spec = pl.BlockSpec((1, 2, hh, kl1), lambda i: (i, 0, 0, 0))
        sc = x4[:, ::2, ::2, :]             # option-A shortcut subsample
    if sc.shape[-1] != cout:                # option-A zero channel padding
        extra = cout - sc.shape[-1]
        sc = jnp.pad(sc, ((0, 0), (0, 0), (0, 0),
                          (extra // 2, extra - extra // 2)))
    res_ld = sc.reshape(n, ho, wo * cout)   # lane-dense residual

    kern = functools.partial(_block_kernel, stride=stride,
                             Ho=ho, Wo=wo, Cout=cout)
    out = pl.pallas_call(
        kern,
        out_shape=jax.ShapeDtypeStruct((n, ho, wo * cout), jnp.bfloat16),
        grid=(n,),
        in_specs=[
            xin_spec,
            pl.BlockSpec((1, ho, wo * cout), lambda i: (i, 0, 0)),
            pl.BlockSpec((3, kl1, wo * cout), lambda i: (0, 0, 0)),
            pl.BlockSpec((1, wo * cout), lambda i: (0, 0)),
            pl.BlockSpec((1, wo * cout), lambda i: (0, 0)),
            pl.BlockSpec((3, kl2, wo * cout), lambda i: (0, 0, 0)),
            pl.BlockSpec((1, wo * cout), lambda i: (0, 0)),
            pl.BlockSpec((1, wo * cout), lambda i: (0, 0)),
        ],
        out_specs=pl.BlockSpec((1, ho, wo * cout), lambda i: (i, 0, 0)),
        scratch_shapes=[pltpu.VMEM((ho + 2, kl2), jnp.float32)],
        compiler_params=pltpu.CompilerParams(dimension_semantics=("parallel",)),
        cost_estimate=pl.CostEstimate(
            flops=2 * n * 3 * ho * (kl1 + kl2) * wo * cout,
            transcendentals=0,
            bytes_accessed=2 * (xin.size + res_ld.size + n * ho * wo * cout
                                + bp["w1b"].size + bp["w2b"].size)),
    )(xin, res_ld, bp["w1b"], bp["s1"], bp["b1"],
      bp["w2b"], bp["s2"], bp["b2"])
    return out                              # (N, Ho, Wo*Cout) lane-dense bf16


def _head_forward(x, hp):
    n = x.shape[0]
    nc = hp["w"].shape[-1]
    return pl.pallas_call(
        functools.partial(_head_kernel, N=n),
        out_shape=jax.ShapeDtypeStruct((n, nc), jnp.float32),
    )(x, hp["w"], hp["b"])


# ------------------------ parameter init & packing ---------------------------

def _kaiming_conv(key, cin, cout, k=3):
    std = (2.0 / (cin * k * k)) ** 0.5                 # kaiming_normal_, fan_in
    w_oihw = std * jax.random.normal(key, (cout, cin, k, k), dtype=jnp.float32)
    return jnp.transpose(w_oihw, (2, 3, 1, 0))          # HWIO


def _bn_fold(c, eps=1e-5):
    gamma = jnp.ones((c,), jnp.float32)
    beta = jnp.zeros((c,), jnp.float32)
    running_mean = jnp.zeros((c,), jnp.float32)
    running_var = jnp.ones((c,), jnp.float32)
    scale = gamma / jnp.sqrt(running_var + eps)
    return scale, beta - running_mean * scale


def init_params(key, num_blocks=(1, 1, 1), num_classes=10):
    keys = jax.random.split(key, 32)
    ki = iter(range(32))
    params = {"conv1_w": _kaiming_conv(keys[next(ki)], 3, 16)}
    params["bn1_s"], params["bn1_b"] = _bn_fold(16)

    in_planes = 16
    layers = []
    for planes, nb, stride0 in zip((16, 32, 64), num_blocks, (1, 2, 2)):
        blocks = []
        for b in range(nb):
            stride = stride0 if b == 0 else 1
            blk = {"stride": stride,
                   "w1": _kaiming_conv(keys[next(ki)], in_planes, planes),
                   "w2": _kaiming_conv(keys[next(ki)], planes, planes)}
            blk["s1"], blk["b1"] = _bn_fold(planes)
            blk["s2"], blk["b2"] = _bn_fold(planes)
            blocks.append(blk)
            in_planes = planes
        layers.append(blocks)
    params["layers"] = layers

    fan_in = 64
    std = (2.0 / fan_in) ** 0.5
    w_fc = std * jax.random.normal(keys[next(ki)], (num_classes, fan_in),
                                   dtype=jnp.float32)
    params["fc_w"] = jnp.transpose(w_fc, (1, 0))        # (64, num_classes)
    bound = 1.0 / (fan_in ** 0.5)
    params["fc_b"] = jax.random.uniform(keys[next(ki)], (num_classes,),
                                        minval=-bound, maxval=bound,
                                        dtype=jnp.float32)
    return params


def _band_weights(w_hwio, w_in, stride, dtype=jnp.bfloat16):
    """Per-dy banded matmul weights for a 3x3 'same' conv on lane-dense rows.

    Returns (3, (w_in+2)*Cin, (w_in//stride)*Cout) with
    band[dy][wi*Cin+ci, wo*Cout+co] = W[dy, wi - stride*wo, ci, co].
    """
    _, _, cin, cout = w_hwio.shape
    wp, wo = w_in + 2, w_in // stride
    wo_idx = jnp.arange(wo)
    bands = []
    for dy in range(3):
        t = jnp.zeros((wo, wp, cin, cout), jnp.float32)
        for dx in range(3):
            t = t.at[wo_idx, stride * wo_idx + dx].set(w_hwio[dy, dx])
        bands.append(jnp.transpose(t, (1, 2, 0, 3)).reshape(wp * cin, wo * cout))
    return jnp.stack(bands).astype(dtype)


def _tile_vec(v, reps):
    return jnp.tile(v, (reps,)).reshape(1, reps * v.shape[0]).astype(jnp.float32)


def pack_params(params, image_hw=16):
    """Precompute kernel-ready banded weights / tiled BN terms (done once)."""
    h = image_hw
    w1 = jnp.pad(params["conv1_w"],
                 ((0, 0), (0, 0), (0, _STEM_CIN_PAD - 3), (0, 0)))
    packed = {"stem": {"wb": _band_weights(w1, h, 1),
                       "s": _tile_vec(params["bn1_s"], h),
                       "b": _tile_vec(params["bn1_b"], h),
                       "cin": _STEM_CIN_PAD, "cout": 16}}
    blocks = []
    for stage in params["layers"]:
        for blk in stage:
            stride = blk["stride"]
            cin, cout = blk["w1"].shape[2], blk["w1"].shape[3]
            ho = h // stride
            blocks.append({
                "stride": stride, "h_in": h, "cin": cin, "cout": cout,
                "w1b": _band_weights(blk["w1"], h, stride),
                "w2b": _band_weights(blk["w2"], ho, 1),
                "s1": _tile_vec(blk["s1"], ho), "b1": _tile_vec(blk["b1"], ho),
                "s2": _tile_vec(blk["s2"], ho), "b2": _tile_vec(blk["b2"], ho),
            })
            h = ho
    packed["blocks"] = blocks
    nc = params["fc_w"].shape[1]
    packed["head"] = {
        "w": (jnp.tile(params["fc_w"], (h, 1)) / float(h * h)).astype(jnp.float32),
        "b": params["fc_b"].reshape(1, nc).astype(jnp.float32),
    }
    return packed


# -------------------------------- forward ------------------------------------

def resnet_forward(x_nchw, packed):
    x = jnp.transpose(x_nchw, (0, 2, 3, 1)).astype(jnp.bfloat16)   # NCHW -> NHWC
    sp = packed["stem"]
    cpad = sp["cin"] - x.shape[-1]
    if cpad > 0:
        x = jnp.pad(x, ((0, 0), (0, 0), (0, 0), (0, cpad)))
    out = _conv_stem(x, sp)                        # (N, H, W*16) lane-dense
    for bp in packed["blocks"]:
        out = _block_forward(out, bp)
    return _head_forward(out, packed["head"])      # (N, num_classes) f32


if __name__ == "__main__":
    key = jax.random.PRNGKey(0)
    pkey, xkey = jax.random.split(key)
    params = init_params(pkey, num_blocks=(1, 1, 1), num_classes=10)
    packed = pack_params(params, image_hw=16)
    # PyTorch-style NCHW input (batch=2, channels=3, 16x16 spatial)
    x = jax.random.normal(xkey, (2, 3, 16, 16), dtype=jnp.float32)

    fwd = jax.jit(lambda inp: resnet_forward(inp, packed))
    logits = fwd(x)
    jax.block_until_ready(logits)
    assert logits.shape == (2, 10)
    print("KERNEL_OK")
</pallas_src>

<mosaic_0001>
module attributes {stable_mosaic.version = 11 : i64} {
  func.func @_stem_kernel(%arg0: i32, %arg1: memref<1x18x72xbf16, #tpu.memory_space<vmem>>, %arg2: memref<3x72x256xbf16, #tpu.memory_space<vmem>>, %arg3: memref<1x256xf32, #tpu.memory_space<vmem>>, %arg4: memref<1x256xf32, #tpu.memory_space<vmem>>, %arg5: memref<1x16x256xbf16, #tpu.memory_space<vmem>>) attributes {dimension_semantics = [#tpu.dimension_semantics<parallel>], iteration_bounds = array<i64: 2>, scalar_prefetch = 0 : i64, scratch_operands = 0 : i64, tpu.core_type = #tpu.core_type<tc>, window_params = [{transform_indices = @transform_0, window_bounds = array<i64: 1, 18, 72>}, {pipeline_mode = #tpu.pipeline_mode<synchronous>, transform_indices = @transform_1, window_bounds = array<i64: 3, 72, 256>}, {pipeline_mode = #tpu.pipeline_mode<synchronous>, transform_indices = @transform_2, window_bounds = array<i64: 1, 256>}, {pipeline_mode = #tpu.pipeline_mode<synchronous>, transform_indices = @transform_3, window_bounds = array<i64: 1, 256>}, {transform_indices = @transform_4, window_bounds = array<i64: 1, 16, 256>}]} {
    %cst = arith.constant 0.000000e+00 : f32
    %0 = vector.broadcast %cst : f32 to vector<16x256xf32>
    %c0 = arith.constant 0 : index
    %c0_0 = arith.constant 0 : index
    %c0_1 = arith.constant 0 : index
    %1 = vector.load %arg1[%c0, %c0_0, %c0_1] : memref<1x18x72xbf16, #tpu.memory_space<vmem>>, vector<1x16x72xbf16>
    %2 = vector.shape_cast %1 : vector<1x16x72xbf16> to vector<16x72xbf16>
    %c0_2 = arith.constant 0 : index
    %c0_3 = arith.constant 0 : index
    %c0_4 = arith.constant 0 : index
    %3 = vector.load %arg2[%c0_2, %c0_3, %c0_4] : memref<3x72x256xbf16, #tpu.memory_space<vmem>>, vector<1x72x256xbf16>
    %4 = vector.shape_cast %3 : vector<1x72x256xbf16> to vector<72x256xbf16>
    %cst_5 = arith.constant dense<0.000000e+00> : vector<16x256xf32>
    %5 = tpu.matmul %2, %4, %cst_5 {dimension_numbers = #tpu.dot_dimension_numbers<[1], [0], [0], [1], [0, 0, 1, 1], [], []>} : vector<16x72xbf16>, vector<72x256xbf16>, vector<16x256xf32> -> vector<16x256xf32>
    %6 = arith.addf %0, %5 : vector<16x256xf32>
    %c0_6 = arith.constant 0 : index
    %c1 = arith.constant 1 : index
    %c0_7 = arith.constant 0 : index
    %7 = vector.load %arg1[%c0_6, %c1, %c0_7] : memref<1x18x72xbf16, #tpu.memory_space<vmem>>, vector<1x16x72xbf16>
    %8 = vector.shape_cast %7 : vector<1x16x72xbf16> to vector<16x72xbf16>
    %c1_8 = arith.constant 1 : index
    %c0_9 = arith.constant 0 : index
    %c0_10 = arith.constant 0 : index
    %9 = vector.load %arg2[%c1_8, %c0_9, %c0_10] : memref<3x72x256xbf16, #tpu.memory_space<vmem>>, vector<1x72x256xbf16>
    %10 = vector.shape_cast %9 : vector<1x72x256xbf16> to vector<72x256xbf16>
    %cst_11 = arith.constant dense<0.000000e+00> : vector<16x256xf32>
    %11 = tpu.matmul %8, %10, %cst_11 {dimension_numbers = #tpu.dot_dimension_numbers<[1], [0], [0], [1], [0, 0, 1, 1], [], []>} : vector<16x72xbf16>, vector<72x256xbf16>, vector<16x256xf32> -> vector<16x256xf32>
    %12 = arith.addf %6, %11 : vector<16x256xf32>
    %c0_12 = arith.constant 0 : index
    %c2 = arith.constant 2 : index
    %c0_13 = arith.constant 0 : index
    %13 = vector.load %arg1[%c0_12, %c2, %c0_13] : memref<1x18x72xbf16, #tpu.memory_space<vmem>>, vector<1x16x72xbf16>
    %14 = vector.shape_cast %13 : vector<1x16x72xbf16> to vector<16x72xbf16>
    %c2_14 = arith.constant 2 : index
    %c0_15 = arith.constant 0 : index
    %c0_16 = arith.constant 0 : index
    %15 = vector.load %arg2[%c2_14, %c0_15, %c0_16] : memref<3x72x256xbf16, #tpu.memory_space<vmem>>, vector<1x72x256xbf16>
    %16 = vector.shape_cast %15 : vector<1x72x256xbf16> to vector<72x256xbf16>
    %cst_17 = arith.constant dense<0.000000e+00> : vector<16x256xf32>
    %17 = tpu.matmul %14, %16, %cst_17 {dimension_numbers = #tpu.dot_dimension_numbers<[1], [0], [0], [1], [0, 0, 1, 1], [], []>} : vector<16x72xbf16>, vector<72x256xbf16>, vector<16x256xf32> -> vector<16x256xf32>
    %18 = arith.addf %12, %17 : vector<16x256xf32>
    %c0_18 = arith.constant 0 : index
    %c0_19 = arith.constant 0 : index
    %19 = vector.load %arg3[%c0_18, %c0_19] : memref<1x256xf32, #tpu.memory_space<vmem>>, vector<1x256xf32>
    %20 = vector.broadcast %19 : vector<1x256xf32> to vector<16x256xf32>
    %21 = arith.mulf %18, %20 : vector<16x256xf32>
    %c0_20 = arith.constant 0 : index
    %c0_21 = arith.constant 0 : index
    %22 = vector.load %arg4[%c0_20, %c0_21] : memref<1x256xf32, #tpu.memory_space<vmem>>, vector<1x256xf32>
    %23 = vector.broadcast %22 : vector<1x256xf32> to vector<16x256xf32>
    %24 = arith.addf %21, %23 : vector<16x256xf32>
    %cst_22 = arith.constant 0.000000e+00 : f32
    %25 = vector.broadcast %cst_22 : f32 to vector<16x256xf32>
    %26 = arith.maximumf %24, %25 : vector<16x256xf32>
    %27 = arith.truncf %26 : vector<16x256xf32> to vector<16x256xbf16>
    %c0_23 = arith.constant 0 : index
    %c0_24 = arith.constant 0 : index
    %c0_25 = arith.constant 0 : index
    %28 = vector.load %arg5[%c0_23, %c0_24, %c0_25] : memref<1x16x256xbf16, #tpu.memory_space<vmem>>, vector<1x16x256xbf16>
    %29 = vector.shape_cast %28 : vector<1x16x256xbf16> to vector<16x256xbf16>
    %30 = vector.shape_cast %27 : vector<16x256xbf16> to vector<1x16x256xbf16>
    tpu.vector_store %arg5[%c0_23, %c0_24, %c0_25], %30 {strides = array<i32>} : memref<1x16x256xbf16, #tpu.memory_space<vmem>>, vector<1x16x256xbf16>,
    return
  }
  func.func @transform_0(%arg0: i32) -> (i32, i32, i32) {
    %c0_i32 = arith.constant 0 : i32
    %c0_i32_0 = arith.constant 0 : i32
    %c0_i32_1 = arith.constant 0 : i32
    return %arg0, %c0_i32, %c0_i32_0 : i32, i32, i32
  }
  func.func @transform_1(%arg0: i32) -> (i32, i32, i32) {
    %c0_i32 = arith.constant 0 : i32
    %c0_i32_0 = arith.constant 0 : i32
    %c0_i32_1 = arith.constant 0 : i32
    %c0_i32_2 = arith.constant 0 : i32
    return %c0_i32, %c0_i32_0, %c0_i32_1 : i32, i32, i32
  }
  func.func @transform_2(%arg0: i32) -> (i32, i32) {
    %c0_i32 = arith.constant 0 : i32
    %c0_i32_0 = arith.constant 0 : i32
    %c0_i32_1 = arith.constant 0 : i32
    return %c0_i32, %c0_i32_0 : i32, i32
  }
  func.func @transform_3(%arg0: i32) -> (i32, i32) {
    %c0_i32 = arith.constant 0 : i32
    %c0_i32_0 = arith.constant 0 : i32
    %c0_i32_1 = arith.constant 0 : i32
    return %c0_i32, %c0_i32_0 : i32, i32
  }
  func.func @transform_4(%arg0: i32) -> (i32, i32, i32) {
    %c0_i32 = arith.constant 0 : i32
    %c0_i32_0 = arith.constant 0 : i32
    %c0_i32_1 = arith.constant 0 : i32
    return %arg0, %c0_i32, %c0_i32_0 : i32, i32, i32
  }
}

module attributes {stable_mosaic.version = 11 : i64} {
  func.func @_block_kernel(%arg0: i32, %arg1: memref<1x18x288xbf16, #tpu.memory_space<vmem>>, %arg2: memref<1x16x256xbf16, #tpu.memory_space<vmem>>, %arg3: memref<3x288x256xbf16, #tpu.memory_space<vmem>>, %arg4: memref<1x256xf32, #tpu.memory_space<vmem>>, %arg5: memref<1x256xf32, #tpu.memory_space<vmem>>, %arg6: memref<3x288x256xbf16, #tpu.memory_space<vmem>>, %arg7: memref<1x256xf32, #tpu.memory_space<vmem>>, %arg8: memref<1x256xf32, #tpu.memory_space<vmem>>, %arg9: memref<1x16x256xbf16, #tpu.memory_space<vmem>>, %arg10: memref<18x288xf32, #tpu.memory_space<vmem>>) attributes {dimension_semantics = [#tpu.dimension_semantics<parallel>], iteration_bounds = array<i64: 2>, scalar_prefetch = 0 : i64, scratch_operands = 1 : i64, tpu.core_type = #tpu.core_type<tc>, window_params = [{transform_indices = @transform_0, window_bounds = array<i64: 1, 18, 288>}, {transform_indices = @transform_1, window_bounds = array<i64: 1, 16, 256>}, {pipeline_mode = #tpu.pipeline_mode<synchronous>, transform_indices = @transform_2, window_bounds = array<i64: 3, 288, 256>}, {pipeline_mode = #tpu.pipeline_mode<synchronous>, transform_indices = @transform_3, window_bounds = array<i64: 1, 256>}, {pipeline_mode = #tpu.pipeline_mode<synchronous>, transform_indices = @transform_4, window_bounds = array<i64: 1, 256>}, {pipeline_mode = #tpu.pipeline_mode<synchronous>, transform_indices = @transform_5, window_bounds = array<i64: 3, 288, 256>}, {pipeline_mode = #tpu.pipeline_mode<synchronous>, transform_indices = @transform_6, window_bounds = array<i64: 1, 256>}, {pipeline_mode = #tpu.pipeline_mode<synchronous>, transform_indices = @transform_7, window_bounds = array<i64: 1, 256>}, {transform_indices = @transform_8, window_bounds = array<i64: 1, 16, 256>}]} {
    %cst = arith.constant 0.000000e+00 : f32
    %0 = vector.broadcast %cst : f32 to vector<16x256xf32>
    %c0 = arith.constant 0 : index
    %c0_0 = arith.constant 0 : index
    %c0_1 = arith.constant 0 : index
    %1 = vector.load %arg1[%c0, %c0_0, %c0_1] : memref<1x18x288xbf16, #tpu.memory_space<vmem>>, vector<1x16x288xbf16>
    %2 = vector.shape_cast %1 : vector<1x16x288xbf16> to vector<16x288xbf16>
    %c0_2 = arith.constant 0 : index
    %c0_3 = arith.constant 0 : index
    %c0_4 = arith.constant 0 : index
    %3 = vector.load %arg3[%c0_2, %c0_3, %c0_4] : memref<3x288x256xbf16, #tpu.memory_space<vmem>>, vector<1x288x256xbf16>
    %4 = vector.shape_cast %3 : vector<1x288x256xbf16> to vector<288x256xbf16>
    %cst_5 = arith.constant dense<0.000000e+00> : vector<16x256xf32>
    %5 = tpu.matmul %2, %4, %cst_5 {dimension_numbers = #tpu.dot_dimension_numbers<[1], [0], [0], [1], [0, 0, 1, 1], [], []>} : vector<16x288xbf16>, vector<288x256xbf16>, vector<16x256xf32> -> vector<16x256xf32>
    %6 = arith.addf %0, %5 : vector<16x256xf32>
    %c0_6 = arith.constant 0 : index
    %c1 = arith.constant 1 : index
    %c0_7 = arith.constant 0 : index
    %7 = vector.load %arg1[%c0_6, %c1, %c0_7] : memref<1x18x288xbf16, #tpu.memory_space<vmem>>, vector<1x16x288xbf16>
    %8 = vector.shape_cast %7 : vector<1x16x288xbf16> to vector<16x288xbf16>
    %c1_8 = arith.constant 1 : index
    %c0_9 = arith.constant 0 : index
    %c0_10 = arith.constant 0 : index
    %9 = vector.load %arg3[%c1_8, %c0_9, %c0_10] : memref<3x288x256xbf16, #tpu.memory_space<vmem>>, vector<1x288x256xbf16>
    %10 = vector.shape_cast %9 : vector<1x288x256xbf16> to vector<288x256xbf16>
    %cst_11 = arith.constant dense<0.000000e+00> : vector<16x256xf32>
    %11 = tpu.matmul %8, %10, %cst_11 {dimension_numbers = #tpu.dot_dimension_numbers<[1], [0], [0], [1], [0, 0, 1, 1], [], []>} : vector<16x288xbf16>, vector<288x256xbf16>, vector<16x256xf32> -> vector<16x256xf32>
    %12 = arith.addf %6, %11 : vector<16x256xf32>
    %c0_12 = arith.constant 0 : index
    %c2 = arith.constant 2 : index
    %c0_13 = arith.constant 0 : index
    %13 = vector.load %arg1[%c0_12, %c2, %c0_13] : memref<1x18x288xbf16, #tpu.memory_space<vmem>>, vector<1x16x288xbf16>
    %14 = vector.shape_cast %13 : vector<1x16x288xbf16> to vector<16x288xbf16>
    %c2_14 = arith.constant 2 : index
    %c0_15 = arith.constant 0 : index
    %c0_16 = arith.constant 0 : index
    %15 = vector.load %arg3[%c2_14, %c0_15, %c0_16] : memref<3x288x256xbf16, #tpu.memory_space<vmem>>, vector<1x288x256xbf16>
    %16 = vector.shape_cast %15 : vector<1x288x256xbf16> to vector<288x256xbf16>
    %cst_17 = arith.constant dense<0.000000e+00> : vector<16x256xf32>
    %17 = tpu.matmul %14, %16, %cst_17 {dimension_numbers = #tpu.dot_dimension_numbers<[1], [0], [0], [1], [0, 0, 1, 1], [], []>} : vector<16x288xbf16>, vector<288x256xbf16>, vector<16x256xf32> -> vector<16x256xf32>
    %18 = arith.addf %12, %17 : vector<16x256xf32>
    %c0_18 = arith.constant 0 : index
    %c0_19 = arith.constant 0 : index
    %19 = vector.load %arg4[%c0_18, %c0_19] : memref<1x256xf32, #tpu.memory_space<vmem>>, vector<1x256xf32>
    %20 = vector.broadcast %19 : vector<1x256xf32> to vector<16x256xf32>
    %21 = arith.mulf %18, %20 : vector<16x256xf32>
    %c0_20 = arith.constant 0 : index
    %c0_21 = arith.constant 0 : index
    %22 = vector.load %arg5[%c0_20, %c0_21] : memref<1x256xf32, #tpu.memory_space<vmem>>, vector<1x256xf32>
    %23 = vector.broadcast %22 : vector<1x256xf32> to vector<16x256xf32>
    %24 = arith.addf %21, %23 : vector<16x256xf32>
    %cst_22 = arith.constant 0.000000e+00 : f32
    %25 = vector.broadcast %cst_22 : f32 to vector<16x256xf32>
    %26 = arith.maximumf %24, %25 : vector<16x256xf32>
    %cst_23 = arith.constant 0.000000e+00 : f32
    %27 = vector.broadcast %cst_23 : f32 to vector<18x288xf32>
    %c0_24 = arith.constant 0 : index
    %c0_25 = arith.constant 0 : index
    %28 = vector.load %arg10[%c0_24, %c0_25] : memref<18x288xf32, #tpu.memory_space<vmem>>, vector<18x288xf32>
    tpu.vector_store %arg10[%c0_24, %c0_25], %27 {strides = array<i32>} : memref<18x288xf32, #tpu.memory_space<vmem>>, vector<18x288xf32>,
    %c1_26 = arith.constant 1 : index
    %c16 = arith.constant 16 : index
    %29 = vector.load %arg10[%c1_26, %c16] : memref<18x288xf32, #tpu.memory_space<vmem>>, vector<16x256xf32>
    tpu.vector_store %arg10[%c1_26, %c16], %26 {strides = array<i32>} : memref<18x288xf32, #tpu.memory_space<vmem>>, vector<16x256xf32>,
    %cst_27 = arith.constant 0.000000e+00 : f32
    %30 = vector.broadcast %cst_27 : f32 to vector<16x256xf32>
    %c0_28 = arith.constant 0 : index
    %c0_29 = arith.constant 0 : index
    %31 = vector.load %arg10[%c0_28, %c0_29] : memref<18x288xf32, #tpu.memory_space<vmem>>, vector<16x288xf32>
    %32 = arith.truncf %31 : vector<16x288xf32> to vector<16x288xbf16>
    %c0_30 = arith.constant 0 : index
    %c0_31 = arith.constant 0 : index
    %c0_32 = arith.constant 0 : index
    %33 = vector.load %arg6[%c0_30, %c0_31, %c0_32] : memref<3x288x256xbf16, #tpu.memory_space<vmem>>, vector<1x288x256xbf16>
    %34 = vector.shape_cast %33 : vector<1x288x256xbf16> to vector<288x256xbf16>
    %cst_33 = arith.constant dense<0.000000e+00> : vector<16x256xf32>
    %35 = tpu.matmul %32, %34, %cst_33 {dimension_numbers = #tpu.dot_dimension_numbers<[1], [0], [0], [1], [0, 0, 1, 1], [], []>} : vector<16x288xbf16>, vector<288x256xbf16>, vector<16x256xf32> -> vector<16x256xf32>
    %36 = arith.addf %30, %35 : vector<16x256xf32>
    %c1_34 = arith.constant 1 : index
    %c0_35 = arith.constant 0 : index
    %37 = vector.load %arg10[%c1_34, %c0_35] : memref<18x288xf32, #tpu.memory_space<vmem>>, vector<16x288xf32>
    %38 = arith.truncf %37 : vector<16x288xf32> to vector<16x288xbf16>
    %c1_36 = arith.constant 1 : index
    %c0_37 = arith.constant 0 : index
    %c0_38 = arith.constant 0 : index
    %39 = vector.load %arg6[%c1_36, %c0_37, %c0_38] : memref<3x288x256xbf16, #tpu.memory_space<vmem>>, vector<1x288x256xbf16>
    %40 = vector.shape_cast %39 : vector<1x288x256xbf16> to vector<288x256xbf16>
    %cst_39 = arith.constant dense<0.000000e+00> : vector<16x256xf32>
    %41 = tpu.matmul %38, %40, %cst_39 {dimension_numbers = #tpu.dot_dimension_numbers<[1], [0], [0], [1], [0, 0, 1, 1], [], []>} : vector<16x288xbf16>, vector<288x256xbf16>, vector<16x256xf32> -> vector<16x256xf32>
    %42 = arith.addf %36, %41 : vector<16x256xf32>
    %c2_40 = arith.constant 2 : index
    %c0_41 = arith.constant 0 : index
    %43 = vector.load %arg10[%c2_40, %c0_41] : memref<18x288xf32, #tpu.memory_space<vmem>>, vector<16x288xf32>
    %44 = arith.truncf %43 : vector<16x288xf32> to vector<16x288xbf16>
    %c2_42 = arith.constant 2 : index
    %c0_43 = arith.constant 0 : index
    %c0_44 = arith.constant 0 : index
    %45 = vector.load %arg6[%c2_42, %c0_43, %c0_44] : memref<3x288x256xbf16, #tpu.memory_space<vmem>>, vector<1x288x256xbf16>
    %46 = vector.shape_cast %45 : vector<1x288x256xbf16> to vector<288x256xbf16>
    %cst_45 = arith.constant dense<0.000000e+00> : vector<16x256xf32>
    %47 = tpu.matmul %44, %46, %cst_45 {dimension_numbers = #tpu.dot_dimension_numbers<[1], [0], [0], [1], [0, 0, 1, 1], [], []>} : vector<16x288xbf16>, vector<288x256xbf16>, vector<16x256xf32> -> vector<16x256xf32>
    %48 = arith.addf %42, %47 : vector<16x256xf32>
    %c0_46 = arith.constant 0 : index
    %c0_47 = arith.constant 0 : index
    %49 = vector.load %arg7[%c0_46, %c0_47] : memref<1x256xf32, #tpu.memory_space<vmem>>, vector<1x256xf32>
    %50 = vector.broadcast %49 : vector<1x256xf32> to vector<16x256xf32>
    %51 = arith.mulf %48, %50 : vector<16x256xf32>
    %c0_48 = arith.constant 0 : index
    %c0_49 = arith.constant 0 : index
    %52 = vector.load %arg8[%c0_48, %c0_49] : memref<1x256xf32, #tpu.memory_space<vmem>>, vector<1x256xf32>
    %53 = vector.broadcast %52 : vector<1x256xf32> to vector<16x256xf32>
    %54 = arith.addf %51, %53 : vector<16x256xf32>
    %c0_50 = arith.constant 0 : index
    %c0_51 = arith.constant 0 : index
    %c0_52 = arith.constant 0 : index
    %55 = vector.load %arg2[%c0_50, %c0_51, %c0_52] : memref<1x16x256xbf16, #tpu.memory_space<vmem>>, vector<1x16x256xbf16>
    %56 = vector.shape_cast %55 : vector<1x16x256xbf16> to vector<16x256xbf16>
    %57 = arith.extf %56 : vector<16x256xbf16> to vector<16x256xf32>
    %58 = arith.addf %54, %57 : vector<16x256xf32>
    %cst_53 = arith.constant 0.000000e+00 : f32
    %59 = vector.broadcast %cst_53 : f32 to vector<16x256xf32>
    %60 = arith.maximumf %58, %59 : vector<16x256xf32>
    %61 = arith.truncf %60 : vector<16x256xf32> to vector<16x256xbf16>
    %c0_54 = arith.constant 0 : index
    %c0_55 = arith.constant 0 : index
    %c0_56 = arith.constant 0 : index
    %62 = vector.load %arg9[%c0_54, %c0_55, %c0_56] : memref<1x16x256xbf16, #tpu.memory_space<vmem>>, vector<1x16x256xbf16>
    %63 = vector.shape_cast %62 : vector<1x16x256xbf16> to vector<16x256xbf16>
    %64 = vector.shape_cast %61 : vector<16x256xbf16> to vector<1x16x256xbf16>
    tpu.vector_store %arg9[%c0_54, %c0_55, %c0_56], %64 {strides = array<i32>} : memref<1x16x256xbf16, #tpu.memory_space<vmem>>, vector<1x16x256xbf16>,
    return
  }
  func.func @transform_0(%arg0: i32) -> (i32, i32, i32) {
    %c0_i32 = arith.constant 0 : i32
    %c0_i32_0 = arith.constant 0 : i32
    %c0_i32_1 = arith.constant 0 : i32
    return %arg0, %c0_i32, %c0_i32_0 : i32, i32, i32
  }
  func.func @transform_1(%arg0: i32) -> (i32, i32, i32) {
    %c0_i32 = arith.constant 0 : i32
    %c0_i32_0 = arith.constant 0 : i32
    %c0_i32_1 = arith.constant 0 : i32
    return %arg0, %c0_i32, %c0_i32_0 : i32, i32, i32
  }
  func.func @transform_2(%arg0: i32) -> (i32, i32, i32) {
    %c0_i32 = arith.constant 0 : i32
    %c0_i32_0 = arith.constant 0 : i32
    %c0_i32_1 = arith.constant 0 : i32
    %c0_i32_2 = arith.constant 0 : i32
    return %c0_i32, %c0_i32_0, %c0_i32_1 : i32, i32, i32
  }
  func.func @transform_3(%arg0: i32) -> (i32, i32) {
    %c0_i32 = arith.constant 0 : i32
    %c0_i32_0 = arith.constant 0 : i32
    %c0_i32_1 = arith.constant 0 : i32
    return %c0_i32, %c0_i32_0 : i32, i32
  }
  func.func @transform_4(%arg0: i32) -> (i32, i32) {
    %c0_i32 = arith.constant 0 : i32
    %c0_i32_0 = arith.constant 0 : i32
    %c0_i32_1 = arith.constant 0 : i32
    return %c0_i32, %c0_i32_0 : i32, i32
  }
  func.func @transform_5(%arg0: i32) -> (i32, i32, i32) {
    %c0_i32 = arith.constant 0 : i32
    %c0_i32_0 = arith.constant 0 : i32
    %c0_i32_1 = arith.constant 0 : i32
    %c0_i32_2 = arith.constant 0 : i32
    return %c0_i32, %c0_i32_0, %c0_i32_1 : i32, i32, i32
  }
  func.func @transform_6(%arg0: i32) -> (i32, i32) {
    %c0_i32 = arith.constant 0 : i32
    %c0_i32_0 = arith.constant 0 : i32
    %c0_i32_1 = arith.constant 0 : i32
    return %c0_i32, %c0_i32_0 : i32, i32
  }
  func.func @transform_7(%arg0: i32) -> (i32, i32) {
    %c0_i32 = arith.constant 0 : i32
    %c0_i32_0 = arith.constant 0 : i32
    %c0_i32_1 = arith.constant 0 : i32
    return %c0_i32, %c0_i32_0 : i32, i32
  }
  func.func @transform_8(%arg0: i32) -> (i32, i32, i32) {
    %c0_i32 = arith.constant 0 : i32
    %c0_i32_0 = arith.constant 0 : i32
    %c0_i32_1 = arith.constant 0 : i32
    return %arg0, %c0_i32, %c0_i32_0 : i32, i32, i32
  }
}

module attributes {stable_mosaic.version = 11 : i64} {
  func.func @_block_kernel(%arg0: i32, %arg1: memref<1x2x9x288xbf16, #tpu.memory_space<vmem>>, %arg2: memref<1x8x256xbf16, #tpu.memory_space<vmem>>, %arg3: memref<3x288x256xbf16, #tpu.memory_space<vmem>>, %arg4: memref<1x256xf32, #tpu.memory_space<vmem>>, %arg5: memref<1x256xf32, #tpu.memory_space<vmem>>, %arg6: memref<3x320x256xbf16, #tpu.memory_space<vmem>>, %arg7: memref<1x256xf32, #tpu.memory_space<vmem>>, %arg8: memref<1x256xf32, #tpu.memory_space<vmem>>, %arg9: memref<1x8x256xbf16, #tpu.memory_space<vmem>>, %arg10: memref<10x320xf32, #tpu.memory_space<vmem>>) attributes {dimension_semantics = [#tpu.dimension_semantics<parallel>], iteration_bounds = array<i64: 2>, scalar_prefetch = 0 : i64, scratch_operands = 1 : i64, tpu.core_type = #tpu.core_type<tc>, window_params = [{transform_indices = @transform_0, window_bounds = array<i64: 1, 2, 9, 288>}, {transform_indices = @transform_1, window_bounds = array<i64: 1, 8, 256>}, {pipeline_mode = #tpu.pipeline_mode<synchronous>, transform_indices = @transform_2, window_bounds = array<i64: 3, 288, 256>}, {pipeline_mode = #tpu.pipeline_mode<synchronous>, transform_indices = @transform_3, window_bounds = array<i64: 1, 256>}, {pipeline_mode = #tpu.pipeline_mode<synchronous>, transform_indices = @transform_4, window_bounds = array<i64: 1, 256>}, {pipeline_mode = #tpu.pipeline_mode<synchronous>, transform_indices = @transform_5, window_bounds = array<i64: 3, 320, 256>}, {pipeline_mode = #tpu.pipeline_mode<synchronous>, transform_indices = @transform_6, window_bounds = array<i64: 1, 256>}, {pipeline_mode = #tpu.pipeline_mode<synchronous>, transform_indices = @transform_7, window_bounds = array<i64: 1, 256>}, {transform_indices = @transform_8, window_bounds = array<i64: 1, 8, 256>}]} {
    %cst = arith.constant 0.000000e+00 : f32
    %0 = vector.broadcast %cst : f32 to vector<8x256xf32>
    %c0 = arith.constant 0 : index
    %c0_0 = arith.constant 0 : index
    %c0_1 = arith.constant 0 : index
    %c0_2 = arith.constant 0 : index
    %1 = vector.load %arg1[%c0, %c0_0, %c0_1, %c0_2] : memref<1x2x9x288xbf16, #tpu.memory_space<vmem>>, vector<1x1x8x288xbf16>
    %2 = vector.shape_cast %1 : vector<1x1x8x288xbf16> to vector<8x288xbf16>
    %c0_3 = arith.constant 0 : index
    %c0_4 = arith.constant 0 : index
    %c0_5 = arith.constant 0 : index
    %3 = vector.load %arg3[%c0_3, %c0_4, %c0_5] : memref<3x288x256xbf16, #tpu.memory_space<vmem>>, vector<1x288x256xbf16>
    %4 = vector.shape_cast %3 : vector<1x288x256xbf16> to vector<288x256xbf16>
    %cst_6 = arith.constant dense<0.000000e+00> : vector<8x256xf32>
    %5 = tpu.matmul %2, %4, %cst_6 {dimension_numbers = #tpu.dot_dimension_numbers<[1], [0], [0], [1], [0, 0, 1, 1], [], []>} : vector<8x288xbf16>, vector<288x256xbf16>, vector<8x256xf32> -> vector<8x256xf32>
    %6 = arith.addf %0, %5 : vector<8x256xf32>
    %c0_7 = arith.constant 0 : index
    %c1 = arith.constant 1 : index
    %c0_8 = arith.constant 0 : index
    %c0_9 = arith.constant 0 : index
    %7 = vector.load %arg1[%c0_7, %c1, %c0_8, %c0_9] : memref<1x2x9x288xbf16, #tpu.memory_space<vmem>>, vector<1x1x8x288xbf16>
    %8 = vector.shape_cast %7 : vector<1x1x8x288xbf16> to vector<8x288xbf16>
    %c1_10 = arith.constant 1 : index
    %c0_11 = arith.constant 0 : index
    %c0_12 = arith.constant 0 : index
    %9 = vector.load %arg3[%c1_10, %c0_11, %c0_12] : memref<3x288x256xbf16, #tpu.memory_space<vmem>>, vector<1x288x256xbf16>
    %10 = vector.shape_cast %9 : vector<1x288x256xbf16> to vector<288x256xbf16>
    %cst_13 = arith.constant dense<0.000000e+00> : vector<8x256xf32>
    %11 = tpu.matmul %8, %10, %cst_13 {dimension_numbers = #tpu.dot_dimension_numbers<[1], [0], [0], [1], [0, 0, 1, 1], [], []>} : vector<8x288xbf16>, vector<288x256xbf16>, vector<8x256xf32> -> vector<8x256xf32>
    %12 = arith.addf %6, %11 : vector<8x256xf32>
    %c0_14 = arith.constant 0 : index
    %c0_15 = arith.constant 0 : index
    %c1_16 = arith.constant 1 : index
    %c0_17 = arith.constant 0 : index
    %13 = vector.load %arg1[%c0_14, %c0_15, %c1_16, %c0_17] : memref<1x2x9x288xbf16, #tpu.memory_space<vmem>>, vector<1x1x8x288xbf16>
    %14 = vector.shape_cast %13 : vector<1x1x8x288xbf16> to vector<8x288xbf16>
    %c2 = arith.constant 2 : index
    %c0_18 = arith.constant 0 : index
    %c0_19 = arith.constant 0 : index
    %15 = vector.load %arg3[%c2, %c0_18, %c0_19] : memref<3x288x256xbf16, #tpu.memory_space<vmem>>, vector<1x288x256xbf16>
    %16 = vector.shape_cast %15 : vector<1x288x256xbf16> to vector<288x256xbf16>
    %cst_20 = arith.constant dense<0.000000e+00> : vector<8x256xf32>
    %17 = tpu.matmul %14, %16, %cst_20 {dimension_numbers = #tpu.dot_dimension_numbers<[1], [0], [0], [1], [0, 0, 1, 1], [], []>} : vector<8x288xbf16>, vector<288x256xbf16>, vector<8x256xf32> -> vector<8x256xf32>
    %18 = arith.addf %12, %17 : vector<8x256xf32>
    %c0_21 = arith.constant 0 : index
    %c0_22 = arith.constant 0 : index
    %19 = vector.load %arg4[%c0_21, %c0_22] : memref<1x256xf32, #tpu.memory_space<vmem>>, vector<1x256xf32>
    %20 = vector.broadcast %19 : vector<1x256xf32> to vector<8x256xf32>
    %21 = arith.mulf %18, %20 : vector<8x256xf32>
    %c0_23 = arith.constant 0 : index
    %c0_24 = arith.constant 0 : index
    %22 = vector.load %arg5[%c0_23, %c0_24] : memref<1x256xf32, #tpu.memory_space<vmem>>, vector<1x256xf32>
    %23 = vector.broadcast %22 : vector<1x256xf32> to vector<8x256xf32>
    %24 = arith.addf %21, %23 : vector<8x256xf32>
    %cst_25 = arith.constant 0.000000e+00 : f32
    %25 = vector.broadcast %cst_25 : f32 to vector<8x256xf32>
    %26 = arith.maximumf %24, %25 : vector<8x256xf32>
    %cst_26 = arith.constant 0.000000e+00 : f32
    %27 = vector.broadcast %cst_26 : f32 to vector<10x320xf32>
    %c0_27 = arith.constant 0 : index
    %c0_28 = arith.constant 0 : index
    %28 = vector.load %arg10[%c0_27, %c0_28] : memref<10x320xf32, #tpu.memory_space<vmem>>, vector<10x320xf32>
    tpu.vector_store %arg10[%c0_27, %c0_28], %27 {strides = array<i32>} : memref<10x320xf32, #tpu.memory_space<vmem>>, vector<10x320xf32>,
    %c1_29 = arith.constant 1 : index
    %c32 = arith.constant 32 : index
    %29 = vector.load %arg10[%c1_29, %c32] : memref<10x320xf32, #tpu.memory_space<vmem>>, vector<8x256xf32>
    tpu.vector_store %arg10[%c1_29, %c32], %26 {strides = array<i32>} : memref<10x320xf32, #tpu.memory_space<vmem>>, vector<8x256xf32>,
    %cst_30 = arith.constant 0.000000e+00 : f32
    %30 = vector.broadcast %cst_30 : f32 to vector<8x256xf32>
    %c0_31 = arith.constant 0 : index
    %c0_32 = arith.constant 0 : index
    %31 = vector.load %arg10[%c0_31, %c0_32] : memref<10x320xf32, #tpu.memory_space<vmem>>, vector<8x320xf32>
    %32 = arith.truncf %31 : vector<8x320xf32> to vector<8x320xbf16>
    %c0_33 = arith.constant 0 : index
    %c0_34 = arith.constant 0 : index
    %c0_35 = arith.constant 0 : index
    %33 = vector.load %arg6[%c0_33, %c0_34, %c0_35] : memref<3x320x256xbf16, #tpu.memory_space<vmem>>, vector<1x320x256xbf16>
    %34 = vector.shape_cast %33 : vector<1x320x256xbf16> to vector<320x256xbf16>
    %cst_36 = arith.constant dense<0.000000e+00> : vector<8x256xf32>
    %35 = tpu.matmul %32, %34, %cst_36 {dimension_numbers = #tpu.dot_dimension_numbers<[1], [0], [0], [1], [0, 0, 1, 1], [], []>} : vector<8x320xbf16>, vector<320x256xbf16>, vector<8x256xf32> -> vector<8x256xf32>
    %36 = arith.addf %30, %35 : vector<8x256xf32>
    %c1_37 = arith.constant 1 : index
    %c0_38 = arith.constant 0 : index
    %37 = vector.load %arg10[%c1_37, %c0_38] : memref<10x320xf32, #tpu.memory_space<vmem>>, vector<8x320xf32>
    %38 = arith.truncf %37 : vector<8x320xf32> to vector<8x320xbf16>
    %c1_39 = arith.constant 1 : index
    %c0_40 = arith.constant 0 : index
    %c0_41 = arith.constant 0 : index
    %39 = vector.load %arg6[%c1_39, %c0_40, %c0_41] : memref<3x320x256xbf16, #tpu.memory_space<vmem>>, vector<1x320x256xbf16>
    %40 = vector.shape_cast %39 : vector<1x320x256xbf16> to vector<320x256xbf16>
    %cst_42 = arith.constant dense<0.000000e+00> : vector<8x256xf32>
    %41 = tpu.matmul %38, %40, %cst_42 {dimension_numbers = #tpu.dot_dimension_numbers<[1], [0], [0], [1], [0, 0, 1, 1], [], []>} : vector<8x320xbf16>, vector<320x256xbf16>, vector<8x256xf32> -> vector<8x256xf32>
    %42 = arith.addf %36, %41 : vector<8x256xf32>
    %c2_43 = arith.constant 2 : index
    %c0_44 = arith.constant 0 : index
    %43 = vector.load %arg10[%c2_43, %c0_44] : memref<10x320xf32, #tpu.memory_space<vmem>>, vector<8x320xf32>
    %44 = arith.truncf %43 : vector<8x320xf32> to vector<8x320xbf16>
    %c2_45 = arith.constant 2 : index
    %c0_46 = arith.constant 0 : index
    %c0_47 = arith.constant 0 : index
    %45 = vector.load %arg6[%c2_45, %c0_46, %c0_47] : memref<3x320x256xbf16, #tpu.memory_space<vmem>>, vector<1x320x256xbf16>
    %46 = vector.shape_cast %45 : vector<1x320x256xbf16> to vector<320x256xbf16>
    %cst_48 = arith.constant dense<0.000000e+00> : vector<8x256xf32>
    %47 = tpu.matmul %44, %46, %cst_48 {dimension_numbers = #tpu.dot_dimension_numbers<[1], [0], [0], [1], [0, 0, 1, 1], [], []>} : vector<8x320xbf16>, vector<320x256xbf16>, vector<8x256xf32> -> vector<8x256xf32>
    %48 = arith.addf %42, %47 : vector<8x256xf32>
    %c0_49 = arith.constant 0 : index
    %c0_50 = arith.constant 0 : index
    %49 = vector.load %arg7[%c0_49, %c0_50] : memref<1x256xf32, #tpu.memory_space<vmem>>, vector<1x256xf32>
    %50 = vector.broadcast %49 : vector<1x256xf32> to vector<8x256xf32>
    %51 = arith.mulf %48, %50 : vector<8x256xf32>
    %c0_51 = arith.constant 0 : index
    %c0_52 = arith.constant 0 : index
    %52 = vector.load %arg8[%c0_51, %c0_52] : memref<1x256xf32, #tpu.memory_space<vmem>>, vector<1x256xf32>
    %53 = vector.broadcast %52 : vector<1x256xf32> to vector<8x256xf32>
    %54 = arith.addf %51, %53 : vector<8x256xf32>
    %c0_53 = arith.constant 0 : index
    %c0_54 = arith.constant 0 : index
    %c0_55 = arith.constant 0 : index
    %55 = vector.load %arg2[%c0_53, %c0_54, %c0_55] : memref<1x8x256xbf16, #tpu.memory_space<vmem>>, vector<1x8x256xbf16>
    %56 = vector.shape_cast %55 : vector<1x8x256xbf16> to vector<8x256xbf16>
    %57 = arith.extf %56 : vector<8x256xbf16> to vector<8x256xf32>
    %58 = arith.addf %54, %57 : vector<8x256xf32>
    %cst_56 = arith.constant 0.000000e+00 : f32
    %59 = vector.broadcast %cst_56 : f32 to vector<8x256xf32>
    %60 = arith.maximumf %58, %59 : vector<8x256xf32>
    %61 = arith.truncf %60 : vector<8x256xf32> to vector<8x256xbf16>
    %c0_57 = arith.constant 0 : index
    %c0_58 = arith.constant 0 : index
    %c0_59 = arith.constant 0 : index
    %62 = vector.load %arg9[%c0_57, %c0_58, %c0_59] : memref<1x8x256xbf16, #tpu.memory_space<vmem>>, vector<1x8x256xbf16>
    %63 = vector.shape_cast %62 : vector<1x8x256xbf16> to vector<8x256xbf16>
    %64 = vector.shape_cast %61 : vector<8x256xbf16> to vector<1x8x256xbf16>
    tpu.vector_store %arg9[%c0_57, %c0_58, %c0_59], %64 {strides = array<i32>} : memref<1x8x256xbf16, #tpu.memory_space<vmem>>, vector<1x8x256xbf16>,
    return
  }
  func.func @transform_0(%arg0: i32) -> (i32, i32, i32, i32) {
    %c0_i32 = arith.constant 0 : i32
    %c0_i32_0 = arith.constant 0 : i32
    %c0_i32_1 = arith.constant 0 : i32
    %c0_i32_2 = arith.constant 0 : i32
    return %arg0, %c0_i32, %c0_i32_0, %c0_i32_1 : i32, i32, i32, i32
  }
  func.func @transform_1(%arg0: i32) -> (i32, i32, i32) {
    %c0_i32 = arith.constant 0 : i32
    %c0_i32_0 = arith.constant 0 : i32
    %c0_i32_1 = arith.constant 0 : i32
    return %arg0, %c0_i32, %c0_i32_0 : i32, i32, i32
  }
  func.func @transform_2(%arg0: i32) -> (i32, i32, i32) {
    %c0_i32 = arith.constant 0 : i32
    %c0_i32_0 = arith.constant 0 : i32
    %c0_i32_1 = arith.constant 0 : i32
    %c0_i32_2 = arith.constant 0 : i32
    return %c0_i32, %c0_i32_0, %c0_i32_1 : i32, i32, i32
  }
  func.func @transform_3(%arg0: i32) -> (i32, i32) {
    %c0_i32 = arith.constant 0 : i32
    %c0_i32_0 = arith.constant 0 : i32
    %c0_i32_1 = arith.constant 0 : i32
    return %c0_i32, %c0_i32_0 : i32, i32
  }
  func.func @transform_4(%arg0: i32) -> (i32, i32) {
    %c0_i32 = arith.constant 0 : i32
    %c0_i32_0 = arith.constant 0 : i32
    %c0_i32_1 = arith.constant 0 : i32
    return %c0_i32, %c0_i32_0 : i32, i32
  }
  func.func @transform_5(%arg0: i32) -> (i32, i32, i32) {
    %c0_i32 = arith.constant 0 : i32
    %c0_i32_0 = arith.constant 0 : i32
    %c0_i32_1 = arith.constant 0 : i32
    %c0_i32_2 = arith.constant 0 : i32
    return %c0_i32, %c0_i32_0, %c0_i32_1 : i32, i32, i32
  }
  func.func @transform_6(%arg0: i32) -> (i32, i32) {
    %c0_i32 = arith.constant 0 : i32
    %c0_i32_0 = arith.constant 0 : i32
    %c0_i32_1 = arith.constant 0 : i32
    return %c0_i32, %c0_i32_0 : i32, i32
  }
  func.func @transform_7(%arg0: i32) -> (i32, i32) {
    %c0_i32 = arith.constant 0 : i32
    %c0_i32_0 = arith.constant 0 : i32
    %c0_i32_1 = arith.constant 0 : i32
    return %c0_i32, %c0_i32_0 : i32, i32
  }
  func.func @transform_8(%arg0: i32) -> (i32, i32, i32) {
    %c0_i32 = arith.constant 0 : i32
    %c0_i32_0 = arith.constant 0 : i32
    %c0_i32_1 = arith.constant 0 : i32
    return %arg0, %c0_i32, %c0_i32_0 : i32, i32, i32
  }
}

module attributes {stable_mosaic.version = 11 : i64} {
  func.func @_block_kernel(%arg0: i32, %arg1: memref<1x2x5x320xbf16, #tpu.memory_space<vmem>>, %arg2: memref<1x4x256xbf16, #tpu.memory_space<vmem>>, %arg3: memref<3x320x256xbf16, #tpu.memory_space<vmem>>, %arg4: memref<1x256xf32, #tpu.memory_space<vmem>>, %arg5: memref<1x256xf32, #tpu.memory_space<vmem>>, %arg6: memref<3x384x256xbf16, #tpu.memory_space<vmem>>, %arg7: memref<1x256xf32, #tpu.memory_space<vmem>>, %arg8: memref<1x256xf32, #tpu.memory_space<vmem>>, %arg9: memref<1x4x256xbf16, #tpu.memory_space<vmem>>, %arg10: memref<6x384xf32, #tpu.memory_space<vmem>>) attributes {dimension_semantics = [#tpu.dimension_semantics<parallel>], iteration_bounds = array<i64: 2>, scalar_prefetch = 0 : i64, scratch_operands = 1 : i64, tpu.core_type = #tpu.core_type<tc>, window_params = [{transform_indices = @transform_0, window_bounds = array<i64: 1, 2, 5, 320>}, {transform_indices = @transform_1, window_bounds = array<i64: 1, 4, 256>}, {pipeline_mode = #tpu.pipeline_mode<synchronous>, transform_indices = @transform_2, window_bounds = array<i64: 3, 320, 256>}, {pipeline_mode = #tpu.pipeline_mode<synchronous>, transform_indices = @transform_3, window_bounds = array<i64: 1, 256>}, {pipeline_mode = #tpu.pipeline_mode<synchronous>, transform_indices = @transform_4, window_bounds = array<i64: 1, 256>}, {pipeline_mode = #tpu.pipeline_mode<synchronous>, transform_indices = @transform_5, window_bounds = array<i64: 3, 384, 256>}, {pipeline_mode = #tpu.pipeline_mode<synchronous>, transform_indices = @transform_6, window_bounds = array<i64: 1, 256>}, {pipeline_mode = #tpu.pipeline_mode<synchronous>, transform_indices = @transform_7, window_bounds = array<i64: 1, 256>}, {transform_indices = @transform_8, window_bounds = array<i64: 1, 4, 256>}]} {
    %cst = arith.constant 0.000000e+00 : f32
    %0 = vector.broadcast %cst : f32 to vector<4x256xf32>
    %c0 = arith.constant 0 : index
    %c0_0 = arith.constant 0 : index
    %c0_1 = arith.constant 0 : index
    %c0_2 = arith.constant 0 : index
    %1 = vector.load %arg1[%c0, %c0_0, %c0_1, %c0_2] : memref<1x2x5x320xbf16, #tpu.memory_space<vmem>>, vector<1x1x4x320xbf16>
    %2 = vector.shape_cast %1 : vector<1x1x4x320xbf16> to vector<4x320xbf16>
    %c0_3 = arith.constant 0 : index
    %c0_4 = arith.constant 0 : index
    %c0_5 = arith.constant 0 : index
    %3 = vector.load %arg3[%c0_3, %c0_4, %c0_5] : memref<3x320x256xbf16, #tpu.memory_space<vmem>>, vector<1x320x256xbf16>
    %4 = vector.shape_cast %3 : vector<1x320x256xbf16> to vector<320x256xbf16>
    %cst_6 = arith.constant dense<0.000000e+00> : vector<4x256xf32>
    %5 = tpu.matmul %2, %4, %cst_6 {dimension_numbers = #tpu.dot_dimension_numbers<[1], [0], [0], [1], [0, 0, 1, 1], [], []>} : vector<4x320xbf16>, vector<320x256xbf16>, vector<4x256xf32> -> vector<4x256xf32>
    %6 = arith.addf %0, %5 : vector<4x256xf32>
    %c0_7 = arith.constant 0 : index
    %c1 = arith.constant 1 : index
    %c0_8 = arith.constant 0 : index
    %c0_9 = arith.constant 0 : index
    %7 = vector.load %arg1[%c0_7, %c1, %c0_8, %c0_9] : memref<1x2x5x320xbf16, #tpu.memory_space<vmem>>, vector<1x1x4x320xbf16>
    %8 = vector.shape_cast %7 : vector<1x1x4x320xbf16> to vector<4x320xbf16>
    %c1_10 = arith.constant 1 : index
    %c0_11 = arith.constant 0 : index
    %c0_12 = arith.constant 0 : index
    %9 = vector.load %arg3[%c1_10, %c0_11, %c0_12] : memref<3x320x256xbf16, #tpu.memory_space<vmem>>, vector<1x320x256xbf16>
    %10 = vector.shape_cast %9 : vector<1x320x256xbf16> to vector<320x256xbf16>
    %cst_13 = arith.constant dense<0.000000e+00> : vector<4x256xf32>
    %11 = tpu.matmul %8, %10, %cst_13 {dimension_numbers = #tpu.dot_dimension_numbers<[1], [0], [0], [1], [0, 0, 1, 1], [], []>} : vector<4x320xbf16>, vector<320x256xbf16>, vector<4x256xf32> -> vector<4x256xf32>
    %12 = arith.addf %6, %11 : vector<4x256xf32>
    %c0_14 = arith.constant 0 : index
    %c0_15 = arith.constant 0 : index
    %c1_16 = arith.constant 1 : index
    %c0_17 = arith.constant 0 : index
    %13 = vector.load %arg1[%c0_14, %c0_15, %c1_16, %c0_17] : memref<1x2x5x320xbf16, #tpu.memory_space<vmem>>, vector<1x1x4x320xbf16>
    %14 = vector.shape_cast %13 : vector<1x1x4x320xbf16> to vector<4x320xbf16>
    %c2 = arith.constant 2 : index
    %c0_18 = arith.constant 0 : index
    %c0_19 = arith.constant 0 : index
    %15 = vector.load %arg3[%c2, %c0_18, %c0_19] : memref<3x320x256xbf16, #tpu.memory_space<vmem>>, vector<1x320x256xbf16>
    %16 = vector.shape_cast %15 : vector<1x320x256xbf16> to vector<320x256xbf16>
    %cst_20 = arith.constant dense<0.000000e+00> : vector<4x256xf32>
    %17 = tpu.matmul %14, %16, %cst_20 {dimension_numbers = #tpu.dot_dimension_numbers<[1], [0], [0], [1], [0, 0, 1, 1], [], []>} : vector<4x320xbf16>, vector<320x256xbf16>, vector<4x256xf32> -> vector<4x256xf32>
    %18 = arith.addf %12, %17 : vector<4x256xf32>
    %c0_21 = arith.constant 0 : index
    %c0_22 = arith.constant 0 : index
    %19 = vector.load %arg4[%c0_21, %c0_22] : memref<1x256xf32, #tpu.memory_space<vmem>>, vector<1x256xf32>
    %20 = vector.broadcast %19 : vector<1x256xf32> to vector<4x256xf32>
    %21 = arith.mulf %18, %20 : vector<4x256xf32>
    %c0_23 = arith.constant 0 : index
    %c0_24 = arith.constant 0 : index
    %22 = vector.load %arg5[%c0_23, %c0_24] : memref<1x256xf32, #tpu.memory_space<vmem>>, vector<1x256xf32>
    %23 = vector.broadcast %22 : vector<1x256xf32> to vector<4x256xf32>
    %24 = arith.addf %21, %23 : vector<4x256xf32>
    %cst_25 = arith.constant 0.000000e+00 : f32
    %25 = vector.broadcast %cst_25 : f32 to vector<4x256xf32>
    %26 = arith.maximumf %24, %25 : vector<4x256xf32>
    %cst_26 = arith.constant 0.000000e+00 : f32
    %27 = vector.broadcast %cst_26 : f32 to vector<6x384xf32>
    %c0_27 = arith.constant 0 : index
    %c0_28 = arith.constant 0 : index
    %28 = vector.load %arg10[%c0_27, %c0_28] : memref<6x384xf32, #tpu.memory_space<vmem>>, vector<6x384xf32>
    tpu.vector_store %arg10[%c0_27, %c0_28], %27 {strides = array<i32>} : memref<6x384xf32, #tpu.memory_space<vmem>>, vector<6x384xf32>,
    %c1_29 = arith.constant 1 : index
    %c64 = arith.constant 64 : index
    %29 = vector.load %arg10[%c1_29, %c64] : memref<6x384xf32, #tpu.memory_space<vmem>>, vector<4x256xf32>
    tpu.vector_store %arg10[%c1_29, %c64], %26 {strides = array<i32>} : memref<6x384xf32, #tpu.memory_space<vmem>>, vector<4x256xf32>,
    %cst_30 = arith.constant 0.000000e+00 : f32
    %30 = vector.broadcast %cst_30 : f32 to vector<4x256xf32>
    %c0_31 = arith.constant 0 : index
    %c0_32 = arith.constant 0 : index
    %31 = vector.load %arg10[%c0_31, %c0_32] : memref<6x384xf32, #tpu.memory_space<vmem>>, vector<4x384xf32>
    %32 = arith.truncf %31 : vector<4x384xf32> to vector<4x384xbf16>
    %c0_33 = arith.constant 0 : index
    %c0_34 = arith.constant 0 : index
    %c0_35 = arith.constant 0 : index
    %33 = vector.load %arg6[%c0_33, %c0_34, %c0_35] : memref<3x384x256xbf16, #tpu.memory_space<vmem>>, vector<1x384x256xbf16>
    %34 = vector.shape_cast %33 : vector<1x384x256xbf16> to vector<384x256xbf16>
    %cst_36 = arith.constant dense<0.000000e+00> : vector<4x256xf32>
    %35 = tpu.matmul %32, %34, %cst_36 {dimension_numbers = #tpu.dot_dimension_numbers<[1], [0], [0], [1], [0, 0, 1, 1], [], []>} : vector<4x384xbf16>, vector<384x256xbf16>, vector<4x256xf32> -> vector<4x256xf32>
    %36 = arith.addf %30, %35 : vector<4x256xf32>
    %c1_37 = arith.constant 1 : index
    %c0_38 = arith.constant 0 : index
    %37 = vector.load %arg10[%c1_37, %c0_38] : memref<6x384xf32, #tpu.memory_space<vmem>>, vector<4x384xf32>
    %38 = arith.truncf %37 : vector<4x384xf32> to vector<4x384xbf16>
    %c1_39 = arith.constant 1 : index
    %c0_40 = arith.constant 0 : index
    %c0_41 = arith.constant 0 : index
    %39 = vector.load %arg6[%c1_39, %c0_40, %c0_41] : memref<3x384x256xbf16, #tpu.memory_space<vmem>>, vector<1x384x256xbf16>
    %40 = vector.shape_cast %39 : vector<1x384x256xbf16> to vector<384x256xbf16>
    %cst_42 = arith.constant dense<0.000000e+00> : vector<4x256xf32>
    %41 = tpu.matmul %38, %40, %cst_42 {dimension_numbers = #tpu.dot_dimension_numbers<[1], [0], [0], [1], [0, 0, 1, 1], [], []>} : vector<4x384xbf16>, vector<384x256xbf16>, vector<4x256xf32> -> vector<4x256xf32>
    %42 = arith.addf %36, %41 : vector<4x256xf32>
    %c2_43 = arith.constant 2 : index
    %c0_44 = arith.constant 0 : index
    %43 = vector.load %arg10[%c2_43, %c0_44] : memref<6x384xf32, #tpu.memory_space<vmem>>, vector<4x384xf32>
    %44 = arith.truncf %43 : vector<4x384xf32> to vector<4x384xbf16>
    %c2_45 = arith.constant 2 : index
    %c0_46 = arith.constant 0 : index
    %c0_47 = arith.constant 0 : index
    %45 = vector.load %arg6[%c2_45, %c0_46, %c0_47] : memref<3x384x256xbf16, #tpu.memory_space<vmem>>, vector<1x384x256xbf16>
    %46 = vector.shape_cast %45 : vector<1x384x256xbf16> to vector<384x256xbf16>
    %cst_48 = arith.constant dense<0.000000e+00> : vector<4x256xf32>
    %47 = tpu.matmul %44, %46, %cst_48 {dimension_numbers = #tpu.dot_dimension_numbers<[1], [0], [0], [1], [0, 0, 1, 1], [], []>} : vector<4x384xbf16>, vector<384x256xbf16>, vector<4x256xf32> -> vector<4x256xf32>
    %48 = arith.addf %42, %47 : vector<4x256xf32>
    %c0_49 = arith.constant 0 : index
    %c0_50 = arith.constant 0 : index
    %49 = vector.load %arg7[%c0_49, %c0_50] : memref<1x256xf32, #tpu.memory_space<vmem>>, vector<1x256xf32>
    %50 = vector.broadcast %49 : vector<1x256xf32> to vector<4x256xf32>
    %51 = arith.mulf %48, %50 : vector<4x256xf32>
    %c0_51 = arith.constant 0 : index
    %c0_52 = arith.constant 0 : index
    %52 = vector.load %arg8[%c0_51, %c0_52] : memref<1x256xf32, #tpu.memory_space<vmem>>, vector<1x256xf32>
    %53 = vector.broadcast %52 : vector<1x256xf32> to vector<4x256xf32>
    %54 = arith.addf %51, %53 : vector<4x256xf32>
    %c0_53 = arith.constant 0 : index
    %c0_54 = arith.constant 0 : index
    %c0_55 = arith.constant 0 : index
    %55 = vector.load %arg2[%c0_53, %c0_54, %c0_55] : memref<1x4x256xbf16, #tpu.memory_space<vmem>>, vector<1x4x256xbf16>
    %56 = vector.shape_cast %55 : vector<1x4x256xbf16> to vector<4x256xbf16>
    %57 = arith.extf %56 : vector<4x256xbf16> to vector<4x256xf32>
    %58 = arith.addf %54, %57 : vector<4x256xf32>
    %cst_56 = arith.constant 0.000000e+00 : f32
    %59 = vector.broadcast %cst_56 : f32 to vector<4x256xf32>
    %60 = arith.maximumf %58, %59 : vector<4x256xf32>
    %61 = arith.truncf %60 : vector<4x256xf32> to vector<4x256xbf16>
    %c0_57 = arith.constant 0 : index
    %c0_58 = arith.constant 0 : index
    %c0_59 = arith.constant 0 : index
    %62 = vector.load %arg9[%c0_57, %c0_58, %c0_59] : memref<1x4x256xbf16, #tpu.memory_space<vmem>>, vector<1x4x256xbf16>
    %63 = vector.shape_cast %62 : vector<1x4x256xbf16> to vector<4x256xbf16>
    %64 = vector.shape_cast %61 : vector<4x256xbf16> to vector<1x4x256xbf16>
    tpu.vector_store %arg9[%c0_57, %c0_58, %c0_59], %64 {strides = array<i32>} : memref<1x4x256xbf16, #tpu.memory_space<vmem>>, vector<1x4x256xbf16>,
    return
  }
  func.func @transform_0(%arg0: i32) -> (i32, i32, i32, i32) {
    %c0_i32 = arith.constant 0 : i32
    %c0_i32_0 = arith.constant 0 : i32
    %c0_i32_1 = arith.constant 0 : i32
    %c0_i32_2 = arith.constant 0 : i32
    return %arg0, %c0_i32, %c0_i32_0, %c0_i32_1 : i32, i32, i32, i32
  }
  func.func @transform_1(%arg0: i32) -> (i32, i32, i32) {
    %c0_i32 = arith.constant 0 : i32
    %c0_i32_0 = arith.constant 0 : i32
    %c0_i32_1 = arith.constant 0 : i32
    return %arg0, %c0_i32, %c0_i32_0 : i32, i32, i32
  }
  func.func @transform_2(%arg0: i32) -> (i32, i32, i32) {
    %c0_i32 = arith.constant 0 : i32
    %c0_i32_0 = arith.constant 0 : i32
    %c0_i32_1 = arith.constant 0 : i32
    %c0_i32_2 = arith.constant 0 : i32
    return %c0_i32, %c0_i32_0, %c0_i32_1 : i32, i32, i32
  }
  func.func @transform_3(%arg0: i32) -> (i32, i32) {
    %c0_i32 = arith.constant 0 : i32
    %c0_i32_0 = arith.constant 0 : i32
    %c0_i32_1 = arith.constant 0 : i32
    return %c0_i32, %c0_i32_0 : i32, i32
  }
  func.func @transform_4(%arg0: i32) -> (i32, i32) {
    %c0_i32 = arith.constant 0 : i32
    %c0_i32_0 = arith.constant 0 : i32
    %c0_i32_1 = arith.constant 0 : i32
    return %c0_i32, %c0_i32_0 : i32, i32
  }
  func.func @transform_5(%arg0: i32) -> (i32, i32, i32) {
    %c0_i32 = arith.constant 0 : i32
    %c0_i32_0 = arith.constant 0 : i32
    %c0_i32_1 = arith.constant 0 : i32
    %c0_i32_2 = arith.constant 0 : i32
    return %c0_i32, %c0_i32_0, %c0_i32_1 : i32, i32, i32
  }
  func.func @transform_6(%arg0: i32) -> (i32, i32) {
    %c0_i32 = arith.constant 0 : i32
    %c0_i32_0 = arith.constant 0 : i32
    %c0_i32_1 = arith.constant 0 : i32
    return %c0_i32, %c0_i32_0 : i32, i32
  }
  func.func @transform_7(%arg0: i32) -> (i32, i32) {
    %c0_i32 = arith.constant 0 : i32
    %c0_i32_0 = arith.constant 0 : i32
    %c0_i32_1 = arith.constant 0 : i32
    return %c0_i32, %c0_i32_0 : i32, i32
  }
  func.func @transform_8(%arg0: i32) -> (i32, i32, i32) {
    %c0_i32 = arith.constant 0 : i32
    %c0_i32_0 = arith.constant 0 : i32
    %c0_i32_1 = arith.constant 0 : i32
    return %arg0, %c0_i32, %c0_i32_0 : i32, i32, i32
  }
}

module attributes {stable_mosaic.version = 11 : i64} {
  func.func @_head_kernel(%arg0: memref<2x4x256xbf16, #tpu.memory_space<vmem>>, %arg1: memref<256x10xf32, #tpu.memory_space<vmem>>, %arg2: memref<1x10xf32, #tpu.memory_space<vmem>>, %arg3: memref<2x10xf32, #tpu.memory_space<vmem>>) attributes {dimension_semantics = [], scalar_prefetch = 0 : i64, scratch_operands = 0 : i64, tpu.core_type = #tpu.core_type<tc>} {
    %c0 = arith.constant 0 : index
    %c0_0 = arith.constant 0 : index
    %c0_1 = arith.constant 0 : index
    %0 = vector.load %arg0[%c0, %c0_0, %c0_1] : memref<2x4x256xbf16, #tpu.memory_space<vmem>>, vector<1x4x256xbf16>
    %1 = vector.shape_cast %0 : vector<1x4x256xbf16> to vector<4x256xbf16>
    %2 = arith.extf %1 : vector<4x256xbf16> to vector<4x256xf32>
    %cst = arith.constant dense<0.000000e+00> : vector<256xf32>
    %3 = vector.multi_reduction <add>, %2, %cst [0] : vector<4x256xf32> to vector<256xf32>
    %4 = vector.shape_cast %3 : vector<256xf32> to vector<1x256xf32>
    %c1 = arith.constant 1 : index
    %c0_2 = arith.constant 0 : index
    %c0_3 = arith.constant 0 : index
    %5 = vector.load %arg0[%c1, %c0_2, %c0_3] : memref<2x4x256xbf16, #tpu.memory_space<vmem>>, vector<1x4x256xbf16>
    %6 = vector.shape_cast %5 : vector<1x4x256xbf16> to vector<4x256xbf16>
    %7 = arith.extf %6 : vector<4x256xbf16> to vector<4x256xf32>
    %cst_4 = arith.constant dense<0.000000e+00> : vector<256xf32>
    %8 = vector.multi_reduction <add>, %7, %cst_4 [0] : vector<4x256xf32> to vector<256xf32>
    %9 = vector.shape_cast %8 : vector<256xf32> to vector<1x256xf32>
    %10 = tpu.concatenate %4, %9 in 0 : vector<1x256xf32>, vector<1x256xf32> -> vector<2x256xf32>
    %c0_5 = arith.constant 0 : index
    %c0_6 = arith.constant 0 : index
    %11 = vector.load %arg1[%c0_5, %c0_6] : memref<256x10xf32, #tpu.memory_space<vmem>>, vector<256x10xf32>
    %cst_7 = arith.constant dense<0.000000e+00> : vector<2x10xf32>
    %12 = tpu.matmul %10, %11, %cst_7 {dimension_numbers = #tpu.dot_dimension_numbers<[1], [0], [0], [1], [0, 0, 1, 1], [], []>} : vector<2x256xf32>, vector<256x10xf32>, vector<2x10xf32> -> vector<2x10xf32>
    %c0_8 = arith.constant 0 : index
    %c0_9 = arith.constant 0 : index
    %13 = vector.load %arg2[%c0_8, %c0_9] : memref<1x10xf32, #tpu.memory_space<vmem>>, vector<1x10xf32>
    %14 = vector.broadcast %13 : vector<1x10xf32> to vector<2x10xf32>
    %15 = arith.addf %12, %14 : vector<2x10xf32>
    %c0_10 = arith.constant 0 : index
    %c0_11 = arith.constant 0 : index
    %16 = vector.load %arg3[%c0_10, %c0_11] : memref<2x10xf32, #tpu.memory_space<vmem>>, vector<2x10xf32>
    tpu.vector_store %arg3[%c0_10, %c0_11], %15 {strides = array<i32>} : memref<2x10xf32, #tpu.memory_space<vmem>>, vector<2x10xf32>,
    return
  }
}

</mosaic_0001>

<llo_original>
// kernel: _lambda_.5
$region0: #{_lambda_.5}
  #allocation0 [shape = 'u32[]', space=smem, size = 0x4, offset = 0x4, fixed_abs, tag = 'smem constant byte address 0x4 - core index']
  #allocation1 [shape = 'u32[144,128]{1,0:T(1,128)}', space=vmem, size = 0x12000, scoped, tag = 'internal scratch']
  %s0 = inlined_call_operand.vmem [shape: bf16[2,18,72], index: 0, kind: input, shape index: {}]
  %s1 = inlined_call_operand.vmem [shape: bf16[3,72,256], index: 1, kind: input, shape index: {}]
  %s2 = inlined_call_operand.vmem [shape: f32[1,256], index: 2, kind: input, shape index: {}]
  %s3 = inlined_call_operand.vmem [shape: f32[1,256], index: 3, kind: input, shape index: {}]
  %s4 = inlined_call_operand.vmem [shape: bf16[2,16,256], index: 4, kind: output, shape index: {}]
  %s5 = sld [smem:[#allocation0]]
  $region49: #{_lambda_.5} parent=0
    _
  %s7 = ssub.s32 1, %s5
  %s8 = scalar_select 0, %s7, %s5
  loop: start=0, step=1, limit=4
  $region2: #{_lambda_.5} parent=0 // loop_pre_header
    _
  $region3: #{_lambda_.5} parent=0 // loop_header
    %s10 = sphi 0, %s14
    %p11 = scmp.ge.s32.totalorder %s10, 4
    %s20 = sphi 0, %s22
    %s23 = sphi 0, %s20
    %s24 = sphi 0, %s23
    %s40 = sphi 0, %s24
    %s44 = sphi 0, %s44
    %s46 = sphi 0, %s44
    %s47 = sphi 0, %s46
    %s61 = sphi 0, %s47
    %s65 = sphi 0, %s65
    %s67 = sphi 0, %s65
    %s68 = sphi 0, %s67
    %s82 = sphi 0, %s68
    %s86 = sphi 0, %s86
    %s88 = sphi 0, %s86
    %s89 = sphi 0, %s88
    %s103 = sphi 0, %s89
    %s109 = sphi 0, %s111
    %s112 = sphi 0, %s109
    %s113 = sphi 0, %s112
    %s129 = sphi 0, %s113
  $region4: #{_lambda_.5} parent=0 // loop_header_branch
    %13 = sbr.rel (%p11) target = $region8
  $region5: #{_lambda_.5} parent=0 // loop_body
    %s15 = ssub.s32 %s10, 1
    %s16 = ssub.s32 %s10, 2
    %s17 = sadd.s32 %s10, 1
    %s18 = ssub.s32 %s10, %s17
    %p19 = scmp.eq.s32.totalorder %s18, 0
    %s21 = sadd.s32 %s20, 1
    %s22 = scalar_select %p19, %s20, %s21
    %p25 = pneg %p19
    %p26 = scmp.eq.s32.totalorder %s10, 1
    %p27 = por %p25, %p26
    %p28 = scmp.ne.s32.totalorder %s20, %s23
    %p29 = scmp.eq.s32.totalorder %s10, 0
    %p30 = por %p28, %p29
    %p31 = scmp.ne.s32.totalorder %s20, %s23
    %p32 = scmp.eq.s32.totalorder %s15, 1
    %p33 = por %p31, %p32
    %p34 = scmp.ne.s32.totalorder %s23, %s24
    %p35 = scmp.eq.s32.totalorder %s15, 0
    %p36 = por %p34, %p35
    %p37 = scmp.ne.s32.totalorder %s23, %s24
    %p38 = scmp.eq.s32.totalorder %s16, 1
    %p39 = por %p37, %p38
    %p41 = scmp.ne.s32.totalorder %s24, %s40
    %p42 = scmp.eq.s32.totalorder %s16, 0
    %p43 = por %p41, %p42
    %s45 = sadd.s32 %s44, 1
    %p48 = scmp.eq.s32.totalorder %s10, 1
    %p49 = scmp.ne.s32.totalorder %s44, %s46
    %p50 = scmp.eq.s32.totalorder %s10, 0
    %p51 = por %p49, %p50
    %p52 = scmp.ne.s32.totalorder %s44, %s46
    %p53 = scmp.eq.s32.totalorder %s15, 1
    %p54 = por %p52, %p53
    %p55 = scmp.ne.s32.totalorder %s46, %s47
    %p56 = scmp.eq.s32.totalorder %s15, 0
    %p57 = por %p55, %p56
    %p58 = scmp.ne.s32.totalorder %s46, %s47
    %p59 = scmp.eq.s32.totalorder %s16, 1
    %p60 = por %p58, %p59
    %p62 = scmp.ne.s32.totalorder %s47, %s61
    %p63 = scmp.eq.s32.totalorder %s16, 0
    %p64 = por %p62, %p63
    %s66 = sadd.s32 %s65, 1
    %p69 = scmp.eq.s32.totalorder %s10, 1
    %p70 = scmp.ne.s32.totalorder %s65, %s67
    %p71 = scmp.eq.s32.totalorder %s10, 0
    %p72 = por %p70, %p71
    %p73 = scmp.ne.s32.totalorder %s65, %s67
    %p74 = scmp.eq.s32.totalorder %s15, 1
    %p75 = por %p73, %p74
    %p76 = scmp.ne.s32.totalorder %s67, %s68
    %p77 = scmp.eq.s32.totalorder %s15, 0
    %p78 = por %p76, %p77
    %p79 = scmp.ne.s32.totalorder %s67, %s68
    %p80 = scmp.eq.s32.totalorder %s16, 1
    %p81 = por %p79, %p80
    %p83 = scmp.ne.s32.totalorder %s68, %s82
    %p84 = scmp.eq.s32.totalorder %s16, 0
    %p85 = por %p83, %p84
    %s87 = sadd.s32 %s86, 1
    %p90 = scmp.eq.s32.totalorder %s10, 1
    %p91 = scmp.ne.s32.totalorder %s86, %s88
    %p92 = scmp.eq.s32.totalorder %s10, 0
    %p93 = por %p91, %p92
    %p94 = scmp.ne.s32.totalorder %s86, %s88
    %p95 = scmp.eq.s32.totalorder %s15, 1
    %p96 = por %p94, %p95
    %p97 = scmp.ne.s32.totalorder %s88, %s89
    %p98 = scmp.eq.s32.totalorder %s15, 0
    %p99 = por %p97, %p98
    %p100 = scmp.ne.s32.totalorder %s88, %s89
    %p101 = scmp.eq.s32.totalorder %s16, 1
    %p102 = por %p100, %p101
    %p104 = scmp.ne.s32.totalorder %s89, %s103
    %p105 = scmp.eq.s32.totalorder %s16, 0
    %p106 = por %p104, %p105
    %s107 = ssub.s32 %s10, %s17
    %p108 = scmp.eq.s32.totalorder %s107, 0
    %s110 = sadd.s32 %s109, 1
    %s111 = scalar_select %p108, %s109, %s110
    %p114 = pneg %p108
    %p115 = scmp.eq.s32.totalorder %s10, 1
    %p116 = por %p114, %p115
    %p117 = scmp.ne.s32.totalorder %s109, %s112
    %p118 = scmp.eq.s32.totalorder %s10, 0
    %p119 = por %p117, %p118
    %p120 = scmp.ne.s32.totalorder %s109, %s112
    %p121 = scmp.eq.s32.totalorder %s15, 1
    %p122 = por %p120, %p121
    %p123 = scmp.ne.s32.totalorder %s112, %s113
    %p124 = scmp.eq.s32.totalorder %s15, 0
    %p125 = por %p123, %p124
    %p126 = scmp.ne.s32.totalorder %s112, %s113
    %p127 = scmp.eq.s32.totalorder %s16, 1
    %p128 = por %p126, %p127
    %p130 = scmp.ne.s32.totalorder %s113, %s129
    %p131 = scmp.eq.s32.totalorder %s16, 0
    %p132 = por %p130, %p131
    %p133 = scmp.le.s32.totalorder 1, %s10
    %p134 = scmp.lt.s32.totalorder %s10, 3
    %p135 = pnand %p133, %p134
    %p136 = pneg %p135
    // Predicated region
    $region9: #{_lambda_.5} parent=5 // pred_check
      _
    $region10: #{_lambda_.5} parent=5 // pred_check_branch
      %138 = sbr.rel (%p135) target = $region12
    $region11: #{_lambda_.5} parent=5 // pred_region
      %s139 = ssub.s32 %s10, 1
      // Predicated region
      $region13: #{_lambda_.5} parent=11 // pred_check
        %p140 = pneg %p57
      $region14: #{_lambda_.5} parent=11 // pred_check_branch
        %142 = sbr.rel (%p140) target = $region16
      $region15: #{_lambda_.5} parent=11 // pred_region
        _
      $region16: #{_lambda_.5} parent=11 // pred_fallthru
        _
      // Predicated region
      $region17: #{_lambda_.5} parent=11 // pred_check
        %p143 = pneg %p78
      $region18: #{_lambda_.5} parent=11 // pred_check_branch
        %145 = sbr.rel (%p143) target = $region20
      $region19: #{_lambda_.5} parent=11 // pred_region
        _
      $region20: #{_lambda_.5} parent=11 // pred_fallthru
        _
      // Predicated region
      $region21: #{_lambda_.5} parent=11 // pred_check
        %p146 = pneg %p99
      $region22: #{_lambda_.5} parent=11 // pred_check_branch
        %148 = sbr.rel (%p146) target = $region24
      $region23: #{_lambda_.5} parent=11 // pred_region
        _
      $region24: #{_lambda_.5} parent=11 // pred_fallthru
        _
    $region12: #{_lambda_.5} parent=5 // pred_fallthru
      _
    %p149 = scmp.lt.s32.totalorder %s10, 2
    // Predicated region
    $region25: #{_lambda_.5} parent=5 // pred_check
      %p150 = pneg %p149
    $region26: #{_lambda_.5} parent=5 // pred_check_branch
      %152 = sbr.rel (%p150) target = $region28
    $region27: #{_lambda_.5} parent=5 // pred_region
      // Predicated region
      $region29: #{_lambda_.5} parent=27 // pred_check
        %p153 = pneg %p30
      $region30: #{_lambda_.5} parent=27 // pred_check_branch
        %155 = sbr.rel (%p153) target = $region32
      $region31: #{_lambda_.5} parent=27 // pred_region
        %p156 = scmp.lt.s32.totalorder %s10, 1
        %s157 = scalar_select %p156, %s10, 1
        %s158 = smul.addr %s157, 3
        %s159 = smul.addr %s158, 4
        %s160 = scalar_lea.vmem %s0, %s159
      $region32: #{_lambda_.5} parent=27 // pred_fallthru
        _
    $region28: #{_lambda_.5} parent=5 // pred_fallthru
      _
    %p161 = scmp.le.s32.totalorder 1, %s10
    %p162 = scmp.lt.s32.totalorder %s10, 3
    %p163 = pnand %p161, %p162
    %p164 = pneg %p163
    // Predicated region
    $region33: #{_lambda_.5} parent=5 // pred_check
      _
    $region34: #{_lambda_.5} parent=5 // pred_check_branch
      %166 = sbr.rel (%p163) target = $region36
    $region35: #{_lambda_.5} parent=5 // pred_region
      %s167 = ssub.s32 %s10, 1
      %p168 = scmp.lt.s32.totalorder %s15, 1
      %s169 = scalar_select %p168, %s15, 1
      %s170 = smul.addr %s169, 3
      %s171 = smul.addr %s170, 4
      %s172 = scalar_lea.vmem %s0, %s171
      %p173 = pneg %p36
      %p174 = pneg %p33
      %p175 = pneg %p57
      %p176 = pneg %p54
      %p177 = pneg %p78
      %p178 = pneg %p75
      %p179 = pneg %p99
      %p180 = pneg %p96
      %p181 = pneg %p125
      %p182 = pneg %p122
      %p183 = scmp.lt.s32.totalorder %s15, 1
      %s184 = scalar_select %p183, %s15, 1
      %s185 = smul.addr %s184, 4
      %s186 = smul.addr %s185, 4
      %s187 = scalar_lea.vmem %s4, %s186
      %p188 = scmp.lt.s32.totalorder %s15, 1
      %s189 = scalar_select %p188, %s15, 1
      %s190 = smul.addr %s189, 3
      %s191 = smul.addr %s190, 4
      %s192 = scalar_lea.vmem %s0, %s191
      %p193 = scmp.lt.s32.totalorder %s15, 1
      %s194 = scalar_select %p193, %s15, 1
      %s195 = smul.addr %s194, 4
      %s196 = smul.addr %s195, 4
      %s197 = scalar_lea.vmem %s4, %s196
      %v199 = vld [vmem:[%s192] sm:$0xf]
      %v200 = vld [vmem:[%s192 + $0x4] sm:$0xf]
      %v201 = vld [vmem:[%s1] sm:$0xff]
      %v202 = vld [vmem:[%s1 + $0x8] sm:$0xff]
      %v203 = vld [vmem:[%s1 + $0x10] sm:$0xff]
      %v204 = vld [vmem:[%s1 + $0x18] sm:$0xff]
      %v205 = vld [vmem:[%s1 + $0x20] sm:$0xff]
      %v206 = vld [vmem:[%s1 + $0x28] sm:$0xff]
      %v207 = vld [vmem:[%s1 + $0x30] sm:$0xff]
      %v208 = vld [vmem:[%s1 + $0x38] sm:$0xff]
      %v209 = vld [vmem:[%s1 + $0x40] sm:$0xff]
      %v210 = vld [vmem:[%s192 + $0x8] sm:$0x1]
      %s211 = scalar_lea.vmem %s1, 72
      %v212 = vld [vmem:[%s211] sm:$0xff]
      %v213 = vld [vmem:[%s211 + $0x8] sm:$0xff]
      %v214 = vld [vmem:[%s211 + $0x10] sm:$0xff]
      %v215 = vld [vmem:[%s211 + $0x18] sm:$0xff]
      %v216 = vld [vmem:[%s211 + $0x20] sm:$0xff]
      %v217 = vld [vmem:[%s211 + $0x28] sm:$0xff]
      %v218 = vld [vmem:[%s211 + $0x30] sm:$0xff]
      %v219 = vld [vmem:[%s211 + $0x38] sm:$0xff]
      %v220 = vld [vmem:[%s211 + $0x40] sm:$0xff]
      %v224 = vunpack.c.l.b16 %v199
      %v225 = vunpack.c.l.b16 %v200
      %v226 = vunpack.c.l.b16 %v210
      %v227 = vpack.c.b16 %v225, %v224
      %v228 = vpack.c.b16 %v226, %v226
      %vm229 = vsmask.f32 7424
      %v231 = vshrl.u32 %v227, 16
      %v233 = vshll.u32 %v227, 16
      %v235 = vrot.slane %v233, 1
      %v236 = vor.u32 %v231, %v235
      %v238 = vshll.u32 %v228, 16
      %v240 = vrot.slane %v238, 1
      %v241 = vsel %vm229, %v236, %v240
      %v251 = vunpack.c.l.b16 %v212
      %v252 = vunpack.c.h.b16 %v212
      %v253 = vunpack.c.l.b16 %v213
      %v254 = vunpack.c.h.b16 %v213
      %v255 = vunpack.c.l.b16 %v214
      %v256 = vunpack.c.h.b16 %v214
      %v257 = vunpack.c.l.b16 %v215
      %v258 = vunpack.c.h.b16 %v215
      %v259 = vunpack.c.l.b16 %v216
      %v260 = vunpack.c.h.b16 %v216
      %v261 = vunpack.c.l.b16 %v217
      %v262 = vunpack.c.h.b16 %v217
      %v263 = vunpack.c.l.b16 %v218
      %v264 = vunpack.c.h.b16 %v218
      %v265 = vunpack.c.l.b16 %v219
      %v266 = vunpack.c.h.b16 %v219
      %v267 = vunpack.c.l.b16 %v220
      %v268 = vunpack.c.h.b16 %v220
      %v269 = vpack.c.b16 %v253, %v251
      %v270 = vpack.c.b16 %v254, %v252
      %v271 = vpack.c.b16 %v257, %v255
      %v272 = vpack.c.b16 %v258, %v256
      %v273 = vpack.c.b16 %v261, %v259
      %v274 = vpack.c.b16 %v262, %v260
      %v275 = vpack.c.b16 %v265, %v263
      %v276 = vpack.c.b16 %v266, %v264
      %v277 = vpack.c.b16 %v267, %v267
      %v278 = vpack.c.b16 %v268, %v268
      %vm287 = vcmask 588800
      %v289 = vsel %vm287, %v241, 0
      %vm291 = vcmask 1043456
      %v293 = vsel %vm291, %v277, 0
      %v296 = vsel %vm291, %v278, 0
      %298 = vmatprep.subr.bf16.mxu0 %v270
      %299 = vmatpush1.bf16.msra.mxu0 %v269
      %300 = vmatprep.subr.bf16.mxu0 %v272
      %301 = vmatpush1.bf16.msra.mxu0 %v271
      %302 = vmatprep.subr.bf16.mxu0 %v274
      %303 = vmatpush1.bf16.msra.mxu0 %v273
      %304 = vmatprep.subr.bf16.mxu0 %v276
      %305 = vmatpush1.bf16.msra.mxu0 %v275
      %306 = vmatprep.subr.bf16.mxu0 %v296
      %307 = vmatpush1.bf16.msra.mxu0 %v293
      %308 = vmatprep.subr.bf16.mxu0 0
      %309 = vmatpush1.bf16.msra.mxu0 0
      %310 = vmatprep.subr.bf16.mxu0 0
      %311 = vmatpush1.bf16.msra.mxu0 0
      %312 = vmatprep.subr.bf16.mxu0 0
      %313 = vmatpush1.bf16.msra.mxu0 0
      %314 = vmatprep.subr.bf16.mxu0 0
      %315 = vmatpush1.bf16.msra.mxu0 0
      %316 = vmatprep.subr.bf16.mxu0 0
      %317 = vmatpush1.bf16.msra.mxu0 0
      %318 = vmatprep.subr.bf16.mxu0 0
      %319 = vmatpush1.bf16.msra.mxu0 0
      %320 = vmatprep.subr.bf16.mxu0 0
      %321 = vmatpush1.bf16.msra.mxu0 0
      %322 = vmatprep.subr.bf16.mxu0 0
      %323 = vmatpush1.bf16.msra.mxu0 0
      %324 = vmatprep.subr.bf16.mxu0 0
      %325 = vmatpush1.bf16.msra.mxu0 0
      %326 = vmatprep.subr.bf16.mxu0 0
      %327 = vmatpush1.bf16.msra.mxu0 0
      %328 = vmatprep.subr.bf16.mxu0 0
      %329 = vmatpush1.bf16.msra.mxu0 0
      %330 = vmatprep.mubr.bf16.mxu0 0
      %331 = vmatmul.mubr.bf16.gmra.mrb[0].mxu0 %v289
      %v332 = vpop.f32.mrb[0].mxu0
      %v333 = vadd.f32 0.0, %v332
      %v334 = vpop.f32.mrb[0].mxu0
      %v335 = vadd.f32 0.0, %v334
      %v336 = vpop.f32.mrb[0].mxu0
      %v337 = vadd.f32 0.0, %v336
      %v338 = vpop.f32.mrb[0].mxu0
      %v339 = vadd.f32 0.0, %v338
      %340 = vdwg.mxu0
      %v350 = vunpack.c.l.b16 %v201
      %v351 = vunpack.c.h.b16 %v201
      %v352 = vunpack.c.l.b16 %v202
      %v353 = vunpack.c.h.b16 %v202
      %v354 = vunpack.c.l.b16 %v203
      %v355 = vunpack.c.h.b16 %v203
      %v356 = vunpack.c.l.b16 %v204
      %v357 = vunpack.c.h.b16 %v204
      %v358 = vunpack.c.l.b16 %v205
      %v359 = vunpack.c.h.b16 %v205
      %v360 = vunpack.c.l.b16 %v206
      %v361 = vunpack.c.h.b16 %v206
      %v362 = vunpack.c.l.b16 %v207
      %v363 = vunpack.c.h.b16 %v207
      %v364 = vunpack.c.l.b16 %v208
      %v365 = vunpack.c.h.b16 %v208
      %v366 = vunpack.c.l.b16 %v209
      %v367 = vunpack.c.h.b16 %v209
      %v368 = vpack.c.b16 %v352, %v350
      %v369 = vpack.c.b16 %v353, %v351
      %v370 = vpack.c.b16 %v356, %v354
      %v371 = vpack.c.b16 %v357, %v355
      %v372 = vpack.c.b16 %v360, %v358
      %v373 = vpack.c.b16 %v361, %v359
      %v374 = vpack.c.b16 %v364, %v362
      %v375 = vpack.c.b16 %v365, %v363
      %v376 = vpack.c.b16 %v366, %v366
      %v377 = vpack.c.b16 %v367, %v367
      %v386 = vsel %vm287, %v227, 0
      %v389 = vsel %vm291, %v376, 0
      %v392 = vsel %vm291, %v377, 0
      %394 = vmatprep.subr.bf16.mxu0 %v369
      %395 = vmatpush1.bf16.msra.mxu0 %v368
      %396 = vmatprep.subr.bf16.mxu0 %v371
      %397 = vmatpush1.bf16.msra.mxu0 %v370
      %398 = vmatprep.subr.bf16.mxu0 %v373
      %399 = vmatpush1.bf16.msra.mxu0 %v372
      %400 = vmatprep.subr.bf16.mxu0 %v375
      %401 = vmatpush1.bf16.msra.mxu0 %v374
      %402 = vmatprep.subr.bf16.mxu0 %v392
      %403 = vmatpush1.bf16.msra.mxu0 %v389
      %404 = vmatprep.subr.bf16.mxu0 0
      %405 = vmatpush1.bf16.msra.mxu0 0
      %406 = vmatprep.subr.bf16.mxu0 0
      %407 = vmatpush1.bf16.msra.mxu0 0
      %408 = vmatprep.subr.bf16.mxu0 0
      %409 = vmatpush1.bf16.msra.mxu0 0
      %410 = vmatprep.subr.bf16.mxu0 0
      %411 = vmatpush1.bf16.msra.mxu0 0
      %412 = vmatprep.subr.bf16.mxu0 0
      %413 = vmatpush1.bf16.msra.mxu0 0
      %414 = vmatprep.subr.bf16.mxu0 0
      %415 = vmatpush1.bf16.msra.mxu0 0
      %416 = vmatprep.subr.bf16.mxu0 0
      %417 = vmatpush1.bf16.msra.mxu0 0
      %418 = vmatprep.subr.bf16.mxu0 0
      %419 = vmatpush1.bf16.msra.mxu0 0
      %420 = vmatprep.subr.bf16.mxu0 0
      %421 = vmatpush1.bf16.msra.mxu0 0
      %422 = vmatprep.subr.bf16.mxu0 0
      %423 = vmatpush1.bf16.msra.mxu0 0
      %424 = vmatprep.subr.bf16.mxu0 0
      %425 = vmatpush1.bf16.msra.mxu0 0
      %426 = vmatprep.mubr.bf16.mxu0 0
      %427 = vmatmul.mubr.bf16.gmra.mrb[0].mxu0 %v386
      %v428 = vpop.f32.mrb[0].mxu0
      %v429 = vadd.f32 %v333, %v428
      %v430 = vpop.f32.mrb[0].mxu0
      %v431 = vadd.f32 %v335, %v430
      %v432 = vpop.f32.mrb[0].mxu0
      %v433 = vadd.f32 %v337, %v432
      %v434 = vpop.f32.mrb[0].mxu0
      %v435 = vadd.f32 %v339, %v434
      %436 = vdwg.mxu0
      %v437 = vld [vmem:[%s192] sm:$0xe]
      %s438 = scalar_lea.vmem %s1, 144
      %v439 = vld [vmem:[%s438] sm:$0xff]
      %v440 = vld [vmem:[%s438 + $0x8] sm:$0xff]
      %v441 = vld [vmem:[%s438 + $0x10] sm:$0xff]
      %v442 = vld [vmem:[%s438 + $0x18] sm:$0xff]
      %v443 = vld [vmem:[%s438 + $0x20] sm:$0xff]
      %v444 = vld [vmem:[%s438 + $0x28] sm:$0xff]
      %v445 = vld [vmem:[%s438 + $0x30] sm:$0xff]
      %v446 = vld [vmem:[%s438 + $0x38] sm:$0xff]
      %v447 = vld [vmem:[%s438 + $0x40] sm:$0xff]
      %v449 = vunpack.c.l.b16 %v437
      %v450 = vpack.c.b16 %v225, %v449
      %vm451 = vcmask 1046528
      %v452 = vrot.slane %v450, 1
      %v453 = vrot.slane %v228, 1
      %v454 = vsel %vm451, %v452, %v453
      %v464 = vunpack.c.l.b16 %v439
      %v465 = vunpack.c.h.b16 %v439
      %v466 = vunpack.c.l.b16 %v440
      %v467 = vunpack.c.h.b16 %v440
      %v468 = vunpack.c.l.b16 %v441
      %v469 = vunpack.c.h.b16 %v441
      %v470 = vunpack.c.l.b16 %v442
      %v471 = vunpack.c.h.b16 %v442
      %v472 = vunpack.c.l.b16 %v443
      %v473 = vunpack.c.h.b16 %v443
      %v474 = vunpack.c.l.b16 %v444
      %v475 = vunpack.c.h.b16 %v444
      %v476 = vunpack.c.l.b16 %v445
      %v477 = vunpack.c.h.b16 %v445
      %v478 = vunpack.c.l.b16 %v446
      %v479 = vunpack.c.h.b16 %v446
      %v480 = vunpack.c.l.b16 %v447
      %v481 = vunpack.c.h.b16 %v447
      %v482 = vpack.c.b16 %v466, %v464
      %v483 = vpack.c.b16 %v467, %v465
      %v484 = vpack.c.b16 %v470, %v468
      %v485 = vpack.c.b16 %v471, %v469
      %v486 = vpack.c.b16 %v474, %v472
      %v487 = vpack.c.b16 %v475, %v473
      %v488 = vpack.c.b16 %v478, %v476
      %v489 = vpack.c.b16 %v479, %v477
      %v490 = vpack.c.b16 %v480, %v480
      %v491 = vpack.c.b16 %v481, %v481
      %v501 = vsel %vm287, %v454, 0
      %v504 = vsel %vm291, %v490, 0
      %v507 = vsel %vm291, %v491, 0
      %509 = vmatprep.subr.bf16.mxu0 %v483
      %510 = vmatpush1.bf16.msra.mxu0 %v482
      %511 = vmatprep.subr.bf16.mxu0 %v485
      %512 = vmatpush1.bf16.msra.mxu0 %v484
      %513 = vmatprep.subr.bf16.mxu0 %v487
      %514 = vmatpush1.bf16.msra.mxu0 %v486
      %515 = vmatprep.subr.bf16.mxu0 %v489
      %516 = vmatpush1.bf16.msra.mxu0 %v488
      %517 = vmatprep.subr.bf16.mxu0 %v507
      %518 = vmatpush1.bf16.msra.mxu0 %v504
      %519 = vmatprep.subr.bf16.mxu0 0
      %520 = vmatpush1.bf16.msra.mxu0 0
      %521 = vmatprep.subr.bf16.mxu0 0
      %522 = vmatpush1.bf16.msra.mxu0 0
      %523 = vmatprep.subr.bf16.mxu0 0
      %524 = vmatpush1.bf16.msra.mxu0 0
      %525 = vmatprep.subr.bf16.mxu0 0
      %526 = vmatpush1.bf16.msra.mxu0 0
      %527 = vmatprep.subr.bf16.mxu0 0
      %528 = vmatpush1.bf16.msra.mxu0 0
      %529 = vmatprep.subr.bf16.mxu0 0
      %530 = vmatpush1.bf16.msra.mxu0 0
      %531 = vmatprep.subr.bf16.mxu0 0
      %532 = vmatpush1.bf16.msra.mxu0 0
      %533 = vmatprep.subr.bf16.mxu0 0
      %534 = vmatpush1.bf16.msra.mxu0 0
      %535 = vmatprep.subr.bf16.mxu0 0
      %536 = vmatpush1.bf16.msra.mxu0 0
      %537 = vmatprep.subr.bf16.mxu0 0
      %538 = vmatpush1.bf16.msra.mxu0 0
      %539 = vmatprep.subr.bf16.mxu0 0
      %540 = vmatpush1.bf16.msra.mxu0 0
      %541 = vmatprep.mubr.bf16.mxu0 0
      %542 = vmatmul.mubr.bf16.gmra.mrb[0].mxu0 %v501
      %v543 = vpop.f32.mrb[0].mxu0
      %v544 = vadd.f32 0.0, %v543
      %v545 = vpop.f32.mrb[0].mxu0
      %v546 = vadd.f32 0.0, %v545
      %v547 = vpop.f32.mrb[0].mxu0
      %v548 = vadd.f32 0.0, %v547
      %v549 = vpop.f32.mrb[0].mxu0
      %v550 = vadd.f32 0.0, %v549
      %551 = vdwg.mxu0
      %v552 = vadd.f32 %v429, %v544
      %v553 = vadd.f32 %v431, %v546
      %v554 = vadd.f32 %v433, %v548
      %v555 = vadd.f32 %v435, %v550
      %v556 = vld [vmem:[%s2] sm:$0x3]
      %v558 = vlaneseq
      %v559 = vshrl.u32 %v558, 7
      %v560 = vsub.s32 0, %v559
      %v561 = vrot.slane %v556, %v560
      %v562 = vlaneseq
      %v563 = vshrl.u32 %v562, 7
      %v564 = vsub.s32 1, %v563
      %v565 = vrot.slane %v556, %v564
      %v568 = vmul.f32 %v552, %v561
      %v569 = vmul.f32 %v553, %v565
      %v570 = vmul.f32 %v554, %v561
      %v571 = vmul.f32 %v555, %v565
      %v572 = vld [vmem:[%s3] sm:$0x3]
      %v574 = vlaneseq
      %v575 = vshrl.u32 %v574, 7
      %v576 = vsub.s32 0, %v575
      %v577 = vrot.slane %v572, %v576
      %v578 = vlaneseq
      %v579 = vshrl.u32 %v578, 7
      %v580 = vsub.s32 1, %v579
      %v581 = vrot.slane %v572, %v580
      %v584 = vadd.f32 %v568, %v577
      %v585 = vadd.f32 %v569, %v581
      %v586 = vadd.f32 %v570, %v577
      %v587 = vadd.f32 %v571, %v581
      %v588 = vmax.f32 %v584, 0.0
      %v589 = vmax.f32 %v585, 0.0
      %v590 = vmax.f32 %v586, 0.0
      %v591 = vmax.f32 %v587, 0.0
      %v592 = vpack.c.bf16 %v590, %v588
      %v593 = vpack.c.bf16 %v591, %v589
      %v596 = vunpack.c.l.b16 %v592
      %v597 = vunpack.c.l.b16 %v593
      %v598 = vunpack.c.h.b16 %v592
      %v599 = vunpack.c.h.b16 %v593
      %v600 = vpack.c.b16 %v597, %v596
      %v601 = vpack.c.b16 %v599, %v598
      %604 = vst [vmem:[%s197] sm:$0xff] %v600
      %605 = vst [vmem:[%s197 + $0x8] sm:$0xff] %v601
      %p606 = scmp.lt.s32.totalorder %s15, 1
      %s607 = scalar_select %p606, %s15, 1
      %s608 = smul.addr %s607, 4
      %s609 = smul.addr %s608, 4
      %s610 = scalar_lea.vmem %s4, %s609
      // Predicated region
      $region37: #{_lambda_.5} parent=35 // pred_check
        %p611 = pneg %p122
      $region38: #{_lambda_.5} parent=35 // pred_check_branch
        %613 = sbr.rel (%p611) target = $region40
      $region39: #{_lambda_.5} parent=35 // pred_region
        _
      $region40: #{_lambda_.5} parent=35 // pred_fallthru
        _
    $region36: #{_lambda_.5} parent=5 // pred_fallthru
      _
    %p614 = scmp.le.s32.totalorder 2, %s10
    // Predicated region
    $region41: #{_lambda_.5} parent=5 // pred_check
      %p615 = pneg %p614
    $region42: #{_lambda_.5} parent=5 // pred_check_branch
      %617 = sbr.rel (%p615) target = $region44
    $region43: #{_lambda_.5} parent=5 // pred_region
      %s618 = ssub.s32 %s10, 2
      // Predicated region
      $region45: #{_lambda_.5} parent=43 // pred_check
        %p619 = pneg %p128
      $region46: #{_lambda_.5} parent=43 // pred_check_branch
        %621 = sbr.rel (%p619) target = $region48
      $region47: #{_lambda_.5} parent=43 // pred_region
        %p622 = scmp.lt.s32.totalorder %s16, 1
        %s623 = scalar_select %p622, %s16, 1
        %s624 = smul.addr %s623, 4
        %s625 = smul.addr %s624, 4
        %s626 = scalar_lea.vmem %s4, %s625
      $region48: #{_lambda_.5} parent=43 // pred_fallthru
        _
    $region44: #{_lambda_.5} parent=5 // pred_fallthru
      _
  $region6: #{_lambda_.5} parent=0 // loop_footer
    %s14 = sadd.s32 1, %s10
  $region7: #{_lambda_.5} parent=0 // loop_footer_branch
    %9 = sbr.rel target = $region3
  $region8: #{_lambda_.5} parent=0 // loop_exit
    _

// kernel: _lambda_.6
$region0: #{_lambda_.6}
  #allocation0 [shape = 'u32[]', space=smem, size = 0x4, offset = 0x4, fixed_abs, tag = 'smem constant byte address 0x4 - core index']
  #allocation1 [shape = 'u32[144,128]{1,0:T(1,128)}', space=vmem, size = 0x12000, scoped, tag = 'internal scratch']
  #allocation2 [shape = 'f32[18,288]{1,0:T(8,128)}', space=vmem, size = 0x9000, scoped, tag = 'scratch operand']
  %s0 = inlined_call_operand.vmem [shape: bf16[2,18,288], index: 0, kind: input, shape index: {}]
  %s1 = inlined_call_operand.vmem [shape: bf16[2,16,256], index: 1, kind: input, shape index: {}]
  %s2 = inlined_call_operand.vmem [shape: bf16[3,288,256], index: 2, kind: input, shape index: {}]
  %s3 = inlined_call_operand.vmem [shape: f32[1,256], index: 3, kind: input, shape index: {}, may-alias: {3,6}]
  %s4 = inlined_call_operand.vmem [shape: f32[1,256], index: 4, kind: input, shape index: {}, may-alias: {4,7}]
  %s5 = inlined_call_operand.vmem [shape: bf16[3,288,256], index: 5, kind: input, shape index: {}]
  %s6 = inlined_call_operand.vmem [shape: f32[1,256], index: 6, kind: input, shape index: {}, may-alias: {3,6}]
  %s7 = inlined_call_operand.vmem [shape: f32[1,256], index: 7, kind: input, shape index: {}, may-alias: {4,7}]
  %s8 = inlined_call_operand.vmem [shape: bf16[2,16,256], index: 8, kind: output, shape index: {}]
  %s9 = sld [smem:[#allocation0]]
  $region65: #{_lambda_.6} parent=0
    _
  %s11 = ssub.s32 1, %s9
  %s12 = scalar_select 0, %s11, %s9
  loop: start=0, step=1, limit=4
  $region2: #{_lambda_.6} parent=0 // loop_pre_header
    _
  $region3: #{_lambda_.6} parent=0 // loop_header
    %s14 = sphi 0, %s18
    %p15 = scmp.ge.s32.totalorder %s14, 4
    %s24 = sphi 0, %s26
    %s27 = sphi 0, %s24
    %s28 = sphi 0, %s27
    %s44 = sphi 0, %s28
    %s50 = sphi 0, %s52
    %s53 = sphi 0, %s50
    %s54 = sphi 0, %s53
    %s70 = sphi 0, %s54
    %s74 = sphi 0, %s74
    %s76 = sphi 0, %s74
    %s77 = sphi 0, %s76
    %s91 = sphi 0, %s77
    %s95 = sphi 0, %s95
    %s97 = sphi 0, %s95
    %s98 = sphi 0, %s97
    %s112 = sphi 0, %s98
    %s116 = sphi 0, %s116
    %s118 = sphi 0, %s116
    %s119 = sphi 0, %s118
    %s133 = sphi 0, %s119
    %s137 = sphi 0, %s137
    %s139 = sphi 0, %s137
    %s140 = sphi 0, %s139
    %s154 = sphi 0, %s140
    %s158 = sphi 0, %s158
    %s160 = sphi 0, %s158
    %s161 = sphi 0, %s160
    %s175 = sphi 0, %s161
    %s179 = sphi 0, %s179
    %s181 = sphi 0, %s179
    %s182 = sphi 0, %s181
    %s196 = sphi 0, %s182
    %s202 = sphi 0, %s204
    %s205 = sphi 0, %s202
    %s206 = sphi 0, %s205
    %s222 = sphi 0, %s206
  $region4: #{_lambda_.6} parent=0 // loop_header_branch
    %17 = sbr.rel (%p15) target = $region8
  $region5: #{_lambda_.6} parent=0 // loop_body
    %s19 = ssub.s32 %s14, 1
    %s20 = ssub.s32 %s14, 2
    %s21 = sadd.s32 %s14, 1
    %s22 = ssub.s32 %s14, %s21
    %p23 = scmp.eq.s32.totalorder %s22, 0
    %s25 = sadd.s32 %s24, 1
    %s26 = scalar_select %p23, %s24, %s25
    %p29 = pneg %p23
    %p30 = scmp.eq.s32.totalorder %s14, 1
    %p31 = por %p29, %p30
    %p32 = scmp.ne.s32.totalorder %s24, %s27
    %p33 = scmp.eq.s32.totalorder %s14, 0
    %p34 = por %p32, %p33
    %p35 = scmp.ne.s32.totalorder %s24, %s27
    %p36 = scmp.eq.s32.totalorder %s19, 1
    %p37 = por %p35, %p36
    %p38 = scmp.ne.s32.totalorder %s27, %s28
    %p39 = scmp.eq.s32.totalorder %s19, 0
    %p40 = por %p38, %p39
    %p41 = scmp.ne.s32.totalorder %s27, %s28
    %p42 = scmp.eq.s32.totalorder %s20, 1
    %p43 = por %p41, %p42
    %p45 = scmp.ne.s32.totalorder %s28, %s44
    %p46 = scmp.eq.s32.totalorder %s20, 0
    %p47 = por %p45, %p46
    %s48 = ssub.s32 %s14, %s21
    %p49 = scmp.eq.s32.totalorder %s48, 0
    %s51 = sadd.s32 %s50, 1
    %s52 = scalar_select %p49, %s50, %s51
    %p55 = pneg %p49
    %p56 = scmp.eq.s32.totalorder %s14, 1
    %p57 = por %p55, %p56
    %p58 = scmp.ne.s32.totalorder %s50, %s53
    %p59 = scmp.eq.s32.totalorder %s14, 0
    %p60 = por %p58, %p59
    %p61 = scmp.ne.s32.totalorder %s50, %s53
    %p62 = scmp.eq.s32.totalorder %s19, 1
    %p63 = por %p61, %p62
    %p64 = scmp.ne.s32.totalorder %s53, %s54
    %p65 = scmp.eq.s32.totalorder %s19, 0
    %p66 = por %p64, %p65
    %p67 = scmp.ne.s32.totalorder %s53, %s54
    %p68 = scmp.eq.s32.totalorder %s20, 1
    %p69 = por %p67, %p68
    %p71 = scmp.ne.s32.totalorder %s54, %s70
    %p72 = scmp.eq.s32.totalorder %s20, 0
    %p73 = por %p71, %p72
    %s75 = sadd.s32 %s74, 1
    %p78 = scmp.eq.s32.totalorder %s14, 1
    %p79 = scmp.ne.s32.totalorder %s74, %s76
    %p80 = scmp.eq.s32.totalorder %s14, 0
    %p81 = por %p79, %p80
    %p82 = scmp.ne.s32.totalorder %s74, %s76
    %p83 = scmp.eq.s32.totalorder %s19, 1
    %p84 = por %p82, %p83
    %p85 = scmp.ne.s32.totalorder %s76, %s77
    %p86 = scmp.eq.s32.totalorder %s19, 0
    %p87 = por %p85, %p86
    %p88 = scmp.ne.s32.totalorder %s76, %s77
    %p89 = scmp.eq.s32.totalorder %s20, 1
    %p90 = por %p88, %p89
    %p92 = scmp.ne.s32.totalorder %s77, %s91
    %p93 = scmp.eq.s32.totalorder %s20, 0
    %p94 = por %p92, %p93
    %s96 = sadd.s32 %s95, 1
    %p99 = scmp.eq.s32.totalorder %s14, 1
    %p100 = scmp.ne.s32.totalorder %s95, %s97
    %p101 = scmp.eq.s32.totalorder %s14, 0
    %p102 = por %p100, %p101
    %p103 = scmp.ne.s32.totalorder %s95, %s97
    %p104 = scmp.eq.s32.totalorder %s19, 1
    %p105 = por %p103, %p104
    %p106 = scmp.ne.s32.totalorder %s97, %s98
    %p107 = scmp.eq.s32.totalorder %s19, 0
    %p108 = por %p106, %p107
    %p109 = scmp.ne.s32.totalorder %s97, %s98
    %p110 = scmp.eq.s32.totalorder %s20, 1
    %p111 = por %p109, %p110
    %p113 = scmp.ne.s32.totalorder %s98, %s112
    %p114 = scmp.eq.s32.totalorder %s20, 0
    %p115 = por %p113, %p114
    %s117 = sadd.s32 %s116, 1
    %p120 = scmp.eq.s32.totalorder %s14, 1
    %p121 = scmp.ne.s32.totalorder %s116, %s118
    %p122 = scmp.eq.s32.totalorder %s14, 0
    %p123 = por %p121, %p122
    %p124 = scmp.ne.s32.totalorder %s116, %s118
    %p125 = scmp.eq.s32.totalorder %s19, 1
    %p126 = por %p124, %p125
    %p127 = scmp.ne.s32.totalorder %s118, %s119
    %p128 = scmp.eq.s32.totalorder %s19, 0
    %p129 = por %p127, %p128
    %p130 = scmp.ne.s32.totalorder %s118, %s119
    %p131 = scmp.eq.s32.totalorder %s20, 1
    %p132 = por %p130, %p131
    %p134 = scmp.ne.s32.totalorder %s119, %s133
    %p135 = scmp.eq.s32.totalorder %s20, 0
    %p136 = por %p134, %p135
    %s138 = sadd.s32 %s137, 1
    %p141 = scmp.eq.s32.totalorder %s14, 1
    %p142 = scmp.ne.s32.totalorder %s137, %s139
    %p143 = scmp.eq.s32.totalorder %s14, 0
    %p144 = por %p142, %p143
    %p145 = scmp.ne.s32.totalorder %s137, %s139
    %p146 = scmp.eq.s32.totalorder %s19, 1
    %p147 = por %p145, %p146
    %p148 = scmp.ne.s32.totalorder %s139, %s140
    %p149 = scmp.eq.s32.totalorder %s19, 0
    %p150 = por %p148, %p149
    %p151 = scmp.ne.s32.totalorder %s139, %s140
    %p152 = scmp.eq.s32.totalorder %s20, 1
    %p153 = por %p151, %p152
    %p155 = scmp.ne.s32.totalorder %s140, %s154
    %p156 = scmp.eq.s32.totalorder %s20, 0
    %p157 = por %p155, %p156
    %s159 = sadd.s32 %s158, 1
    %p162 = scmp.eq.s32.totalorder %s14, 1
    %p163 = scmp.ne.s32.totalorder %s158, %s160
    %p164 = scmp.eq.s32.totalorder %s14, 0
    %p165 = por %p163, %p164
    %p166 = scmp.ne.s32.totalorder %s158, %s160
    %p167 = scmp.eq.s32.totalorder %s19, 1
    %p168 = por %p166, %p167
    %p169 = scmp.ne.s32.totalorder %s160, %s161
    %p170 = scmp.eq.s32.totalorder %s19, 0
    %p171 = por %p169, %p170
    %p172 = scmp.ne.s32.totalorder %s160, %s161
    %p173 = scmp.eq.s32.totalorder %s20, 1
    %p174 = por %p172, %p173
    %p176 = scmp.ne.s32.totalorder %s161, %s175
    %p177 = scmp.eq.s32.totalorder %s20, 0
    %p178 = por %p176, %p177
    %s180 = sadd.s32 %s179, 1
    %p183 = scmp.eq.s32.totalorder %s14, 1
    %p184 = scmp.ne.s32.totalorder %s179, %s181
    %p185 = scmp.eq.s32.totalorder %s14, 0
    %p186 = por %p184, %p185
    %p187 = scmp.ne.s32.totalorder %s179, %s181
    %p188 = scmp.eq.s32.totalorder %s19, 1
    %p189 = por %p187, %p188
    %p190 = scmp.ne.s32.totalorder %s181, %s182
    %p191 = scmp.eq.s32.totalorder %s19, 0
    %p192 = por %p190, %p191
    %p193 = scmp.ne.s32.totalorder %s181, %s182
    %p194 = scmp.eq.s32.totalorder %s20, 1
    %p195 = por %p193, %p194
    %p197 = scmp.ne.s32.totalorder %s182, %s196
    %p198 = scmp.eq.s32.totalorder %s20, 0
    %p199 = por %p197, %p198
    %s200 = ssub.s32 %s14, %s21
    %p201 = scmp.eq.s32.totalorder %s200, 0
    %s203 = sadd.s32 %s202, 1
    %s204 = scalar_select %p201, %s202, %s203
    %p207 = pneg %p201
    %p208 = scmp.eq.s32.totalorder %s14, 1
    %p209 = por %p207, %p208
    %p210 = scmp.ne.s32.totalorder %s202, %s205
    %p211 = scmp.eq.s32.totalorder %s14, 0
    %p212 = por %p210, %p211
    %p213 = scmp.ne.s32.totalorder %s202, %s205
    %p214 = scmp.eq.s32.totalorder %s19, 1
    %p215 = por %p213, %p214
    %p216 = scmp.ne.s32.totalorder %s205, %s206
    %p217 = scmp.eq.s32.totalorder %s19, 0
    %p218 = por %p216, %p217
    %p219 = scmp.ne.s32.totalorder %s205, %s206
    %p220 = scmp.eq.s32.totalorder %s20, 1
    %p221 = por %p219, %p220
    %p223 = scmp.ne.s32.totalorder %s206, %s222
    %p224 = scmp.eq.s32.totalorder %s20, 0
    %p225 = por %p223, %p224
    %p226 = scmp.le.s32.totalorder 1, %s14
    %p227 = scmp.lt.s32.totalorder %s14, 3
    %p228 = pnand %p226, %p227
    %p229 = pneg %p228
    // Predicated region
    $region9: #{_lambda_.6} parent=5 // pred_check
      _
    $region10: #{_lambda_.6} parent=5 // pred_check_branch
      %231 = sbr.rel (%p228) target = $region12
    $region11: #{_lambda_.6} parent=5 // pred_region
      %s232 = ssub.s32 %s14, 1
      // Predicated region
      $region13: #{_lambda_.6} parent=11 // pred_check
        %p233 = pneg %p87
      $region14: #{_lambda_.6} parent=11 // pred_check_branch
        %235 = sbr.rel (%p233) target = $region16
      $region15: #{_lambda_.6} parent=11 // pred_region
        _
      $region16: #{_lambda_.6} parent=11 // pred_fallthru
        _
      // Predicated region
      $region17: #{_lambda_.6} parent=11 // pred_check
        %p236 = pneg %p108
      $region18: #{_lambda_.6} parent=11 // pred_check_branch
        %238 = sbr.rel (%p236) target = $region20
      $region19: #{_lambda_.6} parent=11 // pred_region
        _
      $region20: #{_lambda_.6} parent=11 // pred_fallthru
        _
      // Predicated region
      $region21: #{_lambda_.6} parent=11 // pred_check
        %p239 = pneg %p129
      $region22: #{_lambda_.6} parent=11 // pred_check_branch
        %241 = sbr.rel (%p239) target = $region24
      $region23: #{_lambda_.6} parent=11 // pred_region
        _
      $region24: #{_lambda_.6} parent=11 // pred_fallthru
        _
      // Predicated region
      $region25: #{_lambda_.6} parent=11 // pred_check
        %p242 = pneg %p150
      $region26: #{_lambda_.6} parent=11 // pred_check_branch
        %244 = sbr.rel (%p242) target = $region28
      $region27: #{_lambda_.6} parent=11 // pred_region
        _
      $region28: #{_lambda_.6} parent=11 // pred_fallthru
        _
      // Predicated region
      $region29: #{_lambda_.6} parent=11 // pred_check
        %p245 = pneg %p171
      $region30: #{_lambda_.6} parent=11 // pred_check_branch
        %247 = sbr.rel (%p245) target = $region32
      $region31: #{_lambda_.6} parent=11 // pred_region
        _
      $region32: #{_lambda_.6} parent=11 // pred_fallthru
        _
      // Predicated region
      $region33: #{_lambda_.6} parent=11 // pred_check
        %p248 = pneg %p192
      $region34: #{_lambda_.6} parent=11 // pred_check_branch
        %250 = sbr.rel (%p248) target = $region36
      $region35: #{_lambda_.6} parent=11 // pred_region
        _
      $region36: #{_lambda_.6} parent=11 // pred_fallthru
        _
    $region12: #{_lambda_.6} parent=5 // pred_fallthru
      _
    %p251 = scmp.lt.s32.totalorder %s14, 2
    // Predicated region
    $region37: #{_lambda_.6} parent=5 // pred_check
      %p252 = pneg %p251
    $region38: #{_lambda_.6} parent=5 // pred_check_branch
      %254 = sbr.rel (%p252) target = $region40
    $region39: #{_lambda_.6} parent=5 // pred_region
      // Predicated region
      $region41: #{_lambda_.6} parent=39 // pred_check
        %p255 = pneg %p34
      $region42: #{_lambda_.6} parent=39 // pred_check_branch
        %257 = sbr.rel (%p255) target = $region44
      $region43: #{_lambda_.6} parent=39 // pred_region
        %p258 = scmp.lt.s32.totalorder %s14, 1
        %s259 = scalar_select %p258, %s14, 1
        %s260 = smul.addr %s259, 9
        %s261 = smul.addr %s260, 4
        %s262 = scalar_lea.vmem %s0, %s261
      $region44: #{_lambda_.6} parent=39 // pred_fallthru
        _
      // Predicated region
      $region45: #{_lambda_.6} parent=39 // pred_check
        %p263 = pneg %p60
      $region46: #{_lambda_.6} parent=39 // pred_check_branch
        %265 = sbr.rel (%p263) target = $region48
      $region47: #{_lambda_.6} parent=39 // pred_region
        %p266 = scmp.lt.s32.totalorder %s14, 1
        %s267 = scalar_select %p266, %s14, 1
        %s268 = smul.addr %s267, 4
        %s269 = smul.addr %s268, 4
        %s270 = scalar_lea.vmem %s1, %s269
      $region48: #{_lambda_.6} parent=39 // pred_fallthru
        _
    $region40: #{_lambda_.6} parent=5 // pred_fallthru
      _
    %p271 = scmp.le.s32.totalorder 1, %s14
    %p272 = scmp.lt.s32.totalorder %s14, 3
    %p273 = pnand %p271, %p272
    %p274 = pneg %p273
    // Predicated region
    $region49: #{_lambda_.6} parent=5 // pred_check
      _
    $region50: #{_lambda_.6} parent=5 // pred_check_branch
      %276 = sbr.rel (%p273) target = $region52
    $region51: #{_lambda_.6} parent=5 // pred_region
      %s277 = ssub.s32 %s14, 1
      %p278 = scmp.lt.s32.totalorder %s19, 1
      %s279 = scalar_select %p278, %s19, 1
      %s280 = smul.addr %s279, 9
      %s281 = smul.addr %s280, 4
      %s282 = scalar_lea.vmem %s0, %s281
      %p283 = pneg %p40
      %p284 = pneg %p37
      %p285 = scmp.lt.s32.totalorder %s19, 1
      %s286 = scalar_select %p285, %s19, 1
      %s287 = smul.addr %s286, 4
      %s288 = smul.addr %s287, 4
      %s289 = scalar_lea.vmem %s1, %s288
      %p290 = pneg %p66
      %p291 = pneg %p63
      %p292 = pneg %p87
      %p293 = pneg %p84
      %p294 = pneg %p108
      %p295 = pneg %p105
      %p296 = pneg %p129
      %p297 = pneg %p126
      %p298 = pneg %p150
      %p299 = pneg %p147
      %p300 = pneg %p171
      %p301 = pneg %p168
      %p302 = pneg %p192
      %p303 = pneg %p189
      %p304 = pneg %p218
      %p305 = pneg %p215
      %p306 = scmp.lt.s32.totalorder %s19, 1
      %s307 = scalar_select %p306, %s19, 1
      %s308 = smul.addr %s307, 4
      %s309 = smul.addr %s308, 4
      %s310 = scalar_lea.vmem %s8, %s309
      %p311 = scmp.lt.s32.totalorder %s19, 1
      %s312 = scalar_select %p311, %s19, 1
      %s313 = smul.addr %s312, 9
      %s314 = smul.addr %s313, 4
      %s315 = scalar_lea.vmem %s0, %s314
      %p316 = scmp.lt.s32.totalorder %s19, 1
      %s317 = scalar_select %p316, %s19, 1
      %s318 = smul.addr %s317, 4
      %s319 = smul.addr %s318, 4
      %s320 = scalar_lea.vmem %s1, %s319
      %p321 = scmp.lt.s32.totalorder %s19, 1
      %s322 = scalar_select %p321, %s19, 1
      %s323 = smul.addr %s322, 4
      %s324 = smul.addr %s323, 4
      %s325 = scalar_lea.vmem %s8, %s324
      %v327 = vld [vmem:[%s315] sm:$0xff]
      %v328 = vld [vmem:[%s315 + $0x8] sm:$0xf]
      %v329 = vld [vmem:[%s315 + $0xc] sm:$0xff]
      %v330 = vld [vmem:[%s315 + $0x14] sm:$0xf]
      %v331 = vld [vmem:[%s2] sm:$0xff]
      %v332 = vld [vmem:[%s2 + $0x8] sm:$0xff]
      %v333 = vld [vmem:[%s2 + $0x10] sm:$0xff]
      %v334 = vld [vmem:[%s2 + $0x18] sm:$0xff]
      %v335 = vld [vmem:[%s2 + $0x20] sm:$0xff]
      %v336 = vld [vmem:[%s2 + $0x28] sm:$0xff]
      %v337 = vld [vmem:[%s2 + $0x30] sm:$0xff]
      %v338 = vld [vmem:[%s2 + $0x38] sm:$0xff]
      %v339 = vld [vmem:[%s2 + $0x40] sm:$0xff]
      %v340 = vld [vmem:[%s2 + $0x48] sm:$0xff]
      %v341 = vld [vmem:[%s2 + $0x50] sm:$0xff]
      %v342 = vld [vmem:[%s2 + $0x58] sm:$0xff]
      %v343 = vld [vmem:[%s2 + $0x60] sm:$0xff]
      %v344 = vld [vmem:[%s2 + $0x68] sm:$0xff]
      %v345 = vld [vmem:[%s2 + $0x70] sm:$0xff]
      %v346 = vld [vmem:[%s2 + $0x78] sm:$0xff]
      %v347 = vld [vmem:[%s2 + $0x80] sm:$0xff]
      %v348 = vld [vmem:[%s2 + $0x88] sm:$0xff]
      %v349 = vld [vmem:[%s2 + $0x90] sm:$0xff]
      %v350 = vld [vmem:[%s2 + $0x98] sm:$0xff]
      %v351 = vld [vmem:[%s2 + $0xa0] sm:$0xff]
      %v352 = vld [vmem:[%s2 + $0xa8] sm:$0xff]
      %v353 = vld [vmem:[%s2 + $0xb0] sm:$0xff]
      %v354 = vld [vmem:[%s2 + $0xb8] sm:$0xff]
      %v355 = vld [vmem:[%s2 + $0xc0] sm:$0xff]
      %v356 = vld [vmem:[%s2 + $0xc8] sm:$0xff]
      %v357 = vld [vmem:[%s2 + $0xd0] sm:$0xff]
      %v358 = vld [vmem:[%s2 + $0xd8] sm:$0xff]
      %v359 = vld [vmem:[%s2 + $0xe0] sm:$0xff]
      %v360 = vld [vmem:[%s2 + $0xe8] sm:$0xff]
      %v361 = vld [vmem:[%s2 + $0xf0] sm:$0xff]
      %v362 = vld [vmem:[%s2 + $0xf8] sm:$0xff]
      %v363 = vld [vmem:[%s2 + $0x100] sm:$0xff]
      %v364 = vld [vmem:[%s2 + $0x108] sm:$0xff]
      %v365 = vld [vmem:[%s2 + $0x110] sm:$0xff]
      %v366 = vld [vmem:[%s2 + $0x118] sm:$0xff]
      %v367 = vld [vmem:[%s315 + $0x18] sm:$0x11]
      %v368 = vld [vmem:[%s315 + $0x20] sm:$0x1]
      %s369 = scalar_lea.vmem %s2, 288
      %v370 = vld [vmem:[%s369] sm:$0xff]
      %v371 = vld [vmem:[%s369 + $0x8] sm:$0xff]
      %v372 = vld [vmem:[%s369 + $0x10] sm:$0xff]
      %v373 = vld [vmem:[%s369 + $0x18] sm:$0xff]
      %v374 = vld [vmem:[%s369 + $0x20] sm:$0xff]
      %v375 = vld [vmem:[%s369 + $0x28] sm:$0xff]
      %v376 = vld [vmem:[%s369 + $0x30] sm:$0xff]
      %v377 = vld [vmem:[%s369 + $0x38] sm:$0xff]
      %v378 = vld [vmem:[%s369 + $0x40] sm:$0xff]
      %v379 = vld [vmem:[%s369 + $0x48] sm:$0xff]
      %v380 = vld [vmem:[%s369 + $0x50] sm:$0xff]
      %v381 = vld [vmem:[%s369 + $0x58] sm:$0xff]
      %v382 = vld [vmem:[%s369 + $0x60] sm:$0xff]
      %v383 = vld [vmem:[%s369 + $0x68] sm:$0xff]
      %v384 = vld [vmem:[%s369 + $0x70] sm:$0xff]
      %v385 = vld [vmem:[%s369 + $0x78] sm:$0xff]
      %v386 = vld [vmem:[%s369 + $0x80] sm:$0xff]
      %v387 = vld [vmem:[%s369 + $0x88] sm:$0xff]
      %v388 = vld [vmem:[%s369 + $0x90] sm:$0xff]
      %v389 = vld [vmem:[%s369 + $0x98] sm:$0xff]
      %v390 = vld [vmem:[%s369 + $0xa0] sm:$0xff]
      %v391 = vld [vmem:[%s369 + $0xa8] sm:$0xff]
      %v392 = vld [vmem:[%s369 + $0xb0] sm:$0xff]
      %v393 = vld [vmem:[%s369 + $0xb8] sm:$0xff]
      %v394 = vld [vmem:[%s369 + $0xc0] sm:$0xff]
      %v395 = vld [vmem:[%s369 + $0xc8] sm:$0xff]
      %v396 = vld [vmem:[%s369 + $0xd0] sm:$0xff]
      %v397 = vld [vmem:[%s369 + $0xd8] sm:$0xff]
      %v398 = vld [vmem:[%s369 + $0xe0] sm:$0xff]
      %v399 = vld [vmem:[%s369 + $0xe8] sm:$0xff]
      %v400 = vld [vmem:[%s369 + $0xf0] sm:$0xff]
      %v401 = vld [vmem:[%s369 + $0xf8] sm:$0xff]
      %v402 = vld [vmem:[%s369 + $0x100] sm:$0xff]
      %v403 = vld [vmem:[%s369 + $0x108] sm:$0xff]
      %v404 = vld [vmem:[%s369 + $0x110] sm:$0xff]
      %v405 = vld [vmem:[%s369 + $0x118] sm:$0xff]
      %v412 = vunpack.c.l.b16 %v327
      %v413 = vunpack.c.h.b16 %v327
      %v414 = vunpack.c.l.b16 %v328
      %v415 = vunpack.c.l.b16 %v329
      %v416 = vunpack.c.h.b16 %v329
      %v417 = vunpack.c.l.b16 %v330
      %v418 = vunpack.c.l.b16 %v367
      %v419 = vunpack.c.h.b16 %v367
      %v420 = vunpack.c.l.b16 %v368
      %v421 = vpack.c.b16 %v415, %v412
      %v422 = vpack.c.b16 %v416, %v413
      %v423 = vpack.c.b16 %v417, %v414
      %v424 = vpack.c.b16 %v418, %v418
      %v425 = vpack.c.b16 %v419, %v419
      %v426 = vpack.c.b16 %v420, %v420
      %vm427 = vsmask.f32 7424
      %v429 = vshrl.u32 %v421, 16
      %v431 = vshll.u32 %v421, 16
      %v433 = vrot.slane %v431, 1
      %v434 = vor.u32 %v429, %v433
      %v436 = vshll.u32 %v424, 16
      %v438 = vrot.slane %v436, 1
      %v439 = vsel %vm427, %v434, %v438
      %v441 = vshrl.u32 %v422, 16
      %v443 = vshll.u32 %v422, 16
      %v445 = vrot.slane %v443, 1
      %v446 = vor.u32 %v441, %v445
      %v448 = vshll.u32 %v425, 16
      %v450 = vrot.slane %v448, 1
      %v451 = vsel %vm427, %v446, %v450
      %v453 = vshrl.u32 %v423, 16
      %v455 = vshll.u32 %v423, 16
      %v457 = vrot.slane %v455, 1
      %v458 = vor.u32 %v453, %v457
      %v460 = vshll.u32 %v426, 16
      %v462 = vrot.slane %v460, 1
      %v463 = vsel %vm427, %v458, %v462
      %v502 = vunpack.c.l.b16 %v370
      %v503 = vunpack.c.h.b16 %v370
      %v504 = vunpack.c.l.b16 %v371
      %v505 = vunpack.c.h.b16 %v371
      %v506 = vunpack.c.l.b16 %v372
      %v507 = vunpack.c.h.b16 %v372
      %v508 = vunpack.c.l.b16 %v373
      %v509 = vunpack.c.h.b16 %v373
      %v510 = vunpack.c.l.b16 %v374
      %v511 = vunpack.c.h.b16 %v374
      %v512 = vunpack.c.l.b16 %v375
      %v513 = vunpack.c.h.b16 %v375
      %v514 = vunpack.c.l.b16 %v376
      %v515 = vunpack.c.h.b16 %v376
      %v516 = vunpack.c.l.b16 %v377
      %v517 = vunpack.c.h.b16 %v377
      %v518 = vunpack.c.l.b16 %v378
      %v519 = vunpack.c.h.b16 %v378
      %v520 = vunpack.c.l.b16 %v379
      %v521 = vunpack.c.h.b16 %v379
      %v522 = vunpack.c.l.b16 %v380
      %v523 = vunpack.c.h.b16 %v380
      %v524 = vunpack.c.l.b16 %v381
      %v525 = vunpack.c.h.b16 %v381
      %v526 = vunpack.c.l.b16 %v382
      %v527 = vunpack.c.h.b16 %v382
      %v528 = vunpack.c.l.b16 %v383
      %v529 = vunpack.c.h.b16 %v383
      %v530 = vunpack.c.l.b16 %v384
      %v531 = vunpack.c.h.b16 %v384
      %v532 = vunpack.c.l.b16 %v385
      %v533 = vunpack.c.h.b16 %v385
      %v534 = vunpack.c.l.b16 %v386
      %v535 = vunpack.c.h.b16 %v386
      %v536 = vunpack.c.l.b16 %v387
      %v537 = vunpack.c.h.b16 %v387
      %v538 = vunpack.c.l.b16 %v388
      %v539 = vunpack.c.h.b16 %v388
      %v540 = vunpack.c.l.b16 %v389
      %v541 = vunpack.c.h.b16 %v389
      %v542 = vunpack.c.l.b16 %v390
      %v543 = vunpack.c.h.b16 %v390
      %v544 = vunpack.c.l.b16 %v391
      %v545 = vunpack.c.h.b16 %v391
      %v546 = vunpack.c.l.b16 %v392
      %v547 = vunpack.c.h.b16 %v392
      %v548 = vunpack.c.l.b16 %v393
      %v549 = vunpack.c.h.b16 %v393
      %v550 = vunpack.c.l.b16 %v394
      %v551 = vunpack.c.h.b16 %v394
      %v552 = vunpack.c.l.b16 %v395
      %v553 = vunpack.c.h.b16 %v395
      %v554 = vunpack.c.l.b16 %v396
      %v555 = vunpack.c.h.b16 %v396
      %v556 = vunpack.c.l.b16 %v397
      %v557 = vunpack.c.h.b16 %v397
      %v558 = vunpack.c.l.b16 %v398
      %v559 = vunpack.c.h.b16 %v398
      %v560 = vunpack.c.l.b16 %v399
      %v561 = vunpack.c.h.b16 %v399
      %v562 = vunpack.c.l.b16 %v400
      %v563 = vunpack.c.h.b16 %v400
      %v564 = vunpack.c.l.b16 %v401
      %v565 = vunpack.c.h.b16 %v401
      %v566 = vunpack.c.l.b16 %v402
      %v567 = vunpack.c.h.b16 %v402
      %v568 = vunpack.c.l.b16 %v403
      %v569 = vunpack.c.h.b16 %v403
      %v570 = vunpack.c.l.b16 %v404
      %v571 = vunpack.c.h.b16 %v404
      %v572 = vunpack.c.l.b16 %v405
      %v573 = vunpack.c.h.b16 %v405
      %v574 = vpack.c.b16 %v504, %v502
      %v575 = vpack.c.b16 %v505, %v503
      %v576 = vpack.c.b16 %v508, %v506
      %v577 = vpack.c.b16 %v509, %v507
      %v578 = vpack.c.b16 %v512, %v510
      %v579 = vpack.c.b16 %v513, %v511
      %v580 = vpack.c.b16 %v516, %v514
      %v581 = vpack.c.b16 %v517, %v515
      %v582 = vpack.c.b16 %v520, %v518
      %v583 = vpack.c.b16 %v521, %v519
      %v584 = vpack.c.b16 %v524, %v522
      %v585 = vpack.c.b16 %v525, %v523
      %v586 = vpack.c.b16 %v528, %v526
      %v587 = vpack.c.b16 %v529, %v527
      %v588 = vpack.c.b16 %v532, %v530
      %v589 = vpack.c.b16 %v533, %v531
      %v590 = vpack.c.b16 %v536, %v534
      %v591 = vpack.c.b16 %v537, %v535
      %v592 = vpack.c.b16 %v540, %v538
      %v593 = vpack.c.b16 %v541, %v539
      %v594 = vpack.c.b16 %v544, %v542
      %v595 = vpack.c.b16 %v545, %v543
      %v596 = vpack.c.b16 %v548, %v546
      %v597 = vpack.c.b16 %v549, %v547
      %v598 = vpack.c.b16 %v552, %v550
      %v599 = vpack.c.b16 %v553, %v551
      %v600 = vpack.c.b16 %v556, %v554
      %v601 = vpack.c.b16 %v557, %v555
      %v602 = vpack.c.b16 %v560, %v558
      %v603 = vpack.c.b16 %v561, %v559
      %v604 = vpack.c.b16 %v564, %v562
      %v605 = vpack.c.b16 %v565, %v563
      %v606 = vpack.c.b16 %v568, %v566
      %v607 = vpack.c.b16 %v569, %v567
      %v608 = vpack.c.b16 %v572, %v570
      %v609 = vpack.c.b16 %v573, %v571
      %vm646 = vcmask 261120
      %v648 = vsel %vm646, %v463, 0
      %650 = vmatprep.subr.bf16.mxu0 %v575
      %651 = vmatpush1.bf16.msra.mxu0 %v574
      %652 = vmatprep.subr.bf16.mxu0 %v577
      %653 = vmatpush1.bf16.msra.mxu0 %v576
      %654 = vmatprep.subr.bf16.mxu0 %v579
      %655 = vmatpush1.bf16.msra.mxu0 %v578
      %656 = vmatprep.subr.bf16.mxu0 %v581
      %657 = vmatpush1.bf16.msra.mxu0 %v580
      %658 = vmatprep.subr.bf16.mxu0 %v583
      %659 = vmatpush1.bf16.msra.mxu0 %v582
      %660 = vmatprep.subr.bf16.mxu0 %v585
      %661 = vmatpush1.bf16.msra.mxu0 %v584
      %662 = vmatprep.subr.bf16.mxu0 %v587
      %663 = vmatpush1.bf16.msra.mxu0 %v586
      %664 = vmatprep.subr.bf16.mxu0 %v589
      %665 = vmatpush1.bf16.msra.mxu0 %v588
      %666 = vmatprep.subr.bf16.mxu0 %v591
      %667 = vmatpush1.bf16.msra.mxu0 %v590
      %668 = vmatprep.subr.bf16.mxu0 %v593
      %669 = vmatpush1.bf16.msra.mxu0 %v592
      %670 = vmatprep.subr.bf16.mxu0 %v595
      %671 = vmatpush1.bf16.msra.mxu0 %v594
      %672 = vmatprep.subr.bf16.mxu0 %v597
      %673 = vmatpush1.bf16.msra.mxu0 %v596
      %674 = vmatprep.subr.bf16.mxu0 %v599
      %675 = vmatpush1.bf16.msra.mxu0 %v598
      %676 = vmatprep.subr.bf16.mxu0 %v601
      %677 = vmatpush1.bf16.msra.mxu0 %v600
      %678 = vmatprep.subr.bf16.mxu0 %v603
      %679 = vmatpush1.bf16.msra.mxu0 %v602
      %680 = vmatprep.subr.bf16.mxu0 %v605
      %681 = vmatpush1.bf16.msra.mxu0 %v604
      %682 = vmatprep.mubr.bf16.mxu0 %v451
      %683 = vmatmul.mubr.bf16.gmra.mrb[0].mxu0 %v439
      %v684 = vpop.f32.mrb[0].mxu0
      %v685 = vadd.f32 0.0, %v684
      %v686 = vpop.f32.mrb[0].mxu0
      %v687 = vadd.f32 0.0, %v686
      %v688 = vpop.f32.mrb[0].mxu0
      %v689 = vadd.f32 0.0, %v688
      %v690 = vpop.f32.mrb[0].mxu0
      %v691 = vadd.f32 0.0, %v690
      %692 = vdwg.mxu0
      %693 = vmatprep.subr.bf16.mxu0 %v607
      %694 = vmatpush1.bf16.msra.mxu0 %v606
      %695 = vmatprep.subr.bf16.mxu0 %v609
      %696 = vmatpush1.bf16.msra.mxu0 %v608
      %697 = vmatprep.subr.bf16.mxu0 0
      %698 = vmatpush1.bf16.msra.mxu0 0
      %699 = vmatprep.subr.bf16.mxu0 0
      %700 = vmatpush1.bf16.msra.mxu0 0
      %701 = vmatprep.subr.bf16.mxu0 0
      %702 = vmatpush1.bf16.msra.mxu0 0
      %703 = vmatprep.subr.bf16.mxu0 0
      %704 = vmatpush1.bf16.msra.mxu0 0
      %705 = vmatprep.subr.bf16.mxu0 0
      %706 = vmatpush1.bf16.msra.mxu0 0
      %707 = vmatprep.subr.bf16.mxu0 0
      %708 = vmatpush1.bf16.msra.mxu0 0
      %709 = vmatprep.subr.bf16.mxu0 0
      %710 = vmatpush1.bf16.msra.mxu0 0
      %711 = vmatprep.subr.bf16.mxu0 0
      %712 = vmatpush1.bf16.msra.mxu0 0
      %713 = vmatprep.subr.bf16.mxu0 0
      %714 = vmatpush1.bf16.msra.mxu0 0
      %715 = vmatprep.subr.bf16.mxu0 0
      %716 = vmatpush1.bf16.msra.mxu0 0
      %717 = vmatprep.subr.bf16.mxu0 0
      %718 = vmatpush1.bf16.msra.mxu0 0
      %719 = vmatprep.subr.bf16.mxu0 0
      %720 = vmatpush1.bf16.msra.mxu0 0
      %721 = vmatprep.subr.bf16.mxu0 0
      %722 = vmatpush1.bf16.msra.mxu0 0
      %723 = vmatprep.subr.bf16.mxu0 0
      %724 = vmatpush1.bf16.msra.mxu0 0
      %725 = vmatprep.mubr.bf16.mxu0 0
      %726 = vmatmul.mubr.bf16.gmra.mrb[0].mxu0 %v648
      %v727 = vpop.f32.mrb[0].mxu0
      %v728 = vadd.f32 %v685, %v727
      %v729 = vpop.f32.mrb[0].mxu0
      %v730 = vadd.f32 %v687, %v729
      %v731 = vpop.f32.mrb[0].mxu0
      %v732 = vadd.f32 %v689, %v731
      %v733 = vpop.f32.mrb[0].mxu0
      %v734 = vadd.f32 %v691, %v733
      %735 = vdwg.mxu0
      %v774 = vunpack.c.l.b16 %v331
      %v775 = vunpack.c.h.b16 %v331
      %v776 = vunpack.c.l.b16 %v332
      %v777 = vunpack.c.h.b16 %v332
      %v778 = vunpack.c.l.b16 %v333
      %v779 = vunpack.c.h.b16 %v333
      %v780 = vunpack.c.l.b16 %v334
      %v781 = vunpack.c.h.b16 %v334
      %v782 = vunpack.c.l.b16 %v335
      %v783 = vunpack.c.h.b16 %v335
      %v784 = vunpack.c.l.b16 %v336
      %v785 = vunpack.c.h.b16 %v336
      %v786 = vunpack.c.l.b16 %v337
      %v787 = vunpack.c.h.b16 %v337
      %v788 = vunpack.c.l.b16 %v338
      %v789 = vunpack.c.h.b16 %v338
      %v790 = vunpack.c.l.b16 %v339
      %v791 = vunpack.c.h.b16 %v339
      %v792 = vunpack.c.l.b16 %v340
      %v793 = vunpack.c.h.b16 %v340
      %v794 = vunpack.c.l.b16 %v341
      %v795 = vunpack.c.h.b16 %v341
      %v796 = vunpack.c.l.b16 %v342
      %v797 = vunpack.c.h.b16 %v342
      %v798 = vunpack.c.l.b16 %v343
      %v799 = vunpack.c.h.b16 %v343
      %v800 = vunpack.c.l.b16 %v344
      %v801 = vunpack.c.h.b16 %v344
      %v802 = vunpack.c.l.b16 %v345
      %v803 = vunpack.c.h.b16 %v345
      %v804 = vunpack.c.l.b16 %v346
      %v805 = vunpack.c.h.b16 %v346
      %v806 = vunpack.c.l.b16 %v347
      %v807 = vunpack.c.h.b16 %v347
      %v808 = vunpack.c.l.b16 %v348
      %v809 = vunpack.c.h.b16 %v348
      %v810 = vunpack.c.l.b16 %v349
      %v811 = vunpack.c.h.b16 %v349
      %v812 = vunpack.c.l.b16 %v350
      %v813 = vunpack.c.h.b16 %v350
      %v814 = vunpack.c.l.b16 %v351
      %v815 = vunpack.c.h.b16 %v351
      %v816 = vunpack.c.l.b16 %v352
      %v817 = vunpack.c.h.b16 %v352
      %v818 = vunpack.c.l.b16 %v353
      %v819 = vunpack.c.h.b16 %v353
      %v820 = vunpack.c.l.b16 %v354
      %v821 = vunpack.c.h.b16 %v354
      %v822 = vunpack.c.l.b16 %v355
      %v823 = vunpack.c.h.b16 %v355
      %v824 = vunpack.c.l.b16 %v356
      %v825 = vunpack.c.h.b16 %v356
      %v826 = vunpack.c.l.b16 %v357
      %v827 = vunpack.c.h.b16 %v357
      %v828 = vunpack.c.l.b16 %v358
      %v829 = vunpack.c.h.b16 %v358
      %v830 = vunpack.c.l.b16 %v359
      %v831 = vunpack.c.h.b16 %v359
      %v832 = vunpack.c.l.b16 %v360
      %v833 = vunpack.c.h.b16 %v360
      %v834 = vunpack.c.l.b16 %v361
      %v835 = vunpack.c.h.b16 %v361
      %v836 = vunpack.c.l.b16 %v362
      %v837 = vunpack.c.h.b16 %v362
      %v838 = vunpack.c.l.b16 %v363
      %v839 = vunpack.c.h.b16 %v363
      %v840 = vunpack.c.l.b16 %v364
      %v841 = vunpack.c.h.b16 %v364
      %v842 = vunpack.c.l.b16 %v365
      %v843 = vunpack.c.h.b16 %v365
      %v844 = vunpack.c.l.b16 %v366
      %v845 = vunpack.c.h.b16 %v366
      %v846 = vpack.c.b16 %v776, %v774
      %v847 = vpack.c.b16 %v777, %v775
      %v848 = vpack.c.b16 %v780, %v778
      %v849 = vpack.c.b16 %v781, %v779
      %v850 = vpack.c.b16 %v784, %v782
      %v851 = vpack.c.b16 %v785, %v783
      %v852 = vpack.c.b16 %v788, %v786
      %v853 = vpack.c.b16 %v789, %v787
      %v854 = vpack.c.b16 %v792, %v790
      %v855 = vpack.c.b16 %v793, %v791
      %v856 = vpack.c.b16 %v796, %v794
      %v857 = vpack.c.b16 %v797, %v795
      %v858 = vpack.c.b16 %v800, %v798
      %v859 = vpack.c.b16 %v801, %v799
      %v860 = vpack.c.b16 %v804, %v802
      %v861 = vpack.c.b16 %v805, %v803
      %v862 = vpack.c.b16 %v808, %v806
      %v863 = vpack.c.b16 %v809, %v807
      %v864 = vpack.c.b16 %v812, %v810
      %v865 = vpack.c.b16 %v813, %v811
      %v866 = vpack.c.b16 %v816, %v814
      %v867 = vpack.c.b16 %v817, %v815
      %v868 = vpack.c.b16 %v820, %v818
      %v869 = vpack.c.b16 %v821, %v819
      %v870 = vpack.c.b16 %v824, %v822
      %v871 = vpack.c.b16 %v825, %v823
      %v872 = vpack.c.b16 %v828, %v826
      %v873 = vpack.c.b16 %v829, %v827
      %v874 = vpack.c.b16 %v832, %v830
      %v875 = vpack.c.b16 %v833, %v831
      %v876 = vpack.c.b16 %v836, %v834
      %v877 = vpack.c.b16 %v837, %v835
      %v878 = vpack.c.b16 %v840, %v838
      %v879 = vpack.c.b16 %v841, %v839
      %v880 = vpack.c.b16 %v844, %v842
      %v881 = vpack.c.b16 %v845, %v843
      %v918 = vsel %vm646, %v423, 0
      %920 = vmatprep.subr.bf16.mxu0 %v847
      %921 = vmatpush1.bf16.msra.mxu0 %v846
      %922 = vmatprep.subr.bf16.mxu0 %v849
      %923 = vmatpush1.bf16.msra.mxu0 %v848
      %924 = vmatprep.subr.bf16.mxu0 %v851
      %925 = vmatpush1.bf16.msra.mxu0 %v850
      %926 = vmatprep.subr.bf16.mxu0 %v853
      %927 = vmatpush1.bf16.msra.mxu0 %v852
      %928 = vmatprep.subr.bf16.mxu0 %v855
      %929 = vmatpush1.bf16.msra.mxu0 %v854
      %930 = vmatprep.subr.bf16.mxu0 %v857
      %931 = vmatpush1.bf16.msra.mxu0 %v856
      %932 = vmatprep.subr.bf16.mxu0 %v859
      %933 = vmatpush1.bf16.msra.mxu0 %v858
      %934 = vmatprep.subr.bf16.mxu0 %v861
      %935 = vmatpush1.bf16.msra.mxu0 %v860
      %936 = vmatprep.subr.bf16.mxu0 %v863
      %937 = vmatpush1.bf16.msra.mxu0 %v862
      %938 = vmatprep.subr.bf16.mxu0 %v865
      %939 = vmatpush1.bf16.msra.mxu0 %v864
      %940 = vmatprep.subr.bf16.mxu0 %v867
      %941 = vmatpush1.bf16.msra.mxu0 %v866
      %942 = vmatprep.subr.bf16.mxu0 %v869
      %943 = vmatpush1.bf16.msra.mxu0 %v868
      %944 = vmatprep.subr.bf16.mxu0 %v871
      %945 = vmatpush1.bf16.msra.mxu0 %v870
      %946 = vmatprep.subr.bf16.mxu0 %v873
      %947 = vmatpush1.bf16.msra.mxu0 %v872
      %948 = vmatprep.subr.bf16.mxu0 %v875
      %949 = vmatpush1.bf16.msra.mxu0 %v874
      %950 = vmatprep.subr.bf16.mxu0 %v877
      %951 = vmatpush1.bf16.msra.mxu0 %v876
      %952 = vmatprep.mubr.bf16.mxu0 %v422
      %953 = vmatmul.mubr.bf16.gmra.mrb[0].mxu0 %v421
      %v954 = vpop.f32.mrb[0].mxu0
      %v955 = vadd.f32 %v728, %v954
      %v956 = vpop.f32.mrb[0].mxu0
      %v957 = vadd.f32 %v730, %v956
      %v958 = vpop.f32.mrb[0].mxu0
      %v959 = vadd.f32 %v732, %v958
      %v960 = vpop.f32.mrb[0].mxu0
      %v961 = vadd.f32 %v734, %v960
      %962 = vdwg.mxu0
      %963 = vmatprep.subr.bf16.mxu0 %v879
      %964 = vmatpush1.bf16.msra.mxu0 %v878
      %965 = vmatprep.subr.bf16.mxu0 %v881
      %966 = vmatpush1.bf16.msra.mxu0 %v880
      %967 = vmatprep.subr.bf16.mxu0 0
      %968 = vmatpush1.bf16.msra.mxu0 0
      %969 = vmatprep.subr.bf16.mxu0 0
      %970 = vmatpush1.bf16.msra.mxu0 0
      %971 = vmatprep.subr.bf16.mxu0 0
      %972 = vmatpush1.bf16.msra.mxu0 0
      %973 = vmatprep.subr.bf16.mxu0 0
      %974 = vmatpush1.bf16.msra.mxu0 0
      %975 = vmatprep.subr.bf16.mxu0 0
      %976 = vmatpush1.bf16.msra.mxu0 0
      %977 = vmatprep.subr.bf16.mxu0 0
      %978 = vmatpush1.bf16.msra.mxu0 0
      %979 = vmatprep.subr.bf16.mxu0 0
      %980 = vmatpush1.bf16.msra.mxu0 0
      %981 = vmatprep.subr.bf16.mxu0 0
      %982 = vmatpush1.bf16.msra.mxu0 0
      %983 = vmatprep.subr.bf16.mxu0 0
      %984 = vmatpush1.bf16.msra.mxu0 0
      %985 = vmatprep.subr.bf16.mxu0 0
      %986 = vmatpush1.bf16.msra.mxu0 0
      %987 = vmatprep.subr.bf16.mxu0 0
      %988 = vmatpush1.bf16.msra.mxu0 0
      %989 = vmatprep.subr.bf16.mxu0 0
      %990 = vmatpush1.bf16.msra.mxu0 0
      %991 = vmatprep.subr.bf16.mxu0 0
      %992 = vmatpush1.bf16.msra.mxu0 0
      %993 = vmatprep.subr.bf16.mxu0 0
      %994 = vmatpush1.bf16.msra.mxu0 0
      %995 = vmatprep.mubr.bf16.mxu0 0
      %996 = vmatmul.mubr.bf16.gmra.mrb[0].mxu0 %v918
      %v997 = vpop.f32.mrb[0].mxu0
      %v998 = vadd.f32 %v955, %v997
      %v999 = vpop.f32.mrb[0].mxu0
      %v1000 = vadd.f32 %v957, %v999
      %v1001 = vpop.f32.mrb[0].mxu0
      %v1002 = vadd.f32 %v959, %v1001
      %v1003 = vpop.f32.mrb[0].mxu0
      %v1004 = vadd.f32 %v961, %v1003
      %1005 = vdwg.mxu0
      %v1006 = vld [vmem:[%s315] sm:$0xee]
      %v1007 = vld [vmem:[%s315 + $0x8] sm:$0xe]
      %s1008 = scalar_lea.vmem %s2, 576
      %v1009 = vld [vmem:[%s1008] sm:$0xff]
      %v1010 = vld [vmem:[%s1008 + $0x8] sm:$0xff]
      %v1011 = vld [vmem:[%s1008 + $0x10] sm:$0xff]
      %v1012 = vld [vmem:[%s1008 + $0x18] sm:$0xff]
      %v1013 = vld [vmem:[%s1008 + $0x20] sm:$0xff]
      %v1014 = vld [vmem:[%s1008 + $0x28] sm:$0xff]
      %v1015 = vld [vmem:[%s1008 + $0x30] sm:$0xff]
      %v1016 = vld [vmem:[%s1008 + $0x38] sm:$0xff]
      %v1017 = vld [vmem:[%s1008 + $0x40] sm:$0xff]
      %v1018 = vld [vmem:[%s1008 + $0x48] sm:$0xff]
      %v1019 = vld [vmem:[%s1008 + $0x50] sm:$0xff]
      %v1020 = vld [vmem:[%s1008 + $0x58] sm:$0xff]
      %v1021 = vld [vmem:[%s1008 + $0x60] sm:$0xff]
      %v1022 = vld [vmem:[%s1008 + $0x68] sm:$0xff]
      %v1023 = vld [vmem:[%s1008 + $0x70] sm:$0xff]
      %v1024 = vld [vmem:[%s1008 + $0x78] sm:$0xff]
      %v1025 = vld [vmem:[%s1008 + $0x80] sm:$0xff]
      %v1026 = vld [vmem:[%s1008 + $0x88] sm:$0xff]
      %v1027 = vld [vmem:[%s1008 + $0x90] sm:$0xff]
      %v1028 = vld [vmem:[%s1008 + $0x98] sm:$0xff]
      %v1029 = vld [vmem:[%s1008 + $0xa0] sm:$0xff]
      %v1030 = vld [vmem:[%s1008 + $0xa8] sm:$0xff]
      %v1031 = vld [vmem:[%s1008 + $0xb0] sm:$0xff]
      %v1032 = vld [vmem:[%s1008 + $0xb8] sm:$0xff]
      %v1033 = vld [vmem:[%s1008 + $0xc0] sm:$0xff]
      %v1034 = vld [vmem:[%s1008 + $0xc8] sm:$0xff]
      %v1035 = vld [vmem:[%s1008 + $0xd0] sm:$0xff]
      %v1036 = vld [vmem:[%s1008 + $0xd8] sm:$0xff]
      %v1037 = vld [vmem:[%s1008 + $0xe0] sm:$0xff]
      %v1038 = vld [vmem:[%s1008 + $0xe8] sm:$0xff]
      %v1039 = vld [vmem:[%s1008 + $0xf0] sm:$0xff]
      %v1040 = vld [vmem:[%s1008 + $0xf8] sm:$0xff]
      %v1041 = vld [vmem:[%s1008 + $0x100] sm:$0xff]
      %v1042 = vld [vmem:[%s1008 + $0x108] sm:$0xff]
      %v1043 = vld [vmem:[%s1008 + $0x110] sm:$0xff]
      %v1044 = vld [vmem:[%s1008 + $0x118] sm:$0xff]
      %v1047 = vunpack.c.l.b16 %v1006
      %v1048 = vunpack.c.h.b16 %v1006
      %v1049 = vunpack.c.l.b16 %v1007
      %v1050 = vpack.c.b16 %v415, %v1047
      %v1051 = vpack.c.b16 %v416, %v1048
      %v1052 = vpack.c.b16 %v417, %v1049
      %vm1053 = vcmask 1046528
      %v1054 = vrot.slane %v1050, 1
      %v1055 = vrot.slane %v424, 1
      %v1056 = vsel %vm1053, %v1054, %v1055
      %v1057 = vrot.slane %v1051, 1
      %v1058 = vrot.slane %v425, 1
      %v1059 = vsel %vm1053, %v1057, %v1058
      %v1060 = vrot.slane %v1052, 1
      %v1061 = vrot.slane %v426, 1
      %v1062 = vsel %vm1053, %v1060, %v1061
      %v1101 = vunpack.c.l.b16 %v1009
      %v1102 = vunpack.c.h.b16 %v1009
      %v1103 = vunpack.c.l.b16 %v1010
      %v1104 = vunpack.c.h.b16 %v1010
      %v1105 = vunpack.c.l.b16 %v1011
      %v1106 = vunpack.c.h.b16 %v1011
      %v1107 = vunpack.c.l.b16 %v1012
      %v1108 = vunpack.c.h.b16 %v1012
      %v1109 = vunpack.c.l.b16 %v1013
      %v1110 = vunpack.c.h.b16 %v1013
      %v1111 = vunpack.c.l.b16 %v1014
      %v1112 = vunpack.c.h.b16 %v1014
      %v1113 = vunpack.c.l.b16 %v1015
      %v1114 = vunpack.c.h.b16 %v1015
      %v1115 = vunpack.c.l.b16 %v1016
      %v1116 = vunpack.c.h.b16 %v1016
      %v1117 = vunpack.c.l.b16 %v1017
      %v1118 = vunpack.c.h.b16 %v1017
      %v1119 = vunpack.c.l.b16 %v1018
      %v1120 = vunpack.c.h.b16 %v1018
      %v1121 = vunpack.c.l.b16 %v1019
      %v1122 = vunpack.c.h.b16 %v1019
      %v1123 = vunpack.c.l.b16 %v1020
      %v1124 = vunpack.c.h.b16 %v1020
      %v1125 = vunpack.c.l.b16 %v1021
      %v1126 = vunpack.c.h.b16 %v1021
      %v1127 = vunpack.c.l.b16 %v1022
      %v1128 = vunpack.c.h.b16 %v1022
      %v1129 = vunpack.c.l.b16 %v1023
      %v1130 = vunpack.c.h.b16 %v1023
      %v1131 = vunpack.c.l.b16 %v1024
      %v1132 = vunpack.c.h.b16 %v1024
      %v1133 = vunpack.c.l.b16 %v1025
      %v1134 = vunpack.c.h.b16 %v1025
      %v1135 = vunpack.c.l.b16 %v1026
      %v1136 = vunpack.c.h.b16 %v1026
      %v1137 = vunpack.c.l.b16 %v1027
      %v1138 = vunpack.c.h.b16 %v1027
      %v1139 = vunpack.c.l.b16 %v1028
      %v1140 = vunpack.c.h.b16 %v1028
      %v1141 = vunpack.c.l.b16 %v1029
      %v1142 = vunpack.c.h.b16 %v1029
      %v1143 = vunpack.c.l.b16 %v1030
      %v1144 = vunpack.c.h.b16 %v1030
      %v1145 = vunpack.c.l.b16 %v1031
      %v1146 = vunpack.c.h.b16 %v1031
      %v1147 = vunpack.c.l.b16 %v1032
      %v1148 = vunpack.c.h.b16 %v1032
      %v1149 = vunpack.c.l.b16 %v1033
      %v1150 = vunpack.c.h.b16 %v1033
      %v1151 = vunpack.c.l.b16 %v1034
      %v1152 = vunpack.c.h.b16 %v1034
      %v1153 = vunpack.c.l.b16 %v1035
      %v1154 = vunpack.c.h.b16 %v1035
      %v1155 = vunpack.c.l.b16 %v1036
      %v1156 = vunpack.c.h.b16 %v1036
      %v1157 = vunpack.c.l.b16 %v1037
      %v1158 = vunpack.c.h.b16 %v1037
      %v1159 = vunpack.c.l.b16 %v1038
      %v1160 = vunpack.c.h.b16 %v1038
      %v1161 = vunpack.c.l.b16 %v1039
      %v1162 = vunpack.c.h.b16 %v1039
      %v1163 = vunpack.c.l.b16 %v1040
      %v1164 = vunpack.c.h.b16 %v1040
      %v1165 = vunpack.c.l.b16 %v1041
      %v1166 = vunpack.c.h.b16 %v1041
      %v1167 = vunpack.c.l.b16 %v1042
      %v1168 = vunpack.c.h.b16 %v1042
      %v1169 = vunpack.c.l.b16 %v1043
      %v1170 = vunpack.c.h.b16 %v1043
      %v1171 = vunpack.c.l.b16 %v1044
      %v1172 = vunpack.c.h.b16 %v1044
      %v1173 = vpack.c.b16 %v1103, %v1101
      %v1174 = vpack.c.b16 %v1104, %v1102
      %v1175 = vpack.c.b16 %v1107, %v1105
      %v1176 = vpack.c.b16 %v1108, %v1106
      %v1177 = vpack.c.b16 %v1111, %v1109
      %v1178 = vpack.c.b16 %v1112, %v1110
      %v1179 = vpack.c.b16 %v1115, %v1113
      %v1180 = vpack.c.b16 %v1116, %v1114
      %v1181 = vpack.c.b16 %v1119, %v1117
      %v1182 = vpack.c.b16 %v1120, %v1118
      %v1183 = vpack.c.b16 %v1123, %v1121
      %v1184 = vpack.c.b16 %v1124, %v1122
      %v1185 = vpack.c.b16 %v1127, %v1125
      %v1186 = vpack.c.b16 %v1128, %v1126
      %v1187 = vpack.c.b16 %v1131, %v1129
      %v1188 = vpack.c.b16 %v1132, %v1130
      %v1189 = vpack.c.b16 %v1135, %v1133
      %v1190 = vpack.c.b16 %v1136, %v1134
      %v1191 = vpack.c.b16 %v1139, %v1137
      %v1192 = vpack.c.b16 %v1140, %v1138
      %v1193 = vpack.c.b16 %v1143, %v1141
      %v1194 = vpack.c.b16 %v1144, %v1142
      %v1195 = vpack.c.b16 %v1147, %v1145
      %v1196 = vpack.c.b16 %v1148, %v1146
      %v1197 = vpack.c.b16 %v1151, %v1149
      %v1198 = vpack.c.b16 %v1152, %v1150
      %v1199 = vpack.c.b16 %v1155, %v1153
      %v1200 = vpack.c.b16 %v1156, %v1154
      %v1201 = vpack.c.b16 %v1159, %v1157
      %v1202 = vpack.c.b16 %v1160, %v1158
      %v1203 = vpack.c.b16 %v1163, %v1161
      %v1204 = vpack.c.b16 %v1164, %v1162
      %v1205 = vpack.c.b16 %v1167, %v1165
      %v1206 = vpack.c.b16 %v1168, %v1166
      %v1207 = vpack.c.b16 %v1171, %v1169
      %v1208 = vpack.c.b16 %v1172, %v1170
      %v1246 = vsel %vm646, %v1062, 0
      %1248 = vmatprep.subr.bf16.mxu0 %v1174
      %1249 = vmatpush1.bf16.msra.mxu0 %v1173
      %1250 = vmatprep.subr.bf16.mxu0 %v1176
      %1251 = vmatpush1.bf16.msra.mxu0 %v1175
      %1252 = vmatprep.subr.bf16.mxu0 %v1178
      %1253 = vmatpush1.bf16.msra.mxu0 %v1177
      %1254 = vmatprep.subr.bf16.mxu0 %v1180
      %1255 = vmatpush1.bf16.msra.mxu0 %v1179
      %1256 = vmatprep.subr.bf16.mxu0 %v1182
      %1257 = vmatpush1.bf16.msra.mxu0 %v1181
      %1258 = vmatprep.subr.bf16.mxu0 %v1184
      %1259 = vmatpush1.bf16.msra.mxu0 %v1183
      %1260 = vmatprep.subr.bf16.mxu0 %v1186
      %1261 = vmatpush1.bf16.msra.mxu0 %v1185
      %1262 = vmatprep.subr.bf16.mxu0 %v1188
      %1263 = vmatpush1.bf16.msra.mxu0 %v1187
      %1264 = vmatprep.subr.bf16.mxu0 %v1190
      %1265 = vmatpush1.bf16.msra.mxu0 %v1189
      %1266 = vmatprep.subr.bf16.mxu0 %v1192
      %1267 = vmatpush1.bf16.msra.mxu0 %v1191
      %1268 = vmatprep.subr.bf16.mxu0 %v1194
      %1269 = vmatpush1.bf16.msra.mxu0 %v1193
      %1270 = vmatprep.subr.bf16.mxu0 %v1196
      %1271 = vmatpush1.bf16.msra.mxu0 %v1195
      %1272 = vmatprep.subr.bf16.mxu0 %v1198
      %1273 = vmatpush1.bf16.msra.mxu0 %v1197
      %1274 = vmatprep.subr.bf16.mxu0 %v1200
      %1275 = vmatpush1.bf16.msra.mxu0 %v1199
      %1276 = vmatprep.subr.bf16.mxu0 %v1202
      %1277 = vmatpush1.bf16.msra.mxu0 %v1201
      %1278 = vmatprep.subr.bf16.mxu0 %v1204
      %1279 = vmatpush1.bf16.msra.mxu0 %v1203
      %1280 = vmatprep.mubr.bf16.mxu0 %v1059
      %1281 = vmatmul.mubr.bf16.gmra.mrb[0].mxu0 %v1056
      %v1282 = vpop.f32.mrb[0].mxu0
      %v1283 = vadd.f32 0.0, %v1282
      %v1284 = vpop.f32.mrb[0].mxu0
      %v1285 = vadd.f32 0.0, %v1284
      %v1286 = vpop.f32.mrb[0].mxu0
      %v1287 = vadd.f32 0.0, %v1286
      %v1288 = vpop.f32.mrb[0].mxu0
      %v1289 = vadd.f32 0.0, %v1288
      %1290 = vdwg.mxu0
      %1291 = vmatprep.subr.bf16.mxu0 %v1206
      %1292 = vmatpush1.bf16.msra.mxu0 %v1205
      %1293 = vmatprep.subr.bf16.mxu0 %v1208
      %1294 = vmatpush1.bf16.msra.mxu0 %v1207
      %1295 = vmatprep.subr.bf16.mxu0 0
      %1296 = vmatpush1.bf16.msra.mxu0 0
      %1297 = vmatprep.subr.bf16.mxu0 0
      %1298 = vmatpush1.bf16.msra.mxu0 0
      %1299 = vmatprep.subr.bf16.mxu0 0
      %1300 = vmatpush1.bf16.msra.mxu0 0
      %1301 = vmatprep.subr.bf16.mxu0 0
      %1302 = vmatpush1.bf16.msra.mxu0 0
      %1303 = vmatprep.subr.bf16.mxu0 0
      %1304 = vmatpush1.bf16.msra.mxu0 0
      %1305 = vmatprep.subr.bf16.mxu0 0
      %1306 = vmatpush1.bf16.msra.mxu0 0
      %1307 = vmatprep.subr.bf16.mxu0 0
      %1308 = vmatpush1.bf16.msra.mxu0 0
      %1309 = vmatprep.subr.bf16.mxu0 0
      %1310 = vmatpush1.bf16.msra.mxu0 0
      %1311 = vmatprep.subr.bf16.mxu0 0
      %1312 = vmatpush1.bf16.msra.mxu0 0
      %1313 = vmatprep.subr.bf16.mxu0 0
      %1314 = vmatpush1.bf16.msra.mxu0 0
      %1315 = vmatprep.subr.bf16.mxu0 0
      %1316 = vmatpush1.bf16.msra.mxu0 0
      %1317 = vmatprep.subr.bf16.mxu0 0
      %1318 = vmatpush1.bf16.msra.mxu0 0
      %1319 = vmatprep.subr.bf16.mxu0 0
      %1320 = vmatpush1.bf16.msra.mxu0 0
      %1321 = vmatprep.subr.bf16.mxu0 0
      %1322 = vmatpush1.bf16.msra.mxu0 0
      %1323 = vmatprep.mubr.bf16.mxu0 0
      %1324 = vmatmul.mubr.bf16.gmra.mrb[0].mxu0 %v1246
      %v1325 = vpop.f32.mrb[0].mxu0
      %v1326 = vadd.f32 %v1283, %v1325
      %v1327 = vpop.f32.mrb[0].mxu0
      %v1328 = vadd.f32 %v1285, %v1327
      %v1329 = vpop.f32.mrb[0].mxu0
      %v1330 = vadd.f32 %v1287, %v1329
      %v1331 = vpop.f32.mrb[0].mxu0
      %v1332 = vadd.f32 %v1289, %v1331
      %1333 = vdwg.mxu0
      %v1334 = vadd.f32 %v998, %v1326
      %v1335 = vadd.f32 %v1000, %v1328
      %v1336 = vadd.f32 %v1002, %v1330
      %v1337 = vadd.f32 %v1004, %v1332
      %v1338 = vld [vmem:[%s3] sm:$0x3]
      %v1340 = vlaneseq
      %v1341 = vshrl.u32 %v1340, 7
      %v1342 = vsub.s32 0, %v1341
      %v1343 = vrot.slane %v1338, %v1342
      %v1344 = vlaneseq
      %v1345 = vshrl.u32 %v1344, 7
      %v1346 = vsub.s32 1, %v1345
      %v1347 = vrot.slane %v1338, %v1346
      %v1350 = vmul.f32 %v1334, %v1343
      %v1351 = vmul.f32 %v1335, %v1347
      %v1352 = vmul.f32 %v1336, %v1343
      %v1353 = vmul.f32 %v1337, %v1347
      %v1354 = vld [vmem:[%s4] sm:$0x3]
      %v1356 = vlaneseq
      %v1357 = vshrl.u32 %v1356, 7
      %v1358 = vsub.s32 0, %v1357
      %v1359 = vrot.slane %v1354, %v1358
      %v1360 = vlaneseq
      %v1361 = vshrl.u32 %v1360, 7
      %v1362 = vsub.s32 1, %v1361
      %v1363 = vrot.slane %v1354, %v1362
      %v1366 = vadd.f32 %v1350, %v1359
      %v1367 = vadd.f32 %v1351, %v1363
      %v1368 = vadd.f32 %v1352, %v1359
      %v1369 = vadd.f32 %v1353, %v1363
      %v1370 = vmax.f32 %v1366, 0.0
      %v1371 = vmax.f32 %v1367, 0.0
      %v1372 = vmax.f32 %v1368, 0.0
      %v1373 = vmax.f32 %v1369, 0.0
      %1374 = vst [vmem:[#allocation2] sm:$0xff] 0.0
      %1375 = vst [vmem:[#allocation2 + $0x8] sm:$0xff] 0.0
      %1376 = vst.msk [vmem:[#allocation2 + $0x10] sm:$0xff] %vm646, 0.0
      %1377 = vst [vmem:[#allocation2 + $0x18] sm:$0xff] 0.0
      %1378 = vst [vmem:[#allocation2 + $0x20] sm:$0xff] 0.0
      %1379 = vst.msk [vmem:[#allocation2 + $0x28] sm:$0xff] %vm646, 0.0
      %1380 = vst [vmem:[#allocation2 + $0x30] sm:$0x3] 0.0
      %1381 = vst [vmem:[#allocation2 + $0x38] sm:$0x3] 0.0
      %vm1382 = vcmask 254976
      %1383 = vst.msk [vmem:[#allocation2 + $0x40] sm:$0x3] %vm1382, 0.0
      %vm1388 = vcmask 1040384
      %v1389 = vrot.slane %v1370, 7
      %v1390 = vrot.slane %v1371, 7
      %v1391 = vrot.slane %v1372, 7
      %v1392 = vsel %vm1388, %v1389, %v1391
      %v1393 = vrot.slane %v1373, 7
      %v1394 = vsel %vm1388, %v1390, %v1393
      %1395 = vrot.lane.b32.xlu0 %v1389, 16
      %v1396 = vpop.permute.xlu0 %1395
      %1397 = vrot.lane.b32.xlu0 %v1390, 16
      %v1398 = vpop.permute.xlu0 %1397
      %1399 = vrot.lane.b32.xlu0 %v1392, 16
      %v1400 = vpop.permute.xlu0 %1399
      %1401 = vrot.lane.b32.xlu0 %v1394, 16
      %v1402 = vpop.permute.xlu0 %1401
      %1403 = vrot.lane.b32.xlu0 %v1391, 16
      %v1404 = vpop.permute.xlu0 %1403
      %1405 = vrot.lane.b32.xlu0 %v1393, 16
      %v1406 = vpop.permute.xlu0 %1405
      %vm1407 = vcmask 130048
      %v1408 = vsel %vm1407, %v1396, %v1398
      %v1409 = vsel %vm1407, %v1400, %v1402
      %v1410 = vsel %vm1407, %v1404, %v1406
      %vm1420 = vcmask 1047681
      %1421 = vst.msk [vmem:[#allocation2] sm:$0xfe] %vm1420, %v1396
      %1422 = vst [vmem:[#allocation2 + $0x8] sm:$0xfe] %v1408
      %vm1423 = vcmask 130049
      %1424 = vst.msk [vmem:[#allocation2 + $0x10] sm:$0xfe] %vm1423, %v1398
      %vm1425 = vcmask 1047680
      %1426 = vst.msk [vmem:[#allocation2 + $0x18] sm:$0xff] %vm1425, %v1400
      %1427 = vst [vmem:[#allocation2 + $0x20] sm:$0xff] %v1409
      %1428 = vst.msk [vmem:[#allocation2 + $0x28] sm:$0xff] %vm1407, %v1402
      %vm1429 = vcmask 1040512
      %1430 = vst.msk [vmem:[#allocation2 + $0x30] sm:$0x1] %vm1429, %v1404
      %1431 = vst [vmem:[#allocation2 + $0x38] sm:$0x1] %v1410
      %vm1432 = vcmask 122880
      %1433 = vst.msk [vmem:[#allocation2 + $0x40] sm:$0x1] %vm1432, %v1406
      %v1434 = vld [vmem:[#allocation2] sm:$0xff]
      %v1435 = vld [vmem:[#allocation2 + $0x8] sm:$0xff]
      %v1436 = vld [vmem:[#allocation2 + $0x10] sm:$0xff]
      %v1437 = vld [vmem:[#allocation2 + $0x18] sm:$0xff]
      %v1438 = vld [vmem:[#allocation2 + $0x20] sm:$0xff]
      %v1439 = vld [vmem:[#allocation2 + $0x28] sm:$0xff]
      %v1440 = vpack.c.bf16 %v1437, %v1434
      %v1441 = vpack.c.bf16 %v1438, %v1435
      %v1442 = vpack.c.bf16 %v1439, %v1436
      %v1443 = vld [vmem:[%s5] sm:$0xff]
      %v1444 = vld [vmem:[%s5 + $0x8] sm:$0xff]
      %v1445 = vld [vmem:[%s5 + $0x10] sm:$0xff]
      %v1446 = vld [vmem:[%s5 + $0x18] sm:$0xff]
      %v1447 = vld [vmem:[%s5 + $0x20] sm:$0xff]
      %v1448 = vld [vmem:[%s5 + $0x28] sm:$0xff]
      %v1449 = vld [vmem:[%s5 + $0x30] sm:$0xff]
      %v1450 = vld [vmem:[%s5 + $0x38] sm:$0xff]
      %v1451 = vld [vmem:[%s5 + $0x40] sm:$0xff]
      %v1452 = vld [vmem:[%s5 + $0x48] sm:$0xff]
      %v1453 = vld [vmem:[%s5 + $0x50] sm:$0xff]
      %v1454 = vld [vmem:[%s5 + $0x58] sm:$0xff]
      %v1455 = vld [vmem:[%s5 + $0x60] sm:$0xff]
      %v1456 = vld [vmem:[%s5 + $0x68] sm:$0xff]
      %v1457 = vld [vmem:[%s5 + $0x70] sm:$0xff]
      %v1458 = vld [vmem:[%s5 + $0x78] sm:$0xff]
      %v1459 = vld [vmem:[%s5 + $0x80] sm:$0xff]
      %v1460 = vld [vmem:[%s5 + $0x88] sm:$0xff]
      %v1461 = vld [vmem:[%s5 + $0x90] sm:$0xff]
      %v1462 = vld [vmem:[%s5 + $0x98] sm:$0xff]
      %v1463 = vld [vmem:[%s5 + $0xa0] sm:$0xff]
      %v1464 = vld [vmem:[%s5 + $0xa8] sm:$0xff]
      %v1465 = vld [vmem:[%s5 + $0xb0] sm:$0xff]
      %v1466 = vld [vmem:[%s5 + $0xb8] sm:$0xff]
      %v1467 = vld [vmem:[%s5 + $0xc0] sm:$0xff]
      %v1468 = vld [vmem:[%s5 + $0xc8] sm:$0xff]
      %v1469 = vld [vmem:[%s5 + $0xd0] sm:$0xff]
      %v1470 = vld [vmem:[%s5 + $0xd8] sm:$0xff]
      %v1471 = vld [vmem:[%s5 + $0xe0] sm:$0xff]
      %v1472 = vld [vmem:[%s5 + $0xe8] sm:$0xff]
      %v1473 = vld [vmem:[%s5 + $0xf0] sm:$0xff]
      %v1474 = vld [vmem:[%s5 + $0xf8] sm:$0xff]
      %v1475 = vld [vmem:[%s5 + $0x100] sm:$0xff]
      %v1476 = vld [vmem:[%s5 + $0x108] sm:$0xff]
      %v1477 = vld [vmem:[%s5 + $0x110] sm:$0xff]
      %v1478 = vld [vmem:[%s5 + $0x118] sm:$0xff]
      %v1479 = vld [vmem:[#allocation2] sm:$0xfe]
      %v1480 = vld [vmem:[#allocation2 + $0x8] sm:$0xfe]
      %v1481 = vld [vmem:[#allocation2 + $0x10] sm:$0xfe]
      %v1482 = vld [vmem:[#allocation2 + $0x30] sm:$0x1]
      %v1483 = vld [vmem:[#allocation2 + $0x38] sm:$0x1]
      %v1484 = vld [vmem:[#allocation2 + $0x40] sm:$0x1]
      %v1485 = vpack.c.bf16 %v1437, %v1479
      %v1486 = vpack.c.bf16 %v1438, %v1480
      %v1487 = vpack.c.bf16 %v1439, %v1481
      %v1488 = vpack.c.bf16 %v1482, %v1482
      %v1489 = vpack.c.bf16 %v1483, %v1483
      %v1490 = vpack.c.bf16 %v1484, %v1484
      %s1491 = scalar_lea.vmem %s5, 288
      %v1492 = vld [vmem:[%s1491] sm:$0xff]
      %v1493 = vld [vmem:[%s1491 + $0x8] sm:$0xff]
      %v1494 = vld [vmem:[%s1491 + $0x10] sm:$0xff]
      %v1495 = vld [vmem:[%s1491 + $0x18] sm:$0xff]
      %v1496 = vld [vmem:[%s1491 + $0x20] sm:$0xff]
      %v1497 = vld [vmem:[%s1491 + $0x28] sm:$0xff]
      %v1498 = vld [vmem:[%s1491 + $0x30] sm:$0xff]
      %v1499 = vld [vmem:[%s1491 + $0x38] sm:$0xff]
      %v1500 = vld [vmem:[%s1491 + $0x40] sm:$0xff]
      %v1501 = vld [vmem:[%s1491 + $0x48] sm:$0xff]
      %v1502 = vld [vmem:[%s1491 + $0x50] sm:$0xff]
      %v1503 = vld [vmem:[%s1491 + $0x58] sm:$0xff]
      %v1504 = vld [vmem:[%s1491 + $0x60] sm:$0xff]
      %v1505 = vld [vmem:[%s1491 + $0x68] sm:$0xff]
      %v1506 = vld [vmem:[%s1491 + $0x70] sm:$0xff]
      %v1507 = vld [vmem:[%s1491 + $0x78] sm:$0xff]
      %v1508 = vld [vmem:[%s1491 + $0x80] sm:$0xff]
      %v1509 = vld [vmem:[%s1491 + $0x88] sm:$0xff]
      %v1510 = vld [vmem:[%s1491 + $0x90] sm:$0xff]
      %v1511 = vld [vmem:[%s1491 + $0x98] sm:$0xff]
      %v1512 = vld [vmem:[%s1491 + $0xa0] sm:$0xff]
      %v1513 = vld [vmem:[%s1491 + $0xa8] sm:$0xff]
      %v1514 = vld [vmem:[%s1491 + $0xb0] sm:$0xff]
      %v1515 = vld [vmem:[%s1491 + $0xb8] sm:$0xff]
      %v1516 = vld [vmem:[%s1491 + $0xc0] sm:$0xff]
      %v1517 = vld [vmem:[%s1491 + $0xc8] sm:$0xff]
      %v1518 = vld [vmem:[%s1491 + $0xd0] sm:$0xff]
      %v1519 = vld [vmem:[%s1491 + $0xd8] sm:$0xff]
      %v1520 = vld [vmem:[%s1491 + $0xe0] sm:$0xff]
      %v1521 = vld [vmem:[%s1491 + $0xe8] sm:$0xff]
      %v1522 = vld [vmem:[%s1491 + $0xf0] sm:$0xff]
      %v1523 = vld [vmem:[%s1491 + $0xf8] sm:$0xff]
      %v1524 = vld [vmem:[%s1491 + $0x100] sm:$0xff]
      %v1525 = vld [vmem:[%s1491 + $0x108] sm:$0xff]
      %v1526 = vld [vmem:[%s1491 + $0x110] sm:$0xff]
      %v1527 = vld [vmem:[%s1491 + $0x118] sm:$0xff]
      %v1529 = vshrl.u32 %v1485, 16
      %v1531 = vshll.u32 %v1485, 16
      %v1533 = vrot.slane %v1531, 1
      %v1534 = vor.u32 %v1529, %v1533
      %v1536 = vshll.u32 %v1488, 16
      %v1538 = vrot.slane %v1536, 1
      %v1539 = vsel %vm427, %v1534, %v1538
      %v1541 = vshrl.u32 %v1486, 16
      %v1543 = vshll.u32 %v1486, 16
      %v1545 = vrot.slane %v1543, 1
      %v1546 = vor.u32 %v1541, %v1545
      %v1548 = vshll.u32 %v1489, 16
      %v1550 = vrot.slane %v1548, 1
      %v1551 = vsel %vm427, %v1546, %v1550
      %v1553 = vshrl.u32 %v1487, 16
      %v1555 = vshll.u32 %v1487, 16
      %v1557 = vrot.slane %v1555, 1
      %v1558 = vor.u32 %v1553, %v1557
      %v1560 = vshll.u32 %v1490, 16
      %v1562 = vrot.slane %v1560, 1
      %v1563 = vsel %vm427, %v1558, %v1562
      %v1602 = vunpack.c.l.b16 %v1492
      %v1603 = vunpack.c.h.b16 %v1492
      %v1604 = vunpack.c.l.b16 %v1493
      %v1605 = vunpack.c.h.b16 %v1493
      %v1606 = vunpack.c.l.b16 %v1494
      %v1607 = vunpack.c.h.b16 %v1494
      %v1608 = vunpack.c.l.b16 %v1495
      %v1609 = vunpack.c.h.b16 %v1495
      %v1610 = vunpack.c.l.b16 %v1496
      %v1611 = vunpack.c.h.b16 %v1496
      %v1612 = vunpack.c.l.b16 %v1497
      %v1613 = vunpack.c.h.b16 %v1497
      %v1614 = vunpack.c.l.b16 %v1498
      %v1615 = vunpack.c.h.b16 %v1498
      %v1616 = vunpack.c.l.b16 %v1499
      %v1617 = vunpack.c.h.b16 %v1499
      %v1618 = vunpack.c.l.b16 %v1500
      %v1619 = vunpack.c.h.b16 %v1500
      %v1620 = vunpack.c.l.b16 %v1501
      %v1621 = vunpack.c.h.b16 %v1501
      %v1622 = vunpack.c.l.b16 %v1502
      %v1623 = vunpack.c.h.b16 %v1502
      %v1624 = vunpack.c.l.b16 %v1503
      %v1625 = vunpack.c.h.b16 %v1503
      %v1626 = vunpack.c.l.b16 %v1504
      %v1627 = vunpack.c.h.b16 %v1504
      %v1628 = vunpack.c.l.b16 %v1505
      %v1629 = vunpack.c.h.b16 %v1505
      %v1630 = vunpack.c.l.b16 %v1506
      %v1631 = vunpack.c.h.b16 %v1506
      %v1632 = vunpack.c.l.b16 %v1507
      %v1633 = vunpack.c.h.b16 %v1507
      %v1634 = vunpack.c.l.b16 %v1508
      %v1635 = vunpack.c.h.b16 %v1508
      %v1636 = vunpack.c.l.b16 %v1509
      %v1637 = vunpack.c.h.b16 %v1509
      %v1638 = vunpack.c.l.b16 %v1510
      %v1639 = vunpack.c.h.b16 %v1510
      %v1640 = vunpack.c.l.b16 %v1511
      %v1641 = vunpack.c.h.b16 %v1511
      %v1642 = vunpack.c.l.b16 %v1512
      %v1643 = vunpack.c.h.b16 %v1512
      %v1644 = vunpack.c.l.b16 %v1513
      %v1645 = vunpack.c.h.b16 %v1513
      %v1646 = vunpack.c.l.b16 %v1514
      %v1647 = vunpack.c.h.b16 %v1514
      %v1648 = vunpack.c.l.b16 %v1515
      %v1649 = vunpack.c.h.b16 %v1515
      %v1650 = vunpack.c.l.b16 %v1516
      %v1651 = vunpack.c.h.b16 %v1516
      %v1652 = vunpack.c.l.b16 %v1517
      %v1653 = vunpack.c.h.b16 %v1517
      %v1654 = vunpack.c.l.b16 %v1518
      %v1655 = vunpack.c.h.b16 %v1518
      %v1656 = vunpack.c.l.b16 %v1519
      %v1657 = vunpack.c.h.b16 %v1519
      %v1658 = vunpack.c.l.b16 %v1520
      %v1659 = vunpack.c.h.b16 %v1520
      %v1660 = vunpack.c.l.b16 %v1521
      %v1661 = vunpack.c.h.b16 %v1521
      %v1662 = vunpack.c.l.b16 %v1522
      %v1663 = vunpack.c.h.b16 %v1522
      %v1664 = vunpack.c.l.b16 %v1523
      %v1665 = vunpack.c.h.b16 %v1523
      %v1666 = vunpack.c.l.b16 %v1524
      %v1667 = vunpack.c.h.b16 %v1524
      %v1668 = vunpack.c.l.b16 %v1525
      %v1669 = vunpack.c.h.b16 %v1525
      %v1670 = vunpack.c.l.b16 %v1526
      %v1671 = vunpack.c.h.b16 %v1526
      %v1672 = vunpack.c.l.b16 %v1527
      %v1673 = vunpack.c.h.b16 %v1527
      %v1674 = vpack.c.b16 %v1604, %v1602
      %v1675 = vpack.c.b16 %v1605, %v1603
      %v1676 = vpack.c.b16 %v1608, %v1606
      %v1677 = vpack.c.b16 %v1609, %v1607
      %v1678 = vpack.c.b16 %v1612, %v1610
      %v1679 = vpack.c.b16 %v1613, %v1611
      %v1680 = vpack.c.b16 %v1616, %v1614
      %v1681 = vpack.c.b16 %v1617, %v1615
      %v1682 = vpack.c.b16 %v1620, %v1618
      %v1683 = vpack.c.b16 %v1621, %v1619
      %v1684 = vpack.c.b16 %v1624, %v1622
      %v1685 = vpack.c.b16 %v1625, %v1623
      %v1686 = vpack.c.b16 %v1628, %v1626
      %v1687 = vpack.c.b16 %v1629, %v1627
      %v1688 = vpack.c.b16 %v1632, %v1630
      %v1689 = vpack.c.b16 %v1633, %v1631
      %v1690 = vpack.c.b16 %v1636, %v1634
      %v1691 = vpack.c.b16 %v1637, %v1635
      %v1692 = vpack.c.b16 %v1640, %v1638
      %v1693 = vpack.c.b16 %v1641, %v1639
      %v1694 = vpack.c.b16 %v1644, %v1642
      %v1695 = vpack.c.b16 %v1645, %v1643
      %v1696 = vpack.c.b16 %v1648, %v1646
      %v1697 = vpack.c.b16 %v1649, %v1647
      %v1698 = vpack.c.b16 %v1652, %v1650
      %v1699 = vpack.c.b16 %v1653, %v1651
      %v1700 = vpack.c.b16 %v1656, %v1654
      %v1701 = vpack.c.b16 %v1657, %v1655
      %v1702 = vpack.c.b16 %v1660, %v1658
      %v1703 = vpack.c.b16 %v1661, %v1659
      %v1704 = vpack.c.b16 %v1664, %v1662
      %v1705 = vpack.c.b16 %v1665, %v1663
      %v1706 = vpack.c.b16 %v1668, %v1666
      %v1707 = vpack.c.b16 %v1669, %v1667
      %v1708 = vpack.c.b16 %v1672, %v1670
      %v1709 = vpack.c.b16 %v1673, %v1671
      %v1747 = vsel %vm646, %v1563, 0
      %1749 = vmatprep.subr.bf16.mxu0 %v1675
      %1750 = vmatpush1.bf16.msra.mxu0 %v1674
      %1751 = vmatprep.subr.bf16.mxu0 %v1677
      %1752 = vmatpush1.bf16.msra.mxu0 %v1676
      %1753 = vmatprep.subr.bf16.mxu0 %v1679
      %1754 = vmatpush1.bf16.msra.mxu0 %v1678
      %1755 = vmatprep.subr.bf16.mxu0 %v1681
      %1756 = vmatpush1.bf16.msra.mxu0 %v1680
      %1757 = vmatprep.subr.bf16.mxu0 %v1683
      %1758 = vmatpush1.bf16.msra.mxu0 %v1682
      %1759 = vmatprep.subr.bf16.mxu0 %v1685
      %1760 = vmatpush1.bf16.msra.mxu0 %v1684
      %1761 = vmatprep.subr.bf16.mxu0 %v1687
      %1762 = vmatpush1.bf16.msra.mxu0 %v1686
      %1763 = vmatprep.subr.bf16.mxu0 %v1689
      %1764 = vmatpush1.bf16.msra.mxu0 %v1688
      %1765 = vmatprep.subr.bf16.mxu0 %v1691
      %1766 = vmatpush1.bf16.msra.mxu0 %v1690
      %1767 = vmatprep.subr.bf16.mxu0 %v1693
      %1768 = vmatpush1.bf16.msra.mxu0 %v1692
      %1769 = vmatprep.subr.bf16.mxu0 %v1695
      %1770 = vmatpush1.bf16.msra.mxu0 %v1694
      %1771 = vmatprep.subr.bf16.mxu0 %v1697
      %1772 = vmatpush1.bf16.msra.mxu0 %v1696
      %1773 = vmatprep.subr.bf16.mxu0 %v1699
      %1774 = vmatpush1.bf16.msra.mxu0 %v1698
      %1775 = vmatprep.subr.bf16.mxu0 %v1701
      %1776 = vmatpush1.bf16.msra.mxu0 %v1700
      %1777 = vmatprep.subr.bf16.mxu0 %v1703
      %1778 = vmatpush1.bf16.msra.mxu0 %v1702
      %1779 = vmatprep.subr.bf16.mxu0 %v1705
      %1780 = vmatpush1.bf16.msra.mxu0 %v1704
      %1781 = vmatprep.mubr.bf16.mxu0 %v1551
      %1782 = vmatmul.mubr.bf16.gmra.mrb[0].mxu0 %v1539
      %v1783 = vpop.f32.mrb[0].mxu0
      %v1784 = vadd.f32 0.0, %v1783
      %v1785 = vpop.f32.mrb[0].mxu0
      %v1786 = vadd.f32 0.0, %v1785
      %v1787 = vpop.f32.mrb[0].mxu0
      %v1788 = vadd.f32 0.0, %v1787
      %v1789 = vpop.f32.mrb[0].mxu0
      %v1790 = vadd.f32 0.0, %v1789
      %1791 = vdwg.mxu0
      %1792 = vmatprep.subr.bf16.mxu0 %v1707
      %1793 = vmatpush1.bf16.msra.mxu0 %v1706
      %1794 = vmatprep.subr.bf16.mxu0 %v1709
      %1795 = vmatpush1.bf16.msra.mxu0 %v1708
      %1796 = vmatprep.subr.bf16.mxu0 0
      %1797 = vmatpush1.bf16.msra.mxu0 0
      %1798 = vmatprep.subr.bf16.mxu0 0
      %1799 = vmatpush1.bf16.msra.mxu0 0
      %1800 = vmatprep.subr.bf16.mxu0 0
      %1801 = vmatpush1.bf16.msra.mxu0 0
      %1802 = vmatprep.subr.bf16.mxu0 0
      %1803 = vmatpush1.bf16.msra.mxu0 0
      %1804 = vmatprep.subr.bf16.mxu0 0
      %1805 = vmatpush1.bf16.msra.mxu0 0
      %1806 = vmatprep.subr.bf16.mxu0 0
      %1807 = vmatpush1.bf16.msra.mxu0 0
      %1808 = vmatprep.subr.bf16.mxu0 0
      %1809 = vmatpush1.bf16.msra.mxu0 0
      %1810 = vmatprep.subr.bf16.mxu0 0
      %1811 = vmatpush1.bf16.msra.mxu0 0
      %1812 = vmatprep.subr.bf16.mxu0 0
      %1813 = vmatpush1.bf16.msra.mxu0 0
      %1814 = vmatprep.subr.bf16.mxu0 0
      %1815 = vmatpush1.bf16.msra.mxu0 0
      %1816 = vmatprep.subr.bf16.mxu0 0
      %1817 = vmatpush1.bf16.msra.mxu0 0
      %1818 = vmatprep.subr.bf16.mxu0 0
      %1819 = vmatpush1.bf16.msra.mxu0 0
      %1820 = vmatprep.subr.bf16.mxu0 0
      %1821 = vmatpush1.bf16.msra.mxu0 0
      %1822 = vmatprep.subr.bf16.mxu0 0
      %1823 = vmatpush1.bf16.msra.mxu0 0
      %1824 = vmatprep.mubr.bf16.mxu0 0
      %1825 = vmatmul.mubr.bf16.gmra.mrb[0].mxu0 %v1747
      %v1826 = vpop.f32.mrb[0].mxu0
      %v1827 = vadd.f32 %v1784, %v1826
      %v1828 = vpop.f32.mrb[0].mxu0
      %v1829 = vadd.f32 %v1786, %v1828
      %v1830 = vpop.f32.mrb[0].mxu0
      %v1831 = vadd.f32 %v1788, %v1830
      %v1832 = vpop.f32.mrb[0].mxu0
      %v1833 = vadd.f32 %v1790, %v1832
      %1834 = vdwg.mxu0
      %v1871 = vunpack.c.l.b16 %v1443
      %v1872 = vunpack.c.h.b16 %v1443
      %v1873 = vunpack.c.l.b16 %v1444
      %v1874 = vunpack.c.h.b16 %v1444
      %v1875 = vunpack.c.l.b16 %v1445
      %v1876 = vunpack.c.h.b16 %v1445
      %v1877 = vunpack.c.l.b16 %v1446
      %v1878 = vunpack.c.h.b16 %v1446
      %v1879 = vunpack.c.l.b16 %v1447
      %v1880 = vunpack.c.h.b16 %v1447
      %v1881 = vunpack.c.l.b16 %v1448
      %v1882 = vunpack.c.h.b16 %v1448
      %v1883 = vunpack.c.l.b16 %v1449
      %v1884 = vunpack.c.h.b16 %v1449
      %v1885 = vunpack.c.l.b16 %v1450
      %v1886 = vunpack.c.h.b16 %v1450
      %v1887 = vunpack.c.l.b16 %v1451
      %v1888 = vunpack.c.h.b16 %v1451
      %v1889 = vunpack.c.l.b16 %v1452
      %v1890 = vunpack.c.h.b16 %v1452
      %v1891 = vunpack.c.l.b16 %v1453
      %v1892 = vunpack.c.h.b16 %v1453
      %v1893 = vunpack.c.l.b16 %v1454
      %v1894 = vunpack.c.h.b16 %v1454
      %v1895 = vunpack.c.l.b16 %v1455
      %v1896 = vunpack.c.h.b16 %v1455
      %v1897 = vunpack.c.l.b16 %v1456
      %v1898 = vunpack.c.h.b16 %v1456
      %v1899 = vunpack.c.l.b16 %v1457
      %v1900 = vunpack.c.h.b16 %v1457
      %v1901 = vunpack.c.l.b16 %v1458
      %v1902 = vunpack.c.h.b16 %v1458
      %v1903 = vunpack.c.l.b16 %v1459
      %v1904 = vunpack.c.h.b16 %v1459
      %v1905 = vunpack.c.l.b16 %v1460
      %v1906 = vunpack.c.h.b16 %v1460
      %v1907 = vunpack.c.l.b16 %v1461
      %v1908 = vunpack.c.h.b16 %v1461
      %v1909 = vunpack.c.l.b16 %v1462
      %v1910 = vunpack.c.h.b16 %v1462
      %v1911 = vunpack.c.l.b16 %v1463
      %v1912 = vunpack.c.h.b16 %v1463
      %v1913 = vunpack.c.l.b16 %v1464
      %v1914 = vunpack.c.h.b16 %v1464
      %v1915 = vunpack.c.l.b16 %v1465
      %v1916 = vunpack.c.h.b16 %v1465
      %v1917 = vunpack.c.l.b16 %v1466
      %v1918 = vunpack.c.h.b16 %v1466
      %v1919 = vunpack.c.l.b16 %v1467
      %v1920 = vunpack.c.h.b16 %v1467
      %v1921 = vunpack.c.l.b16 %v1468
      %v1922 = vunpack.c.h.b16 %v1468
      %v1923 = vunpack.c.l.b16 %v1469
      %v1924 = vunpack.c.h.b16 %v1469
      %v1925 = vunpack.c.l.b16 %v1470
      %v1926 = vunpack.c.h.b16 %v1470
      %v1927 = vunpack.c.l.b16 %v1471
      %v1928 = vunpack.c.h.b16 %v1471
      %v1929 = vunpack.c.l.b16 %v1472
      %v1930 = vunpack.c.h.b16 %v1472
      %v1931 = vunpack.c.l.b16 %v1473
      %v1932 = vunpack.c.h.b16 %v1473
      %v1933 = vunpack.c.l.b16 %v1474
      %v1934 = vunpack.c.h.b16 %v1474
      %v1935 = vunpack.c.l.b16 %v1475
      %v1936 = vunpack.c.h.b16 %v1475
      %v1937 = vunpack.c.l.b16 %v1476
      %v1938 = vunpack.c.h.b16 %v1476
      %v1939 = vunpack.c.l.b16 %v1477
      %v1940 = vunpack.c.h.b16 %v1477
      %v1941 = vunpack.c.l.b16 %v1478
      %v1942 = vunpack.c.h.b16 %v1478
      %v1943 = vpack.c.b16 %v1873, %v1871
      %v1944 = vpack.c.b16 %v1874, %v1872
      %v1945 = vpack.c.b16 %v1877, %v1875
      %v1946 = vpack.c.b16 %v1878, %v1876
      %v1947 = vpack.c.b16 %v1881, %v1879
      %v1948 = vpack.c.b16 %v1882, %v1880
      %v1949 = vpack.c.b16 %v1885, %v1883
      %v1950 = vpack.c.b16 %v1886, %v1884
      %v1951 = vpack.c.b16 %v1889, %v1887
      %v1952 = vpack.c.b16 %v1890, %v1888
      %v1953 = vpack.c.b16 %v1893, %v1891
      %v1954 = vpack.c.b16 %v1894, %v1892
      %v1955 = vpack.c.b16 %v1897, %v1895
      %v1956 = vpack.c.b16 %v1898, %v1896
      %v1957 = vpack.c.b16 %v1901, %v1899
      %v1958 = vpack.c.b16 %v1902, %v1900
      %v1959 = vpack.c.b16 %v1905, %v1903
      %v1960 = vpack.c.b16 %v1906, %v1904
      %v1961 = vpack.c.b16 %v1909, %v1907
      %v1962 = vpack.c.b16 %v1910, %v1908
      %v1963 = vpack.c.b16 %v1913, %v1911
      %v1964 = vpack.c.b16 %v1914, %v1912
      %v1965 = vpack.c.b16 %v1917, %v1915
      %v1966 = vpack.c.b16 %v1918, %v1916
      %v1967 = vpack.c.b16 %v1921, %v1919
      %v1968 = vpack.c.b16 %v1922, %v1920
      %v1969 = vpack.c.b16 %v1925, %v1923
      %v1970 = vpack.c.b16 %v1926, %v1924
      %v1971 = vpack.c.b16 %v1929, %v1927
      %v1972 = vpack.c.b16 %v1930, %v1928
      %v1973 = vpack.c.b16 %v1933, %v1931
      %v1974 = vpack.c.b16 %v1934, %v1932
      %v1975 = vpack.c.b16 %v1937, %v1935
      %v1976 = vpack.c.b16 %v1938, %v1936
      %v1977 = vpack.c.b16 %v1941, %v1939
      %v1978 = vpack.c.b16 %v1942, %v1940
      %v2016 = vsel %vm646, %v1442, 0
      %2018 = vmatprep.subr.bf16.mxu0 %v1944
      %2019 = vmatpush1.bf16.msra.mxu0 %v1943
      %2020 = vmatprep.subr.bf16.mxu0 %v1946
      %2021 = vmatpush1.bf16.msra.mxu0 %v1945
      %2022 = vmatprep.subr.bf16.mxu0 %v1948
      %2023 = vmatpush1.bf16.msra.mxu0 %v1947
      %2024 = vmatprep.subr.bf16.mxu0 %v1950
      %2025 = vmatpush1.bf16.msra.mxu0 %v1949
      %2026 = vmatprep.subr.bf16.mxu0 %v1952
      %2027 = vmatpush1.bf16.msra.mxu0 %v1951
      %2028 = vmatprep.subr.bf16.mxu0 %v1954
      %2029 = vmatpush1.bf16.msra.mxu0 %v1953
      %2030 = vmatprep.subr.bf16.mxu0 %v1956
      %2031 = vmatpush1.bf16.msra.mxu0 %v1955
      %2032 = vmatprep.subr.bf16.mxu0 %v1958
      %2033 = vmatpush1.bf16.msra.mxu0 %v1957
      %2034 = vmatprep.subr.bf16.mxu0 %v1960
      %2035 = vmatpush1.bf16.msra.mxu0 %v1959
      %2036 = vmatprep.subr.bf16.mxu0 %v1962
      %2037 = vmatpush1.bf16.msra.mxu0 %v1961
      %2038 = vmatprep.subr.bf16.mxu0 %v1964
      %2039 = vmatpush1.bf16.msra.mxu0 %v1963
      %2040 = vmatprep.subr.bf16.mxu0 %v1966
      %2041 = vmatpush1.bf16.msra.mxu0 %v1965
      %2042 = vmatprep.subr.bf16.mxu0 %v1968
      %2043 = vmatpush1.bf16.msra.mxu0 %v1967
      %2044 = vmatprep.subr.bf16.mxu0 %v1970
      %2045 = vmatpush1.bf16.msra.mxu0 %v1969
      %2046 = vmatprep.subr.bf16.mxu0 %v1972
      %2047 = vmatpush1.bf16.msra.mxu0 %v1971
      %2048 = vmatprep.subr.bf16.mxu0 %v1974
      %2049 = vmatpush1.bf16.msra.mxu0 %v1973
      %2050 = vmatprep.mubr.bf16.mxu0 %v1441
      %2051 = vmatmul.mubr.bf16.gmra.mrb[0].mxu0 %v1440
      %v2052 = vpop.f32.mrb[0].mxu0
      %v2053 = vadd.f32 %v1827, %v2052
      %v2054 = vpop.f32.mrb[0].mxu0
      %v2055 = vadd.f32 %v1829, %v2054
      %v2056 = vpop.f32.mrb[0].mxu0
      %v2057 = vadd.f32 %v1831, %v2056
      %v2058 = vpop.f32.mrb[0].mxu0
      %v2059 = vadd.f32 %v1833, %v2058
      %2060 = vdwg.mxu0
      %2061 = vmatprep.subr.bf16.mxu0 %v1976
      %2062 = vmatpush1.bf16.msra.mxu0 %v1975
      %2063 = vmatprep.subr.bf16.mxu0 %v1978
      %2064 = vmatpush1.bf16.msra.mxu0 %v1977
      %2065 = vmatprep.subr.bf16.mxu0 0
      %2066 = vmatpush1.bf16.msra.mxu0 0
      %2067 = vmatprep.subr.bf16.mxu0 0
      %2068 = vmatpush1.bf16.msra.mxu0 0
      %2069 = vmatprep.subr.bf16.mxu0 0
      %2070 = vmatpush1.bf16.msra.mxu0 0
      %2071 = vmatprep.subr.bf16.mxu0 0
      %2072 = vmatpush1.bf16.msra.mxu0 0
      %2073 = vmatprep.subr.bf16.mxu0 0
      %2074 = vmatpush1.bf16.msra.mxu0 0
      %2075 = vmatprep.subr.bf16.mxu0 0
      %2076 = vmatpush1.bf16.msra.mxu0 0
      %2077 = vmatprep.subr.bf16.mxu0 0
      %2078 = vmatpush1.bf16.msra.mxu0 0
      %2079 = vmatprep.subr.bf16.mxu0 0
      %2080 = vmatpush1.bf16.msra.mxu0 0
      %2081 = vmatprep.subr.bf16.mxu0 0
      %2082 = vmatpush1.bf16.msra.mxu0 0
      %2083 = vmatprep.subr.bf16.mxu0 0
      %2084 = vmatpush1.bf16.msra.mxu0 0
      %2085 = vmatprep.subr.bf16.mxu0 0
      %2086 = vmatpush1.bf16.msra.mxu0 0
      %2087 = vmatprep.subr.bf16.mxu0 0
      %2088 = vmatpush1.bf16.msra.mxu0 0
      %2089 = vmatprep.subr.bf16.mxu0 0
      %2090 = vmatpush1.bf16.msra.mxu0 0
      %2091 = vmatprep.subr.bf16.mxu0 0
      %2092 = vmatpush1.bf16.msra.mxu0 0
      %2093 = vmatprep.mubr.bf16.mxu0 0
      %2094 = vmatmul.mubr.bf16.gmra.mrb[0].mxu0 %v2016
      %v2095 = vpop.f32.mrb[0].mxu0
      %v2096 = vadd.f32 %v2053, %v2095
      %v2097 = vpop.f32.mrb[0].mxu0
      %v2098 = vadd.f32 %v2055, %v2097
      %v2099 = vpop.f32.mrb[0].mxu0
      %v2100 = vadd.f32 %v2057, %v2099
      %v2101 = vpop.f32.mrb[0].mxu0
      %v2102 = vadd.f32 %v2059, %v2101
      %2103 = vdwg.mxu0
      %v2104 = vld [vmem:[#allocation2] sm:$0xfc]
      %v2105 = vld [vmem:[#allocation2 + $0x8] sm:$0xfc]
      %v2106 = vld [vmem:[#allocation2 + $0x10] sm:$0xfc]
      %v2107 = vld [vmem:[#allocation2 + $0x30] sm:$0x3]
      %v2108 = vld [vmem:[#allocation2 + $0x38] sm:$0x3]
      %v2109 = vld [vmem:[#allocation2 + $0x40] sm:$0x3]
      %v2110 = vpack.c.bf16 %v1437, %v2104
      %v2111 = vpack.c.bf16 %v1438, %v2105
      %v2112 = vpack.c.bf16 %v1439, %v2106
      %v2113 = vpack.c.bf16 %v2107, %v2107
      %v2114 = vpack.c.bf16 %v2108, %v2108
      %v2115 = vpack.c.bf16 %v2109, %v2109
      %s2116 = scalar_lea.vmem %s5, 576
      %v2117 = vld [vmem:[%s2116] sm:$0xff]
      %v2118 = vld [vmem:[%s2116 + $0x8] sm:$0xff]
      %v2119 = vld [vmem:[%s2116 + $0x10] sm:$0xff]
      %v2120 = vld [vmem:[%s2116 + $0x18] sm:$0xff]
      %v2121 = vld [vmem:[%s2116 + $0x20] sm:$0xff]
      %v2122 = vld [vmem:[%s2116 + $0x28] sm:$0xff]
      %v2123 = vld [vmem:[%s2116 + $0x30] sm:$0xff]
      %v2124 = vld [vmem:[%s2116 + $0x38] sm:$0xff]
      %v2125 = vld [vmem:[%s2116 + $0x40] sm:$0xff]
      %v2126 = vld [vmem:[%s2116 + $0x48] sm:$0xff]
      %v2127 = vld [vmem:[%s2116 + $0x50] sm:$0xff]
      %v2128 = vld [vmem:[%s2116 + $0x58] sm:$0xff]
      %v2129 = vld [vmem:[%s2116 + $0x60] sm:$0xff]
      %v2130 = vld [vmem:[%s2116 + $0x68] sm:$0xff]
      %v2131 = vld [vmem:[%s2116 + $0x70] sm:$0xff]
      %v2132 = vld [vmem:[%s2116 + $0x78] sm:$0xff]
      %v2133 = vld [vmem:[%s2116 + $0x80] sm:$0xff]
      %v2134 = vld [vmem:[%s2116 + $0x88] sm:$0xff]
      %v2135 = vld [vmem:[%s2116 + $0x90] sm:$0xff]
      %v2136 = vld [vmem:[%s2116 + $0x98] sm:$0xff]
      %v2137 = vld [vmem:[%s2116 + $0xa0] sm:$0xff]
      %v2138 = vld [vmem:[%s2116 + $0xa8] sm:$0xff]
      %v2139 = vld [vmem:[%s2116 + $0xb0] sm:$0xff]
      %v2140 = vld [vmem:[%s2116 + $0xb8] sm:$0xff]
      %v2141 = vld [vmem:[%s2116 + $0xc0] sm:$0xff]
      %v2142 = vld [vmem:[%s2116 + $0xc8] sm:$0xff]
      %v2143 = vld [vmem:[%s2116 + $0xd0] sm:$0xff]
      %v2144 = vld [vmem:[%s2116 + $0xd8] sm:$0xff]
      %v2145 = vld [vmem:[%s2116 + $0xe0] sm:$0xff]
      %v2146 = vld [vmem:[%s2116 + $0xe8] sm:$0xff]
      %v2147 = vld [vmem:[%s2116 + $0xf0] sm:$0xff]
      %v2148 = vld [vmem:[%s2116 + $0xf8] sm:$0xff]
      %v2149 = vld [vmem:[%s2116 + $0x100] sm:$0xff]
      %v2150 = vld [vmem:[%s2116 + $0x108] sm:$0xff]
      %v2151 = vld [vmem:[%s2116 + $0x110] sm:$0xff]
      %v2152 = vld [vmem:[%s2116 + $0x118] sm:$0xff]
      %v2159 = vrot.slane %v2110, 1
      %v2160 = vrot.slane %v2113, 1
      %v2161 = vsel %vm1053, %v2159, %v2160
      %v2162 = vrot.slane %v2111, 1
      %v2163 = vrot.slane %v2114, 1
      %v2164 = vsel %vm1053, %v2162, %v2163
      %v2165 = vrot.slane %v2112, 1
      %v2166 = vrot.slane %v2115, 1
      %v2167 = vsel %vm1053, %v2165, %v2166
      %v2206 = vunpack.c.l.b16 %v2117
      %v2207 = vunpack.c.h.b16 %v2117
      %v2208 = vunpack.c.l.b16 %v2118
      %v2209 = vunpack.c.h.b16 %v2118
      %v2210 = vunpack.c.l.b16 %v2119
      %v2211 = vunpack.c.h.b16 %v2119
      %v2212 = vunpack.c.l.b16 %v2120
      %v2213 = vunpack.c.h.b16 %v2120
      %v2214 = vunpack.c.l.b16 %v2121
      %v2215 = vunpack.c.h.b16 %v2121
      %v2216 = vunpack.c.l.b16 %v2122
      %v2217 = vunpack.c.h.b16 %v2122
      %v2218 = vunpack.c.l.b16 %v2123
      %v2219 = vunpack.c.h.b16 %v2123
      %v2220 = vunpack.c.l.b16 %v2124
      %v2221 = vunpack.c.h.b16 %v2124
      %v2222 = vunpack.c.l.b16 %v2125
      %v2223 = vunpack.c.h.b16 %v2125
      %v2224 = vunpack.c.l.b16 %v2126
      %v2225 = vunpack.c.h.b16 %v2126
      %v2226 = vunpack.c.l.b16 %v2127
      %v2227 = vunpack.c.h.b16 %v2127
      %v2228 = vunpack.c.l.b16 %v2128
      %v2229 = vunpack.c.h.b16 %v2128
      %v2230 = vunpack.c.l.b16 %v2129
      %v2231 = vunpack.c.h.b16 %v2129
      %v2232 = vunpack.c.l.b16 %v2130
      %v2233 = vunpack.c.h.b16 %v2130
      %v2234 = vunpack.c.l.b16 %v2131
      %v2235 = vunpack.c.h.b16 %v2131
      %v2236 = vunpack.c.l.b16 %v2132
      %v2237 = vunpack.c.h.b16 %v2132
      %v2238 = vunpack.c.l.b16 %v2133
      %v2239 = vunpack.c.h.b16 %v2133
      %v2240 = vunpack.c.l.b16 %v2134
      %v2241 = vunpack.c.h.b16 %v2134
      %v2242 = vunpack.c.l.b16 %v2135
      %v2243 = vunpack.c.h.b16 %v2135
      %v2244 = vunpack.c.l.b16 %v2136
      %v2245 = vunpack.c.h.b16 %v2136
      %v2246 = vunpack.c.l.b16 %v2137
      %v2247 = vunpack.c.h.b16 %v2137
      %v2248 = vunpack.c.l.b16 %v2138
      %v2249 = vunpack.c.h.b16 %v2138
      %v2250 = vunpack.c.l.b16 %v2139
      %v2251 = vunpack.c.h.b16 %v2139
      %v2252 = vunpack.c.l.b16 %v2140
      %v2253 = vunpack.c.h.b16 %v2140
      %v2254 = vunpack.c.l.b16 %v2141
      %v2255 = vunpack.c.h.b16 %v2141
      %v2256 = vunpack.c.l.b16 %v2142
      %v2257 = vunpack.c.h.b16 %v2142
      %v2258 = vunpack.c.l.b16 %v2143
      %v2259 = vunpack.c.h.b16 %v2143
      %v2260 = vunpack.c.l.b16 %v2144
      %v2261 = vunpack.c.h.b16 %v2144
      %v2262 = vunpack.c.l.b16 %v2145
      %v2263 = vunpack.c.h.b16 %v2145
      %v2264 = vunpack.c.l.b16 %v2146
      %v2265 = vunpack.c.h.b16 %v2146
      %v2266 = vunpack.c.l.b16 %v2147
      %v2267 = vunpack.c.h.b16 %v2147
      %v2268 = vunpack.c.l.b16 %v2148
      %v2269 = vunpack.c.h.b16 %v2148
      %v2270 = vunpack.c.l.b16 %v2149
      %v2271 = vunpack.c.h.b16 %v2149
      %v2272 = vunpack.c.l.b16 %v2150
      %v2273 = vunpack.c.h.b16 %v2150
      %v2274 = vunpack.c.l.b16 %v2151
      %v2275 = vunpack.c.h.b16 %v2151
      %v2276 = vunpack.c.l.b16 %v2152
      %v2277 = vunpack.c.h.b16 %v2152
      %v2278 = vpack.c.b16 %v2208, %v2206
      %v2279 = vpack.c.b16 %v2209, %v2207
      %v2280 = vpack.c.b16 %v2212, %v2210
      %v2281 = vpack.c.b16 %v2213, %v2211
      %v2282 = vpack.c.b16 %v2216, %v2214
      %v2283 = vpack.c.b16 %v2217, %v2215
      %v2284 = vpack.c.b16 %v2220, %v2218
      %v2285 = vpack.c.b16 %v2221, %v2219
      %v2286 = vpack.c.b16 %v2224, %v2222
      %v2287 = vpack.c.b16 %v2225, %v2223
      %v2288 = vpack.c.b16 %v2228, %v2226
      %v2289 = vpack.c.b16 %v2229, %v2227
      %v2290 = vpack.c.b16 %v2232, %v2230
      %v2291 = vpack.c.b16 %v2233, %v2231
      %v2292 = vpack.c.b16 %v2236, %v2234
      %v2293 = vpack.c.b16 %v2237, %v2235
      %v2294 = vpack.c.b16 %v2240, %v2238
      %v2295 = vpack.c.b16 %v2241, %v2239
      %v2296 = vpack.c.b16 %v2244, %v2242
      %v2297 = vpack.c.b16 %v2245, %v2243
      %v2298 = vpack.c.b16 %v2248, %v2246
      %v2299 = vpack.c.b16 %v2249, %v2247
      %v2300 = vpack.c.b16 %v2252, %v2250
      %v2301 = vpack.c.b16 %v2253, %v2251
      %v2302 = vpack.c.b16 %v2256, %v2254
      %v2303 = vpack.c.b16 %v2257, %v2255
      %v2304 = vpack.c.b16 %v2260, %v2258
      %v2305 = vpack.c.b16 %v2261, %v2259
      %v2306 = vpack.c.b16 %v2264, %v2262
      %v2307 = vpack.c.b16 %v2265, %v2263
      %v2308 = vpack.c.b16 %v2268, %v2266
      %v2309 = vpack.c.b16 %v2269, %v2267
      %v2310 = vpack.c.b16 %v2272, %v2270
      %v2311 = vpack.c.b16 %v2273, %v2271
      %v2312 = vpack.c.b16 %v2276, %v2274
      %v2313 = vpack.c.b16 %v2277, %v2275
      %v2351 = vsel %vm646, %v2167, 0
      %2353 = vmatprep.subr.bf16.mxu0 %v2279
      %2354 = vmatpush1.bf16.msra.mxu0 %v2278
      %2355 = vmatprep.subr.bf16.mxu0 %v2281
      %2356 = vmatpush1.bf16.msra.mxu0 %v2280
      %2357 = vmatprep.subr.bf16.mxu0 %v2283
      %2358 = vmatpush1.bf16.msra.mxu0 %v2282
      %2359 = vmatprep.subr.bf16.mxu0 %v2285
      %2360 = vmatpush1.bf16.msra.mxu0 %v2284
      %2361 = vmatprep.subr.bf16.mxu0 %v2287
      %2362 = vmatpush1.bf16.msra.mxu0 %v2286
      %2363 = vmatprep.subr.bf16.mxu0 %v2289
      %2364 = vmatpush1.bf16.msra.mxu0 %v2288
      %2365 = vmatprep.subr.bf16.mxu0 %v2291
      %2366 = vmatpush1.bf16.msra.mxu0 %v2290
      %2367 = vmatprep.subr.bf16.mxu0 %v2293
      %2368 = vmatpush1.bf16.msra.mxu0 %v2292
      %2369 = vmatprep.subr.bf16.mxu0 %v2295
      %2370 = vmatpush1.bf16.msra.mxu0 %v2294
      %2371 = vmatprep.subr.bf16.mxu0 %v2297
      %2372 = vmatpush1.bf16.msra.mxu0 %v2296
      %2373 = vmatprep.subr.bf16.mxu0 %v2299
      %2374 = vmatpush1.bf16.msra.mxu0 %v2298
      %2375 = vmatprep.subr.bf16.mxu0 %v2301
      %2376 = vmatpush1.bf16.msra.mxu0 %v2300
      %2377 = vmatprep.subr.bf16.mxu0 %v2303
      %2378 = vmatpush1.bf16.msra.mxu0 %v2302
      %2379 = vmatprep.subr.bf16.mxu0 %v2305
      %2380 = vmatpush1.bf16.msra.mxu0 %v2304
      %2381 = vmatprep.subr.bf16.mxu0 %v2307
      %2382 = vmatpush1.bf16.msra.mxu0 %v2306
      %2383 = vmatprep.subr.bf16.mxu0 %v2309
      %2384 = vmatpush1.bf16.msra.mxu0 %v2308
      %2385 = vmatprep.mubr.bf16.mxu0 %v2164
      %2386 = vmatmul.mubr.bf16.gmra.mrb[0].mxu0 %v2161
      %v2387 = vpop.f32.mrb[0].mxu0
      %v2388 = vadd.f32 0.0, %v2387
      %v2389 = vpop.f32.mrb[0].mxu0
      %v2390 = vadd.f32 0.0, %v2389
      %v2391 = vpop.f32.mrb[0].mxu0
      %v2392 = vadd.f32 0.0, %v2391
      %v2393 = vpop.f32.mrb[0].mxu0
      %v2394 = vadd.f32 0.0, %v2393
      %2395 = vdwg.mxu0
      %2396 = vmatprep.subr.bf16.mxu0 %v2311
      %2397 = vmatpush1.bf16.msra.mxu0 %v2310
      %2398 = vmatprep.subr.bf16.mxu0 %v2313
      %2399 = vmatpush1.bf16.msra.mxu0 %v2312
      %2400 = vmatprep.subr.bf16.mxu0 0
      %2401 = vmatpush1.bf16.msra.mxu0 0
      %2402 = vmatprep.subr.bf16.mxu0 0
      %2403 = vmatpush1.bf16.msra.mxu0 0
      %2404 = vmatprep.subr.bf16.mxu0 0
      %2405 = vmatpush1.bf16.msra.mxu0 0
      %2406 = vmatprep.subr.bf16.mxu0 0
      %2407 = vmatpush1.bf16.msra.mxu0 0
      %2408 = vmatprep.subr.bf16.mxu0 0
      %2409 = vmatpush1.bf16.msra.mxu0 0
      %2410 = vmatprep.subr.bf16.mxu0 0
      %2411 = vmatpush1.bf16.msra.mxu0 0
      %2412 = vmatprep.subr.bf16.mxu0 0
      %2413 = vmatpush1.bf16.msra.mxu0 0
      %2414 = vmatprep.subr.bf16.mxu0 0
      %2415 = vmatpush1.bf16.msra.mxu0 0
      %2416 = vmatprep.subr.bf16.mxu0 0
      %2417 = vmatpush1.bf16.msra.mxu0 0
      %2418 = vmatprep.subr.bf16.mxu0 0
      %2419 = vmatpush1.bf16.msra.mxu0 0
      %2420 = vmatprep.subr.bf16.mxu0 0
      %2421 = vmatpush1.bf16.msra.mxu0 0
      %2422 = vmatprep.subr.bf16.mxu0 0
      %2423 = vmatpush1.bf16.msra.mxu0 0
      %2424 = vmatprep.subr.bf16.mxu0 0
      %2425 = vmatpush1.bf16.msra.mxu0 0
      %2426 = vmatprep.subr.bf16.mxu0 0
      %2427 = vmatpush1.bf16.msra.mxu0 0
      %2428 = vmatprep.mubr.bf16.mxu0 0
      %2429 = vmatmul.mubr.bf16.gmra.mrb[0].mxu0 %v2351
      %v2430 = vpop.f32.mrb[0].mxu0
      %v2431 = vadd.f32 %v2388, %v2430
      %v2432 = vpop.f32.mrb[0].mxu0
      %v2433 = vadd.f32 %v2390, %v2432
      %v2434 = vpop.f32.mrb[0].mxu0
      %v2435 = vadd.f32 %v2392, %v2434
      %v2436 = vpop.f32.mrb[0].mxu0
      %v2437 = vadd.f32 %v2394, %v2436
      %2438 = vdwg.mxu0
      %v2439 = vadd.f32 %v2096, %v2431
      %v2440 = vadd.f32 %v2098, %v2433
      %v2441 = vadd.f32 %v2100, %v2435
      %v2442 = vadd.f32 %v2102, %v2437
      %v2443 = vld [vmem:[%s6] sm:$0x3]
      %v2445 = vlaneseq
      %v2446 = vshrl.u32 %v2445, 7
      %v2447 = vsub.s32 0, %v2446
      %v2448 = vrot.slane %v2443, %v2447
      %v2449 = vlaneseq
      %v2450 = vshrl.u32 %v2449, 7
      %v2451 = vsub.s32 1, %v2450
      %v2452 = vrot.slane %v2443, %v2451
      %v2455 = vmul.f32 %v2439, %v2448
      %v2456 = vmul.f32 %v2440, %v2452
      %v2457 = vmul.f32 %v2441, %v2448
      %v2458 = vmul.f32 %v2442, %v2452
      %v2459 = vld [vmem:[%s7] sm:$0x3]
      %v2461 = vlaneseq
      %v2462 = vshrl.u32 %v2461, 7
      %v2463 = vsub.s32 0, %v2462
      %v2464 = vrot.slane %v2459, %v2463
      %v2465 = vlaneseq
      %v2466 = vshrl.u32 %v2465, 7
      %v2467 = vsub.s32 1, %v2466
      %v2468 = vrot.slane %v2459, %v2467
      %v2471 = vadd.f32 %v2455, %v2464
      %v2472 = vadd.f32 %v2456, %v2468
      %v2473 = vadd.f32 %v2457, %v2464
      %v2474 = vadd.f32 %v2458, %v2468
      %v2475 = vld [vmem:[%s320] sm:$0xff]
      %v2476 = vld [vmem:[%s320 + $0x8] sm:$0xff]
      %v2477 = vunpack.c.l.bf16 %v2475
      %v2478 = vunpack.c.h.bf16 %v2475
      %v2479 = vunpack.c.l.bf16 %v2476
      %v2480 = vunpack.c.h.bf16 %v2476
      %v2481 = vadd.f32 %v2471, %v2477
      %v2482 = vadd.f32 %v2472, %v2478
      %v2483 = vadd.f32 %v2473, %v2479
      %v2484 = vadd.f32 %v2474, %v2480
      %v2485 = vmax.f32 %v2481, 0.0
      %v2486 = vmax.f32 %v2482, 0.0
      %v2487 = vmax.f32 %v2483, 0.0
      %v2488 = vmax.f32 %v2484, 0.0
      %v2489 = vpack.c.bf16 %v2487, %v2485
      %v2490 = vpack.c.bf16 %v2488, %v2486
      %v2493 = vunpack.c.l.b16 %v2489
      %v2494 = vunpack.c.l.b16 %v2490
      %v2495 = vunpack.c.h.b16 %v2489
      %v2496 = vunpack.c.h.b16 %v2490
      %v2497 = vpack.c.b16 %v2494, %v2493
      %v2498 = vpack.c.b16 %v2496, %v2495
      %2501 = vst [vmem:[%s325] sm:$0xff] %v2497
      %2502 = vst [vmem:[%s325 + $0x8] sm:$0xff] %v2498
      %p2503 = scmp.lt.s32.totalorder %s19, 1
      %s2504 = scalar_select %p2503, %s19, 1
      %s2505 = smul.addr %s2504, 4
      %s2506 = smul.addr %s2505, 4
      %s2507 = scalar_lea.vmem %s8, %s2506
      // Predicated region
      $region53: #{_lambda_.6} parent=51 // pred_check
        %p2508 = pneg %p215
      $region54: #{_lambda_.6} parent=51 // pred_check_branch
        %2510 = sbr.rel (%p2508) target = $region56
      $region55: #{_lambda_.6} parent=51 // pred_region
        _
      $region56: #{_lambda_.6} parent=51 // pred_fallthru
        _
    $region52: #{_lambda_.6} parent=5 // pred_fallthru
      _
    %p2511 = scmp.le.s32.totalorder 2, %s14
    // Predicated region
    $region57: #{_lambda_.6} parent=5 // pred_check
      %p2512 = pneg %p2511
    $region58: #{_lambda_.6} parent=5 // pred_check_branch
      %2514 = sbr.rel (%p2512) target = $region60
    $region59: #{_lambda_.6} parent=5 // pred_region
      %s2515 = ssub.s32 %s14, 2
      // Predicated region
      $region61: #{_lambda_.6} parent=59 // pred_check
        %p2516 = pneg %p221
      $region62: #{_lambda_.6} parent=59 // pred_check_branch
        %2518 = sbr.rel (%p2516) target = $region64
      $region63: #{_lambda_.6} parent=59 // pred_region
        %p2519 = scmp.lt.s32.totalorder %s20, 1
        %s2520 = scalar_select %p2519, %s20, 1
        %s2521 = smul.addr %s2520, 4
        %s2522 = smul.addr %s2521, 4
        %s2523 = scalar_lea.vmem %s8, %s2522
      $region64: #{_lambda_.6} parent=59 // pred_fallthru
        _
    $region60: #{_lambda_.6} parent=5 // pred_fallthru
      _
  $region6: #{_lambda_.6} parent=0 // loop_footer
    %s18 = sadd.s32 1, %s14
  $region7: #{_lambda_.6} parent=0 // loop_footer_branch
    %13 = sbr.rel target = $region3
  $region8: #{_lambda_.6} parent=0 // loop_exit
    _

// kernel: _lambda_.7
$region0: #{_lambda_.7}
  #allocation0 [shape = 'u32[]', space=smem, size = 0x4, offset = 0x4, fixed_abs, tag = 'smem constant byte address 0x4 - core index']
  #allocation1 [shape = 'u32[144,128]{1,0:T(1,128)}', space=vmem, size = 0x12000, scoped, tag = 'internal scratch']
  #allocation2 [shape = 'f32[10,320]{1,0:T(8,128)}', space=vmem, size = 0x6000, scoped, tag = 'scratch operand']
  %s0 = inlined_call_operand.vmem [shape: bf16[2,2,9,288], index: 0, kind: input, shape index: {}]
  %s1 = inlined_call_operand.vmem [shape: bf16[2,8,256], index: 1, kind: input, shape index: {}]
  %s2 = inlined_call_operand.vmem [shape: bf16[3,288,256], index: 2, kind: input, shape index: {}]
  %s3 = inlined_call_operand.vmem [shape: f32[1,256], index: 3, kind: input, shape index: {}, may-alias: {3,6}]
  %s4 = inlined_call_operand.vmem [shape: f32[1,256], index: 4, kind: input, shape index: {}, may-alias: {4,7}]
  %s5 = inlined_call_operand.vmem [shape: bf16[3,320,256], index: 5, kind: input, shape index: {}]
  %s6 = inlined_call_operand.vmem [shape: f32[1,256], index: 6, kind: input, shape index: {}, may-alias: {3,6}]
  %s7 = inlined_call_operand.vmem [shape: f32[1,256], index: 7, kind: input, shape index: {}, may-alias: {4,7}]
  %s8 = inlined_call_operand.vmem [shape: bf16[2,8,256], index: 8, kind: output, shape index: {}]
  %s9 = sld [smem:[#allocation0]]
  $region65: #{_lambda_.7} parent=0
    _
  %s11 = ssub.s32 1, %s9
  %s12 = scalar_select 0, %s11, %s9
  loop: start=0, step=1, limit=4
  $region2: #{_lambda_.7} parent=0 // loop_pre_header
    _
  $region3: #{_lambda_.7} parent=0 // loop_header
    %s14 = sphi 0, %s18
    %p15 = scmp.ge.s32.totalorder %s14, 4
    %s24 = sphi 0, %s26
    %s27 = sphi 0, %s24
    %s28 = sphi 0, %s27
    %s44 = sphi 0, %s28
    %s50 = sphi 0, %s52
    %s53 = sphi 0, %s50
    %s54 = sphi 0, %s53
    %s70 = sphi 0, %s54
    %s74 = sphi 0, %s74
    %s76 = sphi 0, %s74
    %s77 = sphi 0, %s76
    %s91 = sphi 0, %s77
    %s95 = sphi 0, %s95
    %s97 = sphi 0, %s95
    %s98 = sphi 0, %s97
    %s112 = sphi 0, %s98
    %s116 = sphi 0, %s116
    %s118 = sphi 0, %s116
    %s119 = sphi 0, %s118
    %s133 = sphi 0, %s119
    %s137 = sphi 0, %s137
    %s139 = sphi 0, %s137
    %s140 = sphi 0, %s139
    %s154 = sphi 0, %s140
    %s158 = sphi 0, %s158
    %s160 = sphi 0, %s158
    %s161 = sphi 0, %s160
    %s175 = sphi 0, %s161
    %s179 = sphi 0, %s179
    %s181 = sphi 0, %s179
    %s182 = sphi 0, %s181
    %s196 = sphi 0, %s182
    %s202 = sphi 0, %s204
    %s205 = sphi 0, %s202
    %s206 = sphi 0, %s205
    %s222 = sphi 0, %s206
  $region4: #{_lambda_.7} parent=0 // loop_header_branch
    %17 = sbr.rel (%p15) target = $region8
  $region5: #{_lambda_.7} parent=0 // loop_body
    %s19 = ssub.s32 %s14, 1
    %s20 = ssub.s32 %s14, 2
    %s21 = sadd.s32 %s14, 1
    %s22 = ssub.s32 %s14, %s21
    %p23 = scmp.eq.s32.totalorder %s22, 0
    %s25 = sadd.s32 %s24, 1
    %s26 = scalar_select %p23, %s24, %s25
    %p29 = pneg %p23
    %p30 = scmp.eq.s32.totalorder %s14, 1
    %p31 = por %p29, %p30
    %p32 = scmp.ne.s32.totalorder %s24, %s27
    %p33 = scmp.eq.s32.totalorder %s14, 0
    %p34 = por %p32, %p33
    %p35 = scmp.ne.s32.totalorder %s24, %s27
    %p36 = scmp.eq.s32.totalorder %s19, 1
    %p37 = por %p35, %p36
    %p38 = scmp.ne.s32.totalorder %s27, %s28
    %p39 = scmp.eq.s32.totalorder %s19, 0
    %p40 = por %p38, %p39
    %p41 = scmp.ne.s32.totalorder %s27, %s28
    %p42 = scmp.eq.s32.totalorder %s20, 1
    %p43 = por %p41, %p42
    %p45 = scmp.ne.s32.totalorder %s28, %s44
    %p46 = scmp.eq.s32.totalorder %s20, 0
    %p47 = por %p45, %p46
    %s48 = ssub.s32 %s14, %s21
    %p49 = scmp.eq.s32.totalorder %s48, 0
    %s51 = sadd.s32 %s50, 1
    %s52 = scalar_select %p49, %s50, %s51
    %p55 = pneg %p49
    %p56 = scmp.eq.s32.totalorder %s14, 1
    %p57 = por %p55, %p56
    %p58 = scmp.ne.s32.totalorder %s50, %s53
    %p59 = scmp.eq.s32.totalorder %s14, 0
    %p60 = por %p58, %p59
    %p61 = scmp.ne.s32.totalorder %s50, %s53
    %p62 = scmp.eq.s32.totalorder %s19, 1
    %p63 = por %p61, %p62
    %p64 = scmp.ne.s32.totalorder %s53, %s54
    %p65 = scmp.eq.s32.totalorder %s19, 0
    %p66 = por %p64, %p65
    %p67 = scmp.ne.s32.totalorder %s53, %s54
    %p68 = scmp.eq.s32.totalorder %s20, 1
    %p69 = por %p67, %p68
    %p71 = scmp.ne.s32.totalorder %s54, %s70
    %p72 = scmp.eq.s32.totalorder %s20, 0
    %p73 = por %p71, %p72
    %s75 = sadd.s32 %s74, 1
    %p78 = scmp.eq.s32.totalorder %s14, 1
    %p79 = scmp.ne.s32.totalorder %s74, %s76
    %p80 = scmp.eq.s32.totalorder %s14, 0
    %p81 = por %p79, %p80
    %p82 = scmp.ne.s32.totalorder %s74, %s76
    %p83 = scmp.eq.s32.totalorder %s19, 1
    %p84 = por %p82, %p83
    %p85 = scmp.ne.s32.totalorder %s76, %s77
    %p86 = scmp.eq.s32.totalorder %s19, 0
    %p87 = por %p85, %p86
    %p88 = scmp.ne.s32.totalorder %s76, %s77
    %p89 = scmp.eq.s32.totalorder %s20, 1
    %p90 = por %p88, %p89
    %p92 = scmp.ne.s32.totalorder %s77, %s91
    %p93 = scmp.eq.s32.totalorder %s20, 0
    %p94 = por %p92, %p93
    %s96 = sadd.s32 %s95, 1
    %p99 = scmp.eq.s32.totalorder %s14, 1
    %p100 = scmp.ne.s32.totalorder %s95, %s97
    %p101 = scmp.eq.s32.totalorder %s14, 0
    %p102 = por %p100, %p101
    %p103 = scmp.ne.s32.totalorder %s95, %s97
    %p104 = scmp.eq.s32.totalorder %s19, 1
    %p105 = por %p103, %p104
    %p106 = scmp.ne.s32.totalorder %s97, %s98
    %p107 = scmp.eq.s32.totalorder %s19, 0
    %p108 = por %p106, %p107
    %p109 = scmp.ne.s32.totalorder %s97, %s98
    %p110 = scmp.eq.s32.totalorder %s20, 1
    %p111 = por %p109, %p110
    %p113 = scmp.ne.s32.totalorder %s98, %s112
    %p114 = scmp.eq.s32.totalorder %s20, 0
    %p115 = por %p113, %p114
    %s117 = sadd.s32 %s116, 1
    %p120 = scmp.eq.s32.totalorder %s14, 1
    %p121 = scmp.ne.s32.totalorder %s116, %s118
    %p122 = scmp.eq.s32.totalorder %s14, 0
    %p123 = por %p121, %p122
    %p124 = scmp.ne.s32.totalorder %s116, %s118
    %p125 = scmp.eq.s32.totalorder %s19, 1
    %p126 = por %p124, %p125
    %p127 = scmp.ne.s32.totalorder %s118, %s119
    %p128 = scmp.eq.s32.totalorder %s19, 0
    %p129 = por %p127, %p128
    %p130 = scmp.ne.s32.totalorder %s118, %s119
    %p131 = scmp.eq.s32.totalorder %s20, 1
    %p132 = por %p130, %p131
    %p134 = scmp.ne.s32.totalorder %s119, %s133
    %p135 = scmp.eq.s32.totalorder %s20, 0
    %p136 = por %p134, %p135
    %s138 = sadd.s32 %s137, 1
    %p141 = scmp.eq.s32.totalorder %s14, 1
    %p142 = scmp.ne.s32.totalorder %s137, %s139
    %p143 = scmp.eq.s32.totalorder %s14, 0
    %p144 = por %p142, %p143
    %p145 = scmp.ne.s32.totalorder %s137, %s139
    %p146 = scmp.eq.s32.totalorder %s19, 1
    %p147 = por %p145, %p146
    %p148 = scmp.ne.s32.totalorder %s139, %s140
    %p149 = scmp.eq.s32.totalorder %s19, 0
    %p150 = por %p148, %p149
    %p151 = scmp.ne.s32.totalorder %s139, %s140
    %p152 = scmp.eq.s32.totalorder %s20, 1
    %p153 = por %p151, %p152
    %p155 = scmp.ne.s32.totalorder %s140, %s154
    %p156 = scmp.eq.s32.totalorder %s20, 0
    %p157 = por %p155, %p156
    %s159 = sadd.s32 %s158, 1
    %p162 = scmp.eq.s32.totalorder %s14, 1
    %p163 = scmp.ne.s32.totalorder %s158, %s160
    %p164 = scmp.eq.s32.totalorder %s14, 0
    %p165 = por %p163, %p164
    %p166 = scmp.ne.s32.totalorder %s158, %s160
    %p167 = scmp.eq.s32.totalorder %s19, 1
    %p168 = por %p166, %p167
    %p169 = scmp.ne.s32.totalorder %s160, %s161
    %p170 = scmp.eq.s32.totalorder %s19, 0
    %p171 = por %p169, %p170
    %p172 = scmp.ne.s32.totalorder %s160, %s161
    %p173 = scmp.eq.s32.totalorder %s20, 1
    %p174 = por %p172, %p173
    %p176 = scmp.ne.s32.totalorder %s161, %s175
    %p177 = scmp.eq.s32.totalorder %s20, 0
    %p178 = por %p176, %p177
    %s180 = sadd.s32 %s179, 1
    %p183 = scmp.eq.s32.totalorder %s14, 1
    %p184 = scmp.ne.s32.totalorder %s179, %s181
    %p185 = scmp.eq.s32.totalorder %s14, 0
    %p186 = por %p184, %p185
    %p187 = scmp.ne.s32.totalorder %s179, %s181
    %p188 = scmp.eq.s32.totalorder %s19, 1
    %p189 = por %p187, %p188
    %p190 = scmp.ne.s32.totalorder %s181, %s182
    %p191 = scmp.eq.s32.totalorder %s19, 0
    %p192 = por %p190, %p191
    %p193 = scmp.ne.s32.totalorder %s181, %s182
    %p194 = scmp.eq.s32.totalorder %s20, 1
    %p195 = por %p193, %p194
    %p197 = scmp.ne.s32.totalorder %s182, %s196
    %p198 = scmp.eq.s32.totalorder %s20, 0
    %p199 = por %p197, %p198
    %s200 = ssub.s32 %s14, %s21
    %p201 = scmp.eq.s32.totalorder %s200, 0
    %s203 = sadd.s32 %s202, 1
    %s204 = scalar_select %p201, %s202, %s203
    %p207 = pneg %p201
    %p208 = scmp.eq.s32.totalorder %s14, 1
    %p209 = por %p207, %p208
    %p210 = scmp.ne.s32.totalorder %s202, %s205
    %p211 = scmp.eq.s32.totalorder %s14, 0
    %p212 = por %p210, %p211
    %p213 = scmp.ne.s32.totalorder %s202, %s205
    %p214 = scmp.eq.s32.totalorder %s19, 1
    %p215 = por %p213, %p214
    %p216 = scmp.ne.s32.totalorder %s205, %s206
    %p217 = scmp.eq.s32.totalorder %s19, 0
    %p218 = por %p216, %p217
    %p219 = scmp.ne.s32.totalorder %s205, %s206
    %p220 = scmp.eq.s32.totalorder %s20, 1
    %p221 = por %p219, %p220
    %p223 = scmp.ne.s32.totalorder %s206, %s222
    %p224 = scmp.eq.s32.totalorder %s20, 0
    %p225 = por %p223, %p224
    %p226 = scmp.le.s32.totalorder 1, %s14
    %p227 = scmp.lt.s32.totalorder %s14, 3
    %p228 = pnand %p226, %p227
    %p229 = pneg %p228
    // Predicated region
    $region9: #{_lambda_.7} parent=5 // pred_check
      _
    $region10: #{_lambda_.7} parent=5 // pred_check_branch
      %231 = sbr.rel (%p228) target = $region12
    $region11: #{_lambda_.7} parent=5 // pred_region
      %s232 = ssub.s32 %s14, 1
      // Predicated region
      $region13: #{_lambda_.7} parent=11 // pred_check
        %p233 = pneg %p87
      $region14: #{_lambda_.7} parent=11 // pred_check_branch
        %235 = sbr.rel (%p233) target = $region16
      $region15: #{_lambda_.7} parent=11 // pred_region
        _
      $region16: #{_lambda_.7} parent=11 // pred_fallthru
        _
      // Predicated region
      $region17: #{_lambda_.7} parent=11 // pred_check
        %p236 = pneg %p108
      $region18: #{_lambda_.7} parent=11 // pred_check_branch
        %238 = sbr.rel (%p236) target = $region20
      $region19: #{_lambda_.7} parent=11 // pred_region
        _
      $region20: #{_lambda_.7} parent=11 // pred_fallthru
        _
      // Predicated region
      $region21: #{_lambda_.7} parent=11 // pred_check
        %p239 = pneg %p129
      $region22: #{_lambda_.7} parent=11 // pred_check_branch
        %241 = sbr.rel (%p239) target = $region24
      $region23: #{_lambda_.7} parent=11 // pred_region
        _
      $region24: #{_lambda_.7} parent=11 // pred_fallthru
        _
      // Predicated region
      $region25: #{_lambda_.7} parent=11 // pred_check
        %p242 = pneg %p150
      $region26: #{_lambda_.7} parent=11 // pred_check_branch
        %244 = sbr.rel (%p242) target = $region28
      $region27: #{_lambda_.7} parent=11 // pred_region
        _
      $region28: #{_lambda_.7} parent=11 // pred_fallthru
        _
      // Predicated region
      $region29: #{_lambda_.7} parent=11 // pred_check
        %p245 = pneg %p171
      $region30: #{_lambda_.7} parent=11 // pred_check_branch
        %247 = sbr.rel (%p245) target = $region32
      $region31: #{_lambda_.7} parent=11 // pred_region
        _
      $region32: #{_lambda_.7} parent=11 // pred_fallthru
        _
      // Predicated region
      $region33: #{_lambda_.7} parent=11 // pred_check
        %p248 = pneg %p192
      $region34: #{_lambda_.7} parent=11 // pred_check_branch
        %250 = sbr.rel (%p248) target = $region36
      $region35: #{_lambda_.7} parent=11 // pred_region
        _
      $region36: #{_lambda_.7} parent=11 // pred_fallthru
        _
    $region12: #{_lambda_.7} parent=5 // pred_fallthru
      _
    %p251 = scmp.lt.s32.totalorder %s14, 2
    // Predicated region
    $region37: #{_lambda_.7} parent=5 // pred_check
      %p252 = pneg %p251
    $region38: #{_lambda_.7} parent=5 // pred_check_branch
      %254 = sbr.rel (%p252) target = $region40
    $region39: #{_lambda_.7} parent=5 // pred_region
      // Predicated region
      $region41: #{_lambda_.7} parent=39 // pred_check
        %p255 = pneg %p34
      $region42: #{_lambda_.7} parent=39 // pred_check_branch
        %257 = sbr.rel (%p255) target = $region44
      $region43: #{_lambda_.7} parent=39 // pred_region
        %p258 = scmp.lt.s32.totalorder %s14, 1
        %s259 = scalar_select %p258, %s14, 1
        %s260 = smul.addr %s259, 12
        %s261 = smul.addr %s260, 4
        %s262 = scalar_lea.vmem %s0, %s261
      $region44: #{_lambda_.7} parent=39 // pred_fallthru
        _
      // Predicated region
      $region45: #{_lambda_.7} parent=39 // pred_check
        %p263 = pneg %p60
      $region46: #{_lambda_.7} parent=39 // pred_check_branch
        %265 = sbr.rel (%p263) target = $region48
      $region47: #{_lambda_.7} parent=39 // pred_region
        %p266 = scmp.lt.s32.totalorder %s14, 1
        %s267 = scalar_select %p266, %s14, 1
        %s268 = smul.addr %s267, 2
        %s269 = smul.addr %s268, 4
        %s270 = scalar_lea.vmem %s1, %s269
      $region48: #{_lambda_.7} parent=39 // pred_fallthru
        _
    $region40: #{_lambda_.7} parent=5 // pred_fallthru
      _
    %p271 = scmp.le.s32.totalorder 1, %s14
    %p272 = scmp.lt.s32.totalorder %s14, 3
    %p273 = pnand %p271, %p272
    %p274 = pneg %p273
    // Predicated region
    $region49: #{_lambda_.7} parent=5 // pred_check
      _
    $region50: #{_lambda_.7} parent=5 // pred_check_branch
      %276 = sbr.rel (%p273) target = $region52
    $region51: #{_lambda_.7} parent=5 // pred_region
      %s277 = ssub.s32 %s14, 1
      %p278 = scmp.lt.s32.totalorder %s19, 1
      %s279 = scalar_select %p278, %s19, 1
      %s280 = smul.addr %s279, 12
      %s281 = smul.addr %s280, 4
      %s282 = scalar_lea.vmem %s0, %s281
      %p283 = pneg %p40
      %p284 = pneg %p37
      %p285 = scmp.lt.s32.totalorder %s19, 1
      %s286 = scalar_select %p285, %s19, 1
      %s287 = smul.addr %s286, 2
      %s288 = smul.addr %s287, 4
      %s289 = scalar_lea.vmem %s1, %s288
      %p290 = pneg %p66
      %p291 = pneg %p63
      %p292 = pneg %p87
      %p293 = pneg %p84
      %p294 = pneg %p108
      %p295 = pneg %p105
      %p296 = pneg %p129
      %p297 = pneg %p126
      %p298 = pneg %p150
      %p299 = pneg %p147
      %p300 = pneg %p171
      %p301 = pneg %p168
      %p302 = pneg %p192
      %p303 = pneg %p189
      %p304 = pneg %p218
      %p305 = pneg %p215
      %p306 = scmp.lt.s32.totalorder %s19, 1
      %s307 = scalar_select %p306, %s19, 1
      %s308 = smul.addr %s307, 2
      %s309 = smul.addr %s308, 4
      %s310 = scalar_lea.vmem %s8, %s309
      %p311 = scmp.lt.s32.totalorder %s19, 1
      %s312 = scalar_select %p311, %s19, 1
      %s313 = smul.addr %s312, 12
      %s314 = smul.addr %s313, 4
      %s315 = scalar_lea.vmem %s0, %s314
      %p316 = scmp.lt.s32.totalorder %s19, 1
      %s317 = scalar_select %p316, %s19, 1
      %s318 = smul.addr %s317, 2
      %s319 = smul.addr %s318, 4
      %s320 = scalar_lea.vmem %s1, %s319
      %p321 = scmp.lt.s32.totalorder %s19, 1
      %s322 = scalar_select %p321, %s19, 1
      %s323 = smul.addr %s322, 2
      %s324 = smul.addr %s323, 4
      %s325 = scalar_lea.vmem %s8, %s324
      %v327 = vld [vmem:[%s315] sm:$0xff]
      %v328 = vld [vmem:[%s315 + $0x8] sm:$0xf]
      %v329 = vld [vmem:[%s2] sm:$0xff]
      %v330 = vld [vmem:[%s2 + $0x8] sm:$0xff]
      %v331 = vld [vmem:[%s2 + $0x10] sm:$0xff]
      %v332 = vld [vmem:[%s2 + $0x18] sm:$0xff]
      %v333 = vld [vmem:[%s2 + $0x20] sm:$0xff]
      %v334 = vld [vmem:[%s2 + $0x28] sm:$0xff]
      %v335 = vld [vmem:[%s2 + $0x30] sm:$0xff]
      %v336 = vld [vmem:[%s2 + $0x38] sm:$0xff]
      %v337 = vld [vmem:[%s2 + $0x40] sm:$0xff]
      %v338 = vld [vmem:[%s2 + $0x48] sm:$0xff]
      %v339 = vld [vmem:[%s2 + $0x50] sm:$0xff]
      %v340 = vld [vmem:[%s2 + $0x58] sm:$0xff]
      %v341 = vld [vmem:[%s2 + $0x60] sm:$0xff]
      %v342 = vld [vmem:[%s2 + $0x68] sm:$0xff]
      %v343 = vld [vmem:[%s2 + $0x70] sm:$0xff]
      %v344 = vld [vmem:[%s2 + $0x78] sm:$0xff]
      %v345 = vld [vmem:[%s2 + $0x80] sm:$0xff]
      %v346 = vld [vmem:[%s2 + $0x88] sm:$0xff]
      %v347 = vld [vmem:[%s2 + $0x90] sm:$0xff]
      %v348 = vld [vmem:[%s2 + $0x98] sm:$0xff]
      %v349 = vld [vmem:[%s2 + $0xa0] sm:$0xff]
      %v350 = vld [vmem:[%s2 + $0xa8] sm:$0xff]
      %v351 = vld [vmem:[%s2 + $0xb0] sm:$0xff]
      %v352 = vld [vmem:[%s2 + $0xb8] sm:$0xff]
      %v353 = vld [vmem:[%s2 + $0xc0] sm:$0xff]
      %v354 = vld [vmem:[%s2 + $0xc8] sm:$0xff]
      %v355 = vld [vmem:[%s2 + $0xd0] sm:$0xff]
      %v356 = vld [vmem:[%s2 + $0xd8] sm:$0xff]
      %v357 = vld [vmem:[%s2 + $0xe0] sm:$0xff]
      %v358 = vld [vmem:[%s2 + $0xe8] sm:$0xff]
      %v359 = vld [vmem:[%s2 + $0xf0] sm:$0xff]
      %v360 = vld [vmem:[%s2 + $0xf8] sm:$0xff]
      %v361 = vld [vmem:[%s2 + $0x100] sm:$0xff]
      %v362 = vld [vmem:[%s2 + $0x108] sm:$0xff]
      %v363 = vld [vmem:[%s2 + $0x110] sm:$0xff]
      %v364 = vld [vmem:[%s2 + $0x118] sm:$0xff]
      %s365 = scalar_lea.vmem %s315, 24
      %v366 = vld [vmem:[%s365] sm:$0xff]
      %v367 = vld [vmem:[%s365 + $0x8] sm:$0xf]
      %s368 = scalar_lea.vmem %s2, 288
      %v369 = vld [vmem:[%s368] sm:$0xff]
      %v370 = vld [vmem:[%s368 + $0x8] sm:$0xff]
      %v371 = vld [vmem:[%s368 + $0x10] sm:$0xff]
      %v372 = vld [vmem:[%s368 + $0x18] sm:$0xff]
      %v373 = vld [vmem:[%s368 + $0x20] sm:$0xff]
      %v374 = vld [vmem:[%s368 + $0x28] sm:$0xff]
      %v375 = vld [vmem:[%s368 + $0x30] sm:$0xff]
      %v376 = vld [vmem:[%s368 + $0x38] sm:$0xff]
      %v377 = vld [vmem:[%s368 + $0x40] sm:$0xff]
      %v378 = vld [vmem:[%s368 + $0x48] sm:$0xff]
      %v379 = vld [vmem:[%s368 + $0x50] sm:$0xff]
      %v380 = vld [vmem:[%s368 + $0x58] sm:$0xff]
      %v381 = vld [vmem:[%s368 + $0x60] sm:$0xff]
      %v382 = vld [vmem:[%s368 + $0x68] sm:$0xff]
      %v383 = vld [vmem:[%s368 + $0x70] sm:$0xff]
      %v384 = vld [vmem:[%s368 + $0x78] sm:$0xff]
      %v385 = vld [vmem:[%s368 + $0x80] sm:$0xff]
      %v386 = vld [vmem:[%s368 + $0x88] sm:$0xff]
      %v387 = vld [vmem:[%s368 + $0x90] sm:$0xff]
      %v388 = vld [vmem:[%s368 + $0x98] sm:$0xff]
      %v389 = vld [vmem:[%s368 + $0xa0] sm:$0xff]
      %v390 = vld [vmem:[%s368 + $0xa8] sm:$0xff]
      %v391 = vld [vmem:[%s368 + $0xb0] sm:$0xff]
      %v392 = vld [vmem:[%s368 + $0xb8] sm:$0xff]
      %v393 = vld [vmem:[%s368 + $0xc0] sm:$0xff]
      %v394 = vld [vmem:[%s368 + $0xc8] sm:$0xff]
      %v395 = vld [vmem:[%s368 + $0xd0] sm:$0xff]
      %v396 = vld [vmem:[%s368 + $0xd8] sm:$0xff]
      %v397 = vld [vmem:[%s368 + $0xe0] sm:$0xff]
      %v398 = vld [vmem:[%s368 + $0xe8] sm:$0xff]
      %v399 = vld [vmem:[%s368 + $0xf0] sm:$0xff]
      %v400 = vld [vmem:[%s368 + $0xf8] sm:$0xff]
      %v401 = vld [vmem:[%s368 + $0x100] sm:$0xff]
      %v402 = vld [vmem:[%s368 + $0x108] sm:$0xff]
      %v403 = vld [vmem:[%s368 + $0x110] sm:$0xff]
      %v404 = vld [vmem:[%s368 + $0x118] sm:$0xff]
      %v407 = vunpack.c.l.b16 %v366
      %v408 = vunpack.c.h.b16 %v366
      %v409 = vunpack.c.l.b16 %v367
      %v410 = vpack.c.b16 %v407, %v407
      %v411 = vpack.c.b16 %v408, %v408
      %v412 = vpack.c.b16 %v409, %v409
      %v451 = vunpack.c.l.b16 %v369
      %v452 = vunpack.c.h.b16 %v369
      %v453 = vunpack.c.l.b16 %v370
      %v454 = vunpack.c.h.b16 %v370
      %v455 = vunpack.c.l.b16 %v371
      %v456 = vunpack.c.h.b16 %v371
      %v457 = vunpack.c.l.b16 %v372
      %v458 = vunpack.c.h.b16 %v372
      %v459 = vunpack.c.l.b16 %v373
      %v460 = vunpack.c.h.b16 %v373
      %v461 = vunpack.c.l.b16 %v374
      %v462 = vunpack.c.h.b16 %v374
      %v463 = vunpack.c.l.b16 %v375
      %v464 = vunpack.c.h.b16 %v375
      %v465 = vunpack.c.l.b16 %v376
      %v466 = vunpack.c.h.b16 %v376
      %v467 = vunpack.c.l.b16 %v377
      %v468 = vunpack.c.h.b16 %v377
      %v469 = vunpack.c.l.b16 %v378
      %v470 = vunpack.c.h.b16 %v378
      %v471 = vunpack.c.l.b16 %v379
      %v472 = vunpack.c.h.b16 %v379
      %v473 = vunpack.c.l.b16 %v380
      %v474 = vunpack.c.h.b16 %v380
      %v475 = vunpack.c.l.b16 %v381
      %v476 = vunpack.c.h.b16 %v381
      %v477 = vunpack.c.l.b16 %v382
      %v478 = vunpack.c.h.b16 %v382
      %v479 = vunpack.c.l.b16 %v383
      %v480 = vunpack.c.h.b16 %v383
      %v481 = vunpack.c.l.b16 %v384
      %v482 = vunpack.c.h.b16 %v384
      %v483 = vunpack.c.l.b16 %v385
      %v484 = vunpack.c.h.b16 %v385
      %v485 = vunpack.c.l.b16 %v386
      %v486 = vunpack.c.h.b16 %v386
      %v487 = vunpack.c.l.b16 %v387
      %v488 = vunpack.c.h.b16 %v387
      %v489 = vunpack.c.l.b16 %v388
      %v490 = vunpack.c.h.b16 %v388
      %v491 = vunpack.c.l.b16 %v389
      %v492 = vunpack.c.h.b16 %v389
      %v493 = vunpack.c.l.b16 %v390
      %v494 = vunpack.c.h.b16 %v390
      %v495 = vunpack.c.l.b16 %v391
      %v496 = vunpack.c.h.b16 %v391
      %v497 = vunpack.c.l.b16 %v392
      %v498 = vunpack.c.h.b16 %v392
      %v499 = vunpack.c.l.b16 %v393
      %v500 = vunpack.c.h.b16 %v393
      %v501 = vunpack.c.l.b16 %v394
      %v502 = vunpack.c.h.b16 %v394
      %v503 = vunpack.c.l.b16 %v395
      %v504 = vunpack.c.h.b16 %v395
      %v505 = vunpack.c.l.b16 %v396
      %v506 = vunpack.c.h.b16 %v396
      %v507 = vunpack.c.l.b16 %v397
      %v508 = vunpack.c.h.b16 %v397
      %v509 = vunpack.c.l.b16 %v398
      %v510 = vunpack.c.h.b16 %v398
      %v511 = vunpack.c.l.b16 %v399
      %v512 = vunpack.c.h.b16 %v399
      %v513 = vunpack.c.l.b16 %v400
      %v514 = vunpack.c.h.b16 %v400
      %v515 = vunpack.c.l.b16 %v401
      %v516 = vunpack.c.h.b16 %v401
      %v517 = vunpack.c.l.b16 %v402
      %v518 = vunpack.c.h.b16 %v402
      %v519 = vunpack.c.l.b16 %v403
      %v520 = vunpack.c.h.b16 %v403
      %v521 = vunpack.c.l.b16 %v404
      %v522 = vunpack.c.h.b16 %v404
      %v523 = vpack.c.b16 %v453, %v451
      %v524 = vpack.c.b16 %v454, %v452
      %v525 = vpack.c.b16 %v457, %v455
      %v526 = vpack.c.b16 %v458, %v456
      %v527 = vpack.c.b16 %v461, %v459
      %v528 = vpack.c.b16 %v462, %v460
      %v529 = vpack.c.b16 %v465, %v463
      %v530 = vpack.c.b16 %v466, %v464
      %v531 = vpack.c.b16 %v469, %v467
      %v532 = vpack.c.b16 %v470, %v468
      %v533 = vpack.c.b16 %v473, %v471
      %v534 = vpack.c.b16 %v474, %v472
      %v535 = vpack.c.b16 %v477, %v475
      %v536 = vpack.c.b16 %v478, %v476
      %v537 = vpack.c.b16 %v481, %v479
      %v538 = vpack.c.b16 %v482, %v480
      %v539 = vpack.c.b16 %v485, %v483
      %v540 = vpack.c.b16 %v486, %v484
      %v541 = vpack.c.b16 %v489, %v487
      %v542 = vpack.c.b16 %v490, %v488
      %v543 = vpack.c.b16 %v493, %v491
      %v544 = vpack.c.b16 %v494, %v492
      %v545 = vpack.c.b16 %v497, %v495
      %v546 = vpack.c.b16 %v498, %v496
      %v547 = vpack.c.b16 %v501, %v499
      %v548 = vpack.c.b16 %v502, %v500
      %v549 = vpack.c.b16 %v505, %v503
      %v550 = vpack.c.b16 %v506, %v504
      %v551 = vpack.c.b16 %v509, %v507
      %v552 = vpack.c.b16 %v510, %v508
      %v553 = vpack.c.b16 %v513, %v511
      %v554 = vpack.c.b16 %v514, %v512
      %v555 = vpack.c.b16 %v517, %v515
      %v556 = vpack.c.b16 %v518, %v516
      %v557 = vpack.c.b16 %v521, %v519
      %v558 = vpack.c.b16 %v522, %v520
      %vm595 = vcmask 261120
      %v597 = vsel %vm595, %v412, 0
      %599 = vmatprep.subr.bf16.mxu0 %v524
      %600 = vmatpush1.bf16.msra.mxu0 %v523
      %601 = vmatprep.subr.bf16.mxu0 %v526
      %602 = vmatpush1.bf16.msra.mxu0 %v525
      %603 = vmatprep.subr.bf16.mxu0 %v528
      %604 = vmatpush1.bf16.msra.mxu0 %v527
      %605 = vmatprep.subr.bf16.mxu0 %v530
      %606 = vmatpush1.bf16.msra.mxu0 %v529
      %607 = vmatprep.subr.bf16.mxu0 %v532
      %608 = vmatpush1.bf16.msra.mxu0 %v531
      %609 = vmatprep.subr.bf16.mxu0 %v534
      %610 = vmatpush1.bf16.msra.mxu0 %v533
      %611 = vmatprep.subr.bf16.mxu0 %v536
      %612 = vmatpush1.bf16.msra.mxu0 %v535
      %613 = vmatprep.subr.bf16.mxu0 %v538
      %614 = vmatpush1.bf16.msra.mxu0 %v537
      %615 = vmatprep.subr.bf16.mxu0 %v540
      %616 = vmatpush1.bf16.msra.mxu0 %v539
      %617 = vmatprep.subr.bf16.mxu0 %v542
      %618 = vmatpush1.bf16.msra.mxu0 %v541
      %619 = vmatprep.subr.bf16.mxu0 %v544
      %620 = vmatpush1.bf16.msra.mxu0 %v543
      %621 = vmatprep.subr.bf16.mxu0 %v546
      %622 = vmatpush1.bf16.msra.mxu0 %v545
      %623 = vmatprep.subr.bf16.mxu0 %v548
      %624 = vmatpush1.bf16.msra.mxu0 %v547
      %625 = vmatprep.subr.bf16.mxu0 %v550
      %626 = vmatpush1.bf16.msra.mxu0 %v549
      %627 = vmatprep.subr.bf16.mxu0 %v552
      %628 = vmatpush1.bf16.msra.mxu0 %v551
      %629 = vmatprep.subr.bf16.mxu0 %v554
      %630 = vmatpush1.bf16.msra.mxu0 %v553
      %631 = vmatprep.mubr.bf16.mxu0 %v411
      %632 = vmatmul.mubr.bf16.gmra.mrb[0].mxu0 %v410
      %v633 = vpop.f32.mrb[0].mxu0
      %v634 = vadd.f32 0.0, %v633
      %v635 = vpop.f32.mrb[0].mxu0
      %v636 = vadd.f32 0.0, %v635
      %v637 = vpop.f32.mrb[0].mxu0
      %v638 = vpop.f32.mrb[0].mxu0
      %639 = vdwg.mxu0
      %640 = vmatprep.subr.bf16.mxu0 %v556
      %641 = vmatpush1.bf16.msra.mxu0 %v555
      %642 = vmatprep.subr.bf16.mxu0 %v558
      %643 = vmatpush1.bf16.msra.mxu0 %v557
      %644 = vmatprep.subr.bf16.mxu0 0
      %645 = vmatpush1.bf16.msra.mxu0 0
      %646 = vmatprep.subr.bf16.mxu0 0
      %647 = vmatpush1.bf16.msra.mxu0 0
      %648 = vmatprep.subr.bf16.mxu0 0
      %649 = vmatpush1.bf16.msra.mxu0 0
      %650 = vmatprep.subr.bf16.mxu0 0
      %651 = vmatpush1.bf16.msra.mxu0 0
      %652 = vmatprep.subr.bf16.mxu0 0
      %653 = vmatpush1.bf16.msra.mxu0 0
      %654 = vmatprep.subr.bf16.mxu0 0
      %655 = vmatpush1.bf16.msra.mxu0 0
      %656 = vmatprep.subr.bf16.mxu0 0
      %657 = vmatpush1.bf16.msra.mxu0 0
      %658 = vmatprep.subr.bf16.mxu0 0
      %659 = vmatpush1.bf16.msra.mxu0 0
      %660 = vmatprep.subr.bf16.mxu0 0
      %661 = vmatpush1.bf16.msra.mxu0 0
      %662 = vmatprep.subr.bf16.mxu0 0
      %663 = vmatpush1.bf16.msra.mxu0 0
      %664 = vmatprep.subr.bf16.mxu0 0
      %665 = vmatpush1.bf16.msra.mxu0 0
      %666 = vmatprep.subr.bf16.mxu0 0
      %667 = vmatpush1.bf16.msra.mxu0 0
      %668 = vmatprep.subr.bf16.mxu0 0
      %669 = vmatpush1.bf16.msra.mxu0 0
      %670 = vmatprep.subr.bf16.mxu0 0
      %671 = vmatpush1.bf16.msra.mxu0 0
      %672 = vmatprep.mubr.bf16.mxu0 0
      %673 = vmatmul.mubr.bf16.gmra.mrb[0].mxu0 %v597
      %v674 = vpop.f32.mrb[0].mxu0
      %v675 = vadd.f32 %v634, %v674
      %v676 = vpop.f32.mrb[0].mxu0
      %v677 = vadd.f32 %v636, %v676
      %v678 = vpop.f32.mrb[0].mxu0
      %v679 = vpop.f32.mrb[0].mxu0
      %680 = vdwg.mxu0
      %v683 = vunpack.c.l.b16 %v327
      %v684 = vunpack.c.h.b16 %v327
      %v685 = vunpack.c.l.b16 %v328
      %v686 = vpack.c.b16 %v683, %v683
      %v687 = vpack.c.b16 %v684, %v684
      %v688 = vpack.c.b16 %v685, %v685
      %v727 = vunpack.c.l.b16 %v329
      %v728 = vunpack.c.h.b16 %v329
      %v729 = vunpack.c.l.b16 %v330
      %v730 = vunpack.c.h.b16 %v330
      %v731 = vunpack.c.l.b16 %v331
      %v732 = vunpack.c.h.b16 %v331
      %v733 = vunpack.c.l.b16 %v332
      %v734 = vunpack.c.h.b16 %v332
      %v735 = vunpack.c.l.b16 %v333
      %v736 = vunpack.c.h.b16 %v333
      %v737 = vunpack.c.l.b16 %v334
      %v738 = vunpack.c.h.b16 %v334
      %v739 = vunpack.c.l.b16 %v335
      %v740 = vunpack.c.h.b16 %v335
      %v741 = vunpack.c.l.b16 %v336
      %v742 = vunpack.c.h.b16 %v336
      %v743 = vunpack.c.l.b16 %v337
      %v744 = vunpack.c.h.b16 %v337
      %v745 = vunpack.c.l.b16 %v338
      %v746 = vunpack.c.h.b16 %v338
      %v747 = vunpack.c.l.b16 %v339
      %v748 = vunpack.c.h.b16 %v339
      %v749 = vunpack.c.l.b16 %v340
      %v750 = vunpack.c.h.b16 %v340
      %v751 = vunpack.c.l.b16 %v341
      %v752 = vunpack.c.h.b16 %v341
      %v753 = vunpack.c.l.b16 %v342
      %v754 = vunpack.c.h.b16 %v342
      %v755 = vunpack.c.l.b16 %v343
      %v756 = vunpack.c.h.b16 %v343
      %v757 = vunpack.c.l.b16 %v344
      %v758 = vunpack.c.h.b16 %v344
      %v759 = vunpack.c.l.b16 %v345
      %v760 = vunpack.c.h.b16 %v345
      %v761 = vunpack.c.l.b16 %v346
      %v762 = vunpack.c.h.b16 %v346
      %v763 = vunpack.c.l.b16 %v347
      %v764 = vunpack.c.h.b16 %v347
      %v765 = vunpack.c.l.b16 %v348
      %v766 = vunpack.c.h.b16 %v348
      %v767 = vunpack.c.l.b16 %v349
      %v768 = vunpack.c.h.b16 %v349
      %v769 = vunpack.c.l.b16 %v350
      %v770 = vunpack.c.h.b16 %v350
      %v771 = vunpack.c.l.b16 %v351
      %v772 = vunpack.c.h.b16 %v351
      %v773 = vunpack.c.l.b16 %v352
      %v774 = vunpack.c.h.b16 %v352
      %v775 = vunpack.c.l.b16 %v353
      %v776 = vunpack.c.h.b16 %v353
      %v777 = vunpack.c.l.b16 %v354
      %v778 = vunpack.c.h.b16 %v354
      %v779 = vunpack.c.l.b16 %v355
      %v780 = vunpack.c.h.b16 %v355
      %v781 = vunpack.c.l.b16 %v356
      %v782 = vunpack.c.h.b16 %v356
      %v783 = vunpack.c.l.b16 %v357
      %v784 = vunpack.c.h.b16 %v357
      %v785 = vunpack.c.l.b16 %v358
      %v786 = vunpack.c.h.b16 %v358
      %v787 = vunpack.c.l.b16 %v359
      %v788 = vunpack.c.h.b16 %v359
      %v789 = vunpack.c.l.b16 %v360
      %v790 = vunpack.c.h.b16 %v360
      %v791 = vunpack.c.l.b16 %v361
      %v792 = vunpack.c.h.b16 %v361
      %v793 = vunpack.c.l.b16 %v362
      %v794 = vunpack.c.h.b16 %v362
      %v795 = vunpack.c.l.b16 %v363
      %v796 = vunpack.c.h.b16 %v363
      %v797 = vunpack.c.l.b16 %v364
      %v798 = vunpack.c.h.b16 %v364
      %v799 = vpack.c.b16 %v729, %v727
      %v800 = vpack.c.b16 %v730, %v728
      %v801 = vpack.c.b16 %v733, %v731
      %v802 = vpack.c.b16 %v734, %v732
      %v803 = vpack.c.b16 %v737, %v735
      %v804 = vpack.c.b16 %v738, %v736
      %v805 = vpack.c.b16 %v741, %v739
      %v806 = vpack.c.b16 %v742, %v740
      %v807 = vpack.c.b16 %v745, %v743
      %v808 = vpack.c.b16 %v746, %v744
      %v809 = vpack.c.b16 %v749, %v747
      %v810 = vpack.c.b16 %v750, %v748
      %v811 = vpack.c.b16 %v753, %v751
      %v812 = vpack.c.b16 %v754, %v752
      %v813 = vpack.c.b16 %v757, %v755
      %v814 = vpack.c.b16 %v758, %v756
      %v815 = vpack.c.b16 %v761, %v759
      %v816 = vpack.c.b16 %v762, %v760
      %v817 = vpack.c.b16 %v765, %v763
      %v818 = vpack.c.b16 %v766, %v764
      %v819 = vpack.c.b16 %v769, %v767
      %v820 = vpack.c.b16 %v770, %v768
      %v821 = vpack.c.b16 %v773, %v771
      %v822 = vpack.c.b16 %v774, %v772
      %v823 = vpack.c.b16 %v777, %v775
      %v824 = vpack.c.b16 %v778, %v776
      %v825 = vpack.c.b16 %v781, %v779
      %v826 = vpack.c.b16 %v782, %v780
      %v827 = vpack.c.b16 %v785, %v783
      %v828 = vpack.c.b16 %v786, %v784
      %v829 = vpack.c.b16 %v789, %v787
      %v830 = vpack.c.b16 %v790, %v788
      %v831 = vpack.c.b16 %v793, %v791
      %v832 = vpack.c.b16 %v794, %v792
      %v833 = vpack.c.b16 %v797, %v795
      %v834 = vpack.c.b16 %v798, %v796
      %v872 = vsel %vm595, %v688, 0
      %874 = vmatprep.subr.bf16.mxu0 %v800
      %875 = vmatpush1.bf16.msra.mxu0 %v799
      %876 = vmatprep.subr.bf16.mxu0 %v802
      %877 = vmatpush1.bf16.msra.mxu0 %v801
      %878 = vmatprep.subr.bf16.mxu0 %v804
      %879 = vmatpush1.bf16.msra.mxu0 %v803
      %880 = vmatprep.subr.bf16.mxu0 %v806
      %881 = vmatpush1.bf16.msra.mxu0 %v805
      %882 = vmatprep.subr.bf16.mxu0 %v808
      %883 = vmatpush1.bf16.msra.mxu0 %v807
      %884 = vmatprep.subr.bf16.mxu0 %v810
      %885 = vmatpush1.bf16.msra.mxu0 %v809
      %886 = vmatprep.subr.bf16.mxu0 %v812
      %887 = vmatpush1.bf16.msra.mxu0 %v811
      %888 = vmatprep.subr.bf16.mxu0 %v814
      %889 = vmatpush1.bf16.msra.mxu0 %v813
      %890 = vmatprep.subr.bf16.mxu0 %v816
      %891 = vmatpush1.bf16.msra.mxu0 %v815
      %892 = vmatprep.subr.bf16.mxu0 %v818
      %893 = vmatpush1.bf16.msra.mxu0 %v817
      %894 = vmatprep.subr.bf16.mxu0 %v820
      %895 = vmatpush1.bf16.msra.mxu0 %v819
      %896 = vmatprep.subr.bf16.mxu0 %v822
      %897 = vmatpush1.bf16.msra.mxu0 %v821
      %898 = vmatprep.subr.bf16.mxu0 %v824
      %899 = vmatpush1.bf16.msra.mxu0 %v823
      %900 = vmatprep.subr.bf16.mxu0 %v826
      %901 = vmatpush1.bf16.msra.mxu0 %v825
      %902 = vmatprep.subr.bf16.mxu0 %v828
      %903 = vmatpush1.bf16.msra.mxu0 %v827
      %904 = vmatprep.subr.bf16.mxu0 %v830
      %905 = vmatpush1.bf16.msra.mxu0 %v829
      %906 = vmatprep.mubr.bf16.mxu0 %v687
      %907 = vmatmul.mubr.bf16.gmra.mrb[0].mxu0 %v686
      %v908 = vpop.f32.mrb[0].mxu0
      %v909 = vadd.f32 %v675, %v908
      %v910 = vpop.f32.mrb[0].mxu0
      %v911 = vadd.f32 %v677, %v910
      %v912 = vpop.f32.mrb[0].mxu0
      %v913 = vpop.f32.mrb[0].mxu0
      %914 = vdwg.mxu0
      %915 = vmatprep.subr.bf16.mxu0 %v832
      %916 = vmatpush1.bf16.msra.mxu0 %v831
      %917 = vmatprep.subr.bf16.mxu0 %v834
      %918 = vmatpush1.bf16.msra.mxu0 %v833
      %919 = vmatprep.subr.bf16.mxu0 0
      %920 = vmatpush1.bf16.msra.mxu0 0
      %921 = vmatprep.subr.bf16.mxu0 0
      %922 = vmatpush1.bf16.msra.mxu0 0
      %923 = vmatprep.subr.bf16.mxu0 0
      %924 = vmatpush1.bf16.msra.mxu0 0
      %925 = vmatprep.subr.bf16.mxu0 0
      %926 = vmatpush1.bf16.msra.mxu0 0
      %927 = vmatprep.subr.bf16.mxu0 0
      %928 = vmatpush1.bf16.msra.mxu0 0
      %929 = vmatprep.subr.bf16.mxu0 0
      %930 = vmatpush1.bf16.msra.mxu0 0
      %931 = vmatprep.subr.bf16.mxu0 0
      %932 = vmatpush1.bf16.msra.mxu0 0
      %933 = vmatprep.subr.bf16.mxu0 0
      %934 = vmatpush1.bf16.msra.mxu0 0
      %935 = vmatprep.subr.bf16.mxu0 0
      %936 = vmatpush1.bf16.msra.mxu0 0
      %937 = vmatprep.subr.bf16.mxu0 0
      %938 = vmatpush1.bf16.msra.mxu0 0
      %939 = vmatprep.subr.bf16.mxu0 0
      %940 = vmatpush1.bf16.msra.mxu0 0
      %941 = vmatprep.subr.bf16.mxu0 0
      %942 = vmatpush1.bf16.msra.mxu0 0
      %943 = vmatprep.subr.bf16.mxu0 0
      %944 = vmatpush1.bf16.msra.mxu0 0
      %945 = vmatprep.subr.bf16.mxu0 0
      %946 = vmatpush1.bf16.msra.mxu0 0
      %947 = vmatprep.mubr.bf16.mxu0 0
      %948 = vmatmul.mubr.bf16.gmra.mrb[0].mxu0 %v872
      %v949 = vpop.f32.mrb[0].mxu0
      %v950 = vadd.f32 %v909, %v949
      %v951 = vpop.f32.mrb[0].mxu0
      %v952 = vadd.f32 %v911, %v951
      %v953 = vpop.f32.mrb[0].mxu0
      %v954 = vpop.f32.mrb[0].mxu0
      %955 = vdwg.mxu0
      %v956 = vld [vmem:[%s315] sm:$0xff]
      %v957 = vld [vmem:[%s315 + $0x8] sm:$0xf]
      %v958 = vld [vmem:[%s315 + $0xc] sm:$0x11]
      %v959 = vld [vmem:[%s315 + $0x14] sm:$0x1]
      %s960 = scalar_lea.vmem %s2, 576
      %v961 = vld [vmem:[%s960] sm:$0xff]
      %v962 = vld [vmem:[%s960 + $0x8] sm:$0xff]
      %v963 = vld [vmem:[%s960 + $0x10] sm:$0xff]
      %v964 = vld [vmem:[%s960 + $0x18] sm:$0xff]
      %v965 = vld [vmem:[%s960 + $0x20] sm:$0xff]
      %v966 = vld [vmem:[%s960 + $0x28] sm:$0xff]
      %v967 = vld [vmem:[%s960 + $0x30] sm:$0xff]
      %v968 = vld [vmem:[%s960 + $0x38] sm:$0xff]
      %v969 = vld [vmem:[%s960 + $0x40] sm:$0xff]
      %v970 = vld [vmem:[%s960 + $0x48] sm:$0xff]
      %v971 = vld [vmem:[%s960 + $0x50] sm:$0xff]
      %v972 = vld [vmem:[%s960 + $0x58] sm:$0xff]
      %v973 = vld [vmem:[%s960 + $0x60] sm:$0xff]
      %v974 = vld [vmem:[%s960 + $0x68] sm:$0xff]
      %v975 = vld [vmem:[%s960 + $0x70] sm:$0xff]
      %v976 = vld [vmem:[%s960 + $0x78] sm:$0xff]
      %v977 = vld [vmem:[%s960 + $0x80] sm:$0xff]
      %v978 = vld [vmem:[%s960 + $0x88] sm:$0xff]
      %v979 = vld [vmem:[%s960 + $0x90] sm:$0xff]
      %v980 = vld [vmem:[%s960 + $0x98] sm:$0xff]
      %v981 = vld [vmem:[%s960 + $0xa0] sm:$0xff]
      %v982 = vld [vmem:[%s960 + $0xa8] sm:$0xff]
      %v983 = vld [vmem:[%s960 + $0xb0] sm:$0xff]
      %v984 = vld [vmem:[%s960 + $0xb8] sm:$0xff]
      %v985 = vld [vmem:[%s960 + $0xc0] sm:$0xff]
      %v986 = vld [vmem:[%s960 + $0xc8] sm:$0xff]
      %v987 = vld [vmem:[%s960 + $0xd0] sm:$0xff]
      %v988 = vld [vmem:[%s960 + $0xd8] sm:$0xff]
      %v989 = vld [vmem:[%s960 + $0xe0] sm:$0xff]
      %v990 = vld [vmem:[%s960 + $0xe8] sm:$0xff]
      %v991 = vld [vmem:[%s960 + $0xf0] sm:$0xff]
      %v992 = vld [vmem:[%s960 + $0xf8] sm:$0xff]
      %v993 = vld [vmem:[%s960 + $0x100] sm:$0xff]
      %v994 = vld [vmem:[%s960 + $0x108] sm:$0xff]
      %v995 = vld [vmem:[%s960 + $0x110] sm:$0xff]
      %v996 = vld [vmem:[%s960 + $0x118] sm:$0xff]
      %v1001 = vunpack.c.l.b16 %v956
      %v1002 = vunpack.c.h.b16 %v956
      %v1003 = vunpack.c.l.b16 %v957
      %v1004 = vunpack.c.l.b16 %v958
      %v1005 = vunpack.c.h.b16 %v958
      %v1006 = vunpack.c.l.b16 %v959
      %v1007 = vpack.c.b16 %v1004, %v1001
      %v1008 = vpack.c.b16 %v1005, %v1002
      %v1009 = vpack.c.b16 %v1006, %v1003
      %v1011 = vshrl.u32 %v1007, 16
      %v1013 = vshll.u32 %v1007, 16
      %v1015 = vrot.slane %v1013, 1
      %v1016 = vor.u32 %v1011, %v1015
      %v1018 = vshrl.u32 %v1008, 16
      %v1020 = vshll.u32 %v1008, 16
      %v1022 = vrot.slane %v1020, 1
      %v1023 = vor.u32 %v1018, %v1022
      %v1025 = vshrl.u32 %v1009, 16
      %v1027 = vshll.u32 %v1009, 16
      %v1029 = vrot.slane %v1027, 1
      %v1030 = vor.u32 %v1025, %v1029
      %v1069 = vunpack.c.l.b16 %v961
      %v1070 = vunpack.c.h.b16 %v961
      %v1071 = vunpack.c.l.b16 %v962
      %v1072 = vunpack.c.h.b16 %v962
      %v1073 = vunpack.c.l.b16 %v963
      %v1074 = vunpack.c.h.b16 %v963
      %v1075 = vunpack.c.l.b16 %v964
      %v1076 = vunpack.c.h.b16 %v964
      %v1077 = vunpack.c.l.b16 %v965
      %v1078 = vunpack.c.h.b16 %v965
      %v1079 = vunpack.c.l.b16 %v966
      %v1080 = vunpack.c.h.b16 %v966
      %v1081 = vunpack.c.l.b16 %v967
      %v1082 = vunpack.c.h.b16 %v967
      %v1083 = vunpack.c.l.b16 %v968
      %v1084 = vunpack.c.h.b16 %v968
      %v1085 = vunpack.c.l.b16 %v969
      %v1086 = vunpack.c.h.b16 %v969
      %v1087 = vunpack.c.l.b16 %v970
      %v1088 = vunpack.c.h.b16 %v970
      %v1089 = vunpack.c.l.b16 %v971
      %v1090 = vunpack.c.h.b16 %v971
      %v1091 = vunpack.c.l.b16 %v972
      %v1092 = vunpack.c.h.b16 %v972
      %v1093 = vunpack.c.l.b16 %v973
      %v1094 = vunpack.c.h.b16 %v973
      %v1095 = vunpack.c.l.b16 %v974
      %v1096 = vunpack.c.h.b16 %v974
      %v1097 = vunpack.c.l.b16 %v975
      %v1098 = vunpack.c.h.b16 %v975
      %v1099 = vunpack.c.l.b16 %v976
      %v1100 = vunpack.c.h.b16 %v976
      %v1101 = vunpack.c.l.b16 %v977
      %v1102 = vunpack.c.h.b16 %v977
      %v1103 = vunpack.c.l.b16 %v978
      %v1104 = vunpack.c.h.b16 %v978
      %v1105 = vunpack.c.l.b16 %v979
      %v1106 = vunpack.c.h.b16 %v979
      %v1107 = vunpack.c.l.b16 %v980
      %v1108 = vunpack.c.h.b16 %v980
      %v1109 = vunpack.c.l.b16 %v981
      %v1110 = vunpack.c.h.b16 %v981
      %v1111 = vunpack.c.l.b16 %v982
      %v1112 = vunpack.c.h.b16 %v982
      %v1113 = vunpack.c.l.b16 %v983
      %v1114 = vunpack.c.h.b16 %v983
      %v1115 = vunpack.c.l.b16 %v984
      %v1116 = vunpack.c.h.b16 %v984
      %v1117 = vunpack.c.l.b16 %v985
      %v1118 = vunpack.c.h.b16 %v985
      %v1119 = vunpack.c.l.b16 %v986
      %v1120 = vunpack.c.h.b16 %v986
      %v1121 = vunpack.c.l.b16 %v987
      %v1122 = vunpack.c.h.b16 %v987
      %v1123 = vunpack.c.l.b16 %v988
      %v1124 = vunpack.c.h.b16 %v988
      %v1125 = vunpack.c.l.b16 %v989
      %v1126 = vunpack.c.h.b16 %v989
      %v1127 = vunpack.c.l.b16 %v990
      %v1128 = vunpack.c.h.b16 %v990
      %v1129 = vunpack.c.l.b16 %v991
      %v1130 = vunpack.c.h.b16 %v991
      %v1131 = vunpack.c.l.b16 %v992
      %v1132 = vunpack.c.h.b16 %v992
      %v1133 = vunpack.c.l.b16 %v993
      %v1134 = vunpack.c.h.b16 %v993
      %v1135 = vunpack.c.l.b16 %v994
      %v1136 = vunpack.c.h.b16 %v994
      %v1137 = vunpack.c.l.b16 %v995
      %v1138 = vunpack.c.h.b16 %v995
      %v1139 = vunpack.c.l.b16 %v996
      %v1140 = vunpack.c.h.b16 %v996
      %v1141 = vpack.c.b16 %v1071, %v1069
      %v1142 = vpack.c.b16 %v1072, %v1070
      %v1143 = vpack.c.b16 %v1075, %v1073
      %v1144 = vpack.c.b16 %v1076, %v1074
      %v1145 = vpack.c.b16 %v1079, %v1077
      %v1146 = vpack.c.b16 %v1080, %v1078
      %v1147 = vpack.c.b16 %v1083, %v1081
      %v1148 = vpack.c.b16 %v1084, %v1082
      %v1149 = vpack.c.b16 %v1087, %v1085
      %v1150 = vpack.c.b16 %v1088, %v1086
      %v1151 = vpack.c.b16 %v1091, %v1089
      %v1152 = vpack.c.b16 %v1092, %v1090
      %v1153 = vpack.c.b16 %v1095, %v1093
      %v1154 = vpack.c.b16 %v1096, %v1094
      %v1155 = vpack.c.b16 %v1099, %v1097
      %v1156 = vpack.c.b16 %v1100, %v1098
      %v1157 = vpack.c.b16 %v1103, %v1101
      %v1158 = vpack.c.b16 %v1104, %v1102
      %v1159 = vpack.c.b16 %v1107, %v1105
      %v1160 = vpack.c.b16 %v1108, %v1106
      %v1161 = vpack.c.b16 %v1111, %v1109
      %v1162 = vpack.c.b16 %v1112, %v1110
      %v1163 = vpack.c.b16 %v1115, %v1113
      %v1164 = vpack.c.b16 %v1116, %v1114
      %v1165 = vpack.c.b16 %v1119, %v1117
      %v1166 = vpack.c.b16 %v1120, %v1118
      %v1167 = vpack.c.b16 %v1123, %v1121
      %v1168 = vpack.c.b16 %v1124, %v1122
      %v1169 = vpack.c.b16 %v1127, %v1125
      %v1170 = vpack.c.b16 %v1128, %v1126
      %v1171 = vpack.c.b16 %v1131, %v1129
      %v1172 = vpack.c.b16 %v1132, %v1130
      %v1173 = vpack.c.b16 %v1135, %v1133
      %v1174 = vpack.c.b16 %v1136, %v1134
      %v1175 = vpack.c.b16 %v1139, %v1137
      %v1176 = vpack.c.b16 %v1140, %v1138
      %v1214 = vsel %vm595, %v1030, 0
      %1216 = vmatprep.subr.bf16.mxu0 %v1142
      %1217 = vmatpush1.bf16.msra.mxu0 %v1141
      %1218 = vmatprep.subr.bf16.mxu0 %v1144
      %1219 = vmatpush1.bf16.msra.mxu0 %v1143
      %1220 = vmatprep.subr.bf16.mxu0 %v1146
      %1221 = vmatpush1.bf16.msra.mxu0 %v1145
      %1222 = vmatprep.subr.bf16.mxu0 %v1148
      %1223 = vmatpush1.bf16.msra.mxu0 %v1147
      %1224 = vmatprep.subr.bf16.mxu0 %v1150
      %1225 = vmatpush1.bf16.msra.mxu0 %v1149
      %1226 = vmatprep.subr.bf16.mxu0 %v1152
      %1227 = vmatpush1.bf16.msra.mxu0 %v1151
      %1228 = vmatprep.subr.bf16.mxu0 %v1154
      %1229 = vmatpush1.bf16.msra.mxu0 %v1153
      %1230 = vmatprep.subr.bf16.mxu0 %v1156
      %1231 = vmatpush1.bf16.msra.mxu0 %v1155
      %1232 = vmatprep.subr.bf16.mxu0 %v1158
      %1233 = vmatpush1.bf16.msra.mxu0 %v1157
      %1234 = vmatprep.subr.bf16.mxu0 %v1160
      %1235 = vmatpush1.bf16.msra.mxu0 %v1159
      %1236 = vmatprep.subr.bf16.mxu0 %v1162
      %1237 = vmatpush1.bf16.msra.mxu0 %v1161
      %1238 = vmatprep.subr.bf16.mxu0 %v1164
      %1239 = vmatpush1.bf16.msra.mxu0 %v1163
      %1240 = vmatprep.subr.bf16.mxu0 %v1166
      %1241 = vmatpush1.bf16.msra.mxu0 %v1165
      %1242 = vmatprep.subr.bf16.mxu0 %v1168
      %1243 = vmatpush1.bf16.msra.mxu0 %v1167
      %1244 = vmatprep.subr.bf16.mxu0 %v1170
      %1245 = vmatpush1.bf16.msra.mxu0 %v1169
      %1246 = vmatprep.subr.bf16.mxu0 %v1172
      %1247 = vmatpush1.bf16.msra.mxu0 %v1171
      %1248 = vmatprep.mubr.bf16.mxu0 %v1023
      %1249 = vmatmul.mubr.bf16.gmra.mrb[0].mxu0 %v1016
      %v1250 = vpop.f32.mrb[0].mxu0
      %v1251 = vadd.f32 0.0, %v1250
      %v1252 = vpop.f32.mrb[0].mxu0
      %v1253 = vadd.f32 0.0, %v1252
      %v1254 = vpop.f32.mrb[0].mxu0
      %v1255 = vpop.f32.mrb[0].mxu0
      %1256 = vdwg.mxu0
      %1257 = vmatprep.subr.bf16.mxu0 %v1174
      %1258 = vmatpush1.bf16.msra.mxu0 %v1173
      %1259 = vmatprep.subr.bf16.mxu0 %v1176
      %1260 = vmatpush1.bf16.msra.mxu0 %v1175
      %1261 = vmatprep.subr.bf16.mxu0 0
      %1262 = vmatpush1.bf16.msra.mxu0 0
      %1263 = vmatprep.subr.bf16.mxu0 0
      %1264 = vmatpush1.bf16.msra.mxu0 0
      %1265 = vmatprep.subr.bf16.mxu0 0
      %1266 = vmatpush1.bf16.msra.mxu0 0
      %1267 = vmatprep.subr.bf16.mxu0 0
      %1268 = vmatpush1.bf16.msra.mxu0 0
      %1269 = vmatprep.subr.bf16.mxu0 0
      %1270 = vmatpush1.bf16.msra.mxu0 0
      %1271 = vmatprep.subr.bf16.mxu0 0
      %1272 = vmatpush1.bf16.msra.mxu0 0
      %1273 = vmatprep.subr.bf16.mxu0 0
      %1274 = vmatpush1.bf16.msra.mxu0 0
      %1275 = vmatprep.subr.bf16.mxu0 0
      %1276 = vmatpush1.bf16.msra.mxu0 0
      %1277 = vmatprep.subr.bf16.mxu0 0
      %1278 = vmatpush1.bf16.msra.mxu0 0
      %1279 = vmatprep.subr.bf16.mxu0 0
      %1280 = vmatpush1.bf16.msra.mxu0 0
      %1281 = vmatprep.subr.bf16.mxu0 0
      %1282 = vmatpush1.bf16.msra.mxu0 0
      %1283 = vmatprep.subr.bf16.mxu0 0
      %1284 = vmatpush1.bf16.msra.mxu0 0
      %1285 = vmatprep.subr.bf16.mxu0 0
      %1286 = vmatpush1.bf16.msra.mxu0 0
      %1287 = vmatprep.subr.bf16.mxu0 0
      %1288 = vmatpush1.bf16.msra.mxu0 0
      %1289 = vmatprep.mubr.bf16.mxu0 0
      %1290 = vmatmul.mubr.bf16.gmra.mrb[0].mxu0 %v1214
      %v1291 = vpop.f32.mrb[0].mxu0
      %v1292 = vadd.f32 %v1251, %v1291
      %v1293 = vpop.f32.mrb[0].mxu0
      %v1294 = vadd.f32 %v1253, %v1293
      %v1295 = vpop.f32.mrb[0].mxu0
      %v1296 = vpop.f32.mrb[0].mxu0
      %1297 = vdwg.mxu0
      %v1298 = vadd.f32 %v950, %v1292
      %v1299 = vadd.f32 %v952, %v1294
      %v1300 = vld [vmem:[%s3] sm:$0x3]
      %v1302 = vlaneseq
      %v1303 = vshrl.u32 %v1302, 7
      %v1304 = vsub.s32 0, %v1303
      %v1305 = vrot.slane %v1300, %v1304
      %v1306 = vlaneseq
      %v1307 = vshrl.u32 %v1306, 7
      %v1308 = vsub.s32 1, %v1307
      %v1309 = vrot.slane %v1300, %v1308
      %v1312 = vmul.f32 %v1298, %v1305
      %v1313 = vmul.f32 %v1299, %v1309
      %v1314 = vld [vmem:[%s4] sm:$0x3]
      %v1316 = vlaneseq
      %v1317 = vshrl.u32 %v1316, 7
      %v1318 = vsub.s32 0, %v1317
      %v1319 = vrot.slane %v1314, %v1318
      %v1320 = vlaneseq
      %v1321 = vshrl.u32 %v1320, 7
      %v1322 = vsub.s32 1, %v1321
      %v1323 = vrot.slane %v1314, %v1322
      %v1326 = vadd.f32 %v1312, %v1319
      %v1327 = vadd.f32 %v1313, %v1323
      %v1328 = vmax.f32 %v1326, 0.0
      %v1329 = vmax.f32 %v1327, 0.0
      %1330 = vst [vmem:[#allocation2] sm:$0xff] 0.0
      %1331 = vst [vmem:[#allocation2 + $0x8] sm:$0xff] 0.0
      %vm1332 = vcmask 523264
      %1333 = vst.msk [vmem:[#allocation2 + $0x10] sm:$0xff] %vm1332, 0.0
      %1334 = vst [vmem:[#allocation2 + $0x18] sm:$0x3] 0.0
      %1335 = vst [vmem:[#allocation2 + $0x20] sm:$0x3] 0.0
      %vm1336 = vcmask 517120
      %1337 = vst.msk [vmem:[#allocation2 + $0x28] sm:$0x3] %vm1336, 0.0
      %v1340 = vrot.slane %v1328, 7
      %v1341 = vrot.slane %v1329, 7
      %1342 = vrot.lane.b32.xlu0 %v1340, 32
      %v1343 = vpop.permute.xlu0 %1342
      %1344 = vrot.lane.b32.xlu0 %v1341, 32
      %v1345 = vpop.permute.xlu0 %1344
      %v1346 = vsel %vm595, %v1343, %v1345
      %vm1350 = vcmask 1047809
      %1351 = vst.msk [vmem:[#allocation2] sm:$0xfe] %vm1350, %v1343
      %1352 = vst [vmem:[#allocation2 + $0x8] sm:$0xfe] %v1346
      %vm1353 = vcmask 261121
      %1354 = vst.msk [vmem:[#allocation2 + $0x10] sm:$0xfe] %vm1353, %v1345
      %vm1355 = vcmask 1040640
      %1356 = vst.msk [vmem:[#allocation2 + $0x18] sm:$0x1] %vm1355, %v1343
      %1357 = vst [vmem:[#allocation2 + $0x20] sm:$0x1] %v1346
      %vm1358 = vcmask 253952
      %1359 = vst.msk [vmem:[#allocation2 + $0x28] sm:$0x1] %vm1358, %v1345
      %v1360 = vld [vmem:[#allocation2] sm:$0xff]
      %v1361 = vld [vmem:[#allocation2 + $0x8] sm:$0xff]
      %v1362 = vld [vmem:[#allocation2 + $0x10] sm:$0xff]
      %v1363 = vpack.c.bf16 %v1360, %v1360
      %v1364 = vpack.c.bf16 %v1361, %v1361
      %v1365 = vpack.c.bf16 %v1362, %v1362
      %v1366 = vld [vmem:[%s5] sm:$0xff]
      %v1367 = vld [vmem:[%s5 + $0x8] sm:$0xff]
      %v1368 = vld [vmem:[%s5 + $0x10] sm:$0xff]
      %v1369 = vld [vmem:[%s5 + $0x18] sm:$0xff]
      %v1370 = vld [vmem:[%s5 + $0x20] sm:$0xff]
      %v1371 = vld [vmem:[%s5 + $0x28] sm:$0xff]
      %v1372 = vld [vmem:[%s5 + $0x30] sm:$0xff]
      %v1373 = vld [vmem:[%s5 + $0x38] sm:$0xff]
      %v1374 = vld [vmem:[%s5 + $0x40] sm:$0xff]
      %v1375 = vld [vmem:[%s5 + $0x48] sm:$0xff]
      %v1376 = vld [vmem:[%s5 + $0x50] sm:$0xff]
      %v1377 = vld [vmem:[%s5 + $0x58] sm:$0xff]
      %v1378 = vld [vmem:[%s5 + $0x60] sm:$0xff]
      %v1379 = vld [vmem:[%s5 + $0x68] sm:$0xff]
      %v1380 = vld [vmem:[%s5 + $0x70] sm:$0xff]
      %v1381 = vld [vmem:[%s5 + $0x78] sm:$0xff]
      %v1382 = vld [vmem:[%s5 + $0x80] sm:$0xff]
      %v1383 = vld [vmem:[%s5 + $0x88] sm:$0xff]
      %v1384 = vld [vmem:[%s5 + $0x90] sm:$0xff]
      %v1385 = vld [vmem:[%s5 + $0x98] sm:$0xff]
      %v1386 = vld [vmem:[%s5 + $0xa0] sm:$0xff]
      %v1387 = vld [vmem:[%s5 + $0xa8] sm:$0xff]
      %v1388 = vld [vmem:[%s5 + $0xb0] sm:$0xff]
      %v1389 = vld [vmem:[%s5 + $0xb8] sm:$0xff]
      %v1390 = vld [vmem:[%s5 + $0xc0] sm:$0xff]
      %v1391 = vld [vmem:[%s5 + $0xc8] sm:$0xff]
      %v1392 = vld [vmem:[%s5 + $0xd0] sm:$0xff]
      %v1393 = vld [vmem:[%s5 + $0xd8] sm:$0xff]
      %v1394 = vld [vmem:[%s5 + $0xe0] sm:$0xff]
      %v1395 = vld [vmem:[%s5 + $0xe8] sm:$0xff]
      %v1396 = vld [vmem:[%s5 + $0xf0] sm:$0xff]
      %v1397 = vld [vmem:[%s5 + $0xf8] sm:$0xff]
      %v1398 = vld [vmem:[%s5 + $0x100] sm:$0xff]
      %v1399 = vld [vmem:[%s5 + $0x108] sm:$0xff]
      %v1400 = vld [vmem:[%s5 + $0x110] sm:$0xff]
      %v1401 = vld [vmem:[%s5 + $0x118] sm:$0xff]
      %v1402 = vld [vmem:[%s5 + $0x120] sm:$0xff]
      %v1403 = vld [vmem:[%s5 + $0x128] sm:$0xff]
      %v1404 = vld [vmem:[%s5 + $0x130] sm:$0xff]
      %v1405 = vld [vmem:[%s5 + $0x138] sm:$0xff]
      %v1406 = vld [vmem:[#allocation2] sm:$0xfe]
      %v1407 = vld [vmem:[#allocation2 + $0x8] sm:$0xfe]
      %v1408 = vld [vmem:[#allocation2 + $0x10] sm:$0xfe]
      %v1409 = vld [vmem:[#allocation2 + $0x18] sm:$0x1]
      %v1410 = vld [vmem:[#allocation2 + $0x20] sm:$0x1]
      %v1411 = vld [vmem:[#allocation2 + $0x28] sm:$0x1]
      %v1412 = vpack.c.bf16 %v1409, %v1406
      %v1413 = vpack.c.bf16 %v1410, %v1407
      %v1414 = vpack.c.bf16 %v1411, %v1408
      %s1415 = scalar_lea.vmem %s5, 320
      %v1416 = vld [vmem:[%s1415] sm:$0xff]
      %v1417 = vld [vmem:[%s1415 + $0x8] sm:$0xff]
      %v1418 = vld [vmem:[%s1415 + $0x10] sm:$0xff]
      %v1419 = vld [vmem:[%s1415 + $0x18] sm:$0xff]
      %v1420 = vld [vmem:[%s1415 + $0x20] sm:$0xff]
      %v1421 = vld [vmem:[%s1415 + $0x28] sm:$0xff]
      %v1422 = vld [vmem:[%s1415 + $0x30] sm:$0xff]
      %v1423 = vld [vmem:[%s1415 + $0x38] sm:$0xff]
      %v1424 = vld [vmem:[%s1415 + $0x40] sm:$0xff]
      %v1425 = vld [vmem:[%s1415 + $0x48] sm:$0xff]
      %v1426 = vld [vmem:[%s1415 + $0x50] sm:$0xff]
      %v1427 = vld [vmem:[%s1415 + $0x58] sm:$0xff]
      %v1428 = vld [vmem:[%s1415 + $0x60] sm:$0xff]
      %v1429 = vld [vmem:[%s1415 + $0x68] sm:$0xff]
      %v1430 = vld [vmem:[%s1415 + $0x70] sm:$0xff]
      %v1431 = vld [vmem:[%s1415 + $0x78] sm:$0xff]
      %v1432 = vld [vmem:[%s1415 + $0x80] sm:$0xff]
      %v1433 = vld [vmem:[%s1415 + $0x88] sm:$0xff]
      %v1434 = vld [vmem:[%s1415 + $0x90] sm:$0xff]
      %v1435 = vld [vmem:[%s1415 + $0x98] sm:$0xff]
      %v1436 = vld [vmem:[%s1415 + $0xa0] sm:$0xff]
      %v1437 = vld [vmem:[%s1415 + $0xa8] sm:$0xff]
      %v1438 = vld [vmem:[%s1415 + $0xb0] sm:$0xff]
      %v1439 = vld [vmem:[%s1415 + $0xb8] sm:$0xff]
      %v1440 = vld [vmem:[%s1415 + $0xc0] sm:$0xff]
      %v1441 = vld [vmem:[%s1415 + $0xc8] sm:$0xff]
      %v1442 = vld [vmem:[%s1415 + $0xd0] sm:$0xff]
      %v1443 = vld [vmem:[%s1415 + $0xd8] sm:$0xff]
      %v1444 = vld [vmem:[%s1415 + $0xe0] sm:$0xff]
      %v1445 = vld [vmem:[%s1415 + $0xe8] sm:$0xff]
      %v1446 = vld [vmem:[%s1415 + $0xf0] sm:$0xff]
      %v1447 = vld [vmem:[%s1415 + $0xf8] sm:$0xff]
      %v1448 = vld [vmem:[%s1415 + $0x100] sm:$0xff]
      %v1449 = vld [vmem:[%s1415 + $0x108] sm:$0xff]
      %v1450 = vld [vmem:[%s1415 + $0x110] sm:$0xff]
      %v1451 = vld [vmem:[%s1415 + $0x118] sm:$0xff]
      %v1452 = vld [vmem:[%s1415 + $0x120] sm:$0xff]
      %v1453 = vld [vmem:[%s1415 + $0x128] sm:$0xff]
      %v1454 = vld [vmem:[%s1415 + $0x130] sm:$0xff]
      %v1455 = vld [vmem:[%s1415 + $0x138] sm:$0xff]
      %v1457 = vshrl.u32 %v1412, 16
      %v1459 = vshll.u32 %v1412, 16
      %v1461 = vrot.slane %v1459, 1
      %v1462 = vor.u32 %v1457, %v1461
      %v1464 = vshrl.u32 %v1413, 16
      %v1466 = vshll.u32 %v1413, 16
      %v1468 = vrot.slane %v1466, 1
      %v1469 = vor.u32 %v1464, %v1468
      %v1471 = vshrl.u32 %v1414, 16
      %v1473 = vshll.u32 %v1414, 16
      %v1475 = vrot.slane %v1473, 1
      %v1476 = vor.u32 %v1471, %v1475
      %v1519 = vunpack.c.l.b16 %v1416
      %v1520 = vunpack.c.h.b16 %v1416
      %v1521 = vunpack.c.l.b16 %v1417
      %v1522 = vunpack.c.h.b16 %v1417
      %v1523 = vunpack.c.l.b16 %v1418
      %v1524 = vunpack.c.h.b16 %v1418
      %v1525 = vunpack.c.l.b16 %v1419
      %v1526 = vunpack.c.h.b16 %v1419
      %v1527 = vunpack.c.l.b16 %v1420
      %v1528 = vunpack.c.h.b16 %v1420
      %v1529 = vunpack.c.l.b16 %v1421
      %v1530 = vunpack.c.h.b16 %v1421
      %v1531 = vunpack.c.l.b16 %v1422
      %v1532 = vunpack.c.h.b16 %v1422
      %v1533 = vunpack.c.l.b16 %v1423
      %v1534 = vunpack.c.h.b16 %v1423
      %v1535 = vunpack.c.l.b16 %v1424
      %v1536 = vunpack.c.h.b16 %v1424
      %v1537 = vunpack.c.l.b16 %v1425
      %v1538 = vunpack.c.h.b16 %v1425
      %v1539 = vunpack.c.l.b16 %v1426
      %v1540 = vunpack.c.h.b16 %v1426
      %v1541 = vunpack.c.l.b16 %v1427
      %v1542 = vunpack.c.h.b16 %v1427
      %v1543 = vunpack.c.l.b16 %v1428
      %v1544 = vunpack.c.h.b16 %v1428
      %v1545 = vunpack.c.l.b16 %v1429
      %v1546 = vunpack.c.h.b16 %v1429
      %v1547 = vunpack.c.l.b16 %v1430
      %v1548 = vunpack.c.h.b16 %v1430
      %v1549 = vunpack.c.l.b16 %v1431
      %v1550 = vunpack.c.h.b16 %v1431
      %v1551 = vunpack.c.l.b16 %v1432
      %v1552 = vunpack.c.h.b16 %v1432
      %v1553 = vunpack.c.l.b16 %v1433
      %v1554 = vunpack.c.h.b16 %v1433
      %v1555 = vunpack.c.l.b16 %v1434
      %v1556 = vunpack.c.h.b16 %v1434
      %v1557 = vunpack.c.l.b16 %v1435
      %v1558 = vunpack.c.h.b16 %v1435
      %v1559 = vunpack.c.l.b16 %v1436
      %v1560 = vunpack.c.h.b16 %v1436
      %v1561 = vunpack.c.l.b16 %v1437
      %v1562 = vunpack.c.h.b16 %v1437
      %v1563 = vunpack.c.l.b16 %v1438
      %v1564 = vunpack.c.h.b16 %v1438
      %v1565 = vunpack.c.l.b16 %v1439
      %v1566 = vunpack.c.h.b16 %v1439
      %v1567 = vunpack.c.l.b16 %v1440
      %v1568 = vunpack.c.h.b16 %v1440
      %v1569 = vunpack.c.l.b16 %v1441
      %v1570 = vunpack.c.h.b16 %v1441
      %v1571 = vunpack.c.l.b16 %v1442
      %v1572 = vunpack.c.h.b16 %v1442
      %v1573 = vunpack.c.l.b16 %v1443
      %v1574 = vunpack.c.h.b16 %v1443
      %v1575 = vunpack.c.l.b16 %v1444
      %v1576 = vunpack.c.h.b16 %v1444
      %v1577 = vunpack.c.l.b16 %v1445
      %v1578 = vunpack.c.h.b16 %v1445
      %v1579 = vunpack.c.l.b16 %v1446
      %v1580 = vunpack.c.h.b16 %v1446
      %v1581 = vunpack.c.l.b16 %v1447
      %v1582 = vunpack.c.h.b16 %v1447
      %v1583 = vunpack.c.l.b16 %v1448
      %v1584 = vunpack.c.h.b16 %v1448
      %v1585 = vunpack.c.l.b16 %v1449
      %v1586 = vunpack.c.h.b16 %v1449
      %v1587 = vunpack.c.l.b16 %v1450
      %v1588 = vunpack.c.h.b16 %v1450
      %v1589 = vunpack.c.l.b16 %v1451
      %v1590 = vunpack.c.h.b16 %v1451
      %v1591 = vunpack.c.l.b16 %v1452
      %v1592 = vunpack.c.h.b16 %v1452
      %v1593 = vunpack.c.l.b16 %v1453
      %v1594 = vunpack.c.h.b16 %v1453
      %v1595 = vunpack.c.l.b16 %v1454
      %v1596 = vunpack.c.h.b16 %v1454
      %v1597 = vunpack.c.l.b16 %v1455
      %v1598 = vunpack.c.h.b16 %v1455
      %v1599 = vpack.c.b16 %v1521, %v1519
      %v1600 = vpack.c.b16 %v1522, %v1520
      %v1601 = vpack.c.b16 %v1525, %v1523
      %v1602 = vpack.c.b16 %v1526, %v1524
      %v1603 = vpack.c.b16 %v1529, %v1527
      %v1604 = vpack.c.b16 %v1530, %v1528
      %v1605 = vpack.c.b16 %v1533, %v1531
      %v1606 = vpack.c.b16 %v1534, %v1532
      %v1607 = vpack.c.b16 %v1537, %v1535
      %v1608 = vpack.c.b16 %v1538, %v1536
      %v1609 = vpack.c.b16 %v1541, %v1539
      %v1610 = vpack.c.b16 %v1542, %v1540
      %v1611 = vpack.c.b16 %v1545, %v1543
      %v1612 = vpack.c.b16 %v1546, %v1544
      %v1613 = vpack.c.b16 %v1549, %v1547
      %v1614 = vpack.c.b16 %v1550, %v1548
      %v1615 = vpack.c.b16 %v1553, %v1551
      %v1616 = vpack.c.b16 %v1554, %v1552
      %v1617 = vpack.c.b16 %v1557, %v1555
      %v1618 = vpack.c.b16 %v1558, %v1556
      %v1619 = vpack.c.b16 %v1561, %v1559
      %v1620 = vpack.c.b16 %v1562, %v1560
      %v1621 = vpack.c.b16 %v1565, %v1563
      %v1622 = vpack.c.b16 %v1566, %v1564
      %v1623 = vpack.c.b16 %v1569, %v1567
      %v1624 = vpack.c.b16 %v1570, %v1568
      %v1625 = vpack.c.b16 %v1573, %v1571
      %v1626 = vpack.c.b16 %v1574, %v1572
      %v1627 = vpack.c.b16 %v1577, %v1575
      %v1628 = vpack.c.b16 %v1578, %v1576
      %v1629 = vpack.c.b16 %v1581, %v1579
      %v1630 = vpack.c.b16 %v1582, %v1580
      %v1631 = vpack.c.b16 %v1585, %v1583
      %v1632 = vpack.c.b16 %v1586, %v1584
      %v1633 = vpack.c.b16 %v1589, %v1587
      %v1634 = vpack.c.b16 %v1590, %v1588
      %v1635 = vpack.c.b16 %v1593, %v1591
      %v1636 = vpack.c.b16 %v1594, %v1592
      %v1637 = vpack.c.b16 %v1597, %v1595
      %v1638 = vpack.c.b16 %v1598, %v1596
      %v1680 = vsel %vm1332, %v1476, 0
      %1682 = vmatprep.subr.bf16.mxu0 %v1600
      %1683 = vmatpush1.bf16.msra.mxu0 %v1599
      %1684 = vmatprep.subr.bf16.mxu0 %v1602
      %1685 = vmatpush1.bf16.msra.mxu0 %v1601
      %1686 = vmatprep.subr.bf16.mxu0 %v1604
      %1687 = vmatpush1.bf16.msra.mxu0 %v1603
      %1688 = vmatprep.subr.bf16.mxu0 %v1606
      %1689 = vmatpush1.bf16.msra.mxu0 %v1605
      %1690 = vmatprep.subr.bf16.mxu0 %v1608
      %1691 = vmatpush1.bf16.msra.mxu0 %v1607
      %1692 = vmatprep.subr.bf16.mxu0 %v1610
      %1693 = vmatpush1.bf16.msra.mxu0 %v1609
      %1694 = vmatprep.subr.bf16.mxu0 %v1612
      %1695 = vmatpush1.bf16.msra.mxu0 %v1611
      %1696 = vmatprep.subr.bf16.mxu0 %v1614
      %1697 = vmatpush1.bf16.msra.mxu0 %v1613
      %1698 = vmatprep.subr.bf16.mxu0 %v1616
      %1699 = vmatpush1.bf16.msra.mxu0 %v1615
      %1700 = vmatprep.subr.bf16.mxu0 %v1618
      %1701 = vmatpush1.bf16.msra.mxu0 %v1617
      %1702 = vmatprep.subr.bf16.mxu0 %v1620
      %1703 = vmatpush1.bf16.msra.mxu0 %v1619
      %1704 = vmatprep.subr.bf16.mxu0 %v1622
      %1705 = vmatpush1.bf16.msra.mxu0 %v1621
      %1706 = vmatprep.subr.bf16.mxu0 %v1624
      %1707 = vmatpush1.bf16.msra.mxu0 %v1623
      %1708 = vmatprep.subr.bf16.mxu0 %v1626
      %1709 = vmatpush1.bf16.msra.mxu0 %v1625
      %1710 = vmatprep.subr.bf16.mxu0 %v1628
      %1711 = vmatpush1.bf16.msra.mxu0 %v1627
      %1712 = vmatprep.subr.bf16.mxu0 %v1630
      %1713 = vmatpush1.bf16.msra.mxu0 %v1629
      %1714 = vmatprep.mubr.bf16.mxu0 %v1469
      %1715 = vmatmul.mubr.bf16.gmra.mrb[0].mxu0 %v1462
      %v1716 = vpop.f32.mrb[0].mxu0
      %v1717 = vadd.f32 0.0, %v1716
      %v1718 = vpop.f32.mrb[0].mxu0
      %v1719 = vadd.f32 0.0, %v1718
      %v1720 = vpop.f32.mrb[0].mxu0
      %v1721 = vpop.f32.mrb[0].mxu0
      %1722 = vdwg.mxu0
      %1723 = vmatprep.subr.bf16.mxu0 %v1632
      %1724 = vmatpush1.bf16.msra.mxu0 %v1631
      %1725 = vmatprep.subr.bf16.mxu0 %v1634
      %1726 = vmatpush1.bf16.msra.mxu0 %v1633
      %1727 = vmatprep.subr.bf16.mxu0 %v1636
      %1728 = vmatpush1.bf16.msra.mxu0 %v1635
      %1729 = vmatprep.subr.bf16.mxu0 %v1638
      %1730 = vmatpush1.bf16.msra.mxu0 %v1637
      %1731 = vmatprep.subr.bf16.mxu0 0
      %1732 = vmatpush1.bf16.msra.mxu0 0
      %1733 = vmatprep.subr.bf16.mxu0 0
      %1734 = vmatpush1.bf16.msra.mxu0 0
      %1735 = vmatprep.subr.bf16.mxu0 0
      %1736 = vmatpush1.bf16.msra.mxu0 0
      %1737 = vmatprep.subr.bf16.mxu0 0
      %1738 = vmatpush1.bf16.msra.mxu0 0
      %1739 = vmatprep.subr.bf16.mxu0 0
      %1740 = vmatpush1.bf16.msra.mxu0 0
      %1741 = vmatprep.subr.bf16.mxu0 0
      %1742 = vmatpush1.bf16.msra.mxu0 0
      %1743 = vmatprep.subr.bf16.mxu0 0
      %1744 = vmatpush1.bf16.msra.mxu0 0
      %1745 = vmatprep.subr.bf16.mxu0 0
      %1746 = vmatpush1.bf16.msra.mxu0 0
      %1747 = vmatprep.subr.bf16.mxu0 0
      %1748 = vmatpush1.bf16.msra.mxu0 0
      %1749 = vmatprep.subr.bf16.mxu0 0
      %1750 = vmatpush1.bf16.msra.mxu0 0
      %1751 = vmatprep.subr.bf16.mxu0 0
      %1752 = vmatpush1.bf16.msra.mxu0 0
      %1753 = vmatprep.subr.bf16.mxu0 0
      %1754 = vmatpush1.bf16.msra.mxu0 0
      %1755 = vmatprep.mubr.bf16.mxu0 0
      %1756 = vmatmul.mubr.bf16.gmra.mrb[0].mxu0 %v1680
      %v1757 = vpop.f32.mrb[0].mxu0
      %v1758 = vadd.f32 %v1717, %v1757
      %v1759 = vpop.f32.mrb[0].mxu0
      %v1760 = vadd.f32 %v1719, %v1759
      %v1761 = vpop.f32.mrb[0].mxu0
      %v1762 = vpop.f32.mrb[0].mxu0
      %1763 = vdwg.mxu0
      %v1804 = vunpack.c.l.b16 %v1366
      %v1805 = vunpack.c.h.b16 %v1366
      %v1806 = vunpack.c.l.b16 %v1367
      %v1807 = vunpack.c.h.b16 %v1367
      %v1808 = vunpack.c.l.b16 %v1368
      %v1809 = vunpack.c.h.b16 %v1368
      %v1810 = vunpack.c.l.b16 %v1369
      %v1811 = vunpack.c.h.b16 %v1369
      %v1812 = vunpack.c.l.b16 %v1370
      %v1813 = vunpack.c.h.b16 %v1370
      %v1814 = vunpack.c.l.b16 %v1371
      %v1815 = vunpack.c.h.b16 %v1371
      %v1816 = vunpack.c.l.b16 %v1372
      %v1817 = vunpack.c.h.b16 %v1372
      %v1818 = vunpack.c.l.b16 %v1373
      %v1819 = vunpack.c.h.b16 %v1373
      %v1820 = vunpack.c.l.b16 %v1374
      %v1821 = vunpack.c.h.b16 %v1374
      %v1822 = vunpack.c.l.b16 %v1375
      %v1823 = vunpack.c.h.b16 %v1375
      %v1824 = vunpack.c.l.b16 %v1376
      %v1825 = vunpack.c.h.b16 %v1376
      %v1826 = vunpack.c.l.b16 %v1377
      %v1827 = vunpack.c.h.b16 %v1377
      %v1828 = vunpack.c.l.b16 %v1378
      %v1829 = vunpack.c.h.b16 %v1378
      %v1830 = vunpack.c.l.b16 %v1379
      %v1831 = vunpack.c.h.b16 %v1379
      %v1832 = vunpack.c.l.b16 %v1380
      %v1833 = vunpack.c.h.b16 %v1380
      %v1834 = vunpack.c.l.b16 %v1381
      %v1835 = vunpack.c.h.b16 %v1381
      %v1836 = vunpack.c.l.b16 %v1382
      %v1837 = vunpack.c.h.b16 %v1382
      %v1838 = vunpack.c.l.b16 %v1383
      %v1839 = vunpack.c.h.b16 %v1383
      %v1840 = vunpack.c.l.b16 %v1384
      %v1841 = vunpack.c.h.b16 %v1384
      %v1842 = vunpack.c.l.b16 %v1385
      %v1843 = vunpack.c.h.b16 %v1385
      %v1844 = vunpack.c.l.b16 %v1386
      %v1845 = vunpack.c.h.b16 %v1386
      %v1846 = vunpack.c.l.b16 %v1387
      %v1847 = vunpack.c.h.b16 %v1387
      %v1848 = vunpack.c.l.b16 %v1388
      %v1849 = vunpack.c.h.b16 %v1388
      %v1850 = vunpack.c.l.b16 %v1389
      %v1851 = vunpack.c.h.b16 %v1389
      %v1852 = vunpack.c.l.b16 %v1390
      %v1853 = vunpack.c.h.b16 %v1390
      %v1854 = vunpack.c.l.b16 %v1391
      %v1855 = vunpack.c.h.b16 %v1391
      %v1856 = vunpack.c.l.b16 %v1392
      %v1857 = vunpack.c.h.b16 %v1392
      %v1858 = vunpack.c.l.b16 %v1393
      %v1859 = vunpack.c.h.b16 %v1393
      %v1860 = vunpack.c.l.b16 %v1394
      %v1861 = vunpack.c.h.b16 %v1394
      %v1862 = vunpack.c.l.b16 %v1395
      %v1863 = vunpack.c.h.b16 %v1395
      %v1864 = vunpack.c.l.b16 %v1396
      %v1865 = vunpack.c.h.b16 %v1396
      %v1866 = vunpack.c.l.b16 %v1397
      %v1867 = vunpack.c.h.b16 %v1397
      %v1868 = vunpack.c.l.b16 %v1398
      %v1869 = vunpack.c.h.b16 %v1398
      %v1870 = vunpack.c.l.b16 %v1399
      %v1871 = vunpack.c.h.b16 %v1399
      %v1872 = vunpack.c.l.b16 %v1400
      %v1873 = vunpack.c.h.b16 %v1400
      %v1874 = vunpack.c.l.b16 %v1401
      %v1875 = vunpack.c.h.b16 %v1401
      %v1876 = vunpack.c.l.b16 %v1402
      %v1877 = vunpack.c.h.b16 %v1402
      %v1878 = vunpack.c.l.b16 %v1403
      %v1879 = vunpack.c.h.b16 %v1403
      %v1880 = vunpack.c.l.b16 %v1404
      %v1881 = vunpack.c.h.b16 %v1404
      %v1882 = vunpack.c.l.b16 %v1405
      %v1883 = vunpack.c.h.b16 %v1405
      %v1884 = vpack.c.b16 %v1806, %v1804
      %v1885 = vpack.c.b16 %v1807, %v1805
      %v1886 = vpack.c.b16 %v1810, %v1808
      %v1887 = vpack.c.b16 %v1811, %v1809
      %v1888 = vpack.c.b16 %v1814, %v1812
      %v1889 = vpack.c.b16 %v1815, %v1813
      %v1890 = vpack.c.b16 %v1818, %v1816
      %v1891 = vpack.c.b16 %v1819, %v1817
      %v1892 = vpack.c.b16 %v1822, %v1820
      %v1893 = vpack.c.b16 %v1823, %v1821
      %v1894 = vpack.c.b16 %v1826, %v1824
      %v1895 = vpack.c.b16 %v1827, %v1825
      %v1896 = vpack.c.b16 %v1830, %v1828
      %v1897 = vpack.c.b16 %v1831, %v1829
      %v1898 = vpack.c.b16 %v1834, %v1832
      %v1899 = vpack.c.b16 %v1835, %v1833
      %v1900 = vpack.c.b16 %v1838, %v1836
      %v1901 = vpack.c.b16 %v1839, %v1837
      %v1902 = vpack.c.b16 %v1842, %v1840
      %v1903 = vpack.c.b16 %v1843, %v1841
      %v1904 = vpack.c.b16 %v1846, %v1844
      %v1905 = vpack.c.b16 %v1847, %v1845
      %v1906 = vpack.c.b16 %v1850, %v1848
      %v1907 = vpack.c.b16 %v1851, %v1849
      %v1908 = vpack.c.b16 %v1854, %v1852
      %v1909 = vpack.c.b16 %v1855, %v1853
      %v1910 = vpack.c.b16 %v1858, %v1856
      %v1911 = vpack.c.b16 %v1859, %v1857
      %v1912 = vpack.c.b16 %v1862, %v1860
      %v1913 = vpack.c.b16 %v1863, %v1861
      %v1914 = vpack.c.b16 %v1866, %v1864
      %v1915 = vpack.c.b16 %v1867, %v1865
      %v1916 = vpack.c.b16 %v1870, %v1868
      %v1917 = vpack.c.b16 %v1871, %v1869
      %v1918 = vpack.c.b16 %v1874, %v1872
      %v1919 = vpack.c.b16 %v1875, %v1873
      %v1920 = vpack.c.b16 %v1878, %v1876
      %v1921 = vpack.c.b16 %v1879, %v1877
      %v1922 = vpack.c.b16 %v1882, %v1880
      %v1923 = vpack.c.b16 %v1883, %v1881
      %v1965 = vsel %vm1332, %v1365, 0
      %1967 = vmatprep.subr.bf16.mxu0 %v1885
      %1968 = vmatpush1.bf16.msra.mxu0 %v1884
      %1969 = vmatprep.subr.bf16.mxu0 %v1887
      %1970 = vmatpush1.bf16.msra.mxu0 %v1886
      %1971 = vmatprep.subr.bf16.mxu0 %v1889
      %1972 = vmatpush1.bf16.msra.mxu0 %v1888
      %1973 = vmatprep.subr.bf16.mxu0 %v1891
      %1974 = vmatpush1.bf16.msra.mxu0 %v1890
      %1975 = vmatprep.subr.bf16.mxu0 %v1893
      %1976 = vmatpush1.bf16.msra.mxu0 %v1892
      %1977 = vmatprep.subr.bf16.mxu0 %v1895
      %1978 = vmatpush1.bf16.msra.mxu0 %v1894
      %1979 = vmatprep.subr.bf16.mxu0 %v1897
      %1980 = vmatpush1.bf16.msra.mxu0 %v1896
      %1981 = vmatprep.subr.bf16.mxu0 %v1899
      %1982 = vmatpush1.bf16.msra.mxu0 %v1898
      %1983 = vmatprep.subr.bf16.mxu0 %v1901
      %1984 = vmatpush1.bf16.msra.mxu0 %v1900
      %1985 = vmatprep.subr.bf16.mxu0 %v1903
      %1986 = vmatpush1.bf16.msra.mxu0 %v1902
      %1987 = vmatprep.subr.bf16.mxu0 %v1905
      %1988 = vmatpush1.bf16.msra.mxu0 %v1904
      %1989 = vmatprep.subr.bf16.mxu0 %v1907
      %1990 = vmatpush1.bf16.msra.mxu0 %v1906
      %1991 = vmatprep.subr.bf16.mxu0 %v1909
      %1992 = vmatpush1.bf16.msra.mxu0 %v1908
      %1993 = vmatprep.subr.bf16.mxu0 %v1911
      %1994 = vmatpush1.bf16.msra.mxu0 %v1910
      %1995 = vmatprep.subr.bf16.mxu0 %v1913
      %1996 = vmatpush1.bf16.msra.mxu0 %v1912
      %1997 = vmatprep.subr.bf16.mxu0 %v1915
      %1998 = vmatpush1.bf16.msra.mxu0 %v1914
      %1999 = vmatprep.mubr.bf16.mxu0 %v1364
      %2000 = vmatmul.mubr.bf16.gmra.mrb[0].mxu0 %v1363
      %v2001 = vpop.f32.mrb[0].mxu0
      %v2002 = vadd.f32 %v1758, %v2001
      %v2003 = vpop.f32.mrb[0].mxu0
      %v2004 = vadd.f32 %v1760, %v2003
      %v2005 = vpop.f32.mrb[0].mxu0
      %v2006 = vpop.f32.mrb[0].mxu0
      %2007 = vdwg.mxu0
      %2008 = vmatprep.subr.bf16.mxu0 %v1917
      %2009 = vmatpush1.bf16.msra.mxu0 %v1916
      %2010 = vmatprep.subr.bf16.mxu0 %v1919
      %2011 = vmatpush1.bf16.msra.mxu0 %v1918
      %2012 = vmatprep.subr.bf16.mxu0 %v1921
      %2013 = vmatpush1.bf16.msra.mxu0 %v1920
      %2014 = vmatprep.subr.bf16.mxu0 %v1923
      %2015 = vmatpush1.bf16.msra.mxu0 %v1922
      %2016 = vmatprep.subr.bf16.mxu0 0
      %2017 = vmatpush1.bf16.msra.mxu0 0
      %2018 = vmatprep.subr.bf16.mxu0 0
      %2019 = vmatpush1.bf16.msra.mxu0 0
      %2020 = vmatprep.subr.bf16.mxu0 0
      %2021 = vmatpush1.bf16.msra.mxu0 0
      %2022 = vmatprep.subr.bf16.mxu0 0
      %2023 = vmatpush1.bf16.msra.mxu0 0
      %2024 = vmatprep.subr.bf16.mxu0 0
      %2025 = vmatpush1.bf16.msra.mxu0 0
      %2026 = vmatprep.subr.bf16.mxu0 0
      %2027 = vmatpush1.bf16.msra.mxu0 0
      %2028 = vmatprep.subr.bf16.mxu0 0
      %2029 = vmatpush1.bf16.msra.mxu0 0
      %2030 = vmatprep.subr.bf16.mxu0 0
      %2031 = vmatpush1.bf16.msra.mxu0 0
      %2032 = vmatprep.subr.bf16.mxu0 0
      %2033 = vmatpush1.bf16.msra.mxu0 0
      %2034 = vmatprep.subr.bf16.mxu0 0
      %2035 = vmatpush1.bf16.msra.mxu0 0
      %2036 = vmatprep.subr.bf16.mxu0 0
      %2037 = vmatpush1.bf16.msra.mxu0 0
      %2038 = vmatprep.subr.bf16.mxu0 0
      %2039 = vmatpush1.bf16.msra.mxu0 0
      %2040 = vmatprep.mubr.bf16.mxu0 0
      %2041 = vmatmul.mubr.bf16.gmra.mrb[0].mxu0 %v1965
      %v2042 = vpop.f32.mrb[0].mxu0
      %v2043 = vadd.f32 %v2002, %v2042
      %v2044 = vpop.f32.mrb[0].mxu0
      %v2045 = vadd.f32 %v2004, %v2044
      %v2046 = vpop.f32.mrb[0].mxu0
      %v2047 = vpop.f32.mrb[0].mxu0
      %2048 = vdwg.mxu0
      %v2049 = vld [vmem:[#allocation2] sm:$0xfc]
      %v2050 = vld [vmem:[#allocation2 + $0x8] sm:$0xfc]
      %v2051 = vld [vmem:[#allocation2 + $0x10] sm:$0xfc]
      %v2052 = vld [vmem:[#allocation2 + $0x18] sm:$0x3]
      %v2053 = vld [vmem:[#allocation2 + $0x20] sm:$0x3]
      %v2054 = vld [vmem:[#allocation2 + $0x28] sm:$0x3]
      %v2055 = vpack.c.bf16 %v2052, %v2049
      %v2056 = vpack.c.bf16 %v2053, %v2050
      %v2057 = vpack.c.bf16 %v2054, %v2051
      %s2058 = scalar_lea.vmem %s5, 640
      %v2059 = vld [vmem:[%s2058] sm:$0xff]
      %v2060 = vld [vmem:[%s2058 + $0x8] sm:$0xff]
      %v2061 = vld [vmem:[%s2058 + $0x10] sm:$0xff]
      %v2062 = vld [vmem:[%s2058 + $0x18] sm:$0xff]
      %v2063 = vld [vmem:[%s2058 + $0x20] sm:$0xff]
      %v2064 = vld [vmem:[%s2058 + $0x28] sm:$0xff]
      %v2065 = vld [vmem:[%s2058 + $0x30] sm:$0xff]
      %v2066 = vld [vmem:[%s2058 + $0x38] sm:$0xff]
      %v2067 = vld [vmem:[%s2058 + $0x40] sm:$0xff]
      %v2068 = vld [vmem:[%s2058 + $0x48] sm:$0xff]
      %v2069 = vld [vmem:[%s2058 + $0x50] sm:$0xff]
      %v2070 = vld [vmem:[%s2058 + $0x58] sm:$0xff]
      %v2071 = vld [vmem:[%s2058 + $0x60] sm:$0xff]
      %v2072 = vld [vmem:[%s2058 + $0x68] sm:$0xff]
      %v2073 = vld [vmem:[%s2058 + $0x70] sm:$0xff]
      %v2074 = vld [vmem:[%s2058 + $0x78] sm:$0xff]
      %v2075 = vld [vmem:[%s2058 + $0x80] sm:$0xff]
      %v2076 = vld [vmem:[%s2058 + $0x88] sm:$0xff]
      %v2077 = vld [vmem:[%s2058 + $0x90] sm:$0xff]
      %v2078 = vld [vmem:[%s2058 + $0x98] sm:$0xff]
      %v2079 = vld [vmem:[%s2058 + $0xa0] sm:$0xff]
      %v2080 = vld [vmem:[%s2058 + $0xa8] sm:$0xff]
      %v2081 = vld [vmem:[%s2058 + $0xb0] sm:$0xff]
      %v2082 = vld [vmem:[%s2058 + $0xb8] sm:$0xff]
      %v2083 = vld [vmem:[%s2058 + $0xc0] sm:$0xff]
      %v2084 = vld [vmem:[%s2058 + $0xc8] sm:$0xff]
      %v2085 = vld [vmem:[%s2058 + $0xd0] sm:$0xff]
      %v2086 = vld [vmem:[%s2058 + $0xd8] sm:$0xff]
      %v2087 = vld [vmem:[%s2058 + $0xe0] sm:$0xff]
      %v2088 = vld [vmem:[%s2058 + $0xe8] sm:$0xff]
      %v2089 = vld [vmem:[%s2058 + $0xf0] sm:$0xff]
      %v2090 = vld [vmem:[%s2058 + $0xf8] sm:$0xff]
      %v2091 = vld [vmem:[%s2058 + $0x100] sm:$0xff]
      %v2092 = vld [vmem:[%s2058 + $0x108] sm:$0xff]
      %v2093 = vld [vmem:[%s2058 + $0x110] sm:$0xff]
      %v2094 = vld [vmem:[%s2058 + $0x118] sm:$0xff]
      %v2095 = vld [vmem:[%s2058 + $0x120] sm:$0xff]
      %v2096 = vld [vmem:[%s2058 + $0x128] sm:$0xff]
      %v2097 = vld [vmem:[%s2058 + $0x130] sm:$0xff]
      %v2098 = vld [vmem:[%s2058 + $0x138] sm:$0xff]
      %v2102 = vrot.slane %v2055, 1
      %v2103 = vrot.slane %v2056, 1
      %v2104 = vrot.slane %v2057, 1
      %v2147 = vunpack.c.l.b16 %v2059
      %v2148 = vunpack.c.h.b16 %v2059
      %v2149 = vunpack.c.l.b16 %v2060
      %v2150 = vunpack.c.h.b16 %v2060
      %v2151 = vunpack.c.l.b16 %v2061
      %v2152 = vunpack.c.h.b16 %v2061
      %v2153 = vunpack.c.l.b16 %v2062
      %v2154 = vunpack.c.h.b16 %v2062
      %v2155 = vunpack.c.l.b16 %v2063
      %v2156 = vunpack.c.h.b16 %v2063
      %v2157 = vunpack.c.l.b16 %v2064
      %v2158 = vunpack.c.h.b16 %v2064
      %v2159 = vunpack.c.l.b16 %v2065
      %v2160 = vunpack.c.h.b16 %v2065
      %v2161 = vunpack.c.l.b16 %v2066
      %v2162 = vunpack.c.h.b16 %v2066
      %v2163 = vunpack.c.l.b16 %v2067
      %v2164 = vunpack.c.h.b16 %v2067
      %v2165 = vunpack.c.l.b16 %v2068
      %v2166 = vunpack.c.h.b16 %v2068
      %v2167 = vunpack.c.l.b16 %v2069
      %v2168 = vunpack.c.h.b16 %v2069
      %v2169 = vunpack.c.l.b16 %v2070
      %v2170 = vunpack.c.h.b16 %v2070
      %v2171 = vunpack.c.l.b16 %v2071
      %v2172 = vunpack.c.h.b16 %v2071
      %v2173 = vunpack.c.l.b16 %v2072
      %v2174 = vunpack.c.h.b16 %v2072
      %v2175 = vunpack.c.l.b16 %v2073
      %v2176 = vunpack.c.h.b16 %v2073
      %v2177 = vunpack.c.l.b16 %v2074
      %v2178 = vunpack.c.h.b16 %v2074
      %v2179 = vunpack.c.l.b16 %v2075
      %v2180 = vunpack.c.h.b16 %v2075
      %v2181 = vunpack.c.l.b16 %v2076
      %v2182 = vunpack.c.h.b16 %v2076
      %v2183 = vunpack.c.l.b16 %v2077
      %v2184 = vunpack.c.h.b16 %v2077
      %v2185 = vunpack.c.l.b16 %v2078
      %v2186 = vunpack.c.h.b16 %v2078
      %v2187 = vunpack.c.l.b16 %v2079
      %v2188 = vunpack.c.h.b16 %v2079
      %v2189 = vunpack.c.l.b16 %v2080
      %v2190 = vunpack.c.h.b16 %v2080
      %v2191 = vunpack.c.l.b16 %v2081
      %v2192 = vunpack.c.h.b16 %v2081
      %v2193 = vunpack.c.l.b16 %v2082
      %v2194 = vunpack.c.h.b16 %v2082
      %v2195 = vunpack.c.l.b16 %v2083
      %v2196 = vunpack.c.h.b16 %v2083
      %v2197 = vunpack.c.l.b16 %v2084
      %v2198 = vunpack.c.h.b16 %v2084
      %v2199 = vunpack.c.l.b16 %v2085
      %v2200 = vunpack.c.h.b16 %v2085
      %v2201 = vunpack.c.l.b16 %v2086
      %v2202 = vunpack.c.h.b16 %v2086
      %v2203 = vunpack.c.l.b16 %v2087
      %v2204 = vunpack.c.h.b16 %v2087
      %v2205 = vunpack.c.l.b16 %v2088
      %v2206 = vunpack.c.h.b16 %v2088
      %v2207 = vunpack.c.l.b16 %v2089
      %v2208 = vunpack.c.h.b16 %v2089
      %v2209 = vunpack.c.l.b16 %v2090
      %v2210 = vunpack.c.h.b16 %v2090
      %v2211 = vunpack.c.l.b16 %v2091
      %v2212 = vunpack.c.h.b16 %v2091
      %v2213 = vunpack.c.l.b16 %v2092
      %v2214 = vunpack.c.h.b16 %v2092
      %v2215 = vunpack.c.l.b16 %v2093
      %v2216 = vunpack.c.h.b16 %v2093
      %v2217 = vunpack.c.l.b16 %v2094
      %v2218 = vunpack.c.h.b16 %v2094
      %v2219 = vunpack.c.l.b16 %v2095
      %v2220 = vunpack.c.h.b16 %v2095
      %v2221 = vunpack.c.l.b16 %v2096
      %v2222 = vunpack.c.h.b16 %v2096
      %v2223 = vunpack.c.l.b16 %v2097
      %v2224 = vunpack.c.h.b16 %v2097
      %v2225 = vunpack.c.l.b16 %v2098
      %v2226 = vunpack.c.h.b16 %v2098
      %v2227 = vpack.c.b16 %v2149, %v2147
      %v2228 = vpack.c.b16 %v2150, %v2148
      %v2229 = vpack.c.b16 %v2153, %v2151
      %v2230 = vpack.c.b16 %v2154, %v2152
      %v2231 = vpack.c.b16 %v2157, %v2155
      %v2232 = vpack.c.b16 %v2158, %v2156
      %v2233 = vpack.c.b16 %v2161, %v2159
      %v2234 = vpack.c.b16 %v2162, %v2160
      %v2235 = vpack.c.b16 %v2165, %v2163
      %v2236 = vpack.c.b16 %v2166, %v2164
      %v2237 = vpack.c.b16 %v2169, %v2167
      %v2238 = vpack.c.b16 %v2170, %v2168
      %v2239 = vpack.c.b16 %v2173, %v2171
      %v2240 = vpack.c.b16 %v2174, %v2172
      %v2241 = vpack.c.b16 %v2177, %v2175
      %v2242 = vpack.c.b16 %v2178, %v2176
      %v2243 = vpack.c.b16 %v2181, %v2179
      %v2244 = vpack.c.b16 %v2182, %v2180
      %v2245 = vpack.c.b16 %v2185, %v2183
      %v2246 = vpack.c.b16 %v2186, %v2184
      %v2247 = vpack.c.b16 %v2189, %v2187
      %v2248 = vpack.c.b16 %v2190, %v2188
      %v2249 = vpack.c.b16 %v2193, %v2191
      %v2250 = vpack.c.b16 %v2194, %v2192
      %v2251 = vpack.c.b16 %v2197, %v2195
      %v2252 = vpack.c.b16 %v2198, %v2196
      %v2253 = vpack.c.b16 %v2201, %v2199
      %v2254 = vpack.c.b16 %v2202, %v2200
      %v2255 = vpack.c.b16 %v2205, %v2203
      %v2256 = vpack.c.b16 %v2206, %v2204
      %v2257 = vpack.c.b16 %v2209, %v2207
      %v2258 = vpack.c.b16 %v2210, %v2208
      %v2259 = vpack.c.b16 %v2213, %v2211
      %v2260 = vpack.c.b16 %v2214, %v2212
      %v2261 = vpack.c.b16 %v2217, %v2215
      %v2262 = vpack.c.b16 %v2218, %v2216
      %v2263 = vpack.c.b16 %v2221, %v2219
      %v2264 = vpack.c.b16 %v2222, %v2220
      %v2265 = vpack.c.b16 %v2225, %v2223
      %v2266 = vpack.c.b16 %v2226, %v2224
      %v2308 = vsel %vm1332, %v2104, 0
      %2310 = vmatprep.subr.bf16.mxu0 %v2228
      %2311 = vmatpush1.bf16.msra.mxu0 %v2227
      %2312 = vmatprep.subr.bf16.mxu0 %v2230
      %2313 = vmatpush1.bf16.msra.mxu0 %v2229
      %2314 = vmatprep.subr.bf16.mxu0 %v2232
      %2315 = vmatpush1.bf16.msra.mxu0 %v2231
      %2316 = vmatprep.subr.bf16.mxu0 %v2234
      %2317 = vmatpush1.bf16.msra.mxu0 %v2233
      %2318 = vmatprep.subr.bf16.mxu0 %v2236
      %2319 = vmatpush1.bf16.msra.mxu0 %v2235
      %2320 = vmatprep.subr.bf16.mxu0 %v2238
      %2321 = vmatpush1.bf16.msra.mxu0 %v2237
      %2322 = vmatprep.subr.bf16.mxu0 %v2240
      %2323 = vmatpush1.bf16.msra.mxu0 %v2239
      %2324 = vmatprep.subr.bf16.mxu0 %v2242
      %2325 = vmatpush1.bf16.msra.mxu0 %v2241
      %2326 = vmatprep.subr.bf16.mxu0 %v2244
      %2327 = vmatpush1.bf16.msra.mxu0 %v2243
      %2328 = vmatprep.subr.bf16.mxu0 %v2246
      %2329 = vmatpush1.bf16.msra.mxu0 %v2245
      %2330 = vmatprep.subr.bf16.mxu0 %v2248
      %2331 = vmatpush1.bf16.msra.mxu0 %v2247
      %2332 = vmatprep.subr.bf16.mxu0 %v2250
      %2333 = vmatpush1.bf16.msra.mxu0 %v2249
      %2334 = vmatprep.subr.bf16.mxu0 %v2252
      %2335 = vmatpush1.bf16.msra.mxu0 %v2251
      %2336 = vmatprep.subr.bf16.mxu0 %v2254
      %2337 = vmatpush1.bf16.msra.mxu0 %v2253
      %2338 = vmatprep.subr.bf16.mxu0 %v2256
      %2339 = vmatpush1.bf16.msra.mxu0 %v2255
      %2340 = vmatprep.subr.bf16.mxu0 %v2258
      %2341 = vmatpush1.bf16.msra.mxu0 %v2257
      %2342 = vmatprep.mubr.bf16.mxu0 %v2103
      %2343 = vmatmul.mubr.bf16.gmra.mrb[0].mxu0 %v2102
      %v2344 = vpop.f32.mrb[0].mxu0
      %v2345 = vadd.f32 0.0, %v2344
      %v2346 = vpop.f32.mrb[0].mxu0
      %v2347 = vadd.f32 0.0, %v2346
      %v2348 = vpop.f32.mrb[0].mxu0
      %v2349 = vpop.f32.mrb[0].mxu0
      %2350 = vdwg.mxu0
      %2351 = vmatprep.subr.bf16.mxu0 %v2260
      %2352 = vmatpush1.bf16.msra.mxu0 %v2259
      %2353 = vmatprep.subr.bf16.mxu0 %v2262
      %2354 = vmatpush1.bf16.msra.mxu0 %v2261
      %2355 = vmatprep.subr.bf16.mxu0 %v2264
      %2356 = vmatpush1.bf16.msra.mxu0 %v2263
      %2357 = vmatprep.subr.bf16.mxu0 %v2266
      %2358 = vmatpush1.bf16.msra.mxu0 %v2265
      %2359 = vmatprep.subr.bf16.mxu0 0
      %2360 = vmatpush1.bf16.msra.mxu0 0
      %2361 = vmatprep.subr.bf16.mxu0 0
      %2362 = vmatpush1.bf16.msra.mxu0 0
      %2363 = vmatprep.subr.bf16.mxu0 0
      %2364 = vmatpush1.bf16.msra.mxu0 0
      %2365 = vmatprep.subr.bf16.mxu0 0
      %2366 = vmatpush1.bf16.msra.mxu0 0
      %2367 = vmatprep.subr.bf16.mxu0 0
      %2368 = vmatpush1.bf16.msra.mxu0 0
      %2369 = vmatprep.subr.bf16.mxu0 0
      %2370 = vmatpush1.bf16.msra.mxu0 0
      %2371 = vmatprep.subr.bf16.mxu0 0
      %2372 = vmatpush1.bf16.msra.mxu0 0
      %2373 = vmatprep.subr.bf16.mxu0 0
      %2374 = vmatpush1.bf16.msra.mxu0 0
      %2375 = vmatprep.subr.bf16.mxu0 0
      %2376 = vmatpush1.bf16.msra.mxu0 0
      %2377 = vmatprep.subr.bf16.mxu0 0
      %2378 = vmatpush1.bf16.msra.mxu0 0
      %2379 = vmatprep.subr.bf16.mxu0 0
      %2380 = vmatpush1.bf16.msra.mxu0 0
      %2381 = vmatprep.subr.bf16.mxu0 0
      %2382 = vmatpush1.bf16.msra.mxu0 0
      %2383 = vmatprep.mubr.bf16.mxu0 0
      %2384 = vmatmul.mubr.bf16.gmra.mrb[0].mxu0 %v2308
      %v2385 = vpop.f32.mrb[0].mxu0
      %v2386 = vadd.f32 %v2345, %v2385
      %v2387 = vpop.f32.mrb[0].mxu0
      %v2388 = vadd.f32 %v2347, %v2387
      %v2389 = vpop.f32.mrb[0].mxu0
      %v2390 = vpop.f32.mrb[0].mxu0
      %2391 = vdwg.mxu0
      %v2392 = vadd.f32 %v2043, %v2386
      %v2393 = vadd.f32 %v2045, %v2388
      %v2394 = vld [vmem:[%s6] sm:$0x3]
      %v2396 = vlaneseq
      %v2397 = vshrl.u32 %v2396, 7
      %v2398 = vsub.s32 0, %v2397
      %v2399 = vrot.slane %v2394, %v2398
      %v2400 = vlaneseq
      %v2401 = vshrl.u32 %v2400, 7
      %v2402 = vsub.s32 1, %v2401
      %v2403 = vrot.slane %v2394, %v2402
      %v2406 = vmul.f32 %v2392, %v2399
      %v2407 = vmul.f32 %v2393, %v2403
      %v2408 = vld [vmem:[%s7] sm:$0x3]
      %v2410 = vlaneseq
      %v2411 = vshrl.u32 %v2410, 7
      %v2412 = vsub.s32 0, %v2411
      %v2413 = vrot.slane %v2408, %v2412
      %v2414 = vlaneseq
      %v2415 = vshrl.u32 %v2414, 7
      %v2416 = vsub.s32 1, %v2415
      %v2417 = vrot.slane %v2408, %v2416
      %v2420 = vadd.f32 %v2406, %v2413
      %v2421 = vadd.f32 %v2407, %v2417
      %v2422 = vld [vmem:[%s320] sm:$0xff]
      %v2423 = vunpack.c.l.bf16 %v2422
      %v2424 = vunpack.c.h.bf16 %v2422
      %v2425 = vadd.f32 %v2420, %v2423
      %v2426 = vadd.f32 %v2421, %v2424
      %v2427 = vmax.f32 %v2425, 0.0
      %v2428 = vmax.f32 %v2426, 0.0
      %v2429 = vpack.c.bf16 %v2427, %v2427
      %v2430 = vpack.c.bf16 %v2428, %v2428
      %v2433 = vunpack.c.l.b16 %v2429
      %v2434 = vunpack.c.l.b16 %v2430
      %v2435 = vpack.c.b16 %v2434, %v2433
      %2437 = vst [vmem:[%s325] sm:$0xff] %v2435
      %p2438 = scmp.lt.s32.totalorder %s19, 1
      %s2439 = scalar_select %p2438, %s19, 1
      %s2440 = smul.addr %s2439, 2
      %s2441 = smul.addr %s2440, 4
      %s2442 = scalar_lea.vmem %s8, %s2441
      // Predicated region
      $region53: #{_lambda_.7} parent=51 // pred_check
        %p2443 = pneg %p215
      $region54: #{_lambda_.7} parent=51 // pred_check_branch
        %2445 = sbr.rel (%p2443) target = $region56
      $region55: #{_lambda_.7} parent=51 // pred_region
        _
      $region56: #{_lambda_.7} parent=51 // pred_fallthru
        _
    $region52: #{_lambda_.7} parent=5 // pred_fallthru
      _
    %p2446 = scmp.le.s32.totalorder 2, %s14
    // Predicated region
    $region57: #{_lambda_.7} parent=5 // pred_check
      %p2447 = pneg %p2446
    $region58: #{_lambda_.7} parent=5 // pred_check_branch
      %2449 = sbr.rel (%p2447) target = $region60
    $region59: #{_lambda_.7} parent=5 // pred_region
      %s2450 = ssub.s32 %s14, 2
      // Predicated region
      $region61: #{_lambda_.7} parent=59 // pred_check
        %p2451 = pneg %p221
      $region62: #{_lambda_.7} parent=59 // pred_check_branch
        %2453 = sbr.rel (%p2451) target = $region64
      $region63: #{_lambda_.7} parent=59 // pred_region
        %p2454 = scmp.lt.s32.totalorder %s20, 1
        %s2455 = scalar_select %p2454, %s20, 1
        %s2456 = smul.addr %s2455, 2
        %s2457 = smul.addr %s2456, 4
        %s2458 = scalar_lea.vmem %s8, %s2457
      $region64: #{_lambda_.7} parent=59 // pred_fallthru
        _
    $region60: #{_lambda_.7} parent=5 // pred_fallthru
      _
  $region6: #{_lambda_.7} parent=0 // loop_footer
    %s18 = sadd.s32 1, %s14
  $region7: #{_lambda_.7} parent=0 // loop_footer_branch
    %13 = sbr.rel target = $region3
  $region8: #{_lambda_.7} parent=0 // loop_exit
    _

// kernel: _lambda_.9
$region0: #{_lambda_.9}
  #allocation0 [shape = 'u32[]', space=smem, size = 0x4, offset = 0x4, fixed_abs, tag = 'smem constant byte address 0x4 - core index']
  #allocation1 [shape = 'u32[144,128]{1,0:T(1,128)}', space=vmem, size = 0x12000, scoped, tag = 'internal scratch']
  %s0 = inlined_call_operand.vmem [shape: bf16[2,4,256], index: 0, kind: input, shape index: {}]
  %s1 = inlined_call_operand.vmem [shape: f32[256,10], index: 1, kind: input, shape index: {}]
  %s2 = inlined_call_operand.vmem [shape: f32[1,10], index: 2, kind: input, shape index: {}]
  %s3 = inlined_call_operand.hbm [shape: f32[2,10], index: 3, kind: output, shape index: {}]
  %s4 = sld [smem:[#allocation0]]
  $region22: #{_lambda_.9} parent=0
    _
  %s6 = ssub.s32 1, %s4
  %s7 = scalar_select 0, %s6, %s4
  $region1: #{_lambda_.9} parent=0
    #allocation2 [shape = 'u8[1024]{0}', space=vmem, size = 0x400, scoped, tag = 'output window, operand 0, single buffered']
    #allocation3 [shape = 's32[1]{0}', space=sflag, size = 0x4, scoped, tag = 'scoped memory for _lambda_.9']
    %8 = vsyncpa [#allocation3], 0
    // Predicated region
    $region2: #{_lambda_.9} parent=1 // pred_check
      _
    $region3: #{_lambda_.9} parent=1 // pred_check_branch
      %10 = sbr.rel (0) target = $region5
    $region4: #{_lambda_.9} parent=1 // pred_region
      _
    $region5: #{_lambda_.9} parent=1 // pred_fallthru
      _
    // Predicated region
    $region6: #{_lambda_.9} parent=1 // pred_check
      _
    $region7: #{_lambda_.9} parent=1 // pred_check_branch
      %12 = sbr.rel (0) target = $region9
    $region8: #{_lambda_.9} parent=1 // pred_region
      _
    $region9: #{_lambda_.9} parent=1 // pred_fallthru
      _
    // Predicated region
    $region10: #{_lambda_.9} parent=1 // pred_check
      _
    $region11: #{_lambda_.9} parent=1 // pred_check_branch
      %14 = sbr.rel (0) target = $region13
    $region12: #{_lambda_.9} parent=1 // pred_region
      _
    $region13: #{_lambda_.9} parent=1 // pred_fallthru
      _
    %v15 = vld [vmem:[%s0] sm:$0xf]
    %v16 = vunpack.c.l.bf16 %v15
    %v18 = vcombine.high %v16, %v16
    %vm20 = vcmask 1043456
    %v21 = vsel %vm20, %v16, 0.0
    %v22 = vrot.slane %v21, 4
    %v23 = vadd.f32 %v21, %v22
    %v24 = vrot.slane %v23, 2
    %v25 = vadd.f32 %v23, %v24
    %v26 = vrot.slane %v25, 1
    %v27 = vadd.f32 %v25, %v26
    %v28 = vsel %vm20, %v18, 0.0
    %v29 = vrot.slane %v28, 4
    %v30 = vadd.f32 %v28, %v29
    %v31 = vrot.slane %v30, 2
    %v32 = vadd.f32 %v30, %v31
    %v33 = vrot.slane %v32, 1
    %v34 = vadd.f32 %v32, %v33
    %s35 = scalar_lea.vmem %s0, 4
    %v36 = vld [vmem:[%s35] sm:$0xf]
    %v37 = vunpack.c.l.bf16 %v36
    %v39 = vcombine.high %v37, %v37
    %v41 = vsel %vm20, %v37, 0.0
    %v42 = vrot.slane %v41, 4
    %v43 = vadd.f32 %v41, %v42
    %v44 = vrot.slane %v43, 2
    %v45 = vadd.f32 %v43, %v44
    %v46 = vrot.slane %v45, 1
    %v47 = vadd.f32 %v45, %v46
    %v48 = vsel %vm20, %v39, 0.0
    %v49 = vrot.slane %v48, 4
    %v50 = vadd.f32 %v48, %v49
    %v51 = vrot.slane %v50, 2
    %v52 = vadd.f32 %v50, %v51
    %v53 = vrot.slane %v52, 1
    %v54 = vadd.f32 %v52, %v53
    %vm55 = vcmask 1040384
    %v56 = vsel %vm55, %v27, %v47
    %v57 = vsel %vm55, %v34, %v54
    %v58 = vld [vmem:[%s1] sm:$0xff]
    %v59 = vld [vmem:[%s1 + $0x8] sm:$0xff]
    %v60 = vld [vmem:[%s1 + $0x10] sm:$0xff]
    %v61 = vld [vmem:[%s1 + $0x18] sm:$0xff]
    %v62 = vld [vmem:[%s1 + $0x20] sm:$0xff]
    %v63 = vld [vmem:[%s1 + $0x28] sm:$0xff]
    %v64 = vld [vmem:[%s1 + $0x30] sm:$0xff]
    %v65 = vld [vmem:[%s1 + $0x38] sm:$0xff]
    %v66 = vld [vmem:[%s1 + $0x40] sm:$0xff]
    %v67 = vld [vmem:[%s1 + $0x48] sm:$0xff]
    %v68 = vld [vmem:[%s1 + $0x50] sm:$0xff]
    %v69 = vld [vmem:[%s1 + $0x58] sm:$0xff]
    %v70 = vld [vmem:[%s1 + $0x60] sm:$0xff]
    %v71 = vld [vmem:[%s1 + $0x68] sm:$0xff]
    %v72 = vld [vmem:[%s1 + $0x70] sm:$0xff]
    %v73 = vld [vmem:[%s1 + $0x78] sm:$0xff]
    %v74 = vld [vmem:[%s1 + $0x80] sm:$0xff]
    %v75 = vld [vmem:[%s1 + $0x88] sm:$0xff]
    %v76 = vld [vmem:[%s1 + $0x90] sm:$0xff]
    %v77 = vld [vmem:[%s1 + $0x98] sm:$0xff]
    %v78 = vld [vmem:[%s1 + $0xa0] sm:$0xff]
    %v79 = vld [vmem:[%s1 + $0xa8] sm:$0xff]
    %v80 = vld [vmem:[%s1 + $0xb0] sm:$0xff]
    %v81 = vld [vmem:[%s1 + $0xb8] sm:$0xff]
    %v82 = vld [vmem:[%s1 + $0xc0] sm:$0xff]
    %v83 = vld [vmem:[%s1 + $0xc8] sm:$0xff]
    %v84 = vld [vmem:[%s1 + $0xd0] sm:$0xff]
    %v85 = vld [vmem:[%s1 + $0xd8] sm:$0xff]
    %v86 = vld [vmem:[%s1 + $0xe0] sm:$0xff]
    %v87 = vld [vmem:[%s1 + $0xe8] sm:$0xff]
    %v88 = vld [vmem:[%s1 + $0xf0] sm:$0xff]
    %v89 = vld [vmem:[%s1 + $0xf8] sm:$0xff]
    %v90 = vld [vmem:[%s2] sm:$0x1]
    %v92 = vlaneseq
    %v93 = vshrl.u32 %v92, 7
    %v94 = vsub.s32 0, %v93
    %v95 = vrot.slane %v90, %v94
    %97 = vmatprep.subr.mxu0 0.0
    %98 = vmatpush1.msra.mxu0 %v58
    %99 = vmatprep.subr.mxu0 0.0
    %100 = vmatpush1.msra.mxu0 %v59
    %101 = vmatprep.subr.mxu0 0.0
    %102 = vmatpush1.msra.mxu0 %v60
    %103 = vmatprep.subr.mxu0 0.0
    %104 = vmatpush1.msra.mxu0 %v61
    %105 = vmatprep.subr.mxu0 0.0
    %106 = vmatpush1.msra.mxu0 %v62
    %107 = vmatprep.subr.mxu0 0.0
    %108 = vmatpush1.msra.mxu0 %v63
    %109 = vmatprep.subr.mxu0 0.0
    %110 = vmatpush1.msra.mxu0 %v64
    %111 = vmatprep.subr.mxu0 0.0
    %112 = vmatpush1.msra.mxu0 %v65
    %113 = vmatprep.subr.mxu0 0.0
    %114 = vmatpush1.msra.mxu0 %v66
    %115 = vmatprep.subr.mxu0 0.0
    %116 = vmatpush1.msra.mxu0 %v67
    %117 = vmatprep.subr.mxu0 0.0
    %118 = vmatpush1.msra.mxu0 %v68
    %119 = vmatprep.subr.mxu0 0.0
    %120 = vmatpush1.msra.mxu0 %v69
    %121 = vmatprep.subr.mxu0 0.0
    %122 = vmatpush1.msra.mxu0 %v70
    %123 = vmatprep.subr.mxu0 0.0
    %124 = vmatpush1.msra.mxu0 %v71
    %125 = vmatprep.subr.mxu0 0.0
    %126 = vmatpush1.msra.mxu0 %v72
    %127 = vmatprep.subr.mxu0 0.0
    %128 = vmatpush1.msra.mxu0 %v73
    %129 = vmatprep.subr.mxu0 0.0
    %130 = vmatpush1.msra.mxu0 %v74
    %131 = vmatprep.subr.mxu0 0.0
    %132 = vmatpush1.msra.mxu0 %v75
    %133 = vmatprep.subr.mxu0 0.0
    %134 = vmatpush1.msra.mxu0 %v76
    %135 = vmatprep.subr.mxu0 0.0
    %136 = vmatpush1.msra.mxu0 %v77
    %137 = vmatprep.subr.mxu0 0.0
    %138 = vmatpush1.msra.mxu0 %v78
    %139 = vmatprep.subr.mxu0 0.0
    %140 = vmatpush1.msra.mxu0 %v79
    %141 = vmatprep.subr.mxu0 0.0
    %142 = vmatpush1.msra.mxu0 %v80
    %143 = vmatprep.subr.mxu0 0.0
    %144 = vmatpush1.msra.mxu0 %v81
    %145 = vmatprep.subr.mxu0 0.0
    %146 = vmatpush1.msra.mxu0 %v82
    %147 = vmatprep.subr.mxu0 0.0
    %148 = vmatpush1.msra.mxu0 %v83
    %149 = vmatprep.subr.mxu0 0.0
    %150 = vmatpush1.msra.mxu0 %v84
    %151 = vmatprep.subr.mxu0 0.0
    %152 = vmatpush1.msra.mxu0 %v85
    %153 = vmatprep.subr.mxu0 0.0
    %154 = vmatpush1.msra.mxu0 %v86
    %155 = vmatprep.subr.mxu0 0.0
    %156 = vmatpush1.msra.mxu0 %v87
    %157 = vmatprep.subr.mxu0 0.0
    %158 = vmatpush1.msra.mxu0 %v88
    %159 = vmatprep.subr.mxu0 0.0
    %160 = vmatpush1.msra.mxu0 %v89
    %161 = vmatprep.mubr.f32.mxu0 %v57
    %162 = vmatmul.mubr.f32.gmra.mrb[0].mxu0 %v56
    %v163 = vpop.f32.mrb[0].mxu0
    %v164 = vadd.f32 %v95, %v163
    %v165 = vpop.f32.mrb[0].mxu0
    %166 = vdwg.mxu0
    %vm167 = vcmask 74752
    %168 = vst.msk [vmem:[#allocation2] sm:$0x3] %vm167, %v164
    // Predicated region
    $region14: #{_lambda_.9} parent=1 // pred_check
      _
    $region15: #{_lambda_.9} parent=1 // pred_check_branch
      %170 = sbr.rel (0) target = $region17
    $region16: #{_lambda_.9} parent=1 // pred_region
      %s172 = ssub.s32 32, 32
      %173 = vsyncadd [#allocation3], %s172
      %s175 = sshll.u32 [#allocation2], 4
      %s176 = int_to_ptr.vmem [resolvable:$true] %s175
      %178 = dma.vmem_to_hbm [thread:$0]  %s176, 32, %s3, [#allocation3]
    $region17: #{_lambda_.9} parent=1 // pred_fallthru
      _
    // Predicated region
    $region18: #{_lambda_.9} parent=1 // pred_check
      _
    $region19: #{_lambda_.9} parent=1 // pred_check_branch
      %180 = sbr.rel (0) target = $region21
    $region20: #{_lambda_.9} parent=1 // pred_region
      %181 = dma.done [#allocation3], 32
    $region21: #{_lambda_.9} parent=1 // pred_fallthru
      _
    %182 = vsyncpa [#allocation3], 1

// kernel: _lambda_.8
$region0: #{_lambda_.8}
  #allocation0 [shape = 'u32[]', space=smem, size = 0x4, offset = 0x4, fixed_abs, tag = 'smem constant byte address 0x4 - core index']
  #allocation1 [shape = 'u32[144,128]{1,0:T(1,128)}', space=vmem, size = 0x12000, scoped, tag = 'internal scratch']
  #allocation2 [shape = 'f32[6,384]{1,0:T(8,128)}', space=vmem, size = 0x3000, scoped, tag = 'scratch operand']
  %s0 = inlined_call_operand.vmem [shape: bf16[2,2,5,320], index: 0, kind: input, shape index: {}]
  %s1 = inlined_call_operand.vmem [shape: bf16[2,4,256], index: 1, kind: input, shape index: {}]
  %s2 = inlined_call_operand.vmem [shape: bf16[3,320,256], index: 2, kind: input, shape index: {}]
  %s3 = inlined_call_operand.vmem [shape: f32[1,256], index: 3, kind: input, shape index: {}, may-alias: {3,6}]
  %s4 = inlined_call_operand.vmem [shape: f32[1,256], index: 4, kind: input, shape index: {}, may-alias: {4,7}]
  %s5 = inlined_call_operand.vmem [shape: bf16[3,384,256], index: 5, kind: input, shape index: {}]
  %s6 = inlined_call_operand.vmem [shape: f32[1,256], index: 6, kind: input, shape index: {}, may-alias: {3,6}]
  %s7 = inlined_call_operand.vmem [shape: f32[1,256], index: 7, kind: input, shape index: {}, may-alias: {4,7}]
  %s8 = inlined_call_operand.vmem [shape: bf16[2,4,256], index: 8, kind: output, shape index: {}]
  %s9 = sld [smem:[#allocation0]]
  $region65: #{_lambda_.8} parent=0
    _
  %s11 = ssub.s32 1, %s9
  %s12 = scalar_select 0, %s11, %s9
  loop: start=0, step=1, limit=4
  $region2: #{_lambda_.8} parent=0 // loop_pre_header
    _
  $region3: #{_lambda_.8} parent=0 // loop_header
    %s14 = sphi 0, %s18
    %p15 = scmp.ge.s32.totalorder %s14, 4
    %s24 = sphi 0, %s26
    %s27 = sphi 0, %s24
    %s28 = sphi 0, %s27
    %s44 = sphi 0, %s28
    %s50 = sphi 0, %s52
    %s53 = sphi 0, %s50
    %s54 = sphi 0, %s53
    %s70 = sphi 0, %s54
    %s74 = sphi 0, %s74
    %s76 = sphi 0, %s74
    %s77 = sphi 0, %s76
    %s91 = sphi 0, %s77
    %s95 = sphi 0, %s95
    %s97 = sphi 0, %s95
    %s98 = sphi 0, %s97
    %s112 = sphi 0, %s98
    %s116 = sphi 0, %s116
    %s118 = sphi 0, %s116
    %s119 = sphi 0, %s118
    %s133 = sphi 0, %s119
    %s137 = sphi 0, %s137
    %s139 = sphi 0, %s137
    %s140 = sphi 0, %s139
    %s154 = sphi 0, %s140
    %s158 = sphi 0, %s158
    %s160 = sphi 0, %s158
    %s161 = sphi 0, %s160
    %s175 = sphi 0, %s161
    %s179 = sphi 0, %s179
    %s181 = sphi 0, %s179
    %s182 = sphi 0, %s181
    %s196 = sphi 0, %s182
    %s202 = sphi 0, %s204
    %s205 = sphi 0, %s202
    %s206 = sphi 0, %s205
    %s222 = sphi 0, %s206
  $region4: #{_lambda_.8} parent=0 // loop_header_branch
    %17 = sbr.rel (%p15) target = $region8
  $region5: #{_lambda_.8} parent=0 // loop_body
    %s19 = ssub.s32 %s14, 1
    %s20 = ssub.s32 %s14, 2
    %s21 = sadd.s32 %s14, 1
    %s22 = ssub.s32 %s14, %s21
    %p23 = scmp.eq.s32.totalorder %s22, 0
    %s25 = sadd.s32 %s24, 1
    %s26 = scalar_select %p23, %s24, %s25
    %p29 = pneg %p23
    %p30 = scmp.eq.s32.totalorder %s14, 1
    %p31 = por %p29, %p30
    %p32 = scmp.ne.s32.totalorder %s24, %s27
    %p33 = scmp.eq.s32.totalorder %s14, 0
    %p34 = por %p32, %p33
    %p35 = scmp.ne.s32.totalorder %s24, %s27
    %p36 = scmp.eq.s32.totalorder %s19, 1
    %p37 = por %p35, %p36
    %p38 = scmp.ne.s32.totalorder %s27, %s28
    %p39 = scmp.eq.s32.totalorder %s19, 0
    %p40 = por %p38, %p39
    %p41 = scmp.ne.s32.totalorder %s27, %s28
    %p42 = scmp.eq.s32.totalorder %s20, 1
    %p43 = por %p41, %p42
    %p45 = scmp.ne.s32.totalorder %s28, %s44
    %p46 = scmp.eq.s32.totalorder %s20, 0
    %p47 = por %p45, %p46
    %s48 = ssub.s32 %s14, %s21
    %p49 = scmp.eq.s32.totalorder %s48, 0
    %s51 = sadd.s32 %s50, 1
    %s52 = scalar_select %p49, %s50, %s51
    %p55 = pneg %p49
    %p56 = scmp.eq.s32.totalorder %s14, 1
    %p57 = por %p55, %p56
    %p58 = scmp.ne.s32.totalorder %s50, %s53
    %p59 = scmp.eq.s32.totalorder %s14, 0
    %p60 = por %p58, %p59
    %p61 = scmp.ne.s32.totalorder %s50, %s53
    %p62 = scmp.eq.s32.totalorder %s19, 1
    %p63 = por %p61, %p62
    %p64 = scmp.ne.s32.totalorder %s53, %s54
    %p65 = scmp.eq.s32.totalorder %s19, 0
    %p66 = por %p64, %p65
    %p67 = scmp.ne.s32.totalorder %s53, %s54
    %p68 = scmp.eq.s32.totalorder %s20, 1
    %p69 = por %p67, %p68
    %p71 = scmp.ne.s32.totalorder %s54, %s70
    %p72 = scmp.eq.s32.totalorder %s20, 0
    %p73 = por %p71, %p72
    %s75 = sadd.s32 %s74, 1
    %p78 = scmp.eq.s32.totalorder %s14, 1
    %p79 = scmp.ne.s32.totalorder %s74, %s76
    %p80 = scmp.eq.s32.totalorder %s14, 0
    %p81 = por %p79, %p80
    %p82 = scmp.ne.s32.totalorder %s74, %s76
    %p83 = scmp.eq.s32.totalorder %s19, 1
    %p84 = por %p82, %p83
    %p85 = scmp.ne.s32.totalorder %s76, %s77
    %p86 = scmp.eq.s32.totalorder %s19, 0
    %p87 = por %p85, %p86
    %p88 = scmp.ne.s32.totalorder %s76, %s77
    %p89 = scmp.eq.s32.totalorder %s20, 1
    %p90 = por %p88, %p89
    %p92 = scmp.ne.s32.totalorder %s77, %s91
    %p93 = scmp.eq.s32.totalorder %s20, 0
    %p94 = por %p92, %p93
    %s96 = sadd.s32 %s95, 1
    %p99 = scmp.eq.s32.totalorder %s14, 1
    %p100 = scmp.ne.s32.totalorder %s95, %s97
    %p101 = scmp.eq.s32.totalorder %s14, 0
    %p102 = por %p100, %p101
    %p103 = scmp.ne.s32.totalorder %s95, %s97
    %p104 = scmp.eq.s32.totalorder %s19, 1
    %p105 = por %p103, %p104
    %p106 = scmp.ne.s32.totalorder %s97, %s98
    %p107 = scmp.eq.s32.totalorder %s19, 0
    %p108 = por %p106, %p107
    %p109 = scmp.ne.s32.totalorder %s97, %s98
    %p110 = scmp.eq.s32.totalorder %s20, 1
    %p111 = por %p109, %p110
    %p113 = scmp.ne.s32.totalorder %s98, %s112
    %p114 = scmp.eq.s32.totalorder %s20, 0
    %p115 = por %p113, %p114
    %s117 = sadd.s32 %s116, 1
    %p120 = scmp.eq.s32.totalorder %s14, 1
    %p121 = scmp.ne.s32.totalorder %s116, %s118
    %p122 = scmp.eq.s32.totalorder %s14, 0
    %p123 = por %p121, %p122
    %p124 = scmp.ne.s32.totalorder %s116, %s118
    %p125 = scmp.eq.s32.totalorder %s19, 1
    %p126 = por %p124, %p125
    %p127 = scmp.ne.s32.totalorder %s118, %s119
    %p128 = scmp.eq.s32.totalorder %s19, 0
    %p129 = por %p127, %p128
    %p130 = scmp.ne.s32.totalorder %s118, %s119
    %p131 = scmp.eq.s32.totalorder %s20, 1
    %p132 = por %p130, %p131
    %p134 = scmp.ne.s32.totalorder %s119, %s133
    %p135 = scmp.eq.s32.totalorder %s20, 0
    %p136 = por %p134, %p135
    %s138 = sadd.s32 %s137, 1
    %p141 = scmp.eq.s32.totalorder %s14, 1
    %p142 = scmp.ne.s32.totalorder %s137, %s139
    %p143 = scmp.eq.s32.totalorder %s14, 0
    %p144 = por %p142, %p143
    %p145 = scmp.ne.s32.totalorder %s137, %s139
    %p146 = scmp.eq.s32.totalorder %s19, 1
    %p147 = por %p145, %p146
    %p148 = scmp.ne.s32.totalorder %s139, %s140
    %p149 = scmp.eq.s32.totalorder %s19, 0
    %p150 = por %p148, %p149
    %p151 = scmp.ne.s32.totalorder %s139, %s140
    %p152 = scmp.eq.s32.totalorder %s20, 1
    %p153 = por %p151, %p152
    %p155 = scmp.ne.s32.totalorder %s140, %s154
    %p156 = scmp.eq.s32.totalorder %s20, 0
    %p157 = por %p155, %p156
    %s159 = sadd.s32 %s158, 1
    %p162 = scmp.eq.s32.totalorder %s14, 1
    %p163 = scmp.ne.s32.totalorder %s158, %s160
    %p164 = scmp.eq.s32.totalorder %s14, 0
    %p165 = por %p163, %p164
    %p166 = scmp.ne.s32.totalorder %s158, %s160
    %p167 = scmp.eq.s32.totalorder %s19, 1
    %p168 = por %p166, %p167
    %p169 = scmp.ne.s32.totalorder %s160, %s161
    %p170 = scmp.eq.s32.totalorder %s19, 0
    %p171 = por %p169, %p170
    %p172 = scmp.ne.s32.totalorder %s160, %s161
    %p173 = scmp.eq.s32.totalorder %s20, 1
    %p174 = por %p172, %p173
    %p176 = scmp.ne.s32.totalorder %s161, %s175
    %p177 = scmp.eq.s32.totalorder %s20, 0
    %p178 = por %p176, %p177
    %s180 = sadd.s32 %s179, 1
    %p183 = scmp.eq.s32.totalorder %s14, 1
    %p184 = scmp.ne.s32.totalorder %s179, %s181
    %p185 = scmp.eq.s32.totalorder %s14, 0
    %p186 = por %p184, %p185
    %p187 = scmp.ne.s32.totalorder %s179, %s181
    %p188 = scmp.eq.s32.totalorder %s19, 1
    %p189 = por %p187, %p188
    %p190 = scmp.ne.s32.totalorder %s181, %s182
    %p191 = scmp.eq.s32.totalorder %s19, 0
    %p192 = por %p190, %p191
    %p193 = scmp.ne.s32.totalorder %s181, %s182
    %p194 = scmp.eq.s32.totalorder %s20, 1
    %p195 = por %p193, %p194
    %p197 = scmp.ne.s32.totalorder %s182, %s196
    %p198 = scmp.eq.s32.totalorder %s20, 0
    %p199 = por %p197, %p198
    %s200 = ssub.s32 %s14, %s21
    %p201 = scmp.eq.s32.totalorder %s200, 0
    %s203 = sadd.s32 %s202, 1
    %s204 = scalar_select %p201, %s202, %s203
    %p207 = pneg %p201
    %p208 = scmp.eq.s32.totalorder %s14, 1
    %p209 = por %p207, %p208
    %p210 = scmp.ne.s32.totalorder %s202, %s205
    %p211 = scmp.eq.s32.totalorder %s14, 0
    %p212 = por %p210, %p211
    %p213 = scmp.ne.s32.totalorder %s202, %s205
    %p214 = scmp.eq.s32.totalorder %s19, 1
    %p215 = por %p213, %p214
    %p216 = scmp.ne.s32.totalorder %s205, %s206
    %p217 = scmp.eq.s32.totalorder %s19, 0
    %p218 = por %p216, %p217
    %p219 = scmp.ne.s32.totalorder %s205, %s206
    %p220 = scmp.eq.s32.totalorder %s20, 1
    %p221 = por %p219, %p220
    %p223 = scmp.ne.s32.totalorder %s206, %s222
    %p224 = scmp.eq.s32.totalorder %s20, 0
    %p225 = por %p223, %p224
    %p226 = scmp.le.s32.totalorder 1, %s14
    %p227 = scmp.lt.s32.totalorder %s14, 3
    %p228 = pnand %p226, %p227
    %p229 = pneg %p228
    // Predicated region
    $region9: #{_lambda_.8} parent=5 // pred_check
      _
    $region10: #{_lambda_.8} parent=5 // pred_check_branch
      %231 = sbr.rel (%p228) target = $region12
    $region11: #{_lambda_.8} parent=5 // pred_region
      %s232 = ssub.s32 %s14, 1
      // Predicated region
      $region13: #{_lambda_.8} parent=11 // pred_check
        %p233 = pneg %p87
      $region14: #{_lambda_.8} parent=11 // pred_check_branch
        %235 = sbr.rel (%p233) target = $region16
      $region15: #{_lambda_.8} parent=11 // pred_region
        _
      $region16: #{_lambda_.8} parent=11 // pred_fallthru
        _
      // Predicated region
      $region17: #{_lambda_.8} parent=11 // pred_check
        %p236 = pneg %p108
      $region18: #{_lambda_.8} parent=11 // pred_check_branch
        %238 = sbr.rel (%p236) target = $region20
      $region19: #{_lambda_.8} parent=11 // pred_region
        _
      $region20: #{_lambda_.8} parent=11 // pred_fallthru
        _
      // Predicated region
      $region21: #{_lambda_.8} parent=11 // pred_check
        %p239 = pneg %p129
      $region22: #{_lambda_.8} parent=11 // pred_check_branch
        %241 = sbr.rel (%p239) target = $region24
      $region23: #{_lambda_.8} parent=11 // pred_region
        _
      $region24: #{_lambda_.8} parent=11 // pred_fallthru
        _
      // Predicated region
      $region25: #{_lambda_.8} parent=11 // pred_check
        %p242 = pneg %p150
      $region26: #{_lambda_.8} parent=11 // pred_check_branch
        %244 = sbr.rel (%p242) target = $region28
      $region27: #{_lambda_.8} parent=11 // pred_region
        _
      $region28: #{_lambda_.8} parent=11 // pred_fallthru
        _
      // Predicated region
      $region29: #{_lambda_.8} parent=11 // pred_check
        %p245 = pneg %p171
      $region30: #{_lambda_.8} parent=11 // pred_check_branch
        %247 = sbr.rel (%p245) target = $region32
      $region31: #{_lambda_.8} parent=11 // pred_region
        _
      $region32: #{_lambda_.8} parent=11 // pred_fallthru
        _
      // Predicated region
      $region33: #{_lambda_.8} parent=11 // pred_check
        %p248 = pneg %p192
      $region34: #{_lambda_.8} parent=11 // pred_check_branch
        %250 = sbr.rel (%p248) target = $region36
      $region35: #{_lambda_.8} parent=11 // pred_region
        _
      $region36: #{_lambda_.8} parent=11 // pred_fallthru
        _
    $region12: #{_lambda_.8} parent=5 // pred_fallthru
      _
    %p251 = scmp.lt.s32.totalorder %s14, 2
    // Predicated region
    $region37: #{_lambda_.8} parent=5 // pred_check
      %p252 = pneg %p251
    $region38: #{_lambda_.8} parent=5 // pred_check_branch
      %254 = sbr.rel (%p252) target = $region40
    $region39: #{_lambda_.8} parent=5 // pred_region
      // Predicated region
      $region41: #{_lambda_.8} parent=39 // pred_check
        %p255 = pneg %p34
      $region42: #{_lambda_.8} parent=39 // pred_check_branch
        %257 = sbr.rel (%p255) target = $region44
      $region43: #{_lambda_.8} parent=39 // pred_region
        %p258 = scmp.lt.s32.totalorder %s14, 1
        %s259 = scalar_select %p258, %s14, 1
        %s260 = smul.addr %s259, 6
        %s261 = smul.addr %s260, 4
        %s262 = scalar_lea.vmem %s0, %s261
      $region44: #{_lambda_.8} parent=39 // pred_fallthru
        _
      // Predicated region
      $region45: #{_lambda_.8} parent=39 // pred_check
        %p263 = pneg %p60
      $region46: #{_lambda_.8} parent=39 // pred_check_branch
        %265 = sbr.rel (%p263) target = $region48
      $region47: #{_lambda_.8} parent=39 // pred_region
        %p266 = scmp.lt.s32.totalorder %s14, 1
        %s267 = scalar_select %p266, %s14, 1
        %s268 = smul.addr %s267, 2
        %s269 = smul.addr %s268, 2
        %s270 = scalar_lea.vmem %s1, %s269
      $region48: #{_lambda_.8} parent=39 // pred_fallthru
        _
    $region40: #{_lambda_.8} parent=5 // pred_fallthru
      _
    %p271 = scmp.le.s32.totalorder 1, %s14
    %p272 = scmp.lt.s32.totalorder %s14, 3
    %p273 = pnand %p271, %p272
    %p274 = pneg %p273
    // Predicated region
    $region49: #{_lambda_.8} parent=5 // pred_check
      _
    $region50: #{_lambda_.8} parent=5 // pred_check_branch
      %276 = sbr.rel (%p273) target = $region52
    $region51: #{_lambda_.8} parent=5 // pred_region
      %s277 = ssub.s32 %s14, 1
      %p278 = scmp.lt.s32.totalorder %s19, 1
      %s279 = scalar_select %p278, %s19, 1
      %s280 = smul.addr %s279, 6
      %s281 = smul.addr %s280, 4
      %s282 = scalar_lea.vmem %s0, %s281
      %p283 = pneg %p40
      %p284 = pneg %p37
      %p285 = scmp.lt.s32.totalorder %s19, 1
      %s286 = scalar_select %p285, %s19, 1
      %s287 = smul.addr %s286, 2
      %s288 = smul.addr %s287, 2
      %s289 = scalar_lea.vmem %s1, %s288
      %p290 = pneg %p66
      %p291 = pneg %p63
      %p292 = pneg %p87
      %p293 = pneg %p84
      %p294 = pneg %p108
      %p295 = pneg %p105
      %p296 = pneg %p129
      %p297 = pneg %p126
      %p298 = pneg %p150
      %p299 = pneg %p147
      %p300 = pneg %p171
      %p301 = pneg %p168
      %p302 = pneg %p192
      %p303 = pneg %p189
      %p304 = pneg %p218
      %p305 = pneg %p215
      %p306 = scmp.lt.s32.totalorder %s19, 1
      %s307 = scalar_select %p306, %s19, 1
      %s308 = smul.addr %s307, 2
      %s309 = smul.addr %s308, 2
      %s310 = scalar_lea.vmem %s8, %s309
      %p311 = scmp.lt.s32.totalorder %s19, 1
      %s312 = scalar_select %p311, %s19, 1
      %s313 = smul.addr %s312, 6
      %s314 = smul.addr %s313, 4
      %s315 = scalar_lea.vmem %s0, %s314
      %p316 = scmp.lt.s32.totalorder %s19, 1
      %s317 = scalar_select %p316, %s19, 1
      %s318 = smul.addr %s317, 2
      %s319 = smul.addr %s318, 2
      %s320 = scalar_lea.vmem %s1, %s319
      %p321 = scmp.lt.s32.totalorder %s19, 1
      %s322 = scalar_select %p321, %s19, 1
      %s323 = smul.addr %s322, 2
      %s324 = smul.addr %s323, 2
      %s325 = scalar_lea.vmem %s8, %s324
      %v327 = vld [vmem:[%s315] sm:$0x33]
      %v328 = vld [vmem:[%s315 + $0x8] sm:$0x3]
      %v329 = vld [vmem:[%s2] sm:$0xff]
      %v330 = vld [vmem:[%s2 + $0x8] sm:$0xff]
      %v331 = vld [vmem:[%s2 + $0x10] sm:$0xff]
      %v332 = vld [vmem:[%s2 + $0x18] sm:$0xff]
      %v333 = vld [vmem:[%s2 + $0x20] sm:$0xff]
      %v334 = vld [vmem:[%s2 + $0x28] sm:$0xff]
      %v335 = vld [vmem:[%s2 + $0x30] sm:$0xff]
      %v336 = vld [vmem:[%s2 + $0x38] sm:$0xff]
      %v337 = vld [vmem:[%s2 + $0x40] sm:$0xff]
      %v338 = vld [vmem:[%s2 + $0x48] sm:$0xff]
      %v339 = vld [vmem:[%s2 + $0x50] sm:$0xff]
      %v340 = vld [vmem:[%s2 + $0x58] sm:$0xff]
      %v341 = vld [vmem:[%s2 + $0x60] sm:$0xff]
      %v342 = vld [vmem:[%s2 + $0x68] sm:$0xff]
      %v343 = vld [vmem:[%s2 + $0x70] sm:$0xff]
      %v344 = vld [vmem:[%s2 + $0x78] sm:$0xff]
      %v345 = vld [vmem:[%s2 + $0x80] sm:$0xff]
      %v346 = vld [vmem:[%s2 + $0x88] sm:$0xff]
      %v347 = vld [vmem:[%s2 + $0x90] sm:$0xff]
      %v348 = vld [vmem:[%s2 + $0x98] sm:$0xff]
      %v349 = vld [vmem:[%s2 + $0xa0] sm:$0xff]
      %v350 = vld [vmem:[%s2 + $0xa8] sm:$0xff]
      %v351 = vld [vmem:[%s2 + $0xb0] sm:$0xff]
      %v352 = vld [vmem:[%s2 + $0xb8] sm:$0xff]
      %v353 = vld [vmem:[%s2 + $0xc0] sm:$0xff]
      %v354 = vld [vmem:[%s2 + $0xc8] sm:$0xff]
      %v355 = vld [vmem:[%s2 + $0xd0] sm:$0xff]
      %v356 = vld [vmem:[%s2 + $0xd8] sm:$0xff]
      %v357 = vld [vmem:[%s2 + $0xe0] sm:$0xff]
      %v358 = vld [vmem:[%s2 + $0xe8] sm:$0xff]
      %v359 = vld [vmem:[%s2 + $0xf0] sm:$0xff]
      %v360 = vld [vmem:[%s2 + $0xf8] sm:$0xff]
      %v361 = vld [vmem:[%s2 + $0x100] sm:$0xff]
      %v362 = vld [vmem:[%s2 + $0x108] sm:$0xff]
      %v363 = vld [vmem:[%s2 + $0x110] sm:$0xff]
      %v364 = vld [vmem:[%s2 + $0x118] sm:$0xff]
      %v365 = vld [vmem:[%s2 + $0x120] sm:$0xff]
      %v366 = vld [vmem:[%s2 + $0x128] sm:$0xff]
      %v367 = vld [vmem:[%s2 + $0x130] sm:$0xff]
      %v368 = vld [vmem:[%s2 + $0x138] sm:$0xff]
      %s369 = scalar_lea.vmem %s315, 12
      %v370 = vld [vmem:[%s369] sm:$0x33]
      %v371 = vld [vmem:[%s369 + $0x8] sm:$0x3]
      %s372 = scalar_lea.vmem %s2, 320
      %v373 = vld [vmem:[%s372] sm:$0xff]
      %v374 = vld [vmem:[%s372 + $0x8] sm:$0xff]
      %v375 = vld [vmem:[%s372 + $0x10] sm:$0xff]
      %v376 = vld [vmem:[%s372 + $0x18] sm:$0xff]
      %v377 = vld [vmem:[%s372 + $0x20] sm:$0xff]
      %v378 = vld [vmem:[%s372 + $0x28] sm:$0xff]
      %v379 = vld [vmem:[%s372 + $0x30] sm:$0xff]
      %v380 = vld [vmem:[%s372 + $0x38] sm:$0xff]
      %v381 = vld [vmem:[%s372 + $0x40] sm:$0xff]
      %v382 = vld [vmem:[%s372 + $0x48] sm:$0xff]
      %v383 = vld [vmem:[%s372 + $0x50] sm:$0xff]
      %v384 = vld [vmem:[%s372 + $0x58] sm:$0xff]
      %v385 = vld [vmem:[%s372 + $0x60] sm:$0xff]
      %v386 = vld [vmem:[%s372 + $0x68] sm:$0xff]
      %v387 = vld [vmem:[%s372 + $0x70] sm:$0xff]
      %v388 = vld [vmem:[%s372 + $0x78] sm:$0xff]
      %v389 = vld [vmem:[%s372 + $0x80] sm:$0xff]
      %v390 = vld [vmem:[%s372 + $0x88] sm:$0xff]
      %v391 = vld [vmem:[%s372 + $0x90] sm:$0xff]
      %v392 = vld [vmem:[%s372 + $0x98] sm:$0xff]
      %v393 = vld [vmem:[%s372 + $0xa0] sm:$0xff]
      %v394 = vld [vmem:[%s372 + $0xa8] sm:$0xff]
      %v395 = vld [vmem:[%s372 + $0xb0] sm:$0xff]
      %v396 = vld [vmem:[%s372 + $0xb8] sm:$0xff]
      %v397 = vld [vmem:[%s372 + $0xc0] sm:$0xff]
      %v398 = vld [vmem:[%s372 + $0xc8] sm:$0xff]
      %v399 = vld [vmem:[%s372 + $0xd0] sm:$0xff]
      %v400 = vld [vmem:[%s372 + $0xd8] sm:$0xff]
      %v401 = vld [vmem:[%s372 + $0xe0] sm:$0xff]
      %v402 = vld [vmem:[%s372 + $0xe8] sm:$0xff]
      %v403 = vld [vmem:[%s372 + $0xf0] sm:$0xff]
      %v404 = vld [vmem:[%s372 + $0xf8] sm:$0xff]
      %v405 = vld [vmem:[%s372 + $0x100] sm:$0xff]
      %v406 = vld [vmem:[%s372 + $0x108] sm:$0xff]
      %v407 = vld [vmem:[%s372 + $0x110] sm:$0xff]
      %v408 = vld [vmem:[%s372 + $0x118] sm:$0xff]
      %v409 = vld [vmem:[%s372 + $0x120] sm:$0xff]
      %v410 = vld [vmem:[%s372 + $0x128] sm:$0xff]
      %v411 = vld [vmem:[%s372 + $0x130] sm:$0xff]
      %v412 = vld [vmem:[%s372 + $0x138] sm:$0xff]
      %v415 = vunpack.c.l.b16 %v370
      %v416 = vunpack.c.h.b16 %v370
      %v417 = vunpack.c.l.b16 %v371
      %v418 = vpack.c.b16 %v415, %v415
      %v419 = vpack.c.b16 %v416, %v416
      %v420 = vpack.c.b16 %v417, %v417
      %v463 = vunpack.c.l.b16 %v373
      %v464 = vunpack.c.h.b16 %v373
      %v465 = vunpack.c.l.b16 %v374
      %v466 = vunpack.c.h.b16 %v374
      %v467 = vunpack.c.l.b16 %v375
      %v468 = vunpack.c.h.b16 %v375
      %v469 = vunpack.c.l.b16 %v376
      %v470 = vunpack.c.h.b16 %v376
      %v471 = vunpack.c.l.b16 %v377
      %v472 = vunpack.c.h.b16 %v377
      %v473 = vunpack.c.l.b16 %v378
      %v474 = vunpack.c.h.b16 %v378
      %v475 = vunpack.c.l.b16 %v379
      %v476 = vunpack.c.h.b16 %v379
      %v477 = vunpack.c.l.b16 %v380
      %v478 = vunpack.c.h.b16 %v380
      %v479 = vunpack.c.l.b16 %v381
      %v480 = vunpack.c.h.b16 %v381
      %v481 = vunpack.c.l.b16 %v382
      %v482 = vunpack.c.h.b16 %v382
      %v483 = vunpack.c.l.b16 %v383
      %v484 = vunpack.c.h.b16 %v383
      %v485 = vunpack.c.l.b16 %v384
      %v486 = vunpack.c.h.b16 %v384
      %v487 = vunpack.c.l.b16 %v385
      %v488 = vunpack.c.h.b16 %v385
      %v489 = vunpack.c.l.b16 %v386
      %v490 = vunpack.c.h.b16 %v386
      %v491 = vunpack.c.l.b16 %v387
      %v492 = vunpack.c.h.b16 %v387
      %v493 = vunpack.c.l.b16 %v388
      %v494 = vunpack.c.h.b16 %v388
      %v495 = vunpack.c.l.b16 %v389
      %v496 = vunpack.c.h.b16 %v389
      %v497 = vunpack.c.l.b16 %v390
      %v498 = vunpack.c.h.b16 %v390
      %v499 = vunpack.c.l.b16 %v391
      %v500 = vunpack.c.h.b16 %v391
      %v501 = vunpack.c.l.b16 %v392
      %v502 = vunpack.c.h.b16 %v392
      %v503 = vunpack.c.l.b16 %v393
      %v504 = vunpack.c.h.b16 %v393
      %v505 = vunpack.c.l.b16 %v394
      %v506 = vunpack.c.h.b16 %v394
      %v507 = vunpack.c.l.b16 %v395
      %v508 = vunpack.c.h.b16 %v395
      %v509 = vunpack.c.l.b16 %v396
      %v510 = vunpack.c.h.b16 %v396
      %v511 = vunpack.c.l.b16 %v397
      %v512 = vunpack.c.h.b16 %v397
      %v513 = vunpack.c.l.b16 %v398
      %v514 = vunpack.c.h.b16 %v398
      %v515 = vunpack.c.l.b16 %v399
      %v516 = vunpack.c.h.b16 %v399
      %v517 = vunpack.c.l.b16 %v400
      %v518 = vunpack.c.h.b16 %v400
      %v519 = vunpack.c.l.b16 %v401
      %v520 = vunpack.c.h.b16 %v401
      %v521 = vunpack.c.l.b16 %v402
      %v522 = vunpack.c.h.b16 %v402
      %v523 = vunpack.c.l.b16 %v403
      %v524 = vunpack.c.h.b16 %v403
      %v525 = vunpack.c.l.b16 %v404
      %v526 = vunpack.c.h.b16 %v404
      %v527 = vunpack.c.l.b16 %v405
      %v528 = vunpack.c.h.b16 %v405
      %v529 = vunpack.c.l.b16 %v406
      %v530 = vunpack.c.h.b16 %v406
      %v531 = vunpack.c.l.b16 %v407
      %v532 = vunpack.c.h.b16 %v407
      %v533 = vunpack.c.l.b16 %v408
      %v534 = vunpack.c.h.b16 %v408
      %v535 = vunpack.c.l.b16 %v409
      %v536 = vunpack.c.h.b16 %v409
      %v537 = vunpack.c.l.b16 %v410
      %v538 = vunpack.c.h.b16 %v410
      %v539 = vunpack.c.l.b16 %v411
      %v540 = vunpack.c.h.b16 %v411
      %v541 = vunpack.c.l.b16 %v412
      %v542 = vunpack.c.h.b16 %v412
      %v543 = vpack.c.b16 %v465, %v463
      %v544 = vpack.c.b16 %v466, %v464
      %v545 = vpack.c.b16 %v469, %v467
      %v546 = vpack.c.b16 %v470, %v468
      %v547 = vpack.c.b16 %v473, %v471
      %v548 = vpack.c.b16 %v474, %v472
      %v549 = vpack.c.b16 %v477, %v475
      %v550 = vpack.c.b16 %v478, %v476
      %v551 = vpack.c.b16 %v481, %v479
      %v552 = vpack.c.b16 %v482, %v480
      %v553 = vpack.c.b16 %v485, %v483
      %v554 = vpack.c.b16 %v486, %v484
      %v555 = vpack.c.b16 %v489, %v487
      %v556 = vpack.c.b16 %v490, %v488
      %v557 = vpack.c.b16 %v493, %v491
      %v558 = vpack.c.b16 %v494, %v492
      %v559 = vpack.c.b16 %v497, %v495
      %v560 = vpack.c.b16 %v498, %v496
      %v561 = vpack.c.b16 %v501, %v499
      %v562 = vpack.c.b16 %v502, %v500
      %v563 = vpack.c.b16 %v505, %v503
      %v564 = vpack.c.b16 %v506, %v504
      %v565 = vpack.c.b16 %v509, %v507
      %v566 = vpack.c.b16 %v510, %v508
      %v567 = vpack.c.b16 %v513, %v511
      %v568 = vpack.c.b16 %v514, %v512
      %v569 = vpack.c.b16 %v517, %v515
      %v570 = vpack.c.b16 %v518, %v516
      %v571 = vpack.c.b16 %v521, %v519
      %v572 = vpack.c.b16 %v522, %v520
      %v573 = vpack.c.b16 %v525, %v523
      %v574 = vpack.c.b16 %v526, %v524
      %v575 = vpack.c.b16 %v529, %v527
      %v576 = vpack.c.b16 %v530, %v528
      %v577 = vpack.c.b16 %v533, %v531
      %v578 = vpack.c.b16 %v534, %v532
      %v579 = vpack.c.b16 %v537, %v535
      %v580 = vpack.c.b16 %v538, %v536
      %v581 = vpack.c.b16 %v541, %v539
      %v582 = vpack.c.b16 %v542, %v540
      %vm623 = vcmask 523264
      %v625 = vsel %vm623, %v420, 0
      %627 = vmatprep.subr.bf16.mxu0 %v544
      %628 = vmatpush1.bf16.msra.mxu0 %v543
      %629 = vmatprep.subr.bf16.mxu0 %v546
      %630 = vmatpush1.bf16.msra.mxu0 %v545
      %631 = vmatprep.subr.bf16.mxu0 %v548
      %632 = vmatpush1.bf16.msra.mxu0 %v547
      %633 = vmatprep.subr.bf16.mxu0 %v550
      %634 = vmatpush1.bf16.msra.mxu0 %v549
      %635 = vmatprep.subr.bf16.mxu0 %v552
      %636 = vmatpush1.bf16.msra.mxu0 %v551
      %637 = vmatprep.subr.bf16.mxu0 %v554
      %638 = vmatpush1.bf16.msra.mxu0 %v553
      %639 = vmatprep.subr.bf16.mxu0 %v556
      %640 = vmatpush1.bf16.msra.mxu0 %v555
      %641 = vmatprep.subr.bf16.mxu0 %v558
      %642 = vmatpush1.bf16.msra.mxu0 %v557
      %643 = vmatprep.subr.bf16.mxu0 %v560
      %644 = vmatpush1.bf16.msra.mxu0 %v559
      %645 = vmatprep.subr.bf16.mxu0 %v562
      %646 = vmatpush1.bf16.msra.mxu0 %v561
      %647 = vmatprep.subr.bf16.mxu0 %v564
      %648 = vmatpush1.bf16.msra.mxu0 %v563
      %649 = vmatprep.subr.bf16.mxu0 %v566
      %650 = vmatpush1.bf16.msra.mxu0 %v565
      %651 = vmatprep.subr.bf16.mxu0 %v568
      %652 = vmatpush1.bf16.msra.mxu0 %v567
      %653 = vmatprep.subr.bf16.mxu0 %v570
      %654 = vmatpush1.bf16.msra.mxu0 %v569
      %655 = vmatprep.subr.bf16.mxu0 %v572
      %656 = vmatpush1.bf16.msra.mxu0 %v571
      %657 = vmatprep.subr.bf16.mxu0 %v574
      %658 = vmatpush1.bf16.msra.mxu0 %v573
      %659 = vmatprep.mubr.bf16.mxu0 %v419
      %660 = vmatmul.mubr.bf16.gmra.mrb[0].mxu0 %v418
      %v661 = vpop.f32.mrb[0].mxu0
      %v662 = vadd.f32 0.0, %v661
      %v663 = vpop.f32.mrb[0].mxu0
      %v664 = vadd.f32 0.0, %v663
      %v665 = vpop.f32.mrb[0].mxu0
      %v666 = vpop.f32.mrb[0].mxu0
      %667 = vdwg.mxu0
      %668 = vmatprep.subr.bf16.mxu0 %v576
      %669 = vmatpush1.bf16.msra.mxu0 %v575
      %670 = vmatprep.subr.bf16.mxu0 %v578
      %671 = vmatpush1.bf16.msra.mxu0 %v577
      %672 = vmatprep.subr.bf16.mxu0 %v580
      %673 = vmatpush1.bf16.msra.mxu0 %v579
      %674 = vmatprep.subr.bf16.mxu0 %v582
      %675 = vmatpush1.bf16.msra.mxu0 %v581
      %676 = vmatprep.subr.bf16.mxu0 0
      %677 = vmatpush1.bf16.msra.mxu0 0
      %678 = vmatprep.subr.bf16.mxu0 0
      %679 = vmatpush1.bf16.msra.mxu0 0
      %680 = vmatprep.subr.bf16.mxu0 0
      %681 = vmatpush1.bf16.msra.mxu0 0
      %682 = vmatprep.subr.bf16.mxu0 0
      %683 = vmatpush1.bf16.msra.mxu0 0
      %684 = vmatprep.subr.bf16.mxu0 0
      %685 = vmatpush1.bf16.msra.mxu0 0
      %686 = vmatprep.subr.bf16.mxu0 0
      %687 = vmatpush1.bf16.msra.mxu0 0
      %688 = vmatprep.subr.bf16.mxu0 0
      %689 = vmatpush1.bf16.msra.mxu0 0
      %690 = vmatprep.subr.bf16.mxu0 0
      %691 = vmatpush1.bf16.msra.mxu0 0
      %692 = vmatprep.subr.bf16.mxu0 0
      %693 = vmatpush1.bf16.msra.mxu0 0
      %694 = vmatprep.subr.bf16.mxu0 0
      %695 = vmatpush1.bf16.msra.mxu0 0
      %696 = vmatprep.subr.bf16.mxu0 0
      %697 = vmatpush1.bf16.msra.mxu0 0
      %698 = vmatprep.subr.bf16.mxu0 0
      %699 = vmatpush1.bf16.msra.mxu0 0
      %700 = vmatprep.mubr.bf16.mxu0 0
      %701 = vmatmul.mubr.bf16.gmra.mrb[0].mxu0 %v625
      %v702 = vpop.f32.mrb[0].mxu0
      %v703 = vadd.f32 %v662, %v702
      %v704 = vpop.f32.mrb[0].mxu0
      %v705 = vadd.f32 %v664, %v704
      %v706 = vpop.f32.mrb[0].mxu0
      %v707 = vpop.f32.mrb[0].mxu0
      %708 = vdwg.mxu0
      %v711 = vunpack.c.l.b16 %v327
      %v712 = vunpack.c.h.b16 %v327
      %v713 = vunpack.c.l.b16 %v328
      %v714 = vpack.c.b16 %v711, %v711
      %v715 = vpack.c.b16 %v712, %v712
      %v716 = vpack.c.b16 %v713, %v713
      %v759 = vunpack.c.l.b16 %v329
      %v760 = vunpack.c.h.b16 %v329
      %v761 = vunpack.c.l.b16 %v330
      %v762 = vunpack.c.h.b16 %v330
      %v763 = vunpack.c.l.b16 %v331
      %v764 = vunpack.c.h.b16 %v331
      %v765 = vunpack.c.l.b16 %v332
      %v766 = vunpack.c.h.b16 %v332
      %v767 = vunpack.c.l.b16 %v333
      %v768 = vunpack.c.h.b16 %v333
      %v769 = vunpack.c.l.b16 %v334
      %v770 = vunpack.c.h.b16 %v334
      %v771 = vunpack.c.l.b16 %v335
      %v772 = vunpack.c.h.b16 %v335
      %v773 = vunpack.c.l.b16 %v336
      %v774 = vunpack.c.h.b16 %v336
      %v775 = vunpack.c.l.b16 %v337
      %v776 = vunpack.c.h.b16 %v337
      %v777 = vunpack.c.l.b16 %v338
      %v778 = vunpack.c.h.b16 %v338
      %v779 = vunpack.c.l.b16 %v339
      %v780 = vunpack.c.h.b16 %v339
      %v781 = vunpack.c.l.b16 %v340
      %v782 = vunpack.c.h.b16 %v340
      %v783 = vunpack.c.l.b16 %v341
      %v784 = vunpack.c.h.b16 %v341
      %v785 = vunpack.c.l.b16 %v342
      %v786 = vunpack.c.h.b16 %v342
      %v787 = vunpack.c.l.b16 %v343
      %v788 = vunpack.c.h.b16 %v343
      %v789 = vunpack.c.l.b16 %v344
      %v790 = vunpack.c.h.b16 %v344
      %v791 = vunpack.c.l.b16 %v345
      %v792 = vunpack.c.h.b16 %v345
      %v793 = vunpack.c.l.b16 %v346
      %v794 = vunpack.c.h.b16 %v346
      %v795 = vunpack.c.l.b16 %v347
      %v796 = vunpack.c.h.b16 %v347
      %v797 = vunpack.c.l.b16 %v348
      %v798 = vunpack.c.h.b16 %v348
      %v799 = vunpack.c.l.b16 %v349
      %v800 = vunpack.c.h.b16 %v349
      %v801 = vunpack.c.l.b16 %v350
      %v802 = vunpack.c.h.b16 %v350
      %v803 = vunpack.c.l.b16 %v351
      %v804 = vunpack.c.h.b16 %v351
      %v805 = vunpack.c.l.b16 %v352
      %v806 = vunpack.c.h.b16 %v352
      %v807 = vunpack.c.l.b16 %v353
      %v808 = vunpack.c.h.b16 %v353
      %v809 = vunpack.c.l.b16 %v354
      %v810 = vunpack.c.h.b16 %v354
      %v811 = vunpack.c.l.b16 %v355
      %v812 = vunpack.c.h.b16 %v355
      %v813 = vunpack.c.l.b16 %v356
      %v814 = vunpack.c.h.b16 %v356
      %v815 = vunpack.c.l.b16 %v357
      %v816 = vunpack.c.h.b16 %v357
      %v817 = vunpack.c.l.b16 %v358
      %v818 = vunpack.c.h.b16 %v358
      %v819 = vunpack.c.l.b16 %v359
      %v820 = vunpack.c.h.b16 %v359
      %v821 = vunpack.c.l.b16 %v360
      %v822 = vunpack.c.h.b16 %v360
      %v823 = vunpack.c.l.b16 %v361
      %v824 = vunpack.c.h.b16 %v361
      %v825 = vunpack.c.l.b16 %v362
      %v826 = vunpack.c.h.b16 %v362
      %v827 = vunpack.c.l.b16 %v363
      %v828 = vunpack.c.h.b16 %v363
      %v829 = vunpack.c.l.b16 %v364
      %v830 = vunpack.c.h.b16 %v364
      %v831 = vunpack.c.l.b16 %v365
      %v832 = vunpack.c.h.b16 %v365
      %v833 = vunpack.c.l.b16 %v366
      %v834 = vunpack.c.h.b16 %v366
      %v835 = vunpack.c.l.b16 %v367
      %v836 = vunpack.c.h.b16 %v367
      %v837 = vunpack.c.l.b16 %v368
      %v838 = vunpack.c.h.b16 %v368
      %v839 = vpack.c.b16 %v761, %v759
      %v840 = vpack.c.b16 %v762, %v760
      %v841 = vpack.c.b16 %v765, %v763
      %v842 = vpack.c.b16 %v766, %v764
      %v843 = vpack.c.b16 %v769, %v767
      %v844 = vpack.c.b16 %v770, %v768
      %v845 = vpack.c.b16 %v773, %v771
      %v846 = vpack.c.b16 %v774, %v772
      %v847 = vpack.c.b16 %v777, %v775
      %v848 = vpack.c.b16 %v778, %v776
      %v849 = vpack.c.b16 %v781, %v779
      %v850 = vpack.c.b16 %v782, %v780
      %v851 = vpack.c.b16 %v785, %v783
      %v852 = vpack.c.b16 %v786, %v784
      %v853 = vpack.c.b16 %v789, %v787
      %v854 = vpack.c.b16 %v790, %v788
      %v855 = vpack.c.b16 %v793, %v791
      %v856 = vpack.c.b16 %v794, %v792
      %v857 = vpack.c.b16 %v797, %v795
      %v858 = vpack.c.b16 %v798, %v796
      %v859 = vpack.c.b16 %v801, %v799
      %v860 = vpack.c.b16 %v802, %v800
      %v861 = vpack.c.b16 %v805, %v803
      %v862 = vpack.c.b16 %v806, %v804
      %v863 = vpack.c.b16 %v809, %v807
      %v864 = vpack.c.b16 %v810, %v808
      %v865 = vpack.c.b16 %v813, %v811
      %v866 = vpack.c.b16 %v814, %v812
      %v867 = vpack.c.b16 %v817, %v815
      %v868 = vpack.c.b16 %v818, %v816
      %v869 = vpack.c.b16 %v821, %v819
      %v870 = vpack.c.b16 %v822, %v820
      %v871 = vpack.c.b16 %v825, %v823
      %v872 = vpack.c.b16 %v826, %v824
      %v873 = vpack.c.b16 %v829, %v827
      %v874 = vpack.c.b16 %v830, %v828
      %v875 = vpack.c.b16 %v833, %v831
      %v876 = vpack.c.b16 %v834, %v832
      %v877 = vpack.c.b16 %v837, %v835
      %v878 = vpack.c.b16 %v838, %v836
      %v920 = vsel %vm623, %v716, 0
      %922 = vmatprep.subr.bf16.mxu0 %v840
      %923 = vmatpush1.bf16.msra.mxu0 %v839
      %924 = vmatprep.subr.bf16.mxu0 %v842
      %925 = vmatpush1.bf16.msra.mxu0 %v841
      %926 = vmatprep.subr.bf16.mxu0 %v844
      %927 = vmatpush1.bf16.msra.mxu0 %v843
      %928 = vmatprep.subr.bf16.mxu0 %v846
      %929 = vmatpush1.bf16.msra.mxu0 %v845
      %930 = vmatprep.subr.bf16.mxu0 %v848
      %931 = vmatpush1.bf16.msra.mxu0 %v847
      %932 = vmatprep.subr.bf16.mxu0 %v850
      %933 = vmatpush1.bf16.msra.mxu0 %v849
      %934 = vmatprep.subr.bf16.mxu0 %v852
      %935 = vmatpush1.bf16.msra.mxu0 %v851
      %936 = vmatprep.subr.bf16.mxu0 %v854
      %937 = vmatpush1.bf16.msra.mxu0 %v853
      %938 = vmatprep.subr.bf16.mxu0 %v856
      %939 = vmatpush1.bf16.msra.mxu0 %v855
      %940 = vmatprep.subr.bf16.mxu0 %v858
      %941 = vmatpush1.bf16.msra.mxu0 %v857
      %942 = vmatprep.subr.bf16.mxu0 %v860
      %943 = vmatpush1.bf16.msra.mxu0 %v859
      %944 = vmatprep.subr.bf16.mxu0 %v862
      %945 = vmatpush1.bf16.msra.mxu0 %v861
      %946 = vmatprep.subr.bf16.mxu0 %v864
      %947 = vmatpush1.bf16.msra.mxu0 %v863
      %948 = vmatprep.subr.bf16.mxu0 %v866
      %949 = vmatpush1.bf16.msra.mxu0 %v865
      %950 = vmatprep.subr.bf16.mxu0 %v868
      %951 = vmatpush1.bf16.msra.mxu0 %v867
      %952 = vmatprep.subr.bf16.mxu0 %v870
      %953 = vmatpush1.bf16.msra.mxu0 %v869
      %954 = vmatprep.mubr.bf16.mxu0 %v715
      %955 = vmatmul.mubr.bf16.gmra.mrb[0].mxu0 %v714
      %v956 = vpop.f32.mrb[0].mxu0
      %v957 = vadd.f32 %v703, %v956
      %v958 = vpop.f32.mrb[0].mxu0
      %v959 = vadd.f32 %v705, %v958
      %v960 = vpop.f32.mrb[0].mxu0
      %v961 = vpop.f32.mrb[0].mxu0
      %962 = vdwg.mxu0
      %963 = vmatprep.subr.bf16.mxu0 %v872
      %964 = vmatpush1.bf16.msra.mxu0 %v871
      %965 = vmatprep.subr.bf16.mxu0 %v874
      %966 = vmatpush1.bf16.msra.mxu0 %v873
      %967 = vmatprep.subr.bf16.mxu0 %v876
      %968 = vmatpush1.bf16.msra.mxu0 %v875
      %969 = vmatprep.subr.bf16.mxu0 %v878
      %970 = vmatpush1.bf16.msra.mxu0 %v877
      %971 = vmatprep.subr.bf16.mxu0 0
      %972 = vmatpush1.bf16.msra.mxu0 0
      %973 = vmatprep.subr.bf16.mxu0 0
      %974 = vmatpush1.bf16.msra.mxu0 0
      %975 = vmatprep.subr.bf16.mxu0 0
      %976 = vmatpush1.bf16.msra.mxu0 0
      %977 = vmatprep.subr.bf16.mxu0 0
      %978 = vmatpush1.bf16.msra.mxu0 0
      %979 = vmatprep.subr.bf16.mxu0 0
      %980 = vmatpush1.bf16.msra.mxu0 0
      %981 = vmatprep.subr.bf16.mxu0 0
      %982 = vmatpush1.bf16.msra.mxu0 0
      %983 = vmatprep.subr.bf16.mxu0 0
      %984 = vmatpush1.bf16.msra.mxu0 0
      %985 = vmatprep.subr.bf16.mxu0 0
      %986 = vmatpush1.bf16.msra.mxu0 0
      %987 = vmatprep.subr.bf16.mxu0 0
      %988 = vmatpush1.bf16.msra.mxu0 0
      %989 = vmatprep.subr.bf16.mxu0 0
      %990 = vmatpush1.bf16.msra.mxu0 0
      %991 = vmatprep.subr.bf16.mxu0 0
      %992 = vmatpush1.bf16.msra.mxu0 0
      %993 = vmatprep.subr.bf16.mxu0 0
      %994 = vmatpush1.bf16.msra.mxu0 0
      %995 = vmatprep.mubr.bf16.mxu0 0
      %996 = vmatmul.mubr.bf16.gmra.mrb[0].mxu0 %v920
      %v997 = vpop.f32.mrb[0].mxu0
      %v998 = vadd.f32 %v957, %v997
      %v999 = vpop.f32.mrb[0].mxu0
      %v1000 = vadd.f32 %v959, %v999
      %v1001 = vpop.f32.mrb[0].mxu0
      %v1002 = vpop.f32.mrb[0].mxu0
      %1003 = vdwg.mxu0
      %v1004 = vld [vmem:[%s315] sm:$0x77]
      %v1005 = vld [vmem:[%s315 + $0x8] sm:$0x7]
      %s1006 = scalar_lea.vmem %s2, 640
      %v1007 = vld [vmem:[%s1006] sm:$0xff]
      %v1008 = vld [vmem:[%s1006 + $0x8] sm:$0xff]
      %v1009 = vld [vmem:[%s1006 + $0x10] sm:$0xff]
      %v1010 = vld [vmem:[%s1006 + $0x18] sm:$0xff]
      %v1011 = vld [vmem:[%s1006 + $0x20] sm:$0xff]
      %v1012 = vld [vmem:[%s1006 + $0x28] sm:$0xff]
      %v1013 = vld [vmem:[%s1006 + $0x30] sm:$0xff]
      %v1014 = vld [vmem:[%s1006 + $0x38] sm:$0xff]
      %v1015 = vld [vmem:[%s1006 + $0x40] sm:$0xff]
      %v1016 = vld [vmem:[%s1006 + $0x48] sm:$0xff]
      %v1017 = vld [vmem:[%s1006 + $0x50] sm:$0xff]
      %v1018 = vld [vmem:[%s1006 + $0x58] sm:$0xff]
      %v1019 = vld [vmem:[%s1006 + $0x60] sm:$0xff]
      %v1020 = vld [vmem:[%s1006 + $0x68] sm:$0xff]
      %v1021 = vld [vmem:[%s1006 + $0x70] sm:$0xff]
      %v1022 = vld [vmem:[%s1006 + $0x78] sm:$0xff]
      %v1023 = vld [vmem:[%s1006 + $0x80] sm:$0xff]
      %v1024 = vld [vmem:[%s1006 + $0x88] sm:$0xff]
      %v1025 = vld [vmem:[%s1006 + $0x90] sm:$0xff]
      %v1026 = vld [vmem:[%s1006 + $0x98] sm:$0xff]
      %v1027 = vld [vmem:[%s1006 + $0xa0] sm:$0xff]
      %v1028 = vld [vmem:[%s1006 + $0xa8] sm:$0xff]
      %v1029 = vld [vmem:[%s1006 + $0xb0] sm:$0xff]
      %v1030 = vld [vmem:[%s1006 + $0xb8] sm:$0xff]
      %v1031 = vld [vmem:[%s1006 + $0xc0] sm:$0xff]
      %v1032 = vld [vmem:[%s1006 + $0xc8] sm:$0xff]
      %v1033 = vld [vmem:[%s1006 + $0xd0] sm:$0xff]
      %v1034 = vld [vmem:[%s1006 + $0xd8] sm:$0xff]
      %v1035 = vld [vmem:[%s1006 + $0xe0] sm:$0xff]
      %v1036 = vld [vmem:[%s1006 + $0xe8] sm:$0xff]
      %v1037 = vld [vmem:[%s1006 + $0xf0] sm:$0xff]
      %v1038 = vld [vmem:[%s1006 + $0xf8] sm:$0xff]
      %v1039 = vld [vmem:[%s1006 + $0x100] sm:$0xff]
      %v1040 = vld [vmem:[%s1006 + $0x108] sm:$0xff]
      %v1041 = vld [vmem:[%s1006 + $0x110] sm:$0xff]
      %v1042 = vld [vmem:[%s1006 + $0x118] sm:$0xff]
      %v1043 = vld [vmem:[%s1006 + $0x120] sm:$0xff]
      %v1044 = vld [vmem:[%s1006 + $0x128] sm:$0xff]
      %v1045 = vld [vmem:[%s1006 + $0x130] sm:$0xff]
      %v1046 = vld [vmem:[%s1006 + $0x138] sm:$0xff]
      %v1049 = vunpack.c.l.b16 %v1004
      %v1050 = vunpack.c.h.b16 %v1004
      %v1051 = vunpack.c.l.b16 %v1005
      %v1052 = vpack.c.b16 %v1049, %v1049
      %v1053 = vpack.c.b16 %v1050, %v1050
      %v1054 = vpack.c.b16 %v1051, %v1051
      %v1056 = vshrl.u32 %v1052, 16
      %v1058 = vshll.u32 %v1052, 16
      %v1060 = vrot.slane %v1058, 1
      %v1061 = vor.u32 %v1056, %v1060
      %v1063 = vshrl.u32 %v1053, 16
      %v1065 = vshll.u32 %v1053, 16
      %v1067 = vrot.slane %v1065, 1
      %v1068 = vor.u32 %v1063, %v1067
      %v1070 = vshrl.u32 %v1054, 16
      %v1072 = vshll.u32 %v1054, 16
      %v1074 = vrot.slane %v1072, 1
      %v1075 = vor.u32 %v1070, %v1074
      %v1118 = vunpack.c.l.b16 %v1007
      %v1119 = vunpack.c.h.b16 %v1007
      %v1120 = vunpack.c.l.b16 %v1008
      %v1121 = vunpack.c.h.b16 %v1008
      %v1122 = vunpack.c.l.b16 %v1009
      %v1123 = vunpack.c.h.b16 %v1009
      %v1124 = vunpack.c.l.b16 %v1010
      %v1125 = vunpack.c.h.b16 %v1010
      %v1126 = vunpack.c.l.b16 %v1011
      %v1127 = vunpack.c.h.b16 %v1011
      %v1128 = vunpack.c.l.b16 %v1012
      %v1129 = vunpack.c.h.b16 %v1012
      %v1130 = vunpack.c.l.b16 %v1013
      %v1131 = vunpack.c.h.b16 %v1013
      %v1132 = vunpack.c.l.b16 %v1014
      %v1133 = vunpack.c.h.b16 %v1014
      %v1134 = vunpack.c.l.b16 %v1015
      %v1135 = vunpack.c.h.b16 %v1015
      %v1136 = vunpack.c.l.b16 %v1016
      %v1137 = vunpack.c.h.b16 %v1016
      %v1138 = vunpack.c.l.b16 %v1017
      %v1139 = vunpack.c.h.b16 %v1017
      %v1140 = vunpack.c.l.b16 %v1018
      %v1141 = vunpack.c.h.b16 %v1018
      %v1142 = vunpack.c.l.b16 %v1019
      %v1143 = vunpack.c.h.b16 %v1019
      %v1144 = vunpack.c.l.b16 %v1020
      %v1145 = vunpack.c.h.b16 %v1020
      %v1146 = vunpack.c.l.b16 %v1021
      %v1147 = vunpack.c.h.b16 %v1021
      %v1148 = vunpack.c.l.b16 %v1022
      %v1149 = vunpack.c.h.b16 %v1022
      %v1150 = vunpack.c.l.b16 %v1023
      %v1151 = vunpack.c.h.b16 %v1023
      %v1152 = vunpack.c.l.b16 %v1024
      %v1153 = vunpack.c.h.b16 %v1024
      %v1154 = vunpack.c.l.b16 %v1025
      %v1155 = vunpack.c.h.b16 %v1025
      %v1156 = vunpack.c.l.b16 %v1026
      %v1157 = vunpack.c.h.b16 %v1026
      %v1158 = vunpack.c.l.b16 %v1027
      %v1159 = vunpack.c.h.b16 %v1027
      %v1160 = vunpack.c.l.b16 %v1028
      %v1161 = vunpack.c.h.b16 %v1028
      %v1162 = vunpack.c.l.b16 %v1029
      %v1163 = vunpack.c.h.b16 %v1029
      %v1164 = vunpack.c.l.b16 %v1030
      %v1165 = vunpack.c.h.b16 %v1030
      %v1166 = vunpack.c.l.b16 %v1031
      %v1167 = vunpack.c.h.b16 %v1031
      %v1168 = vunpack.c.l.b16 %v1032
      %v1169 = vunpack.c.h.b16 %v1032
      %v1170 = vunpack.c.l.b16 %v1033
      %v1171 = vunpack.c.h.b16 %v1033
      %v1172 = vunpack.c.l.b16 %v1034
      %v1173 = vunpack.c.h.b16 %v1034
      %v1174 = vunpack.c.l.b16 %v1035
      %v1175 = vunpack.c.h.b16 %v1035
      %v1176 = vunpack.c.l.b16 %v1036
      %v1177 = vunpack.c.h.b16 %v1036
      %v1178 = vunpack.c.l.b16 %v1037
      %v1179 = vunpack.c.h.b16 %v1037
      %v1180 = vunpack.c.l.b16 %v1038
      %v1181 = vunpack.c.h.b16 %v1038
      %v1182 = vunpack.c.l.b16 %v1039
      %v1183 = vunpack.c.h.b16 %v1039
      %v1184 = vunpack.c.l.b16 %v1040
      %v1185 = vunpack.c.h.b16 %v1040
      %v1186 = vunpack.c.l.b16 %v1041
      %v1187 = vunpack.c.h.b16 %v1041
      %v1188 = vunpack.c.l.b16 %v1042
      %v1189 = vunpack.c.h.b16 %v1042
      %v1190 = vunpack.c.l.b16 %v1043
      %v1191 = vunpack.c.h.b16 %v1043
      %v1192 = vunpack.c.l.b16 %v1044
      %v1193 = vunpack.c.h.b16 %v1044
      %v1194 = vunpack.c.l.b16 %v1045
      %v1195 = vunpack.c.h.b16 %v1045
      %v1196 = vunpack.c.l.b16 %v1046
      %v1197 = vunpack.c.h.b16 %v1046
      %v1198 = vpack.c.b16 %v1120, %v1118
      %v1199 = vpack.c.b16 %v1121, %v1119
      %v1200 = vpack.c.b16 %v1124, %v1122
      %v1201 = vpack.c.b16 %v1125, %v1123
      %v1202 = vpack.c.b16 %v1128, %v1126
      %v1203 = vpack.c.b16 %v1129, %v1127
      %v1204 = vpack.c.b16 %v1132, %v1130
      %v1205 = vpack.c.b16 %v1133, %v1131
      %v1206 = vpack.c.b16 %v1136, %v1134
      %v1207 = vpack.c.b16 %v1137, %v1135
      %v1208 = vpack.c.b16 %v1140, %v1138
      %v1209 = vpack.c.b16 %v1141, %v1139
      %v1210 = vpack.c.b16 %v1144, %v1142
      %v1211 = vpack.c.b16 %v1145, %v1143
      %v1212 = vpack.c.b16 %v1148, %v1146
      %v1213 = vpack.c.b16 %v1149, %v1147
      %v1214 = vpack.c.b16 %v1152, %v1150
      %v1215 = vpack.c.b16 %v1153, %v1151
      %v1216 = vpack.c.b16 %v1156, %v1154
      %v1217 = vpack.c.b16 %v1157, %v1155
      %v1218 = vpack.c.b16 %v1160, %v1158
      %v1219 = vpack.c.b16 %v1161, %v1159
      %v1220 = vpack.c.b16 %v1164, %v1162
      %v1221 = vpack.c.b16 %v1165, %v1163
      %v1222 = vpack.c.b16 %v1168, %v1166
      %v1223 = vpack.c.b16 %v1169, %v1167
      %v1224 = vpack.c.b16 %v1172, %v1170
      %v1225 = vpack.c.b16 %v1173, %v1171
      %v1226 = vpack.c.b16 %v1176, %v1174
      %v1227 = vpack.c.b16 %v1177, %v1175
      %v1228 = vpack.c.b16 %v1180, %v1178
      %v1229 = vpack.c.b16 %v1181, %v1179
      %v1230 = vpack.c.b16 %v1184, %v1182
      %v1231 = vpack.c.b16 %v1185, %v1183
      %v1232 = vpack.c.b16 %v1188, %v1186
      %v1233 = vpack.c.b16 %v1189, %v1187
      %v1234 = vpack.c.b16 %v1192, %v1190
      %v1235 = vpack.c.b16 %v1193, %v1191
      %v1236 = vpack.c.b16 %v1196, %v1194
      %v1237 = vpack.c.b16 %v1197, %v1195
      %v1279 = vsel %vm623, %v1075, 0
      %1281 = vmatprep.subr.bf16.mxu0 %v1199
      %1282 = vmatpush1.bf16.msra.mxu0 %v1198
      %1283 = vmatprep.subr.bf16.mxu0 %v1201
      %1284 = vmatpush1.bf16.msra.mxu0 %v1200
      %1285 = vmatprep.subr.bf16.mxu0 %v1203
      %1286 = vmatpush1.bf16.msra.mxu0 %v1202
      %1287 = vmatprep.subr.bf16.mxu0 %v1205
      %1288 = vmatpush1.bf16.msra.mxu0 %v1204
      %1289 = vmatprep.subr.bf16.mxu0 %v1207
      %1290 = vmatpush1.bf16.msra.mxu0 %v1206
      %1291 = vmatprep.subr.bf16.mxu0 %v1209
      %1292 = vmatpush1.bf16.msra.mxu0 %v1208
      %1293 = vmatprep.subr.bf16.mxu0 %v1211
      %1294 = vmatpush1.bf16.msra.mxu0 %v1210
      %1295 = vmatprep.subr.bf16.mxu0 %v1213
      %1296 = vmatpush1.bf16.msra.mxu0 %v1212
      %1297 = vmatprep.subr.bf16.mxu0 %v1215
      %1298 = vmatpush1.bf16.msra.mxu0 %v1214
      %1299 = vmatprep.subr.bf16.mxu0 %v1217
      %1300 = vmatpush1.bf16.msra.mxu0 %v1216
      %1301 = vmatprep.subr.bf16.mxu0 %v1219
      %1302 = vmatpush1.bf16.msra.mxu0 %v1218
      %1303 = vmatprep.subr.bf16.mxu0 %v1221
      %1304 = vmatpush1.bf16.msra.mxu0 %v1220
      %1305 = vmatprep.subr.bf16.mxu0 %v1223
      %1306 = vmatpush1.bf16.msra.mxu0 %v1222
      %1307 = vmatprep.subr.bf16.mxu0 %v1225
      %1308 = vmatpush1.bf16.msra.mxu0 %v1224
      %1309 = vmatprep.subr.bf16.mxu0 %v1227
      %1310 = vmatpush1.bf16.msra.mxu0 %v1226
      %1311 = vmatprep.subr.bf16.mxu0 %v1229
      %1312 = vmatpush1.bf16.msra.mxu0 %v1228
      %1313 = vmatprep.mubr.bf16.mxu0 %v1068
      %1314 = vmatmul.mubr.bf16.gmra.mrb[0].mxu0 %v1061
      %v1315 = vpop.f32.mrb[0].mxu0
      %v1316 = vadd.f32 0.0, %v1315
      %v1317 = vpop.f32.mrb[0].mxu0
      %v1318 = vadd.f32 0.0, %v1317
      %v1319 = vpop.f32.mrb[0].mxu0
      %v1320 = vpop.f32.mrb[0].mxu0
      %1321 = vdwg.mxu0
      %1322 = vmatprep.subr.bf16.mxu0 %v1231
      %1323 = vmatpush1.bf16.msra.mxu0 %v1230
      %1324 = vmatprep.subr.bf16.mxu0 %v1233
      %1325 = vmatpush1.bf16.msra.mxu0 %v1232
      %1326 = vmatprep.subr.bf16.mxu0 %v1235
      %1327 = vmatpush1.bf16.msra.mxu0 %v1234
      %1328 = vmatprep.subr.bf16.mxu0 %v1237
      %1329 = vmatpush1.bf16.msra.mxu0 %v1236
      %1330 = vmatprep.subr.bf16.mxu0 0
      %1331 = vmatpush1.bf16.msra.mxu0 0
      %1332 = vmatprep.subr.bf16.mxu0 0
      %1333 = vmatpush1.bf16.msra.mxu0 0
      %1334 = vmatprep.subr.bf16.mxu0 0
      %1335 = vmatpush1.bf16.msra.mxu0 0
      %1336 = vmatprep.subr.bf16.mxu0 0
      %1337 = vmatpush1.bf16.msra.mxu0 0
      %1338 = vmatprep.subr.bf16.mxu0 0
      %1339 = vmatpush1.bf16.msra.mxu0 0
      %1340 = vmatprep.subr.bf16.mxu0 0
      %1341 = vmatpush1.bf16.msra.mxu0 0
      %1342 = vmatprep.subr.bf16.mxu0 0
      %1343 = vmatpush1.bf16.msra.mxu0 0
      %1344 = vmatprep.subr.bf16.mxu0 0
      %1345 = vmatpush1.bf16.msra.mxu0 0
      %1346 = vmatprep.subr.bf16.mxu0 0
      %1347 = vmatpush1.bf16.msra.mxu0 0
      %1348 = vmatprep.subr.bf16.mxu0 0
      %1349 = vmatpush1.bf16.msra.mxu0 0
      %1350 = vmatprep.subr.bf16.mxu0 0
      %1351 = vmatpush1.bf16.msra.mxu0 0
      %1352 = vmatprep.subr.bf16.mxu0 0
      %1353 = vmatpush1.bf16.msra.mxu0 0
      %1354 = vmatprep.mubr.bf16.mxu0 0
      %1355 = vmatmul.mubr.bf16.gmra.mrb[0].mxu0 %v1279
      %v1356 = vpop.f32.mrb[0].mxu0
      %v1357 = vadd.f32 %v1316, %v1356
      %v1358 = vpop.f32.mrb[0].mxu0
      %v1359 = vadd.f32 %v1318, %v1358
      %v1360 = vpop.f32.mrb[0].mxu0
      %v1361 = vpop.f32.mrb[0].mxu0
      %1362 = vdwg.mxu0
      %v1363 = vadd.f32 %v998, %v1357
      %v1364 = vadd.f32 %v1000, %v1359
      %v1365 = vld [vmem:[%s3] sm:$0x3]
      %v1367 = vlaneseq
      %v1368 = vshrl.u32 %v1367, 7
      %v1369 = vsub.s32 0, %v1368
      %v1370 = vrot.slane %v1365, %v1369
      %v1371 = vlaneseq
      %v1372 = vshrl.u32 %v1371, 7
      %v1373 = vsub.s32 1, %v1372
      %v1374 = vrot.slane %v1365, %v1373
      %v1377 = vmul.f32 %v1363, %v1370
      %v1378 = vmul.f32 %v1364, %v1374
      %v1379 = vld [vmem:[%s4] sm:$0x3]
      %v1381 = vlaneseq
      %v1382 = vshrl.u32 %v1381, 7
      %v1383 = vsub.s32 0, %v1382
      %v1384 = vrot.slane %v1379, %v1383
      %v1385 = vlaneseq
      %v1386 = vshrl.u32 %v1385, 7
      %v1387 = vsub.s32 1, %v1386
      %v1388 = vrot.slane %v1379, %v1387
      %v1391 = vadd.f32 %v1377, %v1384
      %v1392 = vadd.f32 %v1378, %v1388
      %v1393 = vmax.f32 %v1391, 0.0
      %v1394 = vmax.f32 %v1392, 0.0
      %1395 = vst [vmem:[#allocation2] sm:$0x3f] 0.0
      %1396 = vst [vmem:[#allocation2 + $0x8] sm:$0x3f] 0.0
      %1397 = vst [vmem:[#allocation2 + $0x10] sm:$0x3f] 0.0
      %v1400 = vrot.slane %v1393, 7
      %v1401 = vrot.slane %v1394, 7
      %1402 = vrot.lane.b32.xlu0 %v1400, 64
      %v1403 = vpop.permute.xlu0 %1402
      %1404 = vrot.lane.b32.xlu0 %v1401, 64
      %v1405 = vpop.permute.xlu0 %1404
      %v1406 = vsel %vm623, %v1403, %v1405
      %vm1410 = vcmask 1044993
      %1411 = vst.msk [vmem:[#allocation2] sm:$0x1e] %vm1410, %v1403
      %1412 = vst [vmem:[#allocation2 + $0x8] sm:$0x1e] %v1406
      %vm1413 = vcmask 520193
      %1414 = vst.msk [vmem:[#allocation2 + $0x10] sm:$0x1e] %vm1413, %v1405
      %v1415 = vld [vmem:[#allocation2] sm:$0xf]
      %v1416 = vld [vmem:[#allocation2 + $0x8] sm:$0xf]
      %v1417 = vld [vmem:[#allocation2 + $0x10] sm:$0xf]
      %v1418 = vpack.c.bf16 %v1415, %v1415
      %v1419 = vpack.c.bf16 %v1416, %v1416
      %v1420 = vpack.c.bf16 %v1417, %v1417
      %v1421 = vld [vmem:[%s5] sm:$0xff]
      %v1422 = vld [vmem:[%s5 + $0x8] sm:$0xff]
      %v1423 = vld [vmem:[%s5 + $0x10] sm:$0xff]
      %v1424 = vld [vmem:[%s5 + $0x18] sm:$0xff]
      %v1425 = vld [vmem:[%s5 + $0x20] sm:$0xff]
      %v1426 = vld [vmem:[%s5 + $0x28] sm:$0xff]
      %v1427 = vld [vmem:[%s5 + $0x30] sm:$0xff]
      %v1428 = vld [vmem:[%s5 + $0x38] sm:$0xff]
      %v1429 = vld [vmem:[%s5 + $0x40] sm:$0xff]
      %v1430 = vld [vmem:[%s5 + $0x48] sm:$0xff]
      %v1431 = vld [vmem:[%s5 + $0x50] sm:$0xff]
      %v1432 = vld [vmem:[%s5 + $0x58] sm:$0xff]
      %v1433 = vld [vmem:[%s5 + $0x60] sm:$0xff]
      %v1434 = vld [vmem:[%s5 + $0x68] sm:$0xff]
      %v1435 = vld [vmem:[%s5 + $0x70] sm:$0xff]
      %v1436 = vld [vmem:[%s5 + $0x78] sm:$0xff]
      %v1437 = vld [vmem:[%s5 + $0x80] sm:$0xff]
      %v1438 = vld [vmem:[%s5 + $0x88] sm:$0xff]
      %v1439 = vld [vmem:[%s5 + $0x90] sm:$0xff]
      %v1440 = vld [vmem:[%s5 + $0x98] sm:$0xff]
      %v1441 = vld [vmem:[%s5 + $0xa0] sm:$0xff]
      %v1442 = vld [vmem:[%s5 + $0xa8] sm:$0xff]
      %v1443 = vld [vmem:[%s5 + $0xb0] sm:$0xff]
      %v1444 = vld [vmem:[%s5 + $0xb8] sm:$0xff]
      %v1445 = vld [vmem:[%s5 + $0xc0] sm:$0xff]
      %v1446 = vld [vmem:[%s5 + $0xc8] sm:$0xff]
      %v1447 = vld [vmem:[%s5 + $0xd0] sm:$0xff]
      %v1448 = vld [vmem:[%s5 + $0xd8] sm:$0xff]
      %v1449 = vld [vmem:[%s5 + $0xe0] sm:$0xff]
      %v1450 = vld [vmem:[%s5 + $0xe8] sm:$0xff]
      %v1451 = vld [vmem:[%s5 + $0xf0] sm:$0xff]
      %v1452 = vld [vmem:[%s5 + $0xf8] sm:$0xff]
      %v1453 = vld [vmem:[%s5 + $0x100] sm:$0xff]
      %v1454 = vld [vmem:[%s5 + $0x108] sm:$0xff]
      %v1455 = vld [vmem:[%s5 + $0x110] sm:$0xff]
      %v1456 = vld [vmem:[%s5 + $0x118] sm:$0xff]
      %v1457 = vld [vmem:[%s5 + $0x120] sm:$0xff]
      %v1458 = vld [vmem:[%s5 + $0x128] sm:$0xff]
      %v1459 = vld [vmem:[%s5 + $0x130] sm:$0xff]
      %v1460 = vld [vmem:[%s5 + $0x138] sm:$0xff]
      %v1461 = vld [vmem:[%s5 + $0x140] sm:$0xff]
      %v1462 = vld [vmem:[%s5 + $0x148] sm:$0xff]
      %v1463 = vld [vmem:[%s5 + $0x150] sm:$0xff]
      %v1464 = vld [vmem:[%s5 + $0x158] sm:$0xff]
      %v1465 = vld [vmem:[%s5 + $0x160] sm:$0xff]
      %v1466 = vld [vmem:[%s5 + $0x168] sm:$0xff]
      %v1467 = vld [vmem:[%s5 + $0x170] sm:$0xff]
      %v1468 = vld [vmem:[%s5 + $0x178] sm:$0xff]
      %v1469 = vld [vmem:[#allocation2] sm:$0x1e]
      %v1470 = vld [vmem:[#allocation2 + $0x8] sm:$0x1e]
      %v1471 = vld [vmem:[#allocation2 + $0x10] sm:$0x1e]
      %v1472 = vpack.c.bf16 %v1469, %v1469
      %v1473 = vpack.c.bf16 %v1470, %v1470
      %v1474 = vpack.c.bf16 %v1471, %v1471
      %s1475 = scalar_lea.vmem %s5, 384
      %v1476 = vld [vmem:[%s1475] sm:$0xff]
      %v1477 = vld [vmem:[%s1475 + $0x8] sm:$0xff]
      %v1478 = vld [vmem:[%s1475 + $0x10] sm:$0xff]
      %v1479 = vld [vmem:[%s1475 + $0x18] sm:$0xff]
      %v1480 = vld [vmem:[%s1475 + $0x20] sm:$0xff]
      %v1481 = vld [vmem:[%s1475 + $0x28] sm:$0xff]
      %v1482 = vld [vmem:[%s1475 + $0x30] sm:$0xff]
      %v1483 = vld [vmem:[%s1475 + $0x38] sm:$0xff]
      %v1484 = vld [vmem:[%s1475 + $0x40] sm:$0xff]
      %v1485 = vld [vmem:[%s1475 + $0x48] sm:$0xff]
      %v1486 = vld [vmem:[%s1475 + $0x50] sm:$0xff]
      %v1487 = vld [vmem:[%s1475 + $0x58] sm:$0xff]
      %v1488 = vld [vmem:[%s1475 + $0x60] sm:$0xff]
      %v1489 = vld [vmem:[%s1475 + $0x68] sm:$0xff]
      %v1490 = vld [vmem:[%s1475 + $0x70] sm:$0xff]
      %v1491 = vld [vmem:[%s1475 + $0x78] sm:$0xff]
      %v1492 = vld [vmem:[%s1475 + $0x80] sm:$0xff]
      %v1493 = vld [vmem:[%s1475 + $0x88] sm:$0xff]
      %v1494 = vld [vmem:[%s1475 + $0x90] sm:$0xff]
      %v1495 = vld [vmem:[%s1475 + $0x98] sm:$0xff]
      %v1496 = vld [vmem:[%s1475 + $0xa0] sm:$0xff]
      %v1497 = vld [vmem:[%s1475 + $0xa8] sm:$0xff]
      %v1498 = vld [vmem:[%s1475 + $0xb0] sm:$0xff]
      %v1499 = vld [vmem:[%s1475 + $0xb8] sm:$0xff]
      %v1500 = vld [vmem:[%s1475 + $0xc0] sm:$0xff]
      %v1501 = vld [vmem:[%s1475 + $0xc8] sm:$0xff]
      %v1502 = vld [vmem:[%s1475 + $0xd0] sm:$0xff]
      %v1503 = vld [vmem:[%s1475 + $0xd8] sm:$0xff]
      %v1504 = vld [vmem:[%s1475 + $0xe0] sm:$0xff]
      %v1505 = vld [vmem:[%s1475 + $0xe8] sm:$0xff]
      %v1506 = vld [vmem:[%s1475 + $0xf0] sm:$0xff]
      %v1507 = vld [vmem:[%s1475 + $0xf8] sm:$0xff]
      %v1508 = vld [vmem:[%s1475 + $0x100] sm:$0xff]
      %v1509 = vld [vmem:[%s1475 + $0x108] sm:$0xff]
      %v1510 = vld [vmem:[%s1475 + $0x110] sm:$0xff]
      %v1511 = vld [vmem:[%s1475 + $0x118] sm:$0xff]
      %v1512 = vld [vmem:[%s1475 + $0x120] sm:$0xff]
      %v1513 = vld [vmem:[%s1475 + $0x128] sm:$0xff]
      %v1514 = vld [vmem:[%s1475 + $0x130] sm:$0xff]
      %v1515 = vld [vmem:[%s1475 + $0x138] sm:$0xff]
      %v1516 = vld [vmem:[%s1475 + $0x140] sm:$0xff]
      %v1517 = vld [vmem:[%s1475 + $0x148] sm:$0xff]
      %v1518 = vld [vmem:[%s1475 + $0x150] sm:$0xff]
      %v1519 = vld [vmem:[%s1475 + $0x158] sm:$0xff]
      %v1520 = vld [vmem:[%s1475 + $0x160] sm:$0xff]
      %v1521 = vld [vmem:[%s1475 + $0x168] sm:$0xff]
      %v1522 = vld [vmem:[%s1475 + $0x170] sm:$0xff]
      %v1523 = vld [vmem:[%s1475 + $0x178] sm:$0xff]
      %v1525 = vshrl.u32 %v1472, 16
      %v1527 = vshll.u32 %v1472, 16
      %v1529 = vrot.slane %v1527, 1
      %v1530 = vor.u32 %v1525, %v1529
      %v1532 = vshrl.u32 %v1473, 16
      %v1534 = vshll.u32 %v1473, 16
      %v1536 = vrot.slane %v1534, 1
      %v1537 = vor.u32 %v1532, %v1536
      %v1539 = vshrl.u32 %v1474, 16
      %v1541 = vshll.u32 %v1474, 16
      %v1543 = vrot.slane %v1541, 1
      %v1544 = vor.u32 %v1539, %v1543
      %v1596 = vunpack.c.l.b16 %v1476
      %v1597 = vunpack.c.h.b16 %v1476
      %v1598 = vunpack.c.l.b16 %v1477
      %v1599 = vunpack.c.h.b16 %v1477
      %v1600 = vunpack.c.l.b16 %v1478
      %v1601 = vunpack.c.h.b16 %v1478
      %v1602 = vunpack.c.l.b16 %v1479
      %v1603 = vunpack.c.h.b16 %v1479
      %v1604 = vunpack.c.l.b16 %v1480
      %v1605 = vunpack.c.h.b16 %v1480
      %v1606 = vunpack.c.l.b16 %v1481
      %v1607 = vunpack.c.h.b16 %v1481
      %v1608 = vunpack.c.l.b16 %v1482
      %v1609 = vunpack.c.h.b16 %v1482
      %v1610 = vunpack.c.l.b16 %v1483
      %v1611 = vunpack.c.h.b16 %v1483
      %v1612 = vunpack.c.l.b16 %v1484
      %v1613 = vunpack.c.h.b16 %v1484
      %v1614 = vunpack.c.l.b16 %v1485
      %v1615 = vunpack.c.h.b16 %v1485
      %v1616 = vunpack.c.l.b16 %v1486
      %v1617 = vunpack.c.h.b16 %v1486
      %v1618 = vunpack.c.l.b16 %v1487
      %v1619 = vunpack.c.h.b16 %v1487
      %v1620 = vunpack.c.l.b16 %v1488
      %v1621 = vunpack.c.h.b16 %v1488
      %v1622 = vunpack.c.l.b16 %v1489
      %v1623 = vunpack.c.h.b16 %v1489
      %v1624 = vunpack.c.l.b16 %v1490
      %v1625 = vunpack.c.h.b16 %v1490
      %v1626 = vunpack.c.l.b16 %v1491
      %v1627 = vunpack.c.h.b16 %v1491
      %v1628 = vunpack.c.l.b16 %v1492
      %v1629 = vunpack.c.h.b16 %v1492
      %v1630 = vunpack.c.l.b16 %v1493
      %v1631 = vunpack.c.h.b16 %v1493
      %v1632 = vunpack.c.l.b16 %v1494
      %v1633 = vunpack.c.h.b16 %v1494
      %v1634 = vunpack.c.l.b16 %v1495
      %v1635 = vunpack.c.h.b16 %v1495
      %v1636 = vunpack.c.l.b16 %v1496
      %v1637 = vunpack.c.h.b16 %v1496
      %v1638 = vunpack.c.l.b16 %v1497
      %v1639 = vunpack.c.h.b16 %v1497
      %v1640 = vunpack.c.l.b16 %v1498
      %v1641 = vunpack.c.h.b16 %v1498
      %v1642 = vunpack.c.l.b16 %v1499
      %v1643 = vunpack.c.h.b16 %v1499
      %v1644 = vunpack.c.l.b16 %v1500
      %v1645 = vunpack.c.h.b16 %v1500
      %v1646 = vunpack.c.l.b16 %v1501
      %v1647 = vunpack.c.h.b16 %v1501
      %v1648 = vunpack.c.l.b16 %v1502
      %v1649 = vunpack.c.h.b16 %v1502
      %v1650 = vunpack.c.l.b16 %v1503
      %v1651 = vunpack.c.h.b16 %v1503
      %v1652 = vunpack.c.l.b16 %v1504
      %v1653 = vunpack.c.h.b16 %v1504
      %v1654 = vunpack.c.l.b16 %v1505
      %v1655 = vunpack.c.h.b16 %v1505
      %v1656 = vunpack.c.l.b16 %v1506
      %v1657 = vunpack.c.h.b16 %v1506
      %v1658 = vunpack.c.l.b16 %v1507
      %v1659 = vunpack.c.h.b16 %v1507
      %v1660 = vunpack.c.l.b16 %v1508
      %v1661 = vunpack.c.h.b16 %v1508
      %v1662 = vunpack.c.l.b16 %v1509
      %v1663 = vunpack.c.h.b16 %v1509
      %v1664 = vunpack.c.l.b16 %v1510
      %v1665 = vunpack.c.h.b16 %v1510
      %v1666 = vunpack.c.l.b16 %v1511
      %v1667 = vunpack.c.h.b16 %v1511
      %v1668 = vunpack.c.l.b16 %v1512
      %v1669 = vunpack.c.h.b16 %v1512
      %v1670 = vunpack.c.l.b16 %v1513
      %v1671 = vunpack.c.h.b16 %v1513
      %v1672 = vunpack.c.l.b16 %v1514
      %v1673 = vunpack.c.h.b16 %v1514
      %v1674 = vunpack.c.l.b16 %v1515
      %v1675 = vunpack.c.h.b16 %v1515
      %v1676 = vunpack.c.l.b16 %v1516
      %v1677 = vunpack.c.h.b16 %v1516
      %v1678 = vunpack.c.l.b16 %v1517
      %v1679 = vunpack.c.h.b16 %v1517
      %v1680 = vunpack.c.l.b16 %v1518
      %v1681 = vunpack.c.h.b16 %v1518
      %v1682 = vunpack.c.l.b16 %v1519
      %v1683 = vunpack.c.h.b16 %v1519
      %v1684 = vunpack.c.l.b16 %v1520
      %v1685 = vunpack.c.h.b16 %v1520
      %v1686 = vunpack.c.l.b16 %v1521
      %v1687 = vunpack.c.h.b16 %v1521
      %v1688 = vunpack.c.l.b16 %v1522
      %v1689 = vunpack.c.h.b16 %v1522
      %v1690 = vunpack.c.l.b16 %v1523
      %v1691 = vunpack.c.h.b16 %v1523
      %v1692 = vpack.c.b16 %v1598, %v1596
      %v1693 = vpack.c.b16 %v1599, %v1597
      %v1694 = vpack.c.b16 %v1602, %v1600
      %v1695 = vpack.c.b16 %v1603, %v1601
      %v1696 = vpack.c.b16 %v1606, %v1604
      %v1697 = vpack.c.b16 %v1607, %v1605
      %v1698 = vpack.c.b16 %v1610, %v1608
      %v1699 = vpack.c.b16 %v1611, %v1609
      %v1700 = vpack.c.b16 %v1614, %v1612
      %v1701 = vpack.c.b16 %v1615, %v1613
      %v1702 = vpack.c.b16 %v1618, %v1616
      %v1703 = vpack.c.b16 %v1619, %v1617
      %v1704 = vpack.c.b16 %v1622, %v1620
      %v1705 = vpack.c.b16 %v1623, %v1621
      %v1706 = vpack.c.b16 %v1626, %v1624
      %v1707 = vpack.c.b16 %v1627, %v1625
      %v1708 = vpack.c.b16 %v1630, %v1628
      %v1709 = vpack.c.b16 %v1631, %v1629
      %v1710 = vpack.c.b16 %v1634, %v1632
      %v1711 = vpack.c.b16 %v1635, %v1633
      %v1712 = vpack.c.b16 %v1638, %v1636
      %v1713 = vpack.c.b16 %v1639, %v1637
      %v1714 = vpack.c.b16 %v1642, %v1640
      %v1715 = vpack.c.b16 %v1643, %v1641
      %v1716 = vpack.c.b16 %v1646, %v1644
      %v1717 = vpack.c.b16 %v1647, %v1645
      %v1718 = vpack.c.b16 %v1650, %v1648
      %v1719 = vpack.c.b16 %v1651, %v1649
      %v1720 = vpack.c.b16 %v1654, %v1652
      %v1721 = vpack.c.b16 %v1655, %v1653
      %v1722 = vpack.c.b16 %v1658, %v1656
      %v1723 = vpack.c.b16 %v1659, %v1657
      %v1724 = vpack.c.b16 %v1662, %v1660
      %v1725 = vpack.c.b16 %v1663, %v1661
      %v1726 = vpack.c.b16 %v1666, %v1664
      %v1727 = vpack.c.b16 %v1667, %v1665
      %v1728 = vpack.c.b16 %v1670, %v1668
      %v1729 = vpack.c.b16 %v1671, %v1669
      %v1730 = vpack.c.b16 %v1674, %v1672
      %v1731 = vpack.c.b16 %v1675, %v1673
      %v1732 = vpack.c.b16 %v1678, %v1676
      %v1733 = vpack.c.b16 %v1679, %v1677
      %v1734 = vpack.c.b16 %v1682, %v1680
      %v1735 = vpack.c.b16 %v1683, %v1681
      %v1736 = vpack.c.b16 %v1686, %v1684
      %v1737 = vpack.c.b16 %v1687, %v1685
      %v1738 = vpack.c.b16 %v1690, %v1688
      %v1739 = vpack.c.b16 %v1691, %v1689
      %1788 = vmatprep.subr.bf16.mxu0 %v1693
      %1789 = vmatpush1.bf16.msra.mxu0 %v1692
      %1790 = vmatprep.subr.bf16.mxu0 %v1695
      %1791 = vmatpush1.bf16.msra.mxu0 %v1694
      %1792 = vmatprep.subr.bf16.mxu0 %v1697
      %1793 = vmatpush1.bf16.msra.mxu0 %v1696
      %1794 = vmatprep.subr.bf16.mxu0 %v1699
      %1795 = vmatpush1.bf16.msra.mxu0 %v1698
      %1796 = vmatprep.subr.bf16.mxu0 %v1701
      %1797 = vmatpush1.bf16.msra.mxu0 %v1700
      %1798 = vmatprep.subr.bf16.mxu0 %v1703
      %1799 = vmatpush1.bf16.msra.mxu0 %v1702
      %1800 = vmatprep.subr.bf16.mxu0 %v1705
      %1801 = vmatpush1.bf16.msra.mxu0 %v1704
      %1802 = vmatprep.subr.bf16.mxu0 %v1707
      %1803 = vmatpush1.bf16.msra.mxu0 %v1706
      %1804 = vmatprep.subr.bf16.mxu0 %v1709
      %1805 = vmatpush1.bf16.msra.mxu0 %v1708
      %1806 = vmatprep.subr.bf16.mxu0 %v1711
      %1807 = vmatpush1.bf16.msra.mxu0 %v1710
      %1808 = vmatprep.subr.bf16.mxu0 %v1713
      %1809 = vmatpush1.bf16.msra.mxu0 %v1712
      %1810 = vmatprep.subr.bf16.mxu0 %v1715
      %1811 = vmatpush1.bf16.msra.mxu0 %v1714
      %1812 = vmatprep.subr.bf16.mxu0 %v1717
      %1813 = vmatpush1.bf16.msra.mxu0 %v1716
      %1814 = vmatprep.subr.bf16.mxu0 %v1719
      %1815 = vmatpush1.bf16.msra.mxu0 %v1718
      %1816 = vmatprep.subr.bf16.mxu0 %v1721
      %1817 = vmatpush1.bf16.msra.mxu0 %v1720
      %1818 = vmatprep.subr.bf16.mxu0 %v1723
      %1819 = vmatpush1.bf16.msra.mxu0 %v1722
      %1820 = vmatprep.mubr.bf16.mxu0 %v1537
      %1821 = vmatmul.mubr.bf16.gmra.mrb[0].mxu0 %v1530
      %v1822 = vpop.f32.mrb[0].mxu0
      %v1823 = vadd.f32 0.0, %v1822
      %v1824 = vpop.f32.mrb[0].mxu0
      %v1825 = vadd.f32 0.0, %v1824
      %v1826 = vpop.f32.mrb[0].mxu0
      %v1827 = vpop.f32.mrb[0].mxu0
      %1828 = vdwg.mxu0
      %1829 = vmatprep.subr.bf16.mxu0 %v1725
      %1830 = vmatpush1.bf16.msra.mxu0 %v1724
      %1831 = vmatprep.subr.bf16.mxu0 %v1727
      %1832 = vmatpush1.bf16.msra.mxu0 %v1726
      %1833 = vmatprep.subr.bf16.mxu0 %v1729
      %1834 = vmatpush1.bf16.msra.mxu0 %v1728
      %1835 = vmatprep.subr.bf16.mxu0 %v1731
      %1836 = vmatpush1.bf16.msra.mxu0 %v1730
      %1837 = vmatprep.subr.bf16.mxu0 %v1733
      %1838 = vmatpush1.bf16.msra.mxu0 %v1732
      %1839 = vmatprep.subr.bf16.mxu0 %v1735
      %1840 = vmatpush1.bf16.msra.mxu0 %v1734
      %1841 = vmatprep.subr.bf16.mxu0 %v1737
      %1842 = vmatpush1.bf16.msra.mxu0 %v1736
      %1843 = vmatprep.subr.bf16.mxu0 %v1739
      %1844 = vmatpush1.bf16.msra.mxu0 %v1738
      %1845 = vmatprep.subr.bf16.mxu0 0
      %1846 = vmatpush1.bf16.msra.mxu0 0
      %1847 = vmatprep.subr.bf16.mxu0 0
      %1848 = vmatpush1.bf16.msra.mxu0 0
      %1849 = vmatprep.subr.bf16.mxu0 0
      %1850 = vmatpush1.bf16.msra.mxu0 0
      %1851 = vmatprep.subr.bf16.mxu0 0
      %1852 = vmatpush1.bf16.msra.mxu0 0
      %1853 = vmatprep.subr.bf16.mxu0 0
      %1854 = vmatpush1.bf16.msra.mxu0 0
      %1855 = vmatprep.subr.bf16.mxu0 0
      %1856 = vmatpush1.bf16.msra.mxu0 0
      %1857 = vmatprep.subr.bf16.mxu0 0
      %1858 = vmatpush1.bf16.msra.mxu0 0
      %1859 = vmatprep.subr.bf16.mxu0 0
      %1860 = vmatpush1.bf16.msra.mxu0 0
      %1861 = vmatprep.mubr.bf16.mxu0 0
      %1862 = vmatmul.mubr.bf16.gmra.mrb[0].mxu0 %v1544
      %v1863 = vpop.f32.mrb[0].mxu0
      %v1864 = vadd.f32 %v1823, %v1863
      %v1865 = vpop.f32.mrb[0].mxu0
      %v1866 = vadd.f32 %v1825, %v1865
      %v1867 = vpop.f32.mrb[0].mxu0
      %v1868 = vpop.f32.mrb[0].mxu0
      %1869 = vdwg.mxu0
      %v1918 = vunpack.c.l.b16 %v1421
      %v1919 = vunpack.c.h.b16 %v1421
      %v1920 = vunpack.c.l.b16 %v1422
      %v1921 = vunpack.c.h.b16 %v1422
      %v1922 = vunpack.c.l.b16 %v1423
      %v1923 = vunpack.c.h.b16 %v1423
      %v1924 = vunpack.c.l.b16 %v1424
      %v1925 = vunpack.c.h.b16 %v1424
      %v1926 = vunpack.c.l.b16 %v1425
      %v1927 = vunpack.c.h.b16 %v1425
      %v1928 = vunpack.c.l.b16 %v1426
      %v1929 = vunpack.c.h.b16 %v1426
      %v1930 = vunpack.c.l.b16 %v1427
      %v1931 = vunpack.c.h.b16 %v1427
      %v1932 = vunpack.c.l.b16 %v1428
      %v1933 = vunpack.c.h.b16 %v1428
      %v1934 = vunpack.c.l.b16 %v1429
      %v1935 = vunpack.c.h.b16 %v1429
      %v1936 = vunpack.c.l.b16 %v1430
      %v1937 = vunpack.c.h.b16 %v1430
      %v1938 = vunpack.c.l.b16 %v1431
      %v1939 = vunpack.c.h.b16 %v1431
      %v1940 = vunpack.c.l.b16 %v1432
      %v1941 = vunpack.c.h.b16 %v1432
      %v1942 = vunpack.c.l.b16 %v1433
      %v1943 = vunpack.c.h.b16 %v1433
      %v1944 = vunpack.c.l.b16 %v1434
      %v1945 = vunpack.c.h.b16 %v1434
      %v1946 = vunpack.c.l.b16 %v1435
      %v1947 = vunpack.c.h.b16 %v1435
      %v1948 = vunpack.c.l.b16 %v1436
      %v1949 = vunpack.c.h.b16 %v1436
      %v1950 = vunpack.c.l.b16 %v1437
      %v1951 = vunpack.c.h.b16 %v1437
      %v1952 = vunpack.c.l.b16 %v1438
      %v1953 = vunpack.c.h.b16 %v1438
      %v1954 = vunpack.c.l.b16 %v1439
      %v1955 = vunpack.c.h.b16 %v1439
      %v1956 = vunpack.c.l.b16 %v1440
      %v1957 = vunpack.c.h.b16 %v1440
      %v1958 = vunpack.c.l.b16 %v1441
      %v1959 = vunpack.c.h.b16 %v1441
      %v1960 = vunpack.c.l.b16 %v1442
      %v1961 = vunpack.c.h.b16 %v1442
      %v1962 = vunpack.c.l.b16 %v1443
      %v1963 = vunpack.c.h.b16 %v1443
      %v1964 = vunpack.c.l.b16 %v1444
      %v1965 = vunpack.c.h.b16 %v1444
      %v1966 = vunpack.c.l.b16 %v1445
      %v1967 = vunpack.c.h.b16 %v1445
      %v1968 = vunpack.c.l.b16 %v1446
      %v1969 = vunpack.c.h.b16 %v1446
      %v1970 = vunpack.c.l.b16 %v1447
      %v1971 = vunpack.c.h.b16 %v1447
      %v1972 = vunpack.c.l.b16 %v1448
      %v1973 = vunpack.c.h.b16 %v1448
      %v1974 = vunpack.c.l.b16 %v1449
      %v1975 = vunpack.c.h.b16 %v1449
      %v1976 = vunpack.c.l.b16 %v1450
      %v1977 = vunpack.c.h.b16 %v1450
      %v1978 = vunpack.c.l.b16 %v1451
      %v1979 = vunpack.c.h.b16 %v1451
      %v1980 = vunpack.c.l.b16 %v1452
      %v1981 = vunpack.c.h.b16 %v1452
      %v1982 = vunpack.c.l.b16 %v1453
      %v1983 = vunpack.c.h.b16 %v1453
      %v1984 = vunpack.c.l.b16 %v1454
      %v1985 = vunpack.c.h.b16 %v1454
      %v1986 = vunpack.c.l.b16 %v1455
      %v1987 = vunpack.c.h.b16 %v1455
      %v1988 = vunpack.c.l.b16 %v1456
      %v1989 = vunpack.c.h.b16 %v1456
      %v1990 = vunpack.c.l.b16 %v1457
      %v1991 = vunpack.c.h.b16 %v1457
      %v1992 = vunpack.c.l.b16 %v1458
      %v1993 = vunpack.c.h.b16 %v1458
      %v1994 = vunpack.c.l.b16 %v1459
      %v1995 = vunpack.c.h.b16 %v1459
      %v1996 = vunpack.c.l.b16 %v1460
      %v1997 = vunpack.c.h.b16 %v1460
      %v1998 = vunpack.c.l.b16 %v1461
      %v1999 = vunpack.c.h.b16 %v1461
      %v2000 = vunpack.c.l.b16 %v1462
      %v2001 = vunpack.c.h.b16 %v1462
      %v2002 = vunpack.c.l.b16 %v1463
      %v2003 = vunpack.c.h.b16 %v1463
      %v2004 = vunpack.c.l.b16 %v1464
      %v2005 = vunpack.c.h.b16 %v1464
      %v2006 = vunpack.c.l.b16 %v1465
      %v2007 = vunpack.c.h.b16 %v1465
      %v2008 = vunpack.c.l.b16 %v1466
      %v2009 = vunpack.c.h.b16 %v1466
      %v2010 = vunpack.c.l.b16 %v1467
      %v2011 = vunpack.c.h.b16 %v1467
      %v2012 = vunpack.c.l.b16 %v1468
      %v2013 = vunpack.c.h.b16 %v1468
      %v2014 = vpack.c.b16 %v1920, %v1918
      %v2015 = vpack.c.b16 %v1921, %v1919
      %v2016 = vpack.c.b16 %v1924, %v1922
      %v2017 = vpack.c.b16 %v1925, %v1923
      %v2018 = vpack.c.b16 %v1928, %v1926
      %v2019 = vpack.c.b16 %v1929, %v1927
      %v2020 = vpack.c.b16 %v1932, %v1930
      %v2021 = vpack.c.b16 %v1933, %v1931
      %v2022 = vpack.c.b16 %v1936, %v1934
      %v2023 = vpack.c.b16 %v1937, %v1935
      %v2024 = vpack.c.b16 %v1940, %v1938
      %v2025 = vpack.c.b16 %v1941, %v1939
      %v2026 = vpack.c.b16 %v1944, %v1942
      %v2027 = vpack.c.b16 %v1945, %v1943
      %v2028 = vpack.c.b16 %v1948, %v1946
      %v2029 = vpack.c.b16 %v1949, %v1947
      %v2030 = vpack.c.b16 %v1952, %v1950
      %v2031 = vpack.c.b16 %v1953, %v1951
      %v2032 = vpack.c.b16 %v1956, %v1954
      %v2033 = vpack.c.b16 %v1957, %v1955
      %v2034 = vpack.c.b16 %v1960, %v1958
      %v2035 = vpack.c.b16 %v1961, %v1959
      %v2036 = vpack.c.b16 %v1964, %v1962
      %v2037 = vpack.c.b16 %v1965, %v1963
      %v2038 = vpack.c.b16 %v1968, %v1966
      %v2039 = vpack.c.b16 %v1969, %v1967
      %v2040 = vpack.c.b16 %v1972, %v1970
      %v2041 = vpack.c.b16 %v1973, %v1971
      %v2042 = vpack.c.b16 %v1976, %v1974
      %v2043 = vpack.c.b16 %v1977, %v1975
      %v2044 = vpack.c.b16 %v1980, %v1978
      %v2045 = vpack.c.b16 %v1981, %v1979
      %v2046 = vpack.c.b16 %v1984, %v1982
      %v2047 = vpack.c.b16 %v1985, %v1983
      %v2048 = vpack.c.b16 %v1988, %v1986
      %v2049 = vpack.c.b16 %v1989, %v1987
      %v2050 = vpack.c.b16 %v1992, %v1990
      %v2051 = vpack.c.b16 %v1993, %v1991
      %v2052 = vpack.c.b16 %v1996, %v1994
      %v2053 = vpack.c.b16 %v1997, %v1995
      %v2054 = vpack.c.b16 %v2000, %v1998
      %v2055 = vpack.c.b16 %v2001, %v1999
      %v2056 = vpack.c.b16 %v2004, %v2002
      %v2057 = vpack.c.b16 %v2005, %v2003
      %v2058 = vpack.c.b16 %v2008, %v2006
      %v2059 = vpack.c.b16 %v2009, %v2007
      %v2060 = vpack.c.b16 %v2012, %v2010
      %v2061 = vpack.c.b16 %v2013, %v2011
      %2110 = vmatprep.subr.bf16.mxu0 %v2015
      %2111 = vmatpush1.bf16.msra.mxu0 %v2014
      %2112 = vmatprep.subr.bf16.mxu0 %v2017
      %2113 = vmatpush1.bf16.msra.mxu0 %v2016
      %2114 = vmatprep.subr.bf16.mxu0 %v2019
      %2115 = vmatpush1.bf16.msra.mxu0 %v2018
      %2116 = vmatprep.subr.bf16.mxu0 %v2021
      %2117 = vmatpush1.bf16.msra.mxu0 %v2020
      %2118 = vmatprep.subr.bf16.mxu0 %v2023
      %2119 = vmatpush1.bf16.msra.mxu0 %v2022
      %2120 = vmatprep.subr.bf16.mxu0 %v2025
      %2121 = vmatpush1.bf16.msra.mxu0 %v2024
      %2122 = vmatprep.subr.bf16.mxu0 %v2027
      %2123 = vmatpush1.bf16.msra.mxu0 %v2026
      %2124 = vmatprep.subr.bf16.mxu0 %v2029
      %2125 = vmatpush1.bf16.msra.mxu0 %v2028
      %2126 = vmatprep.subr.bf16.mxu0 %v2031
      %2127 = vmatpush1.bf16.msra.mxu0 %v2030
      %2128 = vmatprep.subr.bf16.mxu0 %v2033
      %2129 = vmatpush1.bf16.msra.mxu0 %v2032
      %2130 = vmatprep.subr.bf16.mxu0 %v2035
      %2131 = vmatpush1.bf16.msra.mxu0 %v2034
      %2132 = vmatprep.subr.bf16.mxu0 %v2037
      %2133 = vmatpush1.bf16.msra.mxu0 %v2036
      %2134 = vmatprep.subr.bf16.mxu0 %v2039
      %2135 = vmatpush1.bf16.msra.mxu0 %v2038
      %2136 = vmatprep.subr.bf16.mxu0 %v2041
      %2137 = vmatpush1.bf16.msra.mxu0 %v2040
      %2138 = vmatprep.subr.bf16.mxu0 %v2043
      %2139 = vmatpush1.bf16.msra.mxu0 %v2042
      %2140 = vmatprep.subr.bf16.mxu0 %v2045
      %2141 = vmatpush1.bf16.msra.mxu0 %v2044
      %2142 = vmatprep.mubr.bf16.mxu0 %v1419
      %2143 = vmatmul.mubr.bf16.gmra.mrb[0].mxu0 %v1418
      %v2144 = vpop.f32.mrb[0].mxu0
      %v2145 = vadd.f32 %v1864, %v2144
      %v2146 = vpop.f32.mrb[0].mxu0
      %v2147 = vadd.f32 %v1866, %v2146
      %v2148 = vpop.f32.mrb[0].mxu0
      %v2149 = vpop.f32.mrb[0].mxu0
      %2150 = vdwg.mxu0
      %2151 = vmatprep.subr.bf16.mxu0 %v2047
      %2152 = vmatpush1.bf16.msra.mxu0 %v2046
      %2153 = vmatprep.subr.bf16.mxu0 %v2049
      %2154 = vmatpush1.bf16.msra.mxu0 %v2048
      %2155 = vmatprep.subr.bf16.mxu0 %v2051
      %2156 = vmatpush1.bf16.msra.mxu0 %v2050
      %2157 = vmatprep.subr.bf16.mxu0 %v2053
      %2158 = vmatpush1.bf16.msra.mxu0 %v2052
      %2159 = vmatprep.subr.bf16.mxu0 %v2055
      %2160 = vmatpush1.bf16.msra.mxu0 %v2054
      %2161 = vmatprep.subr.bf16.mxu0 %v2057
      %2162 = vmatpush1.bf16.msra.mxu0 %v2056
      %2163 = vmatprep.subr.bf16.mxu0 %v2059
      %2164 = vmatpush1.bf16.msra.mxu0 %v2058
      %2165 = vmatprep.subr.bf16.mxu0 %v2061
      %2166 = vmatpush1.bf16.msra.mxu0 %v2060
      %2167 = vmatprep.subr.bf16.mxu0 0
      %2168 = vmatpush1.bf16.msra.mxu0 0
      %2169 = vmatprep.subr.bf16.mxu0 0
      %2170 = vmatpush1.bf16.msra.mxu0 0
      %2171 = vmatprep.subr.bf16.mxu0 0
      %2172 = vmatpush1.bf16.msra.mxu0 0
      %2173 = vmatprep.subr.bf16.mxu0 0
      %2174 = vmatpush1.bf16.msra.mxu0 0
      %2175 = vmatprep.subr.bf16.mxu0 0
      %2176 = vmatpush1.bf16.msra.mxu0 0
      %2177 = vmatprep.subr.bf16.mxu0 0
      %2178 = vmatpush1.bf16.msra.mxu0 0
      %2179 = vmatprep.subr.bf16.mxu0 0
      %2180 = vmatpush1.bf16.msra.mxu0 0
      %2181 = vmatprep.subr.bf16.mxu0 0
      %2182 = vmatpush1.bf16.msra.mxu0 0
      %2183 = vmatprep.mubr.bf16.mxu0 0
      %2184 = vmatmul.mubr.bf16.gmra.mrb[0].mxu0 %v1420
      %v2185 = vpop.f32.mrb[0].mxu0
      %v2186 = vadd.f32 %v2145, %v2185
      %v2187 = vpop.f32.mrb[0].mxu0
      %v2188 = vadd.f32 %v2147, %v2187
      %v2189 = vpop.f32.mrb[0].mxu0
      %v2190 = vpop.f32.mrb[0].mxu0
      %2191 = vdwg.mxu0
      %v2192 = vld [vmem:[#allocation2] sm:$0x3c]
      %v2193 = vld [vmem:[#allocation2 + $0x8] sm:$0x3c]
      %v2194 = vld [vmem:[#allocation2 + $0x10] sm:$0x3c]
      %v2195 = vpack.c.bf16 %v2192, %v2192
      %v2196 = vpack.c.bf16 %v2193, %v2193
      %v2197 = vpack.c.bf16 %v2194, %v2194
      %s2198 = scalar_lea.vmem %s5, 768
      %v2199 = vld [vmem:[%s2198] sm:$0xff]
      %v2200 = vld [vmem:[%s2198 + $0x8] sm:$0xff]
      %v2201 = vld [vmem:[%s2198 + $0x10] sm:$0xff]
      %v2202 = vld [vmem:[%s2198 + $0x18] sm:$0xff]
      %v2203 = vld [vmem:[%s2198 + $0x20] sm:$0xff]
      %v2204 = vld [vmem:[%s2198 + $0x28] sm:$0xff]
      %v2205 = vld [vmem:[%s2198 + $0x30] sm:$0xff]
      %v2206 = vld [vmem:[%s2198 + $0x38] sm:$0xff]
      %v2207 = vld [vmem:[%s2198 + $0x40] sm:$0xff]
      %v2208 = vld [vmem:[%s2198 + $0x48] sm:$0xff]
      %v2209 = vld [vmem:[%s2198 + $0x50] sm:$0xff]
      %v2210 = vld [vmem:[%s2198 + $0x58] sm:$0xff]
      %v2211 = vld [vmem:[%s2198 + $0x60] sm:$0xff]
      %v2212 = vld [vmem:[%s2198 + $0x68] sm:$0xff]
      %v2213 = vld [vmem:[%s2198 + $0x70] sm:$0xff]
      %v2214 = vld [vmem:[%s2198 + $0x78] sm:$0xff]
      %v2215 = vld [vmem:[%s2198 + $0x80] sm:$0xff]
      %v2216 = vld [vmem:[%s2198 + $0x88] sm:$0xff]
      %v2217 = vld [vmem:[%s2198 + $0x90] sm:$0xff]
      %v2218 = vld [vmem:[%s2198 + $0x98] sm:$0xff]
      %v2219 = vld [vmem:[%s2198 + $0xa0] sm:$0xff]
      %v2220 = vld [vmem:[%s2198 + $0xa8] sm:$0xff]
      %v2221 = vld [vmem:[%s2198 + $0xb0] sm:$0xff]
      %v2222 = vld [vmem:[%s2198 + $0xb8] sm:$0xff]
      %v2223 = vld [vmem:[%s2198 + $0xc0] sm:$0xff]
      %v2224 = vld [vmem:[%s2198 + $0xc8] sm:$0xff]
      %v2225 = vld [vmem:[%s2198 + $0xd0] sm:$0xff]
      %v2226 = vld [vmem:[%s2198 + $0xd8] sm:$0xff]
      %v2227 = vld [vmem:[%s2198 + $0xe0] sm:$0xff]
      %v2228 = vld [vmem:[%s2198 + $0xe8] sm:$0xff]
      %v2229 = vld [vmem:[%s2198 + $0xf0] sm:$0xff]
      %v2230 = vld [vmem:[%s2198 + $0xf8] sm:$0xff]
      %v2231 = vld [vmem:[%s2198 + $0x100] sm:$0xff]
      %v2232 = vld [vmem:[%s2198 + $0x108] sm:$0xff]
      %v2233 = vld [vmem:[%s2198 + $0x110] sm:$0xff]
      %v2234 = vld [vmem:[%s2198 + $0x118] sm:$0xff]
      %v2235 = vld [vmem:[%s2198 + $0x120] sm:$0xff]
      %v2236 = vld [vmem:[%s2198 + $0x128] sm:$0xff]
      %v2237 = vld [vmem:[%s2198 + $0x130] sm:$0xff]
      %v2238 = vld [vmem:[%s2198 + $0x138] sm:$0xff]
      %v2239 = vld [vmem:[%s2198 + $0x140] sm:$0xff]
      %v2240 = vld [vmem:[%s2198 + $0x148] sm:$0xff]
      %v2241 = vld [vmem:[%s2198 + $0x150] sm:$0xff]
      %v2242 = vld [vmem:[%s2198 + $0x158] sm:$0xff]
      %v2243 = vld [vmem:[%s2198 + $0x160] sm:$0xff]
      %v2244 = vld [vmem:[%s2198 + $0x168] sm:$0xff]
      %v2245 = vld [vmem:[%s2198 + $0x170] sm:$0xff]
      %v2246 = vld [vmem:[%s2198 + $0x178] sm:$0xff]
      %v2250 = vrot.slane %v2195, 1
      %v2251 = vrot.slane %v2196, 1
      %v2252 = vrot.slane %v2197, 1
      %v2304 = vunpack.c.l.b16 %v2199
      %v2305 = vunpack.c.h.b16 %v2199
      %v2306 = vunpack.c.l.b16 %v2200
      %v2307 = vunpack.c.h.b16 %v2200
      %v2308 = vunpack.c.l.b16 %v2201
      %v2309 = vunpack.c.h.b16 %v2201
      %v2310 = vunpack.c.l.b16 %v2202
      %v2311 = vunpack.c.h.b16 %v2202
      %v2312 = vunpack.c.l.b16 %v2203
      %v2313 = vunpack.c.h.b16 %v2203
      %v2314 = vunpack.c.l.b16 %v2204
      %v2315 = vunpack.c.h.b16 %v2204
      %v2316 = vunpack.c.l.b16 %v2205
      %v2317 = vunpack.c.h.b16 %v2205
      %v2318 = vunpack.c.l.b16 %v2206
      %v2319 = vunpack.c.h.b16 %v2206
      %v2320 = vunpack.c.l.b16 %v2207
      %v2321 = vunpack.c.h.b16 %v2207
      %v2322 = vunpack.c.l.b16 %v2208
      %v2323 = vunpack.c.h.b16 %v2208
      %v2324 = vunpack.c.l.b16 %v2209
      %v2325 = vunpack.c.h.b16 %v2209
      %v2326 = vunpack.c.l.b16 %v2210
      %v2327 = vunpack.c.h.b16 %v2210
      %v2328 = vunpack.c.l.b16 %v2211
      %v2329 = vunpack.c.h.b16 %v2211
      %v2330 = vunpack.c.l.b16 %v2212
      %v2331 = vunpack.c.h.b16 %v2212
      %v2332 = vunpack.c.l.b16 %v2213
      %v2333 = vunpack.c.h.b16 %v2213
      %v2334 = vunpack.c.l.b16 %v2214
      %v2335 = vunpack.c.h.b16 %v2214
      %v2336 = vunpack.c.l.b16 %v2215
      %v2337 = vunpack.c.h.b16 %v2215
      %v2338 = vunpack.c.l.b16 %v2216
      %v2339 = vunpack.c.h.b16 %v2216
      %v2340 = vunpack.c.l.b16 %v2217
      %v2341 = vunpack.c.h.b16 %v2217
      %v2342 = vunpack.c.l.b16 %v2218
      %v2343 = vunpack.c.h.b16 %v2218
      %v2344 = vunpack.c.l.b16 %v2219
      %v2345 = vunpack.c.h.b16 %v2219
      %v2346 = vunpack.c.l.b16 %v2220
      %v2347 = vunpack.c.h.b16 %v2220
      %v2348 = vunpack.c.l.b16 %v2221
      %v2349 = vunpack.c.h.b16 %v2221
      %v2350 = vunpack.c.l.b16 %v2222
      %v2351 = vunpack.c.h.b16 %v2222
      %v2352 = vunpack.c.l.b16 %v2223
      %v2353 = vunpack.c.h.b16 %v2223
      %v2354 = vunpack.c.l.b16 %v2224
      %v2355 = vunpack.c.h.b16 %v2224
      %v2356 = vunpack.c.l.b16 %v2225
      %v2357 = vunpack.c.h.b16 %v2225
      %v2358 = vunpack.c.l.b16 %v2226
      %v2359 = vunpack.c.h.b16 %v2226
      %v2360 = vunpack.c.l.b16 %v2227
      %v2361 = vunpack.c.h.b16 %v2227
      %v2362 = vunpack.c.l.b16 %v2228
      %v2363 = vunpack.c.h.b16 %v2228
      %v2364 = vunpack.c.l.b16 %v2229
      %v2365 = vunpack.c.h.b16 %v2229
      %v2366 = vunpack.c.l.b16 %v2230
      %v2367 = vunpack.c.h.b16 %v2230
      %v2368 = vunpack.c.l.b16 %v2231
      %v2369 = vunpack.c.h.b16 %v2231
      %v2370 = vunpack.c.l.b16 %v2232
      %v2371 = vunpack.c.h.b16 %v2232
      %v2372 = vunpack.c.l.b16 %v2233
      %v2373 = vunpack.c.h.b16 %v2233
      %v2374 = vunpack.c.l.b16 %v2234
      %v2375 = vunpack.c.h.b16 %v2234
      %v2376 = vunpack.c.l.b16 %v2235
      %v2377 = vunpack.c.h.b16 %v2235
      %v2378 = vunpack.c.l.b16 %v2236
      %v2379 = vunpack.c.h.b16 %v2236
      %v2380 = vunpack.c.l.b16 %v2237
      %v2381 = vunpack.c.h.b16 %v2237
      %v2382 = vunpack.c.l.b16 %v2238
      %v2383 = vunpack.c.h.b16 %v2238
      %v2384 = vunpack.c.l.b16 %v2239
      %v2385 = vunpack.c.h.b16 %v2239
      %v2386 = vunpack.c.l.b16 %v2240
      %v2387 = vunpack.c.h.b16 %v2240
      %v2388 = vunpack.c.l.b16 %v2241
      %v2389 = vunpack.c.h.b16 %v2241
      %v2390 = vunpack.c.l.b16 %v2242
      %v2391 = vunpack.c.h.b16 %v2242
      %v2392 = vunpack.c.l.b16 %v2243
      %v2393 = vunpack.c.h.b16 %v2243
      %v2394 = vunpack.c.l.b16 %v2244
      %v2395 = vunpack.c.h.b16 %v2244
      %v2396 = vunpack.c.l.b16 %v2245
      %v2397 = vunpack.c.h.b16 %v2245
      %v2398 = vunpack.c.l.b16 %v2246
      %v2399 = vunpack.c.h.b16 %v2246
      %v2400 = vpack.c.b16 %v2306, %v2304
      %v2401 = vpack.c.b16 %v2307, %v2305
      %v2402 = vpack.c.b16 %v2310, %v2308
      %v2403 = vpack.c.b16 %v2311, %v2309
      %v2404 = vpack.c.b16 %v2314, %v2312
      %v2405 = vpack.c.b16 %v2315, %v2313
      %v2406 = vpack.c.b16 %v2318, %v2316
      %v2407 = vpack.c.b16 %v2319, %v2317
      %v2408 = vpack.c.b16 %v2322, %v2320
      %v2409 = vpack.c.b16 %v2323, %v2321
      %v2410 = vpack.c.b16 %v2326, %v2324
      %v2411 = vpack.c.b16 %v2327, %v2325
      %v2412 = vpack.c.b16 %v2330, %v2328
      %v2413 = vpack.c.b16 %v2331, %v2329
      %v2414 = vpack.c.b16 %v2334, %v2332
      %v2415 = vpack.c.b16 %v2335, %v2333
      %v2416 = vpack.c.b16 %v2338, %v2336
      %v2417 = vpack.c.b16 %v2339, %v2337
      %v2418 = vpack.c.b16 %v2342, %v2340
      %v2419 = vpack.c.b16 %v2343, %v2341
      %v2420 = vpack.c.b16 %v2346, %v2344
      %v2421 = vpack.c.b16 %v2347, %v2345
      %v2422 = vpack.c.b16 %v2350, %v2348
      %v2423 = vpack.c.b16 %v2351, %v2349
      %v2424 = vpack.c.b16 %v2354, %v2352
      %v2425 = vpack.c.b16 %v2355, %v2353
      %v2426 = vpack.c.b16 %v2358, %v2356
      %v2427 = vpack.c.b16 %v2359, %v2357
      %v2428 = vpack.c.b16 %v2362, %v2360
      %v2429 = vpack.c.b16 %v2363, %v2361
      %v2430 = vpack.c.b16 %v2366, %v2364
      %v2431 = vpack.c.b16 %v2367, %v2365
      %v2432 = vpack.c.b16 %v2370, %v2368
      %v2433 = vpack.c.b16 %v2371, %v2369
      %v2434 = vpack.c.b16 %v2374, %v2372
      %v2435 = vpack.c.b16 %v2375, %v2373
      %v2436 = vpack.c.b16 %v2378, %v2376
      %v2437 = vpack.c.b16 %v2379, %v2377
      %v2438 = vpack.c.b16 %v2382, %v2380
      %v2439 = vpack.c.b16 %v2383, %v2381
      %v2440 = vpack.c.b16 %v2386, %v2384
      %v2441 = vpack.c.b16 %v2387, %v2385
      %v2442 = vpack.c.b16 %v2390, %v2388
      %v2443 = vpack.c.b16 %v2391, %v2389
      %v2444 = vpack.c.b16 %v2394, %v2392
      %v2445 = vpack.c.b16 %v2395, %v2393
      %v2446 = vpack.c.b16 %v2398, %v2396
      %v2447 = vpack.c.b16 %v2399, %v2397
      %2496 = vmatprep.subr.bf16.mxu0 %v2401
      %2497 = vmatpush1.bf16.msra.mxu0 %v2400
      %2498 = vmatprep.subr.bf16.mxu0 %v2403
      %2499 = vmatpush1.bf16.msra.mxu0 %v2402
      %2500 = vmatprep.subr.bf16.mxu0 %v2405
      %2501 = vmatpush1.bf16.msra.mxu0 %v2404
      %2502 = vmatprep.subr.bf16.mxu0 %v2407
      %2503 = vmatpush1.bf16.msra.mxu0 %v2406
      %2504 = vmatprep.subr.bf16.mxu0 %v2409
      %2505 = vmatpush1.bf16.msra.mxu0 %v2408
      %2506 = vmatprep.subr.bf16.mxu0 %v2411
      %2507 = vmatpush1.bf16.msra.mxu0 %v2410
      %2508 = vmatprep.subr.bf16.mxu0 %v2413
      %2509 = vmatpush1.bf16.msra.mxu0 %v2412
      %2510 = vmatprep.subr.bf16.mxu0 %v2415
      %2511 = vmatpush1.bf16.msra.mxu0 %v2414
      %2512 = vmatprep.subr.bf16.mxu0 %v2417
      %2513 = vmatpush1.bf16.msra.mxu0 %v2416
      %2514 = vmatprep.subr.bf16.mxu0 %v2419
      %2515 = vmatpush1.bf16.msra.mxu0 %v2418
      %2516 = vmatprep.subr.bf16.mxu0 %v2421
      %2517 = vmatpush1.bf16.msra.mxu0 %v2420
      %2518 = vmatprep.subr.bf16.mxu0 %v2423
      %2519 = vmatpush1.bf16.msra.mxu0 %v2422
      %2520 = vmatprep.subr.bf16.mxu0 %v2425
      %2521 = vmatpush1.bf16.msra.mxu0 %v2424
      %2522 = vmatprep.subr.bf16.mxu0 %v2427
      %2523 = vmatpush1.bf16.msra.mxu0 %v2426
      %2524 = vmatprep.subr.bf16.mxu0 %v2429
      %2525 = vmatpush1.bf16.msra.mxu0 %v2428
      %2526 = vmatprep.subr.bf16.mxu0 %v2431
      %2527 = vmatpush1.bf16.msra.mxu0 %v2430
      %2528 = vmatprep.mubr.bf16.mxu0 %v2251
      %2529 = vmatmul.mubr.bf16.gmra.mrb[0].mxu0 %v2250
      %v2530 = vpop.f32.mrb[0].mxu0
      %v2531 = vadd.f32 0.0, %v2530
      %v2532 = vpop.f32.mrb[0].mxu0
      %v2533 = vadd.f32 0.0, %v2532
      %v2534 = vpop.f32.mrb[0].mxu0
      %v2535 = vpop.f32.mrb[0].mxu0
      %2536 = vdwg.mxu0
      %2537 = vmatprep.subr.bf16.mxu0 %v2433
      %2538 = vmatpush1.bf16.msra.mxu0 %v2432
      %2539 = vmatprep.subr.bf16.mxu0 %v2435
      %2540 = vmatpush1.bf16.msra.mxu0 %v2434
      %2541 = vmatprep.subr.bf16.mxu0 %v2437
      %2542 = vmatpush1.bf16.msra.mxu0 %v2436
      %2543 = vmatprep.subr.bf16.mxu0 %v2439
      %2544 = vmatpush1.bf16.msra.mxu0 %v2438
      %2545 = vmatprep.subr.bf16.mxu0 %v2441
      %2546 = vmatpush1.bf16.msra.mxu0 %v2440
      %2547 = vmatprep.subr.bf16.mxu0 %v2443
      %2548 = vmatpush1.bf16.msra.mxu0 %v2442
      %2549 = vmatprep.subr.bf16.mxu0 %v2445
      %2550 = vmatpush1.bf16.msra.mxu0 %v2444
      %2551 = vmatprep.subr.bf16.mxu0 %v2447
      %2552 = vmatpush1.bf16.msra.mxu0 %v2446
      %2553 = vmatprep.subr.bf16.mxu0 0
      %2554 = vmatpush1.bf16.msra.mxu0 0
      %2555 = vmatprep.subr.bf16.mxu0 0
      %2556 = vmatpush1.bf16.msra.mxu0 0
      %2557 = vmatprep.subr.bf16.mxu0 0
      %2558 = vmatpush1.bf16.msra.mxu0 0
      %2559 = vmatprep.subr.bf16.mxu0 0
      %2560 = vmatpush1.bf16.msra.mxu0 0
      %2561 = vmatprep.subr.bf16.mxu0 0
      %2562 = vmatpush1.bf16.msra.mxu0 0
      %2563 = vmatprep.subr.bf16.mxu0 0
      %2564 = vmatpush1.bf16.msra.mxu0 0
      %2565 = vmatprep.subr.bf16.mxu0 0
      %2566 = vmatpush1.bf16.msra.mxu0 0
      %2567 = vmatprep.subr.bf16.mxu0 0
      %2568 = vmatpush1.bf16.msra.mxu0 0
      %2569 = vmatprep.mubr.bf16.mxu0 0
      %2570 = vmatmul.mubr.bf16.gmra.mrb[0].mxu0 %v2252
      %v2571 = vpop.f32.mrb[0].mxu0
      %v2572 = vadd.f32 %v2531, %v2571
      %v2573 = vpop.f32.mrb[0].mxu0
      %v2574 = vadd.f32 %v2533, %v2573
      %v2575 = vpop.f32.mrb[0].mxu0
      %v2576 = vpop.f32.mrb[0].mxu0
      %2577 = vdwg.mxu0
      %v2578 = vadd.f32 %v2186, %v2572
      %v2579 = vadd.f32 %v2188, %v2574
      %v2580 = vld [vmem:[%s6] sm:$0x3]
      %v2582 = vlaneseq
      %v2583 = vshrl.u32 %v2582, 7
      %v2584 = vsub.s32 0, %v2583
      %v2585 = vrot.slane %v2580, %v2584
      %v2586 = vlaneseq
      %v2587 = vshrl.u32 %v2586, 7
      %v2588 = vsub.s32 1, %v2587
      %v2589 = vrot.slane %v2580, %v2588
      %v2592 = vmul.f32 %v2578, %v2585
      %v2593 = vmul.f32 %v2579, %v2589
      %v2594 = vld [vmem:[%s7] sm:$0x3]
      %v2596 = vlaneseq
      %v2597 = vshrl.u32 %v2596, 7
      %v2598 = vsub.s32 0, %v2597
      %v2599 = vrot.slane %v2594, %v2598
      %v2600 = vlaneseq
      %v2601 = vshrl.u32 %v2600, 7
      %v2602 = vsub.s32 1, %v2601
      %v2603 = vrot.slane %v2594, %v2602
      %v2606 = vadd.f32 %v2592, %v2599
      %v2607 = vadd.f32 %v2593, %v2603
      %v2608 = vld [vmem:[%s320] sm:$0xf]
      %v2609 = vunpack.c.l.bf16 %v2608
      %v2611 = vcombine.high %v2609, %v2609
      %v2613 = vadd.f32 %v2606, %v2609
      %v2614 = vadd.f32 %v2607, %v2611
      %v2615 = vmax.f32 %v2613, 0.0
      %v2616 = vmax.f32 %v2614, 0.0
      %v2617 = vpack.c.bf16 %v2615, %v2615
      %v2618 = vpack.c.bf16 %v2616, %v2616
      %v2621 = vcombine.low %v2617, %v2618
      %v2623 = vunpack.c.l.s4 1983009808
      %v2624 = vunpack.c.0.s8 %v2623
      %v2625 = vlaneseq
      %v2626 = vshrl.u32 %v2625, 7
      %v2627 = vsub.s32 %v2624, %v2626
      %v2628 = vrot.slane %v2621, %v2627
      %2630 = vst [vmem:[%s325] sm:$0xf] %v2628
      %p2631 = scmp.lt.s32.totalorder %s19, 1
      %s2632 = scalar_select %p2631, %s19, 1
      %s2633 = smul.addr %s2632, 2
      %s2634 = smul.addr %s2633, 2
      %s2635 = scalar_lea.vmem %s8, %s2634
      // Predicated region
      $region53: #{_lambda_.8} parent=51 // pred_check
        %p2636 = pneg %p215
      $region54: #{_lambda_.8} parent=51 // pred_check_branch
        %2638 = sbr.rel (%p2636) target = $region56
      $region55: #{_lambda_.8} parent=51 // pred_region
        _
      $region56: #{_lambda_.8} parent=51 // pred_fallthru
        _
    $region52: #{_lambda_.8} parent=5 // pred_fallthru
      _
    %p2639 = scmp.le.s32.totalorder 2, %s14
    // Predicated region
    $region57: #{_lambda_.8} parent=5 // pred_check
      %p2640 = pneg %p2639
    $region58: #{_lambda_.8} parent=5 // pred_check_branch
      %2642 = sbr.rel (%p2640) target = $region60
    $region59: #{_lambda_.8} parent=5 // pred_region
      %s2643 = ssub.s32 %s14, 2
      // Predicated region
      $region61: #{_lambda_.8} parent=59 // pred_check
        %p2644 = pneg %p221
      $region62: #{_lambda_.8} parent=59 // pred_check_branch
        %2646 = sbr.rel (%p2644) target = $region64
      $region63: #{_lambda_.8} parent=59 // pred_region
        %p2647 = scmp.lt.s32.totalorder %s20, 1
        %s2648 = scalar_select %p2647, %s20, 1
        %s2649 = smul.addr %s2648, 2
        %s2650 = smul.addr %s2649, 2
        %s2651 = scalar_lea.vmem %s8, %s2650
      $region64: #{_lambda_.8} parent=59 // pred_fallthru
        _
    $region60: #{_lambda_.8} parent=5 // pred_fallthru
      _
  $region6: #{_lambda_.8} parent=0 // loop_footer
    %s18 = sadd.s32 1, %s14
  $region7: #{_lambda_.8} parent=0 // loop_footer_branch
    %13 = sbr.rel target = $region3
  $region8: #{_lambda_.8} parent=0 // loop_exit
    _

</llo_original>
